<compile_context>
chip_gen: v7x
topology: tpu7x:2x2x1
jax: 0.10.0
libtpu: 0.0.40
codegen_flags: <defaults>
</compile_context>

<pallas_src>
import functools

import jax
import jax.numpy as jnp
from jax.experimental import pallas as pl
from jax.experimental.pallas import tpu as pltpu

LANE = 128          # conv output-channel dims are zero-padded to one vreg width
VMEM_LIMIT = 32 * 1024 * 1024
_RESIDENT = pl.Buffered(1)   # single-buffer constant-index (resident) operands


# ----------------------------------------------------------------------------
# Pallas kernels
# ----------------------------------------------------------------------------
def _matmul_bias_act_kernel(a_ref, w_ref, b_ref, o_ref, *, apply_relu):
    """out = act(a @ w + b). bf16 MXU operands, f32 accumulate + epilogue."""
    acc = jnp.dot(a_ref[...], w_ref[...], preferred_element_type=jnp.float32)
    acc = acc + b_ref[...]                       # (1, N) bias broadcast, f32
    if apply_relu:
        acc = jnp.maximum(acc, 0.0)
    o_ref[...] = acc.astype(o_ref.dtype)


def _fc_head_kernel(x_ref, w1_ref, b1_ref, w2_ref, b2_ref, o_ref):
    """Fused fc1(+ReLU) -> out. Hidden activation stays on-chip (no HBM hop)."""
    h = jnp.dot(x_ref[...], w1_ref[...], preferred_element_type=jnp.float32)
    h = jnp.maximum(h + b1_ref[...], 0.0)
    q = jnp.dot(h.astype(w2_ref.dtype), w2_ref[...],
                preferred_element_type=jnp.float32)
    o_ref[...] = (q + b2_ref[...]).astype(o_ref.dtype)


# ----------------------------------------------------------------------------
# pallas_call wrappers
# ----------------------------------------------------------------------------
def _pick_tile_m(m, cap):
    """Largest row-tile <= cap; prefer one that divides M (no ragged edge)."""
    if m <= cap:
        return m
    for t in range(cap, 7, -8):
        if m % t == 0:
            return t
    # Ragged last block: rows are independent, OOB output rows are dropped.
    # Any future row-coupled epilogue would need divisor tiles / explicit pad.
    return cap


def matmul_bias_act(a, w, b2d, *, relu, out_dtype, tm_cap=1024):
    """a: (M, K) bf16, w: (K, N) bf16, b2d: (1, N) f32 -> (M, N) out_dtype."""
    M, K = a.shape
    K2, N = w.shape
    assert K == K2, (K, K2)
    tm = _pick_tile_m(M, tm_cap)
    grid_m = pl.cdiv(M, tm)
    kernel = functools.partial(_matmul_bias_act_kernel, apply_relu=relu)
    return pl.pallas_call(
        kernel,
        out_shape=jax.ShapeDtypeStruct((M, N), out_dtype),
        grid=(grid_m,),
        in_specs=[
            pl.BlockSpec((tm, K), lambda i: (i, 0)),
            pl.BlockSpec((K, N), lambda i: (0, 0), pipeline_mode=_RESIDENT),
            pl.BlockSpec((1, N), lambda i: (0, 0), pipeline_mode=_RESIDENT),
        ],
        out_specs=pl.BlockSpec((tm, N), lambda i: (i, 0)),
        compiler_params=pltpu.CompilerParams(
            dimension_semantics=("parallel",),
            vmem_limit_bytes=VMEM_LIMIT),
    )(a, w, b2d)


def fc_head(x, w1, b1, w2, b2, *, tm_cap=512):
    """Fused fc1+ReLU+out. x: (M, 3136) bf16 -> (M, 128) f32 (lane-padded q)."""
    M, K = x.shape
    K1, H = w1.shape
    H2, N = w2.shape
    assert K == K1 and H == H2
    tm = _pick_tile_m(M, tm_cap)
    grid_m = pl.cdiv(M, tm)
    return pl.pallas_call(
        _fc_head_kernel,
        out_shape=jax.ShapeDtypeStruct((M, N), jnp.float32),
        grid=(grid_m,),
        in_specs=[
            pl.BlockSpec((tm, K), lambda i: (i, 0)),
            pl.BlockSpec((K, H), lambda i: (0, 0), pipeline_mode=_RESIDENT),
            pl.BlockSpec((1, H), lambda i: (0, 0), pipeline_mode=_RESIDENT),
            pl.BlockSpec((H, N), lambda i: (0, 0), pipeline_mode=_RESIDENT),
            pl.BlockSpec((1, N), lambda i: (0, 0), pipeline_mode=_RESIDENT),
        ],
        out_specs=pl.BlockSpec((tm, N), lambda i: (i, 0)),
        compiler_params=pltpu.CompilerParams(
            dimension_semantics=("parallel",),
            vmem_limit_bytes=VMEM_LIMIT),
    )(x, w1, b1, w2, b2)


# ----------------------------------------------------------------------------
# Conv layer = XLA im2col (bf16) + fused Pallas matmul/bias/ReLU
# ----------------------------------------------------------------------------
def _im2col(x_nhwc, kh, kw, stride, cin):
    """(B, H, W, C>=cin) -> (B*OH*OW, kh*kw*cin); K order = (di, dj, c)."""
    B, H, W, _ = x_nhwc.shape
    oh = (H - kh) // stride + 1
    ow = (W - kw) // stride + 1
    cols = []
    for di in range(kh):
        for dj in range(kw):
            cols.append(x_nhwc[:, di:di + stride * (oh - 1) + 1:stride,
                                  dj:dj + stride * (ow - 1) + 1:stride, :cin])
    patches = jnp.stack(cols, axis=3)                 # (B, oh, ow, kh*kw, cin)
    return patches.reshape(B * oh * ow, kh * kw * cin), oh, ow


def conv2d_relu(x_nhwc, w_mat, b2d, *, kh, kw, stride, cin):
    """w_mat: (kh*kw*cin, 128) prepacked bf16; returns (B, OH, OW, 128) bf16."""
    B = x_nhwc.shape[0]
    a, oh, ow = _im2col(x_nhwc, kh, kw, stride, cin)
    out = matmul_bias_act(a, w_mat, b2d, relu=True, out_dtype=jnp.bfloat16)
    return out.reshape(B, oh, ow, LANE)


# ----------------------------------------------------------------------------
# Parameter init (deterministic, PyTorch layouts) + one-time kernel re-layout
# ----------------------------------------------------------------------------
def init_params(key, num_actions):
    ks = jax.random.split(key, 10)

    def u(k, shape, fan_in):
        bound = 1.0 / jnp.sqrt(fan_in)
        return jax.random.uniform(k, shape, jnp.float32, -bound, bound)

    return {
        "conv1_w": u(ks[0], (32, 3, 8, 8), 3 * 8 * 8),
        "conv1_b": u(ks[1], (32,), 3 * 8 * 8),
        "conv2_w": u(ks[2], (64, 32, 4, 4), 32 * 4 * 4),
        "conv2_b": u(ks[3], (64,), 32 * 4 * 4),
        "conv3_w": u(ks[4], (64, 64, 3, 3), 64 * 3 * 3),
        "conv3_b": u(ks[5], (64,), 64 * 3 * 3),
        "fc1_w":   u(ks[6], (512, 64 * 7 * 7), 64 * 7 * 7),   # PyTorch (out, in)
        "fc1_b":   u(ks[7], (512,), 64 * 7 * 7),
        "out_w":   u(ks[8], (num_actions, 512), 512),
        "out_b":   u(ks[9], (num_actions,), 512),
    }


def prepare_params(p):
    """One-time re-layout of PyTorch-shaped params into kernel-ready operands
    (im2col weight order, lane padding to 128, bf16). Runs outside forward()."""
    def conv_w(w_oihw):
        cout, cin, kh, kw = w_oihw.shape
        w = jnp.transpose(w_oihw, (2, 3, 1, 0)).reshape(kh * kw * cin, cout)
        return jnp.pad(w, ((0, 0), (0, LANE - cout))).astype(jnp.bfloat16)

    def pad_bias(b):
        return jnp.pad(b, (0, LANE - b.shape[0])).reshape(1, LANE).astype(jnp.float32)

    # fc1 consumes the conv3 activation flattened in (h, w, c=64) order:
    # permute torch's (c, h, w) column order once here, NO channel zero-padding
    # (K = 3136 real features => half the HBM weight DMA vs. a 6272-row pack).
    fc1_w = p["fc1_w"].reshape(512, 64, 49)               # (out, c, p=h*7+w)
    fc1_w = jnp.transpose(fc1_w, (2, 1, 0))               # (p, c, out)
    fc1_w = fc1_w.reshape(49 * 64, 512).astype(jnp.bfloat16)   # row = p*64 + c

    num_actions = p["out_w"].shape[0]
    assert num_actions <= LANE
    out_w = jnp.pad(p["out_w"].T, ((0, 0), (0, LANE - num_actions))).astype(jnp.bfloat16)

    return {
        "conv1_w": conv_w(p["conv1_w"]), "conv1_b": pad_bias(p["conv1_b"]),
        "conv2_w": conv_w(p["conv2_w"]), "conv2_b": pad_bias(p["conv2_b"]),
        "conv3_w": conv_w(p["conv3_w"]), "conv3_b": pad_bias(p["conv3_b"]),
        "fc1_w": fc1_w,
        "fc1_b": p["fc1_b"].reshape(1, 512).astype(jnp.float32),
        "out_w": out_w,
        "out_b": pad_bias(p["out_b"]),
    }


# ----------------------------------------------------------------------------
# Forward pass (mirrors NeuralNetwork.forward)
# ----------------------------------------------------------------------------
def forward(params, x_nchw, *, num_actions):
    # Cast to bf16 BEFORE the NCHW->NHWC relayout (half the transpose bytes).
    # bf16 activations with f32 MXU accumulation: ~1e-2 relative tolerance vs.
    # a PyTorch f32 reference — acceptable for DQN inference.
    x = jnp.transpose(x_nchw.astype(jnp.bfloat16), (0, 2, 3, 1))  # (B,84,84,3)
    x = conv2d_relu(x, params["conv1_w"], params["conv1_b"],
                    kh=8, kw=8, stride=4, cin=3)    # (B, 20, 20, 128)
    x = conv2d_relu(x, params["conv2_w"], params["conv2_b"],
                    kh=4, kw=4, stride=2, cin=32)   # (B,  9,  9, 128)
    x = conv2d_relu(x, params["conv3_w"], params["conv3_b"],
                    kh=3, kw=3, stride=1, cin=64)   # (B,  7,  7, 128)
    B = x.shape[0]
    # Drop the zero-padded channels (tiny lane slice) and flatten (h, w, c):
    # matches fc1_w's (p, c) row order, K = 3136 real features.
    x = x[:, :, :, :64].reshape(B, 7 * 7 * 64)
    q = fc_head(x, params["fc1_w"], params["fc1_b"],
                params["out_w"], params["out_b"])   # (B, 128) f32, lane-padded
    return q[:, :num_actions]

# NOTE: at batch=2 the network is launch/overhead bound (M=2 rows into a
# 128/256-row MXU); batch requests to M >= 128 before tuning the matmuls further.


if __name__ == "__main__":
    num_actions = 4
    batch = 2
    key = jax.random.PRNGKey(0)
    k_params, k_x = jax.random.split(key)

    torch_layout_params = init_params(k_params, num_actions)
    params = prepare_params(torch_layout_params)        # one-time re-layout

    # fc1 expects 64*7*7 features, which pins the spatial size to 84x84.
    x = jax.random.normal(k_x, (batch, 3, 84, 84), dtype=jnp.float32)

    fwd = jax.jit(functools.partial(forward, num_actions=num_actions))
    q_values = fwd(params, x)
    jax.block_until_ready(q_values)
    assert q_values.shape == (batch, num_actions), q_values.shape
    assert bool(jnp.all(jnp.isfinite(q_values)))
    print("KERNEL_OK")
</pallas_src>

<mosaic_0001>
module attributes {stable_mosaic.version = 11 : i64} {
  func.func @_matmul_bias_act_kernel(%arg0: i32, %arg1: memref<800x192xbf16, #tpu.memory_space<vmem>>, %arg2: memref<192x128xbf16, #tpu.memory_space<vmem>>, %arg3: memref<1x128xf32, #tpu.memory_space<vmem>>, %arg4: memref<800x128xbf16, #tpu.memory_space<vmem>>) attributes {dimension_semantics = [#tpu.dimension_semantics<parallel>], iteration_bounds = array<i64: 1>, scalar_prefetch = 0 : i64, scratch_operands = 0 : i64, tpu.core_type = #tpu.core_type<tc>, window_params = [{transform_indices = @transform_0, window_bounds = array<i64: 800, 192>}, {pipeline_mode = #tpu.pipeline_mode<synchronous>, transform_indices = @transform_1, window_bounds = array<i64: 192, 128>}, {pipeline_mode = #tpu.pipeline_mode<synchronous>, transform_indices = @transform_2, window_bounds = array<i64: 1, 128>}, {transform_indices = @transform_3, window_bounds = array<i64: 800, 128>}]} {
    %c0 = arith.constant 0 : index
    %c0_0 = arith.constant 0 : index
    %0 = vector.load %arg1[%c0, %c0_0] : memref<800x192xbf16, #tpu.memory_space<vmem>>, vector<800x192xbf16>
    %c0_1 = arith.constant 0 : index
    %c0_2 = arith.constant 0 : index
    %1 = vector.load %arg2[%c0_1, %c0_2] : memref<192x128xbf16, #tpu.memory_space<vmem>>, vector<192x128xbf16>
    %cst = arith.constant dense<0.000000e+00> : vector<800x128xf32>
    %2 = tpu.matmul %0, %1, %cst {dimension_numbers = #tpu.dot_dimension_numbers<[1], [0], [0], [1], [0, 0, 1, 1], [], []>} : vector<800x192xbf16>, vector<192x128xbf16>, vector<800x128xf32> -> vector<800x128xf32>
    %c0_3 = arith.constant 0 : index
    %c0_4 = arith.constant 0 : index
    %3 = vector.load %arg3[%c0_3, %c0_4] : memref<1x128xf32, #tpu.memory_space<vmem>>, vector<1x128xf32>
    %4 = vector.broadcast %3 : vector<1x128xf32> to vector<800x128xf32>
    %5 = arith.addf %2, %4 : vector<800x128xf32>
    %cst_5 = arith.constant 0.000000e+00 : f32
    %6 = vector.broadcast %cst_5 : f32 to vector<800x128xf32>
    %7 = arith.maximumf %5, %6 : vector<800x128xf32>
    %8 = arith.truncf %7 : vector<800x128xf32> to vector<800x128xbf16>
    %c0_6 = arith.constant 0 : index
    %c0_7 = arith.constant 0 : index
    %9 = vector.load %arg4[%c0_6, %c0_7] : memref<800x128xbf16, #tpu.memory_space<vmem>>, vector<800x128xbf16>
    tpu.vector_store %arg4[%c0_6, %c0_7], %8 {strides = array<i32>} : memref<800x128xbf16, #tpu.memory_space<vmem>>, vector<800x128xbf16>,
    return
  }
  func.func @transform_0(%arg0: i32) -> (i32, i32) {
    %c0_i32 = arith.constant 0 : i32
    %c0_i32_0 = arith.constant 0 : i32
    return %arg0, %c0_i32 : i32, i32
  }
  func.func @transform_1(%arg0: i32) -> (i32, i32) {
    %c0_i32 = arith.constant 0 : i32
    %c0_i32_0 = arith.constant 0 : i32
    %c0_i32_1 = arith.constant 0 : i32
    return %c0_i32, %c0_i32_0 : i32, i32
  }
  func.func @transform_2(%arg0: i32) -> (i32, i32) {
    %c0_i32 = arith.constant 0 : i32
    %c0_i32_0 = arith.constant 0 : i32
    %c0_i32_1 = arith.constant 0 : i32
    return %c0_i32, %c0_i32_0 : i32, i32
  }
  func.func @transform_3(%arg0: i32) -> (i32, i32) {
    %c0_i32 = arith.constant 0 : i32
    %c0_i32_0 = arith.constant 0 : i32
    return %arg0, %c0_i32 : i32, i32
  }
}

module attributes {stable_mosaic.version = 11 : i64} {
  func.func @_matmul_bias_act_kernel(%arg0: i32, %arg1: memref<162x512xbf16, #tpu.memory_space<vmem>>, %arg2: memref<512x128xbf16, #tpu.memory_space<vmem>>, %arg3: memref<1x128xf32, #tpu.memory_space<vmem>>, %arg4: memref<162x128xbf16, #tpu.memory_space<vmem>>) attributes {dimension_semantics = [#tpu.dimension_semantics<parallel>], iteration_bounds = array<i64: 1>, scalar_prefetch = 0 : i64, scratch_operands = 0 : i64, tpu.core_type = #tpu.core_type<tc>, window_params = [{transform_indices = @transform_0, window_bounds = array<i64: 162, 512>}, {pipeline_mode = #tpu.pipeline_mode<synchronous>, transform_indices = @transform_1, window_bounds = array<i64: 512, 128>}, {pipeline_mode = #tpu.pipeline_mode<synchronous>, transform_indices = @transform_2, window_bounds = array<i64: 1, 128>}, {transform_indices = @transform_3, window_bounds = array<i64: 162, 128>}]} {
    %c0 = arith.constant 0 : index
    %c0_0 = arith.constant 0 : index
    %0 = vector.load %arg1[%c0, %c0_0] : memref<162x512xbf16, #tpu.memory_space<vmem>>, vector<162x512xbf16>
    %c0_1 = arith.constant 0 : index
    %c0_2 = arith.constant 0 : index
    %1 = vector.load %arg2[%c0_1, %c0_2] : memref<512x128xbf16, #tpu.memory_space<vmem>>, vector<512x128xbf16>
    %cst = arith.constant dense<0.000000e+00> : vector<162x128xf32>
    %2 = tpu.matmul %0, %1, %cst {dimension_numbers = #tpu.dot_dimension_numbers<[1], [0], [0], [1], [0, 0, 1, 1], [], []>} : vector<162x512xbf16>, vector<512x128xbf16>, vector<162x128xf32> -> vector<162x128xf32>
    %c0_3 = arith.constant 0 : index
    %c0_4 = arith.constant 0 : index
    %3 = vector.load %arg3[%c0_3, %c0_4] : memref<1x128xf32, #tpu.memory_space<vmem>>, vector<1x128xf32>
    %4 = vector.broadcast %3 : vector<1x128xf32> to vector<162x128xf32>
    %5 = arith.addf %2, %4 : vector<162x128xf32>
    %cst_5 = arith.constant 0.000000e+00 : f32
    %6 = vector.broadcast %cst_5 : f32 to vector<162x128xf32>
    %7 = arith.maximumf %5, %6 : vector<162x128xf32>
    %8 = arith.truncf %7 : vector<162x128xf32> to vector<162x128xbf16>
    %c0_6 = arith.constant 0 : index
    %c0_7 = arith.constant 0 : index
    %9 = vector.load %arg4[%c0_6, %c0_7] : memref<162x128xbf16, #tpu.memory_space<vmem>>, vector<162x128xbf16>
    tpu.vector_store %arg4[%c0_6, %c0_7], %8 {strides = array<i32>} : memref<162x128xbf16, #tpu.memory_space<vmem>>, vector<162x128xbf16>,
    return
  }
  func.func @transform_0(%arg0: i32) -> (i32, i32) {
    %c0_i32 = arith.constant 0 : i32
    %c0_i32_0 = arith.constant 0 : i32
    return %arg0, %c0_i32 : i32, i32
  }
  func.func @transform_1(%arg0: i32) -> (i32, i32) {
    %c0_i32 = arith.constant 0 : i32
    %c0_i32_0 = arith.constant 0 : i32
    %c0_i32_1 = arith.constant 0 : i32
    return %c0_i32, %c0_i32_0 : i32, i32
  }
  func.func @transform_2(%arg0: i32) -> (i32, i32) {
    %c0_i32 = arith.constant 0 : i32
    %c0_i32_0 = arith.constant 0 : i32
    %c0_i32_1 = arith.constant 0 : i32
    return %c0_i32, %c0_i32_0 : i32, i32
  }
  func.func @transform_3(%arg0: i32) -> (i32, i32) {
    %c0_i32 = arith.constant 0 : i32
    %c0_i32_0 = arith.constant 0 : i32
    return %arg0, %c0_i32 : i32, i32
  }
}

module attributes {stable_mosaic.version = 11 : i64} {
  func.func @_matmul_bias_act_kernel(%arg0: i32, %arg1: memref<98x576xbf16, #tpu.memory_space<vmem>>, %arg2: memref<576x128xbf16, #tpu.memory_space<vmem>>, %arg3: memref<1x128xf32, #tpu.memory_space<vmem>>, %arg4: memref<98x128xbf16, #tpu.memory_space<vmem>>) attributes {dimension_semantics = [#tpu.dimension_semantics<parallel>], iteration_bounds = array<i64: 1>, scalar_prefetch = 0 : i64, scratch_operands = 0 : i64, tpu.core_type = #tpu.core_type<tc>, window_params = [{transform_indices = @transform_0, window_bounds = array<i64: 98, 576>}, {pipeline_mode = #tpu.pipeline_mode<synchronous>, transform_indices = @transform_1, window_bounds = array<i64: 576, 128>}, {pipeline_mode = #tpu.pipeline_mode<synchronous>, transform_indices = @transform_2, window_bounds = array<i64: 1, 128>}, {transform_indices = @transform_3, window_bounds = array<i64: 98, 128>}]} {
    %c0 = arith.constant 0 : index
    %c0_0 = arith.constant 0 : index
    %0 = vector.load %arg1[%c0, %c0_0] : memref<98x576xbf16, #tpu.memory_space<vmem>>, vector<98x576xbf16>
    %c0_1 = arith.constant 0 : index
    %c0_2 = arith.constant 0 : index
    %1 = vector.load %arg2[%c0_1, %c0_2] : memref<576x128xbf16, #tpu.memory_space<vmem>>, vector<576x128xbf16>
    %cst = arith.constant dense<0.000000e+00> : vector<98x128xf32>
    %2 = tpu.matmul %0, %1, %cst {dimension_numbers = #tpu.dot_dimension_numbers<[1], [0], [0], [1], [0, 0, 1, 1], [], []>} : vector<98x576xbf16>, vector<576x128xbf16>, vector<98x128xf32> -> vector<98x128xf32>
    %c0_3 = arith.constant 0 : index
    %c0_4 = arith.constant 0 : index
    %3 = vector.load %arg3[%c0_3, %c0_4] : memref<1x128xf32, #tpu.memory_space<vmem>>, vector<1x128xf32>
    %4 = vector.broadcast %3 : vector<1x128xf32> to vector<98x128xf32>
    %5 = arith.addf %2, %4 : vector<98x128xf32>
    %cst_5 = arith.constant 0.000000e+00 : f32
    %6 = vector.broadcast %cst_5 : f32 to vector<98x128xf32>
    %7 = arith.maximumf %5, %6 : vector<98x128xf32>
    %8 = arith.truncf %7 : vector<98x128xf32> to vector<98x128xbf16>
    %c0_6 = arith.constant 0 : index
    %c0_7 = arith.constant 0 : index
    %9 = vector.load %arg4[%c0_6, %c0_7] : memref<98x128xbf16, #tpu.memory_space<vmem>>, vector<98x128xbf16>
    tpu.vector_store %arg4[%c0_6, %c0_7], %8 {strides = array<i32>} : memref<98x128xbf16, #tpu.memory_space<vmem>>, vector<98x128xbf16>,
    return
  }
  func.func @transform_0(%arg0: i32) -> (i32, i32) {
    %c0_i32 = arith.constant 0 : i32
    %c0_i32_0 = arith.constant 0 : i32
    return %arg0, %c0_i32 : i32, i32
  }
  func.func @transform_1(%arg0: i32) -> (i32, i32) {
    %c0_i32 = arith.constant 0 : i32
    %c0_i32_0 = arith.constant 0 : i32
    %c0_i32_1 = arith.constant 0 : i32
    return %c0_i32, %c0_i32_0 : i32, i32
  }
  func.func @transform_2(%arg0: i32) -> (i32, i32) {
    %c0_i32 = arith.constant 0 : i32
    %c0_i32_0 = arith.constant 0 : i32
    %c0_i32_1 = arith.constant 0 : i32
    return %c0_i32, %c0_i32_0 : i32, i32
  }
  func.func @transform_3(%arg0: i32) -> (i32, i32) {
    %c0_i32 = arith.constant 0 : i32
    %c0_i32_0 = arith.constant 0 : i32
    return %arg0, %c0_i32 : i32, i32
  }
}

module attributes {stable_mosaic.version = 11 : i64} {
  func.func @_fc_head_kernel(%arg0: i32, %arg1: memref<2x3136xbf16, #tpu.memory_space<vmem>>, %arg2: memref<3136x512xbf16, #tpu.memory_space<vmem>>, %arg3: memref<1x512xf32, #tpu.memory_space<vmem>>, %arg4: memref<512x128xbf16, #tpu.memory_space<vmem>>, %arg5: memref<1x128xf32, #tpu.memory_space<vmem>>, %arg6: memref<2x128xf32, #tpu.memory_space<vmem>>) attributes {dimension_semantics = [#tpu.dimension_semantics<parallel>], iteration_bounds = array<i64: 1>, scalar_prefetch = 0 : i64, scratch_operands = 0 : i64, tpu.core_type = #tpu.core_type<tc>, window_params = [{transform_indices = @transform_0, window_bounds = array<i64: 2, 3136>}, {pipeline_mode = #tpu.pipeline_mode<synchronous>, transform_indices = @transform_1, window_bounds = array<i64: 3136, 512>}, {pipeline_mode = #tpu.pipeline_mode<synchronous>, transform_indices = @transform_2, window_bounds = array<i64: 1, 512>}, {pipeline_mode = #tpu.pipeline_mode<synchronous>, transform_indices = @transform_3, window_bounds = array<i64: 512, 128>}, {pipeline_mode = #tpu.pipeline_mode<synchronous>, transform_indices = @transform_4, window_bounds = array<i64: 1, 128>}, {transform_indices = @transform_5, window_bounds = array<i64: 2, 128>}]} {
    %c0 = arith.constant 0 : index
    %c0_0 = arith.constant 0 : index
    %0 = vector.load %arg1[%c0, %c0_0] : memref<2x3136xbf16, #tpu.memory_space<vmem>>, vector<2x3136xbf16>
    %c0_1 = arith.constant 0 : index
    %c0_2 = arith.constant 0 : index
    %1 = vector.load %arg2[%c0_1, %c0_2] : memref<3136x512xbf16, #tpu.memory_space<vmem>>, vector<3136x512xbf16>
    %cst = arith.constant dense<0.000000e+00> : vector<2x512xf32>
    %2 = tpu.matmul %0, %1, %cst {dimension_numbers = #tpu.dot_dimension_numbers<[1], [0], [0], [1], [0, 0, 1, 1], [], []>} : vector<2x3136xbf16>, vector<3136x512xbf16>, vector<2x512xf32> -> vector<2x512xf32>
    %c0_3 = arith.constant 0 : index
    %c0_4 = arith.constant 0 : index
    %3 = vector.load %arg3[%c0_3, %c0_4] : memref<1x512xf32, #tpu.memory_space<vmem>>, vector<1x512xf32>
    %4 = vector.broadcast %3 : vector<1x512xf32> to vector<2x512xf32>
    %5 = arith.addf %2, %4 : vector<2x512xf32>
    %cst_5 = arith.constant 0.000000e+00 : f32
    %6 = vector.broadcast %cst_5 : f32 to vector<2x512xf32>
    %7 = arith.maximumf %5, %6 : vector<2x512xf32>
    %8 = arith.truncf %7 : vector<2x512xf32> to vector<2x512xbf16>
    %c0_6 = arith.constant 0 : index
    %c0_7 = arith.constant 0 : index
    %9 = vector.load %arg4[%c0_6, %c0_7] : memref<512x128xbf16, #tpu.memory_space<vmem>>, vector<512x128xbf16>
    %cst_8 = arith.constant dense<0.000000e+00> : vector<2x128xf32>
    %10 = tpu.matmul %8, %9, %cst_8 {dimension_numbers = #tpu.dot_dimension_numbers<[1], [0], [0], [1], [0, 0, 1, 1], [], []>} : vector<2x512xbf16>, vector<512x128xbf16>, vector<2x128xf32> -> vector<2x128xf32>
    %c0_9 = arith.constant 0 : index
    %c0_10 = arith.constant 0 : index
    %11 = vector.load %arg5[%c0_9, %c0_10] : memref<1x128xf32, #tpu.memory_space<vmem>>, vector<1x128xf32>
    %12 = vector.broadcast %11 : vector<1x128xf32> to vector<2x128xf32>
    %13 = arith.addf %10, %12 : vector<2x128xf32>
    %c0_11 = arith.constant 0 : index
    %c0_12 = arith.constant 0 : index
    %14 = vector.load %arg6[%c0_11, %c0_12] : memref<2x128xf32, #tpu.memory_space<vmem>>, vector<2x128xf32>
    tpu.vector_store %arg6[%c0_11, %c0_12], %13 {strides = array<i32>} : memref<2x128xf32, #tpu.memory_space<vmem>>, vector<2x128xf32>,
    return
  }
  func.func @transform_0(%arg0: i32) -> (i32, i32) {
    %c0_i32 = arith.constant 0 : i32
    %c0_i32_0 = arith.constant 0 : i32
    return %arg0, %c0_i32 : i32, i32
  }
  func.func @transform_1(%arg0: i32) -> (i32, i32) {
    %c0_i32 = arith.constant 0 : i32
    %c0_i32_0 = arith.constant 0 : i32
    %c0_i32_1 = arith.constant 0 : i32
    return %c0_i32, %c0_i32_0 : i32, i32
  }
  func.func @transform_2(%arg0: i32) -> (i32, i32) {
    %c0_i32 = arith.constant 0 : i32
    %c0_i32_0 = arith.constant 0 : i32
    %c0_i32_1 = arith.constant 0 : i32
    return %c0_i32, %c0_i32_0 : i32, i32
  }
  func.func @transform_3(%arg0: i32) -> (i32, i32) {
    %c0_i32 = arith.constant 0 : i32
    %c0_i32_0 = arith.constant 0 : i32
    %c0_i32_1 = arith.constant 0 : i32
    return %c0_i32, %c0_i32_0 : i32, i32
  }
  func.func @transform_4(%arg0: i32) -> (i32, i32) {
    %c0_i32 = arith.constant 0 : i32
    %c0_i32_0 = arith.constant 0 : i32
    %c0_i32_1 = arith.constant 0 : i32
    return %c0_i32, %c0_i32_0 : i32, i32
  }
  func.func @transform_5(%arg0: i32) -> (i32, i32) {
    %c0_i32 = arith.constant 0 : i32
    %c0_i32_0 = arith.constant 0 : i32
    return %arg0, %c0_i32 : i32, i32
  }
}

</mosaic_0001>

<llo_original>
// kernel: forward.4
$region0: #{forward.4}
  #allocation0 [shape = 'u32[]', space=smem, size = 0x4, offset = 0x4, fixed_abs, tag = 'smem constant byte address 0x4 - core index']
  #allocation1 [shape = 'u32[144,128]{1,0:T(1,128)}', space=vmem, size = 0x12000, scoped, tag = 'internal scratch']
  %s0 = inlined_call_operand.vmem [shape: bf16[800,192], index: 0, kind: input, shape index: {}]
  %s1 = inlined_call_operand.vmem [shape: bf16[192,128], index: 1, kind: input, shape index: {}]
  %s2 = inlined_call_operand.vmem [shape: f32[1,128], index: 2, kind: input, shape index: {}]
  %s3 = inlined_call_operand.vmem [shape: bf16[800,128], index: 3, kind: output, shape index: {}]
  %s4 = sld [smem:[#allocation0]]
  $region22: #{forward.4} parent=0
    _
  %s6 = ssub.s32 1, %s4
  %s7 = scalar_select 0, %s6, %s4
  // Predicated region
  $region2: #{forward.4} parent=0 // pred_check
    _
  $region3: #{forward.4} parent=0 // pred_check_branch
    %9 = sbr.rel (0) target = $region5
  $region4: #{forward.4} parent=0 // pred_region
    _
  $region5: #{forward.4} parent=0 // pred_fallthru
    _
  // Predicated region
  $region6: #{forward.4} parent=0 // pred_check
    _
  $region7: #{forward.4} parent=0 // pred_check_branch
    %11 = sbr.rel (0) target = $region9
  $region8: #{forward.4} parent=0 // pred_region
    _
  $region9: #{forward.4} parent=0 // pred_fallthru
    _
  // Predicated region
  $region10: #{forward.4} parent=0 // pred_check
    _
  $region11: #{forward.4} parent=0 // pred_check_branch
    %13 = sbr.rel (0) target = $region13
  $region12: #{forward.4} parent=0 // pred_region
    _
  $region13: #{forward.4} parent=0 // pred_fallthru
    _
  %v15 = vld [vmem:[%s0] sm:$0xff]
  %v16 = vld [vmem:[%s0 + $0x8] sm:$0xff]
  %v17 = vld [vmem:[%s0 + $0x10] sm:$0xff]
  %v18 = vld [vmem:[%s0 + $0x18] sm:$0xff]
  %v19 = vld [vmem:[%s0 + $0x20] sm:$0xff]
  %v20 = vld [vmem:[%s0 + $0x28] sm:$0xff]
  %v21 = vld [vmem:[%s0 + $0x30] sm:$0xff]
  %v22 = vld [vmem:[%s0 + $0x38] sm:$0xff]
  %v23 = vld [vmem:[%s0 + $0x40] sm:$0xff]
  %v24 = vld [vmem:[%s0 + $0x48] sm:$0xff]
  %v25 = vld [vmem:[%s0 + $0x50] sm:$0xff]
  %v26 = vld [vmem:[%s0 + $0x58] sm:$0xff]
  %v27 = vld [vmem:[%s0 + $0x60] sm:$0xff]
  %v28 = vld [vmem:[%s0 + $0x68] sm:$0xff]
  %v29 = vld [vmem:[%s0 + $0x70] sm:$0xff]
  %v30 = vld [vmem:[%s0 + $0x78] sm:$0xff]
  %v31 = vld [vmem:[%s0 + $0x80] sm:$0xff]
  %v32 = vld [vmem:[%s0 + $0x88] sm:$0xff]
  %v33 = vld [vmem:[%s0 + $0x90] sm:$0xff]
  %v34 = vld [vmem:[%s0 + $0x98] sm:$0xff]
  %v35 = vld [vmem:[%s0 + $0xa0] sm:$0xff]
  %v36 = vld [vmem:[%s0 + $0xa8] sm:$0xff]
  %v37 = vld [vmem:[%s0 + $0xb0] sm:$0xff]
  %v38 = vld [vmem:[%s0 + $0xb8] sm:$0xff]
  %v39 = vld [vmem:[%s0 + $0xc0] sm:$0xff]
  %v40 = vld [vmem:[%s0 + $0xc8] sm:$0xff]
  %v41 = vld [vmem:[%s0 + $0xd0] sm:$0xff]
  %v42 = vld [vmem:[%s0 + $0xd8] sm:$0xff]
  %v43 = vld [vmem:[%s0 + $0xe0] sm:$0xff]
  %v44 = vld [vmem:[%s0 + $0xe8] sm:$0xff]
  %v45 = vld [vmem:[%s0 + $0xf0] sm:$0xff]
  %v46 = vld [vmem:[%s0 + $0xf8] sm:$0xff]
  %v47 = vld [vmem:[%s0 + $0x100] sm:$0xff]
  %v48 = vld [vmem:[%s0 + $0x108] sm:$0xff]
  %v49 = vld [vmem:[%s0 + $0x110] sm:$0xff]
  %v50 = vld [vmem:[%s0 + $0x118] sm:$0xff]
  %v51 = vld [vmem:[%s0 + $0x120] sm:$0xff]
  %v52 = vld [vmem:[%s0 + $0x128] sm:$0xff]
  %v53 = vld [vmem:[%s0 + $0x130] sm:$0xff]
  %v54 = vld [vmem:[%s0 + $0x138] sm:$0xff]
  %v55 = vld [vmem:[%s0 + $0x140] sm:$0xff]
  %v56 = vld [vmem:[%s0 + $0x148] sm:$0xff]
  %v57 = vld [vmem:[%s0 + $0x150] sm:$0xff]
  %v58 = vld [vmem:[%s0 + $0x158] sm:$0xff]
  %v59 = vld [vmem:[%s0 + $0x160] sm:$0xff]
  %v60 = vld [vmem:[%s0 + $0x168] sm:$0xff]
  %v61 = vld [vmem:[%s0 + $0x170] sm:$0xff]
  %v62 = vld [vmem:[%s0 + $0x178] sm:$0xff]
  %v63 = vld [vmem:[%s0 + $0x180] sm:$0xff]
  %v64 = vld [vmem:[%s0 + $0x188] sm:$0xff]
  %v65 = vld [vmem:[%s0 + $0x190] sm:$0xff]
  %v66 = vld [vmem:[%s0 + $0x198] sm:$0xff]
  %v67 = vld [vmem:[%s0 + $0x1a0] sm:$0xff]
  %v68 = vld [vmem:[%s0 + $0x1a8] sm:$0xff]
  %v69 = vld [vmem:[%s0 + $0x1b0] sm:$0xff]
  %v70 = vld [vmem:[%s0 + $0x1b8] sm:$0xff]
  %v71 = vld [vmem:[%s0 + $0x1c0] sm:$0xff]
  %v72 = vld [vmem:[%s0 + $0x1c8] sm:$0xff]
  %v73 = vld [vmem:[%s0 + $0x1d0] sm:$0xff]
  %v74 = vld [vmem:[%s0 + $0x1d8] sm:$0xff]
  %v75 = vld [vmem:[%s0 + $0x1e0] sm:$0xff]
  %v76 = vld [vmem:[%s0 + $0x1e8] sm:$0xff]
  %v77 = vld [vmem:[%s0 + $0x1f0] sm:$0xff]
  %v78 = vld [vmem:[%s0 + $0x1f8] sm:$0xff]
  %v79 = vld [vmem:[%s0 + $0x200] sm:$0xff]
  %v80 = vld [vmem:[%s0 + $0x208] sm:$0xff]
  %v81 = vld [vmem:[%s0 + $0x210] sm:$0xff]
  %v82 = vld [vmem:[%s0 + $0x218] sm:$0xff]
  %v83 = vld [vmem:[%s0 + $0x220] sm:$0xff]
  %v84 = vld [vmem:[%s0 + $0x228] sm:$0xff]
  %v85 = vld [vmem:[%s0 + $0x230] sm:$0xff]
  %v86 = vld [vmem:[%s0 + $0x238] sm:$0xff]
  %v87 = vld [vmem:[%s0 + $0x240] sm:$0xff]
  %v88 = vld [vmem:[%s0 + $0x248] sm:$0xff]
  %v89 = vld [vmem:[%s0 + $0x250] sm:$0xff]
  %v90 = vld [vmem:[%s0 + $0x258] sm:$0xff]
  %v91 = vld [vmem:[%s0 + $0x260] sm:$0xff]
  %v92 = vld [vmem:[%s0 + $0x268] sm:$0xff]
  %v93 = vld [vmem:[%s0 + $0x270] sm:$0xff]
  %v94 = vld [vmem:[%s0 + $0x278] sm:$0xff]
  %v95 = vld [vmem:[%s0 + $0x280] sm:$0xff]
  %v96 = vld [vmem:[%s0 + $0x288] sm:$0xff]
  %v97 = vld [vmem:[%s0 + $0x290] sm:$0xff]
  %v98 = vld [vmem:[%s0 + $0x298] sm:$0xff]
  %v99 = vld [vmem:[%s0 + $0x2a0] sm:$0xff]
  %v100 = vld [vmem:[%s0 + $0x2a8] sm:$0xff]
  %v101 = vld [vmem:[%s0 + $0x2b0] sm:$0xff]
  %v102 = vld [vmem:[%s0 + $0x2b8] sm:$0xff]
  %v103 = vld [vmem:[%s0 + $0x2c0] sm:$0xff]
  %v104 = vld [vmem:[%s0 + $0x2c8] sm:$0xff]
  %v105 = vld [vmem:[%s0 + $0x2d0] sm:$0xff]
  %v106 = vld [vmem:[%s0 + $0x2d8] sm:$0xff]
  %v107 = vld [vmem:[%s0 + $0x2e0] sm:$0xff]
  %v108 = vld [vmem:[%s0 + $0x2e8] sm:$0xff]
  %v109 = vld [vmem:[%s0 + $0x2f0] sm:$0xff]
  %v110 = vld [vmem:[%s0 + $0x2f8] sm:$0xff]
  %v111 = vld [vmem:[%s0 + $0x300] sm:$0xff]
  %v112 = vld [vmem:[%s0 + $0x308] sm:$0xff]
  %v113 = vld [vmem:[%s0 + $0x310] sm:$0xff]
  %v114 = vld [vmem:[%s0 + $0x318] sm:$0xff]
  %v115 = vld [vmem:[%s1] sm:$0xf]
  %v116 = vld [vmem:[%s1 + $0x4] sm:$0xf]
  %v117 = vld [vmem:[%s1 + $0x8] sm:$0xf]
  %v118 = vld [vmem:[%s1 + $0xc] sm:$0xf]
  %v119 = vld [vmem:[%s1 + $0x10] sm:$0xf]
  %v120 = vld [vmem:[%s1 + $0x14] sm:$0xf]
  %v121 = vld [vmem:[%s1 + $0x18] sm:$0xf]
  %v122 = vld [vmem:[%s1 + $0x1c] sm:$0xf]
  %v123 = vld [vmem:[%s1 + $0x20] sm:$0xf]
  %v124 = vld [vmem:[%s1 + $0x24] sm:$0xf]
  %v125 = vld [vmem:[%s1 + $0x28] sm:$0xf]
  %v126 = vld [vmem:[%s1 + $0x2c] sm:$0xf]
  %v127 = vld [vmem:[%s1 + $0x30] sm:$0xf]
  %v128 = vld [vmem:[%s1 + $0x34] sm:$0xf]
  %v129 = vld [vmem:[%s1 + $0x38] sm:$0xf]
  %v130 = vld [vmem:[%s1 + $0x3c] sm:$0xf]
  %v131 = vld [vmem:[%s1 + $0x40] sm:$0xf]
  %v132 = vld [vmem:[%s1 + $0x44] sm:$0xf]
  %v133 = vld [vmem:[%s1 + $0x48] sm:$0xf]
  %v134 = vld [vmem:[%s1 + $0x4c] sm:$0xf]
  %v135 = vld [vmem:[%s1 + $0x50] sm:$0xf]
  %v136 = vld [vmem:[%s1 + $0x54] sm:$0xf]
  %v137 = vld [vmem:[%s1 + $0x58] sm:$0xf]
  %v138 = vld [vmem:[%s1 + $0x5c] sm:$0xf]
  %v139 = vld [vmem:[%s2] sm:$0x1]
  %v141 = vlaneseq
  %v142 = vshrl.u32 %v141, 7
  %v143 = vsub.s32 0, %v142
  %v144 = vrot.slane %v139, %v143
  %v246 = vunpack.c.l.b16 %v15
  %v247 = vunpack.c.h.b16 %v15
  %v248 = vunpack.c.l.b16 %v16
  %v249 = vunpack.c.h.b16 %v16
  %v250 = vunpack.c.l.b16 %v17
  %v251 = vunpack.c.h.b16 %v17
  %v252 = vunpack.c.l.b16 %v18
  %v253 = vunpack.c.h.b16 %v18
  %v254 = vunpack.c.l.b16 %v19
  %v255 = vunpack.c.h.b16 %v19
  %v256 = vunpack.c.l.b16 %v20
  %v257 = vunpack.c.h.b16 %v20
  %v258 = vunpack.c.l.b16 %v21
  %v259 = vunpack.c.h.b16 %v21
  %v260 = vunpack.c.l.b16 %v22
  %v261 = vunpack.c.h.b16 %v22
  %v262 = vunpack.c.l.b16 %v23
  %v263 = vunpack.c.h.b16 %v23
  %v264 = vunpack.c.l.b16 %v24
  %v265 = vunpack.c.h.b16 %v24
  %v266 = vunpack.c.l.b16 %v25
  %v267 = vunpack.c.h.b16 %v25
  %v268 = vunpack.c.l.b16 %v26
  %v269 = vunpack.c.h.b16 %v26
  %v270 = vunpack.c.l.b16 %v27
  %v271 = vunpack.c.h.b16 %v27
  %v272 = vunpack.c.l.b16 %v28
  %v273 = vunpack.c.h.b16 %v28
  %v274 = vunpack.c.l.b16 %v29
  %v275 = vunpack.c.h.b16 %v29
  %v276 = vunpack.c.l.b16 %v30
  %v277 = vunpack.c.h.b16 %v30
  %v278 = vunpack.c.l.b16 %v31
  %v279 = vunpack.c.h.b16 %v31
  %v280 = vunpack.c.l.b16 %v32
  %v281 = vunpack.c.h.b16 %v32
  %v282 = vunpack.c.l.b16 %v33
  %v283 = vunpack.c.h.b16 %v33
  %v284 = vunpack.c.l.b16 %v34
  %v285 = vunpack.c.h.b16 %v34
  %v286 = vunpack.c.l.b16 %v35
  %v287 = vunpack.c.h.b16 %v35
  %v288 = vunpack.c.l.b16 %v36
  %v289 = vunpack.c.h.b16 %v36
  %v290 = vunpack.c.l.b16 %v37
  %v291 = vunpack.c.h.b16 %v37
  %v292 = vunpack.c.l.b16 %v38
  %v293 = vunpack.c.h.b16 %v38
  %v294 = vunpack.c.l.b16 %v39
  %v295 = vunpack.c.h.b16 %v39
  %v296 = vunpack.c.l.b16 %v40
  %v297 = vunpack.c.h.b16 %v40
  %v298 = vunpack.c.l.b16 %v41
  %v299 = vunpack.c.h.b16 %v41
  %v300 = vunpack.c.l.b16 %v42
  %v301 = vunpack.c.h.b16 %v42
  %v302 = vunpack.c.l.b16 %v43
  %v303 = vunpack.c.h.b16 %v43
  %v304 = vunpack.c.l.b16 %v44
  %v305 = vunpack.c.h.b16 %v44
  %v306 = vunpack.c.l.b16 %v45
  %v307 = vunpack.c.h.b16 %v45
  %v308 = vunpack.c.l.b16 %v46
  %v309 = vunpack.c.h.b16 %v46
  %v310 = vunpack.c.l.b16 %v47
  %v311 = vunpack.c.h.b16 %v47
  %v312 = vunpack.c.l.b16 %v48
  %v313 = vunpack.c.h.b16 %v48
  %v314 = vunpack.c.l.b16 %v49
  %v315 = vunpack.c.h.b16 %v49
  %v316 = vunpack.c.l.b16 %v50
  %v317 = vunpack.c.h.b16 %v50
  %v318 = vunpack.c.l.b16 %v51
  %v319 = vunpack.c.h.b16 %v51
  %v320 = vunpack.c.l.b16 %v52
  %v321 = vunpack.c.h.b16 %v52
  %v322 = vunpack.c.l.b16 %v53
  %v323 = vunpack.c.h.b16 %v53
  %v324 = vunpack.c.l.b16 %v54
  %v325 = vunpack.c.h.b16 %v54
  %v326 = vunpack.c.l.b16 %v55
  %v327 = vunpack.c.h.b16 %v55
  %v328 = vunpack.c.l.b16 %v56
  %v329 = vunpack.c.h.b16 %v56
  %v330 = vunpack.c.l.b16 %v57
  %v331 = vunpack.c.h.b16 %v57
  %v332 = vunpack.c.l.b16 %v58
  %v333 = vunpack.c.h.b16 %v58
  %v334 = vunpack.c.l.b16 %v59
  %v335 = vunpack.c.h.b16 %v59
  %v336 = vunpack.c.l.b16 %v60
  %v337 = vunpack.c.h.b16 %v60
  %v338 = vunpack.c.l.b16 %v61
  %v339 = vunpack.c.h.b16 %v61
  %v340 = vunpack.c.l.b16 %v62
  %v341 = vunpack.c.h.b16 %v62
  %v342 = vunpack.c.l.b16 %v63
  %v343 = vunpack.c.h.b16 %v63
  %v344 = vunpack.c.l.b16 %v64
  %v345 = vunpack.c.h.b16 %v64
  %v346 = vunpack.c.l.b16 %v65
  %v347 = vunpack.c.h.b16 %v65
  %v348 = vunpack.c.l.b16 %v66
  %v349 = vunpack.c.h.b16 %v66
  %v350 = vunpack.c.l.b16 %v67
  %v351 = vunpack.c.h.b16 %v67
  %v352 = vunpack.c.l.b16 %v68
  %v353 = vunpack.c.h.b16 %v68
  %v354 = vunpack.c.l.b16 %v69
  %v355 = vunpack.c.h.b16 %v69
  %v356 = vunpack.c.l.b16 %v70
  %v357 = vunpack.c.h.b16 %v70
  %v358 = vunpack.c.l.b16 %v71
  %v359 = vunpack.c.h.b16 %v71
  %v360 = vunpack.c.l.b16 %v72
  %v361 = vunpack.c.h.b16 %v72
  %v362 = vunpack.c.l.b16 %v73
  %v363 = vunpack.c.h.b16 %v73
  %v364 = vunpack.c.l.b16 %v74
  %v365 = vunpack.c.h.b16 %v74
  %v366 = vunpack.c.l.b16 %v75
  %v367 = vunpack.c.h.b16 %v75
  %v368 = vunpack.c.l.b16 %v76
  %v369 = vunpack.c.h.b16 %v76
  %v370 = vunpack.c.l.b16 %v77
  %v371 = vunpack.c.h.b16 %v77
  %v372 = vunpack.c.l.b16 %v78
  %v373 = vunpack.c.h.b16 %v78
  %v374 = vunpack.c.l.b16 %v79
  %v375 = vunpack.c.h.b16 %v79
  %v376 = vunpack.c.l.b16 %v80
  %v377 = vunpack.c.h.b16 %v80
  %v378 = vunpack.c.l.b16 %v81
  %v379 = vunpack.c.h.b16 %v81
  %v380 = vunpack.c.l.b16 %v82
  %v381 = vunpack.c.h.b16 %v82
  %v382 = vunpack.c.l.b16 %v83
  %v383 = vunpack.c.h.b16 %v83
  %v384 = vunpack.c.l.b16 %v84
  %v385 = vunpack.c.h.b16 %v84
  %v386 = vunpack.c.l.b16 %v85
  %v387 = vunpack.c.h.b16 %v85
  %v388 = vunpack.c.l.b16 %v86
  %v389 = vunpack.c.h.b16 %v86
  %v390 = vunpack.c.l.b16 %v87
  %v391 = vunpack.c.h.b16 %v87
  %v392 = vunpack.c.l.b16 %v88
  %v393 = vunpack.c.h.b16 %v88
  %v394 = vunpack.c.l.b16 %v89
  %v395 = vunpack.c.h.b16 %v89
  %v396 = vunpack.c.l.b16 %v90
  %v397 = vunpack.c.h.b16 %v90
  %v398 = vunpack.c.l.b16 %v91
  %v399 = vunpack.c.h.b16 %v91
  %v400 = vunpack.c.l.b16 %v92
  %v401 = vunpack.c.h.b16 %v92
  %v402 = vunpack.c.l.b16 %v93
  %v403 = vunpack.c.h.b16 %v93
  %v404 = vunpack.c.l.b16 %v94
  %v405 = vunpack.c.h.b16 %v94
  %v406 = vunpack.c.l.b16 %v95
  %v407 = vunpack.c.h.b16 %v95
  %v408 = vunpack.c.l.b16 %v96
  %v409 = vunpack.c.h.b16 %v96
  %v410 = vunpack.c.l.b16 %v97
  %v411 = vunpack.c.h.b16 %v97
  %v412 = vunpack.c.l.b16 %v98
  %v413 = vunpack.c.h.b16 %v98
  %v414 = vunpack.c.l.b16 %v99
  %v415 = vunpack.c.h.b16 %v99
  %v416 = vunpack.c.l.b16 %v100
  %v417 = vunpack.c.h.b16 %v100
  %v418 = vunpack.c.l.b16 %v101
  %v419 = vunpack.c.h.b16 %v101
  %v420 = vunpack.c.l.b16 %v102
  %v421 = vunpack.c.h.b16 %v102
  %v422 = vunpack.c.l.b16 %v103
  %v423 = vunpack.c.h.b16 %v103
  %v424 = vunpack.c.l.b16 %v104
  %v425 = vunpack.c.h.b16 %v104
  %v426 = vunpack.c.l.b16 %v105
  %v427 = vunpack.c.h.b16 %v105
  %v428 = vunpack.c.l.b16 %v106
  %v429 = vunpack.c.h.b16 %v106
  %v430 = vunpack.c.l.b16 %v107
  %v431 = vunpack.c.h.b16 %v107
  %v432 = vunpack.c.l.b16 %v108
  %v433 = vunpack.c.h.b16 %v108
  %v434 = vunpack.c.l.b16 %v109
  %v435 = vunpack.c.h.b16 %v109
  %v436 = vunpack.c.l.b16 %v110
  %v437 = vunpack.c.h.b16 %v110
  %v438 = vunpack.c.l.b16 %v111
  %v439 = vunpack.c.h.b16 %v111
  %v440 = vunpack.c.l.b16 %v112
  %v441 = vunpack.c.h.b16 %v112
  %v442 = vunpack.c.l.b16 %v113
  %v443 = vunpack.c.h.b16 %v113
  %v444 = vunpack.c.l.b16 %v114
  %v445 = vunpack.c.h.b16 %v114
  %v446 = vpack.c.b16 %v248, %v246
  %v447 = vpack.c.b16 %v249, %v247
  %v448 = vpack.c.b16 %v252, %v250
  %v449 = vpack.c.b16 %v253, %v251
  %v450 = vpack.c.b16 %v256, %v254
  %v451 = vpack.c.b16 %v257, %v255
  %v452 = vpack.c.b16 %v260, %v258
  %v453 = vpack.c.b16 %v261, %v259
  %v454 = vpack.c.b16 %v264, %v262
  %v455 = vpack.c.b16 %v265, %v263
  %v456 = vpack.c.b16 %v268, %v266
  %v457 = vpack.c.b16 %v269, %v267
  %v458 = vpack.c.b16 %v272, %v270
  %v459 = vpack.c.b16 %v273, %v271
  %v460 = vpack.c.b16 %v276, %v274
  %v461 = vpack.c.b16 %v277, %v275
  %v462 = vpack.c.b16 %v280, %v278
  %v463 = vpack.c.b16 %v281, %v279
  %v464 = vpack.c.b16 %v284, %v282
  %v465 = vpack.c.b16 %v285, %v283
  %v466 = vpack.c.b16 %v288, %v286
  %v467 = vpack.c.b16 %v289, %v287
  %v468 = vpack.c.b16 %v292, %v290
  %v469 = vpack.c.b16 %v293, %v291
  %v470 = vpack.c.b16 %v296, %v294
  %v471 = vpack.c.b16 %v297, %v295
  %v472 = vpack.c.b16 %v300, %v298
  %v473 = vpack.c.b16 %v301, %v299
  %v474 = vpack.c.b16 %v304, %v302
  %v475 = vpack.c.b16 %v305, %v303
  %v476 = vpack.c.b16 %v308, %v306
  %v477 = vpack.c.b16 %v309, %v307
  %v478 = vpack.c.b16 %v312, %v310
  %v479 = vpack.c.b16 %v313, %v311
  %v480 = vpack.c.b16 %v316, %v314
  %v481 = vpack.c.b16 %v317, %v315
  %v482 = vpack.c.b16 %v320, %v318
  %v483 = vpack.c.b16 %v321, %v319
  %v484 = vpack.c.b16 %v324, %v322
  %v485 = vpack.c.b16 %v325, %v323
  %v486 = vpack.c.b16 %v328, %v326
  %v487 = vpack.c.b16 %v329, %v327
  %v488 = vpack.c.b16 %v332, %v330
  %v489 = vpack.c.b16 %v333, %v331
  %v490 = vpack.c.b16 %v336, %v334
  %v491 = vpack.c.b16 %v337, %v335
  %v492 = vpack.c.b16 %v340, %v338
  %v493 = vpack.c.b16 %v341, %v339
  %v494 = vpack.c.b16 %v344, %v342
  %v495 = vpack.c.b16 %v345, %v343
  %v496 = vpack.c.b16 %v348, %v346
  %v497 = vpack.c.b16 %v349, %v347
  %v498 = vpack.c.b16 %v352, %v350
  %v499 = vpack.c.b16 %v353, %v351
  %v500 = vpack.c.b16 %v356, %v354
  %v501 = vpack.c.b16 %v357, %v355
  %v502 = vpack.c.b16 %v360, %v358
  %v503 = vpack.c.b16 %v361, %v359
  %v504 = vpack.c.b16 %v364, %v362
  %v505 = vpack.c.b16 %v365, %v363
  %v506 = vpack.c.b16 %v368, %v366
  %v507 = vpack.c.b16 %v369, %v367
  %v508 = vpack.c.b16 %v372, %v370
  %v509 = vpack.c.b16 %v373, %v371
  %v510 = vpack.c.b16 %v376, %v374
  %v511 = vpack.c.b16 %v377, %v375
  %v512 = vpack.c.b16 %v380, %v378
  %v513 = vpack.c.b16 %v381, %v379
  %v514 = vpack.c.b16 %v384, %v382
  %v515 = vpack.c.b16 %v385, %v383
  %v516 = vpack.c.b16 %v388, %v386
  %v517 = vpack.c.b16 %v389, %v387
  %v518 = vpack.c.b16 %v392, %v390
  %v519 = vpack.c.b16 %v393, %v391
  %v520 = vpack.c.b16 %v396, %v394
  %v521 = vpack.c.b16 %v397, %v395
  %v522 = vpack.c.b16 %v400, %v398
  %v523 = vpack.c.b16 %v401, %v399
  %v524 = vpack.c.b16 %v404, %v402
  %v525 = vpack.c.b16 %v405, %v403
  %v526 = vpack.c.b16 %v408, %v406
  %v527 = vpack.c.b16 %v409, %v407
  %v528 = vpack.c.b16 %v412, %v410
  %v529 = vpack.c.b16 %v413, %v411
  %v530 = vpack.c.b16 %v416, %v414
  %v531 = vpack.c.b16 %v417, %v415
  %v532 = vpack.c.b16 %v420, %v418
  %v533 = vpack.c.b16 %v421, %v419
  %v534 = vpack.c.b16 %v424, %v422
  %v535 = vpack.c.b16 %v425, %v423
  %v536 = vpack.c.b16 %v428, %v426
  %v537 = vpack.c.b16 %v429, %v427
  %v538 = vpack.c.b16 %v432, %v430
  %v539 = vpack.c.b16 %v433, %v431
  %v540 = vpack.c.b16 %v436, %v434
  %v541 = vpack.c.b16 %v437, %v435
  %v542 = vpack.c.b16 %v440, %v438
  %v543 = vpack.c.b16 %v441, %v439
  %v544 = vpack.c.b16 %v444, %v442
  %v545 = vpack.c.b16 %v445, %v443
  %v620 = vunpack.c.l.b16 %v115
  %v621 = vunpack.c.l.b16 %v116
  %v622 = vunpack.c.l.b16 %v117
  %v623 = vunpack.c.l.b16 %v118
  %v624 = vunpack.c.l.b16 %v119
  %v625 = vunpack.c.l.b16 %v120
  %v626 = vunpack.c.l.b16 %v121
  %v627 = vunpack.c.l.b16 %v122
  %v628 = vunpack.c.l.b16 %v123
  %v629 = vunpack.c.l.b16 %v124
  %v630 = vunpack.c.l.b16 %v125
  %v631 = vunpack.c.l.b16 %v126
  %v632 = vunpack.c.l.b16 %v127
  %v633 = vunpack.c.l.b16 %v128
  %v634 = vunpack.c.l.b16 %v129
  %v635 = vunpack.c.l.b16 %v130
  %v636 = vunpack.c.l.b16 %v131
  %v637 = vunpack.c.l.b16 %v132
  %v638 = vunpack.c.l.b16 %v133
  %v639 = vunpack.c.l.b16 %v134
  %v640 = vunpack.c.l.b16 %v135
  %v641 = vunpack.c.l.b16 %v136
  %v642 = vunpack.c.l.b16 %v137
  %v643 = vunpack.c.l.b16 %v138
  %v644 = vpack.c.b16 %v621, %v620
  %v645 = vpack.c.b16 %v623, %v622
  %v646 = vpack.c.b16 %v625, %v624
  %v647 = vpack.c.b16 %v627, %v626
  %v648 = vpack.c.b16 %v629, %v628
  %v649 = vpack.c.b16 %v631, %v630
  %v650 = vpack.c.b16 %v633, %v632
  %v651 = vpack.c.b16 %v635, %v634
  %v652 = vpack.c.b16 %v637, %v636
  %v653 = vpack.c.b16 %v639, %v638
  %v654 = vpack.c.b16 %v641, %v640
  %v655 = vpack.c.b16 %v643, %v642
  %vm668 = vcmask 523264
  %v670 = vsel %vm668, %v447, 0
  %v673 = vsel %vm668, %v449, 0
  %v676 = vsel %vm668, %v451, 0
  %v679 = vsel %vm668, %v453, 0
  %v682 = vsel %vm668, %v455, 0
  %v685 = vsel %vm668, %v457, 0
  %v688 = vsel %vm668, %v459, 0
  %v691 = vsel %vm668, %v461, 0
  %v694 = vsel %vm668, %v463, 0
  %v697 = vsel %vm668, %v465, 0
  %v700 = vsel %vm668, %v467, 0
  %v703 = vsel %vm668, %v469, 0
  %v706 = vsel %vm668, %v471, 0
  %v709 = vsel %vm668, %v473, 0
  %v712 = vsel %vm668, %v475, 0
  %v715 = vsel %vm668, %v477, 0
  %v718 = vsel %vm668, %v479, 0
  %v721 = vsel %vm668, %v481, 0
  %v724 = vsel %vm668, %v483, 0
  %v727 = vsel %vm668, %v485, 0
  %v730 = vsel %vm668, %v487, 0
  %v733 = vsel %vm668, %v489, 0
  %v736 = vsel %vm668, %v491, 0
  %v739 = vsel %vm668, %v493, 0
  %v742 = vsel %vm668, %v495, 0
  %v745 = vsel %vm668, %v497, 0
  %v748 = vsel %vm668, %v499, 0
  %v751 = vsel %vm668, %v501, 0
  %v754 = vsel %vm668, %v503, 0
  %v757 = vsel %vm668, %v505, 0
  %v760 = vsel %vm668, %v507, 0
  %v763 = vsel %vm668, %v509, 0
  %v766 = vsel %vm668, %v511, 0
  %v769 = vsel %vm668, %v513, 0
  %v772 = vsel %vm668, %v515, 0
  %v775 = vsel %vm668, %v517, 0
  %v778 = vsel %vm668, %v519, 0
  %v781 = vsel %vm668, %v521, 0
  %v784 = vsel %vm668, %v523, 0
  %v787 = vsel %vm668, %v525, 0
  %v790 = vsel %vm668, %v527, 0
  %v793 = vsel %vm668, %v529, 0
  %v796 = vsel %vm668, %v531, 0
  %v799 = vsel %vm668, %v533, 0
  %v802 = vsel %vm668, %v535, 0
  %v805 = vsel %vm668, %v537, 0
  %v808 = vsel %vm668, %v539, 0
  %v811 = vsel %vm668, %v541, 0
  %v814 = vsel %vm668, %v543, 0
  %v817 = vsel %vm668, %v545, 0
  %819 = vmatprep.subr.bf16.mxu0 0
  %820 = vmatpush1.bf16.msra.mxu0 %v644
  %821 = vmatprep.subr.bf16.mxu0 0
  %822 = vmatpush1.bf16.msra.mxu0 %v645
  %823 = vmatprep.subr.bf16.mxu0 0
  %824 = vmatpush1.bf16.msra.mxu0 %v646
  %825 = vmatprep.subr.bf16.mxu0 0
  %826 = vmatpush1.bf16.msra.mxu0 %v647
  %827 = vmatprep.subr.bf16.mxu0 0
  %828 = vmatpush1.bf16.msra.mxu0 %v648
  %829 = vmatprep.subr.bf16.mxu0 0
  %830 = vmatpush1.bf16.msra.mxu0 %v649
  %831 = vmatprep.subr.bf16.mxu0 0
  %832 = vmatpush1.bf16.msra.mxu0 %v650
  %833 = vmatprep.subr.bf16.mxu0 0
  %834 = vmatpush1.bf16.msra.mxu0 %v651
  %835 = vmatprep.subr.bf16.mxu0 0
  %836 = vmatpush1.bf16.msra.mxu0 %v652
  %837 = vmatprep.subr.bf16.mxu0 0
  %838 = vmatpush1.bf16.msra.mxu0 %v653
  %839 = vmatprep.subr.bf16.mxu0 0
  %840 = vmatpush1.bf16.msra.mxu0 %v654
  %841 = vmatprep.subr.bf16.mxu0 0
  %842 = vmatpush1.bf16.msra.mxu0 %v655
  %843 = vmatprep.subr.bf16.mxu0 0
  %844 = vmatpush1.bf16.msra.mxu0 0
  %845 = vmatprep.subr.bf16.mxu0 0
  %846 = vmatpush1.bf16.msra.mxu0 0
  %847 = vmatprep.subr.bf16.mxu0 0
  %848 = vmatpush1.bf16.msra.mxu0 0
  %849 = vmatprep.subr.bf16.mxu0 0
  %850 = vmatpush1.bf16.msra.mxu0 0
  %851 = vmatprep.mubr.bf16.mxu0 %v670
  %852 = vmatmul.mubr.bf16.gmra.mrb[0].mxu0 %v446
  %v853 = vpop.f32.mrb[0].mxu0
  %v854 = vadd.f32 %v144, %v853
  %v855 = vpop.f32.mrb[0].mxu0
  %v856 = vpop.f32.mrb[0].mxu0
  %v857 = vadd.f32 %v144, %v856
  %v858 = vpop.f32.mrb[0].mxu0
  %859 = vmatprep.mubr.bf16.mxu0 %v673
  %860 = vmatmul.mubr.bf16.gmra.mrb[0].mxu0 %v448
  %v861 = vpop.f32.mrb[0].mxu0
  %v862 = vadd.f32 %v144, %v861
  %v863 = vpop.f32.mrb[0].mxu0
  %v864 = vpop.f32.mrb[0].mxu0
  %v865 = vadd.f32 %v144, %v864
  %v866 = vpop.f32.mrb[0].mxu0
  %867 = vmatprep.mubr.bf16.mxu0 %v676
  %868 = vmatmul.mubr.bf16.gmra.mrb[0].mxu0 %v450
  %v869 = vpop.f32.mrb[0].mxu0
  %v870 = vadd.f32 %v144, %v869
  %v871 = vpop.f32.mrb[0].mxu0
  %v872 = vpop.f32.mrb[0].mxu0
  %v873 = vadd.f32 %v144, %v872
  %v874 = vpop.f32.mrb[0].mxu0
  %875 = vmatprep.mubr.bf16.mxu0 %v679
  %876 = vmatmul.mubr.bf16.gmra.mrb[0].mxu0 %v452
  %v877 = vpop.f32.mrb[0].mxu0
  %v878 = vadd.f32 %v144, %v877
  %v879 = vpop.f32.mrb[0].mxu0
  %v880 = vpop.f32.mrb[0].mxu0
  %v881 = vadd.f32 %v144, %v880
  %v882 = vpop.f32.mrb[0].mxu0
  %883 = vmatprep.mubr.bf16.mxu0 %v682
  %884 = vmatmul.mubr.bf16.gmra.mrb[0].mxu0 %v454
  %v885 = vpop.f32.mrb[0].mxu0
  %v886 = vadd.f32 %v144, %v885
  %v887 = vpop.f32.mrb[0].mxu0
  %v888 = vpop.f32.mrb[0].mxu0
  %v889 = vadd.f32 %v144, %v888
  %v890 = vpop.f32.mrb[0].mxu0
  %891 = vmatprep.mubr.bf16.mxu0 %v685
  %892 = vmatmul.mubr.bf16.gmra.mrb[0].mxu0 %v456
  %v893 = vpop.f32.mrb[0].mxu0
  %v894 = vadd.f32 %v144, %v893
  %v895 = vpop.f32.mrb[0].mxu0
  %v896 = vpop.f32.mrb[0].mxu0
  %v897 = vadd.f32 %v144, %v896
  %v898 = vpop.f32.mrb[0].mxu0
  %899 = vmatprep.mubr.bf16.mxu0 %v688
  %900 = vmatmul.mubr.bf16.gmra.mrb[0].mxu0 %v458
  %v901 = vpop.f32.mrb[0].mxu0
  %v902 = vadd.f32 %v144, %v901
  %v903 = vpop.f32.mrb[0].mxu0
  %v904 = vpop.f32.mrb[0].mxu0
  %v905 = vadd.f32 %v144, %v904
  %v906 = vpop.f32.mrb[0].mxu0
  %907 = vmatprep.mubr.bf16.mxu0 %v691
  %908 = vmatmul.mubr.bf16.gmra.mrb[0].mxu0 %v460
  %v909 = vpop.f32.mrb[0].mxu0
  %v910 = vadd.f32 %v144, %v909
  %v911 = vpop.f32.mrb[0].mxu0
  %v912 = vpop.f32.mrb[0].mxu0
  %v913 = vadd.f32 %v144, %v912
  %v914 = vpop.f32.mrb[0].mxu0
  %915 = vmatprep.mubr.bf16.mxu0 %v694
  %916 = vmatmul.mubr.bf16.gmra.mrb[0].mxu0 %v462
  %v917 = vpop.f32.mrb[0].mxu0
  %v918 = vadd.f32 %v144, %v917
  %v919 = vpop.f32.mrb[0].mxu0
  %v920 = vpop.f32.mrb[0].mxu0
  %v921 = vadd.f32 %v144, %v920
  %v922 = vpop.f32.mrb[0].mxu0
  %923 = vmatprep.mubr.bf16.mxu0 %v697
  %924 = vmatmul.mubr.bf16.gmra.mrb[0].mxu0 %v464
  %v925 = vpop.f32.mrb[0].mxu0
  %v926 = vadd.f32 %v144, %v925
  %v927 = vpop.f32.mrb[0].mxu0
  %v928 = vpop.f32.mrb[0].mxu0
  %v929 = vadd.f32 %v144, %v928
  %v930 = vpop.f32.mrb[0].mxu0
  %931 = vmatprep.mubr.bf16.mxu0 %v700
  %932 = vmatmul.mubr.bf16.gmra.mrb[0].mxu0 %v466
  %v933 = vpop.f32.mrb[0].mxu0
  %v934 = vadd.f32 %v144, %v933
  %v935 = vpop.f32.mrb[0].mxu0
  %v936 = vpop.f32.mrb[0].mxu0
  %v937 = vadd.f32 %v144, %v936
  %v938 = vpop.f32.mrb[0].mxu0
  %939 = vmatprep.mubr.bf16.mxu0 %v703
  %940 = vmatmul.mubr.bf16.gmra.mrb[0].mxu0 %v468
  %v941 = vpop.f32.mrb[0].mxu0
  %v942 = vadd.f32 %v144, %v941
  %v943 = vpop.f32.mrb[0].mxu0
  %v944 = vpop.f32.mrb[0].mxu0
  %v945 = vadd.f32 %v144, %v944
  %v946 = vpop.f32.mrb[0].mxu0
  %947 = vmatprep.mubr.bf16.mxu0 %v706
  %948 = vmatmul.mubr.bf16.gmra.mrb[0].mxu0 %v470
  %v949 = vpop.f32.mrb[0].mxu0
  %v950 = vadd.f32 %v144, %v949
  %v951 = vpop.f32.mrb[0].mxu0
  %v952 = vpop.f32.mrb[0].mxu0
  %v953 = vadd.f32 %v144, %v952
  %v954 = vpop.f32.mrb[0].mxu0
  %955 = vmatprep.mubr.bf16.mxu0 %v709
  %956 = vmatmul.mubr.bf16.gmra.mrb[0].mxu0 %v472
  %v957 = vpop.f32.mrb[0].mxu0
  %v958 = vadd.f32 %v144, %v957
  %v959 = vpop.f32.mrb[0].mxu0
  %v960 = vpop.f32.mrb[0].mxu0
  %v961 = vadd.f32 %v144, %v960
  %v962 = vpop.f32.mrb[0].mxu0
  %963 = vmatprep.mubr.bf16.mxu0 %v712
  %964 = vmatmul.mubr.bf16.gmra.mrb[0].mxu0 %v474
  %v965 = vpop.f32.mrb[0].mxu0
  %v966 = vadd.f32 %v144, %v965
  %v967 = vpop.f32.mrb[0].mxu0
  %v968 = vpop.f32.mrb[0].mxu0
  %v969 = vadd.f32 %v144, %v968
  %v970 = vpop.f32.mrb[0].mxu0
  %971 = vmatprep.mubr.bf16.mxu0 %v715
  %972 = vmatmul.mubr.bf16.gmra.mrb[0].mxu0 %v476
  %v973 = vpop.f32.mrb[0].mxu0
  %v974 = vadd.f32 %v144, %v973
  %v975 = vpop.f32.mrb[0].mxu0
  %v976 = vpop.f32.mrb[0].mxu0
  %v977 = vadd.f32 %v144, %v976
  %v978 = vpop.f32.mrb[0].mxu0
  %979 = vmatprep.mubr.bf16.mxu0 %v718
  %980 = vmatmul.mubr.bf16.gmra.mrb[0].mxu0 %v478
  %v981 = vpop.f32.mrb[0].mxu0
  %v982 = vadd.f32 %v144, %v981
  %v983 = vpop.f32.mrb[0].mxu0
  %v984 = vpop.f32.mrb[0].mxu0
  %v985 = vadd.f32 %v144, %v984
  %v986 = vpop.f32.mrb[0].mxu0
  %987 = vmatprep.mubr.bf16.mxu0 %v721
  %988 = vmatmul.mubr.bf16.gmra.mrb[0].mxu0 %v480
  %v989 = vpop.f32.mrb[0].mxu0
  %v990 = vadd.f32 %v144, %v989
  %v991 = vpop.f32.mrb[0].mxu0
  %v992 = vpop.f32.mrb[0].mxu0
  %v993 = vadd.f32 %v144, %v992
  %v994 = vpop.f32.mrb[0].mxu0
  %995 = vmatprep.mubr.bf16.mxu0 %v724
  %996 = vmatmul.mubr.bf16.gmra.mrb[0].mxu0 %v482
  %v997 = vpop.f32.mrb[0].mxu0
  %v998 = vadd.f32 %v144, %v997
  %v999 = vpop.f32.mrb[0].mxu0
  %v1000 = vpop.f32.mrb[0].mxu0
  %v1001 = vadd.f32 %v144, %v1000
  %v1002 = vpop.f32.mrb[0].mxu0
  %1003 = vmatprep.mubr.bf16.mxu0 %v727
  %1004 = vmatmul.mubr.bf16.gmra.mrb[0].mxu0 %v484
  %v1005 = vpop.f32.mrb[0].mxu0
  %v1006 = vadd.f32 %v144, %v1005
  %v1007 = vpop.f32.mrb[0].mxu0
  %v1008 = vpop.f32.mrb[0].mxu0
  %v1009 = vadd.f32 %v144, %v1008
  %v1010 = vpop.f32.mrb[0].mxu0
  %1011 = vmatprep.mubr.bf16.mxu0 %v730
  %1012 = vmatmul.mubr.bf16.gmra.mrb[0].mxu0 %v486
  %v1013 = vpop.f32.mrb[0].mxu0
  %v1014 = vadd.f32 %v144, %v1013
  %v1015 = vpop.f32.mrb[0].mxu0
  %v1016 = vpop.f32.mrb[0].mxu0
  %v1017 = vadd.f32 %v144, %v1016
  %v1018 = vpop.f32.mrb[0].mxu0
  %1019 = vmatprep.mubr.bf16.mxu0 %v733
  %1020 = vmatmul.mubr.bf16.gmra.mrb[0].mxu0 %v488
  %v1021 = vpop.f32.mrb[0].mxu0
  %v1022 = vadd.f32 %v144, %v1021
  %v1023 = vpop.f32.mrb[0].mxu0
  %v1024 = vpop.f32.mrb[0].mxu0
  %v1025 = vadd.f32 %v144, %v1024
  %v1026 = vpop.f32.mrb[0].mxu0
  %1027 = vmatprep.mubr.bf16.mxu0 %v736
  %1028 = vmatmul.mubr.bf16.gmra.mrb[0].mxu0 %v490
  %v1029 = vpop.f32.mrb[0].mxu0
  %v1030 = vadd.f32 %v144, %v1029
  %v1031 = vpop.f32.mrb[0].mxu0
  %v1032 = vpop.f32.mrb[0].mxu0
  %v1033 = vadd.f32 %v144, %v1032
  %v1034 = vpop.f32.mrb[0].mxu0
  %1035 = vmatprep.mubr.bf16.mxu0 %v739
  %1036 = vmatmul.mubr.bf16.gmra.mrb[0].mxu0 %v492
  %v1037 = vpop.f32.mrb[0].mxu0
  %v1038 = vadd.f32 %v144, %v1037
  %v1039 = vpop.f32.mrb[0].mxu0
  %v1040 = vpop.f32.mrb[0].mxu0
  %v1041 = vadd.f32 %v144, %v1040
  %v1042 = vpop.f32.mrb[0].mxu0
  %1043 = vmatprep.mubr.bf16.mxu0 %v742
  %1044 = vmatmul.mubr.bf16.gmra.mrb[0].mxu0 %v494
  %v1045 = vpop.f32.mrb[0].mxu0
  %v1046 = vadd.f32 %v144, %v1045
  %v1047 = vpop.f32.mrb[0].mxu0
  %v1048 = vpop.f32.mrb[0].mxu0
  %v1049 = vadd.f32 %v144, %v1048
  %v1050 = vpop.f32.mrb[0].mxu0
  %1051 = vmatprep.mubr.bf16.mxu0 %v745
  %1052 = vmatmul.mubr.bf16.gmra.mrb[0].mxu0 %v496
  %v1053 = vpop.f32.mrb[0].mxu0
  %v1054 = vadd.f32 %v144, %v1053
  %v1055 = vpop.f32.mrb[0].mxu0
  %v1056 = vpop.f32.mrb[0].mxu0
  %v1057 = vadd.f32 %v144, %v1056
  %v1058 = vpop.f32.mrb[0].mxu0
  %1059 = vmatprep.mubr.bf16.mxu0 %v748
  %1060 = vmatmul.mubr.bf16.gmra.mrb[0].mxu0 %v498
  %v1061 = vpop.f32.mrb[0].mxu0
  %v1062 = vadd.f32 %v144, %v1061
  %v1063 = vpop.f32.mrb[0].mxu0
  %v1064 = vpop.f32.mrb[0].mxu0
  %v1065 = vadd.f32 %v144, %v1064
  %v1066 = vpop.f32.mrb[0].mxu0
  %1067 = vmatprep.mubr.bf16.mxu0 %v751
  %1068 = vmatmul.mubr.bf16.gmra.mrb[0].mxu0 %v500
  %v1069 = vpop.f32.mrb[0].mxu0
  %v1070 = vadd.f32 %v144, %v1069
  %v1071 = vpop.f32.mrb[0].mxu0
  %v1072 = vpop.f32.mrb[0].mxu0
  %v1073 = vadd.f32 %v144, %v1072
  %v1074 = vpop.f32.mrb[0].mxu0
  %1075 = vmatprep.mubr.bf16.mxu0 %v754
  %1076 = vmatmul.mubr.bf16.gmra.mrb[0].mxu0 %v502
  %v1077 = vpop.f32.mrb[0].mxu0
  %v1078 = vadd.f32 %v144, %v1077
  %v1079 = vpop.f32.mrb[0].mxu0
  %v1080 = vpop.f32.mrb[0].mxu0
  %v1081 = vadd.f32 %v144, %v1080
  %v1082 = vpop.f32.mrb[0].mxu0
  %1083 = vmatprep.mubr.bf16.mxu0 %v757
  %1084 = vmatmul.mubr.bf16.gmra.mrb[0].mxu0 %v504
  %v1085 = vpop.f32.mrb[0].mxu0
  %v1086 = vadd.f32 %v144, %v1085
  %v1087 = vpop.f32.mrb[0].mxu0
  %v1088 = vpop.f32.mrb[0].mxu0
  %v1089 = vadd.f32 %v144, %v1088
  %v1090 = vpop.f32.mrb[0].mxu0
  %1091 = vmatprep.mubr.bf16.mxu0 %v760
  %1092 = vmatmul.mubr.bf16.gmra.mrb[0].mxu0 %v506
  %v1093 = vpop.f32.mrb[0].mxu0
  %v1094 = vadd.f32 %v144, %v1093
  %v1095 = vpop.f32.mrb[0].mxu0
  %v1096 = vpop.f32.mrb[0].mxu0
  %v1097 = vadd.f32 %v144, %v1096
  %v1098 = vpop.f32.mrb[0].mxu0
  %1099 = vmatprep.mubr.bf16.mxu0 %v763
  %1100 = vmatmul.mubr.bf16.gmra.mrb[0].mxu0 %v508
  %v1101 = vpop.f32.mrb[0].mxu0
  %v1102 = vadd.f32 %v144, %v1101
  %v1103 = vpop.f32.mrb[0].mxu0
  %v1104 = vpop.f32.mrb[0].mxu0
  %v1105 = vadd.f32 %v144, %v1104
  %v1106 = vpop.f32.mrb[0].mxu0
  %1107 = vmatprep.mubr.bf16.mxu0 %v766
  %1108 = vmatmul.mubr.bf16.gmra.mrb[0].mxu0 %v510
  %v1109 = vpop.f32.mrb[0].mxu0
  %v1110 = vadd.f32 %v144, %v1109
  %v1111 = vpop.f32.mrb[0].mxu0
  %v1112 = vpop.f32.mrb[0].mxu0
  %v1113 = vadd.f32 %v144, %v1112
  %v1114 = vpop.f32.mrb[0].mxu0
  %1115 = vmatprep.mubr.bf16.mxu0 %v769
  %1116 = vmatmul.mubr.bf16.gmra.mrb[0].mxu0 %v512
  %v1117 = vpop.f32.mrb[0].mxu0
  %v1118 = vadd.f32 %v144, %v1117
  %v1119 = vpop.f32.mrb[0].mxu0
  %v1120 = vpop.f32.mrb[0].mxu0
  %v1121 = vadd.f32 %v144, %v1120
  %v1122 = vpop.f32.mrb[0].mxu0
  %1123 = vmatprep.mubr.bf16.mxu0 %v772
  %1124 = vmatmul.mubr.bf16.gmra.mrb[0].mxu0 %v514
  %v1125 = vpop.f32.mrb[0].mxu0
  %v1126 = vadd.f32 %v144, %v1125
  %v1127 = vpop.f32.mrb[0].mxu0
  %v1128 = vpop.f32.mrb[0].mxu0
  %v1129 = vadd.f32 %v144, %v1128
  %v1130 = vpop.f32.mrb[0].mxu0
  %1131 = vmatprep.mubr.bf16.mxu0 %v775
  %1132 = vmatmul.mubr.bf16.gmra.mrb[0].mxu0 %v516
  %v1133 = vpop.f32.mrb[0].mxu0
  %v1134 = vadd.f32 %v144, %v1133
  %v1135 = vpop.f32.mrb[0].mxu0
  %v1136 = vpop.f32.mrb[0].mxu0
  %v1137 = vadd.f32 %v144, %v1136
  %v1138 = vpop.f32.mrb[0].mxu0
  %1139 = vmatprep.mubr.bf16.mxu0 %v778
  %1140 = vmatmul.mubr.bf16.gmra.mrb[0].mxu0 %v518
  %v1141 = vpop.f32.mrb[0].mxu0
  %v1142 = vadd.f32 %v144, %v1141
  %v1143 = vpop.f32.mrb[0].mxu0
  %v1144 = vpop.f32.mrb[0].mxu0
  %v1145 = vadd.f32 %v144, %v1144
  %v1146 = vpop.f32.mrb[0].mxu0
  %1147 = vmatprep.mubr.bf16.mxu0 %v781
  %1148 = vmatmul.mubr.bf16.gmra.mrb[0].mxu0 %v520
  %v1149 = vpop.f32.mrb[0].mxu0
  %v1150 = vadd.f32 %v144, %v1149
  %v1151 = vpop.f32.mrb[0].mxu0
  %v1152 = vpop.f32.mrb[0].mxu0
  %v1153 = vadd.f32 %v144, %v1152
  %v1154 = vpop.f32.mrb[0].mxu0
  %1155 = vmatprep.mubr.bf16.mxu0 %v784
  %1156 = vmatmul.mubr.bf16.gmra.mrb[0].mxu0 %v522
  %v1157 = vpop.f32.mrb[0].mxu0
  %v1158 = vadd.f32 %v144, %v1157
  %v1159 = vpop.f32.mrb[0].mxu0
  %v1160 = vpop.f32.mrb[0].mxu0
  %v1161 = vadd.f32 %v144, %v1160
  %v1162 = vpop.f32.mrb[0].mxu0
  %1163 = vmatprep.mubr.bf16.mxu0 %v787
  %1164 = vmatmul.mubr.bf16.gmra.mrb[0].mxu0 %v524
  %v1165 = vpop.f32.mrb[0].mxu0
  %v1166 = vadd.f32 %v144, %v1165
  %v1167 = vpop.f32.mrb[0].mxu0
  %v1168 = vpop.f32.mrb[0].mxu0
  %v1169 = vadd.f32 %v144, %v1168
  %v1170 = vpop.f32.mrb[0].mxu0
  %1171 = vmatprep.mubr.bf16.mxu0 %v790
  %1172 = vmatmul.mubr.bf16.gmra.mrb[0].mxu0 %v526
  %v1173 = vpop.f32.mrb[0].mxu0
  %v1174 = vadd.f32 %v144, %v1173
  %v1175 = vpop.f32.mrb[0].mxu0
  %v1176 = vpop.f32.mrb[0].mxu0
  %v1177 = vadd.f32 %v144, %v1176
  %v1178 = vpop.f32.mrb[0].mxu0
  %1179 = vmatprep.mubr.bf16.mxu0 %v793
  %1180 = vmatmul.mubr.bf16.gmra.mrb[0].mxu0 %v528
  %v1181 = vpop.f32.mrb[0].mxu0
  %v1182 = vadd.f32 %v144, %v1181
  %v1183 = vpop.f32.mrb[0].mxu0
  %v1184 = vpop.f32.mrb[0].mxu0
  %v1185 = vadd.f32 %v144, %v1184
  %v1186 = vpop.f32.mrb[0].mxu0
  %1187 = vmatprep.mubr.bf16.mxu0 %v796
  %1188 = vmatmul.mubr.bf16.gmra.mrb[0].mxu0 %v530
  %v1189 = vpop.f32.mrb[0].mxu0
  %v1190 = vadd.f32 %v144, %v1189
  %v1191 = vpop.f32.mrb[0].mxu0
  %v1192 = vpop.f32.mrb[0].mxu0
  %v1193 = vadd.f32 %v144, %v1192
  %v1194 = vpop.f32.mrb[0].mxu0
  %1195 = vmatprep.mubr.bf16.mxu0 %v799
  %1196 = vmatmul.mubr.bf16.gmra.mrb[0].mxu0 %v532
  %v1197 = vpop.f32.mrb[0].mxu0
  %v1198 = vadd.f32 %v144, %v1197
  %v1199 = vpop.f32.mrb[0].mxu0
  %v1200 = vpop.f32.mrb[0].mxu0
  %v1201 = vadd.f32 %v144, %v1200
  %v1202 = vpop.f32.mrb[0].mxu0
  %1203 = vmatprep.mubr.bf16.mxu0 %v802
  %1204 = vmatmul.mubr.bf16.gmra.mrb[0].mxu0 %v534
  %v1205 = vpop.f32.mrb[0].mxu0
  %v1206 = vadd.f32 %v144, %v1205
  %v1207 = vpop.f32.mrb[0].mxu0
  %v1208 = vpop.f32.mrb[0].mxu0
  %v1209 = vadd.f32 %v144, %v1208
  %v1210 = vpop.f32.mrb[0].mxu0
  %1211 = vmatprep.mubr.bf16.mxu0 %v805
  %1212 = vmatmul.mubr.bf16.gmra.mrb[0].mxu0 %v536
  %v1213 = vpop.f32.mrb[0].mxu0
  %v1214 = vadd.f32 %v144, %v1213
  %v1215 = vpop.f32.mrb[0].mxu0
  %v1216 = vpop.f32.mrb[0].mxu0
  %v1217 = vadd.f32 %v144, %v1216
  %v1218 = vpop.f32.mrb[0].mxu0
  %1219 = vmatprep.mubr.bf16.mxu0 %v808
  %1220 = vmatmul.mubr.bf16.gmra.mrb[0].mxu0 %v538
  %v1221 = vpop.f32.mrb[0].mxu0
  %v1222 = vadd.f32 %v144, %v1221
  %v1223 = vpop.f32.mrb[0].mxu0
  %v1224 = vpop.f32.mrb[0].mxu0
  %v1225 = vadd.f32 %v144, %v1224
  %v1226 = vpop.f32.mrb[0].mxu0
  %1227 = vmatprep.mubr.bf16.mxu0 %v811
  %1228 = vmatmul.mubr.bf16.gmra.mrb[0].mxu0 %v540
  %v1229 = vpop.f32.mrb[0].mxu0
  %v1230 = vadd.f32 %v144, %v1229
  %v1231 = vpop.f32.mrb[0].mxu0
  %v1232 = vpop.f32.mrb[0].mxu0
  %v1233 = vadd.f32 %v144, %v1232
  %v1234 = vpop.f32.mrb[0].mxu0
  %1235 = vmatprep.mubr.bf16.mxu0 %v814
  %1236 = vmatmul.mubr.bf16.gmra.mrb[0].mxu0 %v542
  %v1237 = vpop.f32.mrb[0].mxu0
  %v1238 = vadd.f32 %v144, %v1237
  %v1239 = vpop.f32.mrb[0].mxu0
  %v1240 = vpop.f32.mrb[0].mxu0
  %v1241 = vadd.f32 %v144, %v1240
  %v1242 = vpop.f32.mrb[0].mxu0
  %1243 = vmatprep.mubr.bf16.mxu0 %v817
  %1244 = vmatmul.mubr.bf16.gmra.mrb[0].mxu0 %v544
  %v1245 = vpop.f32.mrb[0].mxu0
  %v1246 = vadd.f32 %v144, %v1245
  %v1247 = vpop.f32.mrb[0].mxu0
  %v1248 = vpop.f32.mrb[0].mxu0
  %v1249 = vadd.f32 %v144, %v1248
  %v1250 = vpop.f32.mrb[0].mxu0
  %1251 = vdwg.mxu0
  %v1252 = vmax.f32 %v854, 0.0
  %v1253 = vmax.f32 %v857, 0.0
  %v1254 = vmax.f32 %v862, 0.0
  %v1255 = vmax.f32 %v865, 0.0
  %v1256 = vmax.f32 %v870, 0.0
  %v1257 = vmax.f32 %v873, 0.0
  %v1258 = vmax.f32 %v878, 0.0
  %v1259 = vmax.f32 %v881, 0.0
  %v1260 = vmax.f32 %v886, 0.0
  %v1261 = vmax.f32 %v889, 0.0
  %v1262 = vmax.f32 %v894, 0.0
  %v1263 = vmax.f32 %v897, 0.0
  %v1264 = vmax.f32 %v902, 0.0
  %v1265 = vmax.f32 %v905, 0.0
  %v1266 = vmax.f32 %v910, 0.0
  %v1267 = vmax.f32 %v913, 0.0
  %v1268 = vmax.f32 %v918, 0.0
  %v1269 = vmax.f32 %v921, 0.0
  %v1270 = vmax.f32 %v926, 0.0
  %v1271 = vmax.f32 %v929, 0.0
  %v1272 = vmax.f32 %v934, 0.0
  %v1273 = vmax.f32 %v937, 0.0
  %v1274 = vmax.f32 %v942, 0.0
  %v1275 = vmax.f32 %v945, 0.0
  %v1276 = vmax.f32 %v950, 0.0
  %v1277 = vmax.f32 %v953, 0.0
  %v1278 = vmax.f32 %v958, 0.0
  %v1279 = vmax.f32 %v961, 0.0
  %v1280 = vmax.f32 %v966, 0.0
  %v1281 = vmax.f32 %v969, 0.0
  %v1282 = vmax.f32 %v974, 0.0
  %v1283 = vmax.f32 %v977, 0.0
  %v1284 = vmax.f32 %v982, 0.0
  %v1285 = vmax.f32 %v985, 0.0
  %v1286 = vmax.f32 %v990, 0.0
  %v1287 = vmax.f32 %v993, 0.0
  %v1288 = vmax.f32 %v998, 0.0
  %v1289 = vmax.f32 %v1001, 0.0
  %v1290 = vmax.f32 %v1006, 0.0
  %v1291 = vmax.f32 %v1009, 0.0
  %v1292 = vmax.f32 %v1014, 0.0
  %v1293 = vmax.f32 %v1017, 0.0
  %v1294 = vmax.f32 %v1022, 0.0
  %v1295 = vmax.f32 %v1025, 0.0
  %v1296 = vmax.f32 %v1030, 0.0
  %v1297 = vmax.f32 %v1033, 0.0
  %v1298 = vmax.f32 %v1038, 0.0
  %v1299 = vmax.f32 %v1041, 0.0
  %v1300 = vmax.f32 %v1046, 0.0
  %v1301 = vmax.f32 %v1049, 0.0
  %v1302 = vmax.f32 %v1054, 0.0
  %v1303 = vmax.f32 %v1057, 0.0
  %v1304 = vmax.f32 %v1062, 0.0
  %v1305 = vmax.f32 %v1065, 0.0
  %v1306 = vmax.f32 %v1070, 0.0
  %v1307 = vmax.f32 %v1073, 0.0
  %v1308 = vmax.f32 %v1078, 0.0
  %v1309 = vmax.f32 %v1081, 0.0
  %v1310 = vmax.f32 %v1086, 0.0
  %v1311 = vmax.f32 %v1089, 0.0
  %v1312 = vmax.f32 %v1094, 0.0
  %v1313 = vmax.f32 %v1097, 0.0
  %v1314 = vmax.f32 %v1102, 0.0
  %v1315 = vmax.f32 %v1105, 0.0
  %v1316 = vmax.f32 %v1110, 0.0
  %v1317 = vmax.f32 %v1113, 0.0
  %v1318 = vmax.f32 %v1118, 0.0
  %v1319 = vmax.f32 %v1121, 0.0
  %v1320 = vmax.f32 %v1126, 0.0
  %v1321 = vmax.f32 %v1129, 0.0
  %v1322 = vmax.f32 %v1134, 0.0
  %v1323 = vmax.f32 %v1137, 0.0
  %v1324 = vmax.f32 %v1142, 0.0
  %v1325 = vmax.f32 %v1145, 0.0
  %v1326 = vmax.f32 %v1150, 0.0
  %v1327 = vmax.f32 %v1153, 0.0
  %v1328 = vmax.f32 %v1158, 0.0
  %v1329 = vmax.f32 %v1161, 0.0
  %v1330 = vmax.f32 %v1166, 0.0
  %v1331 = vmax.f32 %v1169, 0.0
  %v1332 = vmax.f32 %v1174, 0.0
  %v1333 = vmax.f32 %v1177, 0.0
  %v1334 = vmax.f32 %v1182, 0.0
  %v1335 = vmax.f32 %v1185, 0.0
  %v1336 = vmax.f32 %v1190, 0.0
  %v1337 = vmax.f32 %v1193, 0.0
  %v1338 = vmax.f32 %v1198, 0.0
  %v1339 = vmax.f32 %v1201, 0.0
  %v1340 = vmax.f32 %v1206, 0.0
  %v1341 = vmax.f32 %v1209, 0.0
  %v1342 = vmax.f32 %v1214, 0.0
  %v1343 = vmax.f32 %v1217, 0.0
  %v1344 = vmax.f32 %v1222, 0.0
  %v1345 = vmax.f32 %v1225, 0.0
  %v1346 = vmax.f32 %v1230, 0.0
  %v1347 = vmax.f32 %v1233, 0.0
  %v1348 = vmax.f32 %v1238, 0.0
  %v1349 = vmax.f32 %v1241, 0.0
  %v1350 = vmax.f32 %v1246, 0.0
  %v1351 = vmax.f32 %v1249, 0.0
  %v1352 = vpack.c.bf16 %v1253, %v1252
  %v1353 = vpack.c.bf16 %v1255, %v1254
  %v1354 = vpack.c.bf16 %v1257, %v1256
  %v1355 = vpack.c.bf16 %v1259, %v1258
  %v1356 = vpack.c.bf16 %v1261, %v1260
  %v1357 = vpack.c.bf16 %v1263, %v1262
  %v1358 = vpack.c.bf16 %v1265, %v1264
  %v1359 = vpack.c.bf16 %v1267, %v1266
  %v1360 = vpack.c.bf16 %v1269, %v1268
  %v1361 = vpack.c.bf16 %v1271, %v1270
  %v1362 = vpack.c.bf16 %v1273, %v1272
  %v1363 = vpack.c.bf16 %v1275, %v1274
  %v1364 = vpack.c.bf16 %v1277, %v1276
  %v1365 = vpack.c.bf16 %v1279, %v1278
  %v1366 = vpack.c.bf16 %v1281, %v1280
  %v1367 = vpack.c.bf16 %v1283, %v1282
  %v1368 = vpack.c.bf16 %v1285, %v1284
  %v1369 = vpack.c.bf16 %v1287, %v1286
  %v1370 = vpack.c.bf16 %v1289, %v1288
  %v1371 = vpack.c.bf16 %v1291, %v1290
  %v1372 = vpack.c.bf16 %v1293, %v1292
  %v1373 = vpack.c.bf16 %v1295, %v1294
  %v1374 = vpack.c.bf16 %v1297, %v1296
  %v1375 = vpack.c.bf16 %v1299, %v1298
  %v1376 = vpack.c.bf16 %v1301, %v1300
  %v1377 = vpack.c.bf16 %v1303, %v1302
  %v1378 = vpack.c.bf16 %v1305, %v1304
  %v1379 = vpack.c.bf16 %v1307, %v1306
  %v1380 = vpack.c.bf16 %v1309, %v1308
  %v1381 = vpack.c.bf16 %v1311, %v1310
  %v1382 = vpack.c.bf16 %v1313, %v1312
  %v1383 = vpack.c.bf16 %v1315, %v1314
  %v1384 = vpack.c.bf16 %v1317, %v1316
  %v1385 = vpack.c.bf16 %v1319, %v1318
  %v1386 = vpack.c.bf16 %v1321, %v1320
  %v1387 = vpack.c.bf16 %v1323, %v1322
  %v1388 = vpack.c.bf16 %v1325, %v1324
  %v1389 = vpack.c.bf16 %v1327, %v1326
  %v1390 = vpack.c.bf16 %v1329, %v1328
  %v1391 = vpack.c.bf16 %v1331, %v1330
  %v1392 = vpack.c.bf16 %v1333, %v1332
  %v1393 = vpack.c.bf16 %v1335, %v1334
  %v1394 = vpack.c.bf16 %v1337, %v1336
  %v1395 = vpack.c.bf16 %v1339, %v1338
  %v1396 = vpack.c.bf16 %v1341, %v1340
  %v1397 = vpack.c.bf16 %v1343, %v1342
  %v1398 = vpack.c.bf16 %v1345, %v1344
  %v1399 = vpack.c.bf16 %v1347, %v1346
  %v1400 = vpack.c.bf16 %v1349, %v1348
  %v1401 = vpack.c.bf16 %v1351, %v1350
  %v1452 = vunpack.c.l.b16 %v1352
  %v1453 = vunpack.c.h.b16 %v1352
  %v1454 = vunpack.c.l.b16 %v1353
  %v1455 = vunpack.c.h.b16 %v1353
  %v1456 = vunpack.c.l.b16 %v1354
  %v1457 = vunpack.c.h.b16 %v1354
  %v1458 = vunpack.c.l.b16 %v1355
  %v1459 = vunpack.c.h.b16 %v1355
  %v1460 = vunpack.c.l.b16 %v1356
  %v1461 = vunpack.c.h.b16 %v1356
  %v1462 = vunpack.c.l.b16 %v1357
  %v1463 = vunpack.c.h.b16 %v1357
  %v1464 = vunpack.c.l.b16 %v1358
  %v1465 = vunpack.c.h.b16 %v1358
  %v1466 = vunpack.c.l.b16 %v1359
  %v1467 = vunpack.c.h.b16 %v1359
  %v1468 = vunpack.c.l.b16 %v1360
  %v1469 = vunpack.c.h.b16 %v1360
  %v1470 = vunpack.c.l.b16 %v1361
  %v1471 = vunpack.c.h.b16 %v1361
  %v1472 = vunpack.c.l.b16 %v1362
  %v1473 = vunpack.c.h.b16 %v1362
  %v1474 = vunpack.c.l.b16 %v1363
  %v1475 = vunpack.c.h.b16 %v1363
  %v1476 = vunpack.c.l.b16 %v1364
  %v1477 = vunpack.c.h.b16 %v1364
  %v1478 = vunpack.c.l.b16 %v1365
  %v1479 = vunpack.c.h.b16 %v1365
  %v1480 = vunpack.c.l.b16 %v1366
  %v1481 = vunpack.c.h.b16 %v1366
  %v1482 = vunpack.c.l.b16 %v1367
  %v1483 = vunpack.c.h.b16 %v1367
  %v1484 = vunpack.c.l.b16 %v1368
  %v1485 = vunpack.c.h.b16 %v1368
  %v1486 = vunpack.c.l.b16 %v1369
  %v1487 = vunpack.c.h.b16 %v1369
  %v1488 = vunpack.c.l.b16 %v1370
  %v1489 = vunpack.c.h.b16 %v1370
  %v1490 = vunpack.c.l.b16 %v1371
  %v1491 = vunpack.c.h.b16 %v1371
  %v1492 = vunpack.c.l.b16 %v1372
  %v1493 = vunpack.c.h.b16 %v1372
  %v1494 = vunpack.c.l.b16 %v1373
  %v1495 = vunpack.c.h.b16 %v1373
  %v1496 = vunpack.c.l.b16 %v1374
  %v1497 = vunpack.c.h.b16 %v1374
  %v1498 = vunpack.c.l.b16 %v1375
  %v1499 = vunpack.c.h.b16 %v1375
  %v1500 = vunpack.c.l.b16 %v1376
  %v1501 = vunpack.c.h.b16 %v1376
  %v1502 = vunpack.c.l.b16 %v1377
  %v1503 = vunpack.c.h.b16 %v1377
  %v1504 = vunpack.c.l.b16 %v1378
  %v1505 = vunpack.c.h.b16 %v1378
  %v1506 = vunpack.c.l.b16 %v1379
  %v1507 = vunpack.c.h.b16 %v1379
  %v1508 = vunpack.c.l.b16 %v1380
  %v1509 = vunpack.c.h.b16 %v1380
  %v1510 = vunpack.c.l.b16 %v1381
  %v1511 = vunpack.c.h.b16 %v1381
  %v1512 = vunpack.c.l.b16 %v1382
  %v1513 = vunpack.c.h.b16 %v1382
  %v1514 = vunpack.c.l.b16 %v1383
  %v1515 = vunpack.c.h.b16 %v1383
  %v1516 = vunpack.c.l.b16 %v1384
  %v1517 = vunpack.c.h.b16 %v1384
  %v1518 = vunpack.c.l.b16 %v1385
  %v1519 = vunpack.c.h.b16 %v1385
  %v1520 = vunpack.c.l.b16 %v1386
  %v1521 = vunpack.c.h.b16 %v1386
  %v1522 = vunpack.c.l.b16 %v1387
  %v1523 = vunpack.c.h.b16 %v1387
  %v1524 = vunpack.c.l.b16 %v1388
  %v1525 = vunpack.c.h.b16 %v1388
  %v1526 = vunpack.c.l.b16 %v1389
  %v1527 = vunpack.c.h.b16 %v1389
  %v1528 = vunpack.c.l.b16 %v1390
  %v1529 = vunpack.c.h.b16 %v1390
  %v1530 = vunpack.c.l.b16 %v1391
  %v1531 = vunpack.c.h.b16 %v1391
  %v1532 = vunpack.c.l.b16 %v1392
  %v1533 = vunpack.c.h.b16 %v1392
  %v1534 = vunpack.c.l.b16 %v1393
  %v1535 = vunpack.c.h.b16 %v1393
  %v1536 = vunpack.c.l.b16 %v1394
  %v1537 = vunpack.c.h.b16 %v1394
  %v1538 = vunpack.c.l.b16 %v1395
  %v1539 = vunpack.c.h.b16 %v1395
  %v1540 = vunpack.c.l.b16 %v1396
  %v1541 = vunpack.c.h.b16 %v1396
  %v1542 = vunpack.c.l.b16 %v1397
  %v1543 = vunpack.c.h.b16 %v1397
  %v1544 = vunpack.c.l.b16 %v1398
  %v1545 = vunpack.c.h.b16 %v1398
  %v1546 = vunpack.c.l.b16 %v1399
  %v1547 = vunpack.c.h.b16 %v1399
  %v1548 = vunpack.c.l.b16 %v1400
  %v1549 = vunpack.c.h.b16 %v1400
  %v1550 = vunpack.c.l.b16 %v1401
  %v1551 = vunpack.c.h.b16 %v1401
  %v1552 = vpack.c.b16 %v1452, %v1452
  %v1553 = vpack.c.b16 %v1453, %v1453
  %v1554 = vpack.c.b16 %v1454, %v1454
  %v1555 = vpack.c.b16 %v1455, %v1455
  %v1556 = vpack.c.b16 %v1456, %v1456
  %v1557 = vpack.c.b16 %v1457, %v1457
  %v1558 = vpack.c.b16 %v1458, %v1458
  %v1559 = vpack.c.b16 %v1459, %v1459
  %v1560 = vpack.c.b16 %v1460, %v1460
  %v1561 = vpack.c.b16 %v1461, %v1461
  %v1562 = vpack.c.b16 %v1462, %v1462
  %v1563 = vpack.c.b16 %v1463, %v1463
  %v1564 = vpack.c.b16 %v1464, %v1464
  %v1565 = vpack.c.b16 %v1465, %v1465
  %v1566 = vpack.c.b16 %v1466, %v1466
  %v1567 = vpack.c.b16 %v1467, %v1467
  %v1568 = vpack.c.b16 %v1468, %v1468
  %v1569 = vpack.c.b16 %v1469, %v1469
  %v1570 = vpack.c.b16 %v1470, %v1470
  %v1571 = vpack.c.b16 %v1471, %v1471
  %v1572 = vpack.c.b16 %v1472, %v1472
  %v1573 = vpack.c.b16 %v1473, %v1473
  %v1574 = vpack.c.b16 %v1474, %v1474
  %v1575 = vpack.c.b16 %v1475, %v1475
  %v1576 = vpack.c.b16 %v1476, %v1476
  %v1577 = vpack.c.b16 %v1477, %v1477
  %v1578 = vpack.c.b16 %v1478, %v1478
  %v1579 = vpack.c.b16 %v1479, %v1479
  %v1580 = vpack.c.b16 %v1480, %v1480
  %v1581 = vpack.c.b16 %v1481, %v1481
  %v1582 = vpack.c.b16 %v1482, %v1482
  %v1583 = vpack.c.b16 %v1483, %v1483
  %v1584 = vpack.c.b16 %v1484, %v1484
  %v1585 = vpack.c.b16 %v1485, %v1485
  %v1586 = vpack.c.b16 %v1486, %v1486
  %v1587 = vpack.c.b16 %v1487, %v1487
  %v1588 = vpack.c.b16 %v1488, %v1488
  %v1589 = vpack.c.b16 %v1489, %v1489
  %v1590 = vpack.c.b16 %v1490, %v1490
  %v1591 = vpack.c.b16 %v1491, %v1491
  %v1592 = vpack.c.b16 %v1492, %v1492
  %v1593 = vpack.c.b16 %v1493, %v1493
  %v1594 = vpack.c.b16 %v1494, %v1494
  %v1595 = vpack.c.b16 %v1495, %v1495
  %v1596 = vpack.c.b16 %v1496, %v1496
  %v1597 = vpack.c.b16 %v1497, %v1497
  %v1598 = vpack.c.b16 %v1498, %v1498
  %v1599 = vpack.c.b16 %v1499, %v1499
  %v1600 = vpack.c.b16 %v1500, %v1500
  %v1601 = vpack.c.b16 %v1501, %v1501
  %v1602 = vpack.c.b16 %v1502, %v1502
  %v1603 = vpack.c.b16 %v1503, %v1503
  %v1604 = vpack.c.b16 %v1504, %v1504
  %v1605 = vpack.c.b16 %v1505, %v1505
  %v1606 = vpack.c.b16 %v1506, %v1506
  %v1607 = vpack.c.b16 %v1507, %v1507
  %v1608 = vpack.c.b16 %v1508, %v1508
  %v1609 = vpack.c.b16 %v1509, %v1509
  %v1610 = vpack.c.b16 %v1510, %v1510
  %v1611 = vpack.c.b16 %v1511, %v1511
  %v1612 = vpack.c.b16 %v1512, %v1512
  %v1613 = vpack.c.b16 %v1513, %v1513
  %v1614 = vpack.c.b16 %v1514, %v1514
  %v1615 = vpack.c.b16 %v1515, %v1515
  %v1616 = vpack.c.b16 %v1516, %v1516
  %v1617 = vpack.c.b16 %v1517, %v1517
  %v1618 = vpack.c.b16 %v1518, %v1518
  %v1619 = vpack.c.b16 %v1519, %v1519
  %v1620 = vpack.c.b16 %v1520, %v1520
  %v1621 = vpack.c.b16 %v1521, %v1521
  %v1622 = vpack.c.b16 %v1522, %v1522
  %v1623 = vpack.c.b16 %v1523, %v1523
  %v1624 = vpack.c.b16 %v1524, %v1524
  %v1625 = vpack.c.b16 %v1525, %v1525
  %v1626 = vpack.c.b16 %v1526, %v1526
  %v1627 = vpack.c.b16 %v1527, %v1527
  %v1628 = vpack.c.b16 %v1528, %v1528
  %v1629 = vpack.c.b16 %v1529, %v1529
  %v1630 = vpack.c.b16 %v1530, %v1530
  %v1631 = vpack.c.b16 %v1531, %v1531
  %v1632 = vpack.c.b16 %v1532, %v1532
  %v1633 = vpack.c.b16 %v1533, %v1533
  %v1634 = vpack.c.b16 %v1534, %v1534
  %v1635 = vpack.c.b16 %v1535, %v1535
  %v1636 = vpack.c.b16 %v1536, %v1536
  %v1637 = vpack.c.b16 %v1537, %v1537
  %v1638 = vpack.c.b16 %v1538, %v1538
  %v1639 = vpack.c.b16 %v1539, %v1539
  %v1640 = vpack.c.b16 %v1540, %v1540
  %v1641 = vpack.c.b16 %v1541, %v1541
  %v1642 = vpack.c.b16 %v1542, %v1542
  %v1643 = vpack.c.b16 %v1543, %v1543
  %v1644 = vpack.c.b16 %v1544, %v1544
  %v1645 = vpack.c.b16 %v1545, %v1545
  %v1646 = vpack.c.b16 %v1546, %v1546
  %v1647 = vpack.c.b16 %v1547, %v1547
  %v1648 = vpack.c.b16 %v1548, %v1548
  %v1649 = vpack.c.b16 %v1549, %v1549
  %v1650 = vpack.c.b16 %v1550, %v1550
  %v1651 = vpack.c.b16 %v1551, %v1551
  %1752 = vst [vmem:[%s3] sm:$0xf] %v1552
  %1753 = vst [vmem:[%s3 + $0x4] sm:$0xf] %v1553
  %1754 = vst [vmem:[%s3 + $0x8] sm:$0xf] %v1554
  %1755 = vst [vmem:[%s3 + $0xc] sm:$0xf] %v1555
  %1756 = vst [vmem:[%s3 + $0x10] sm:$0xf] %v1556
  %1757 = vst [vmem:[%s3 + $0x14] sm:$0xf] %v1557
  %1758 = vst [vmem:[%s3 + $0x18] sm:$0xf] %v1558
  %1759 = vst [vmem:[%s3 + $0x1c] sm:$0xf] %v1559
  %1760 = vst [vmem:[%s3 + $0x20] sm:$0xf] %v1560
  %1761 = vst [vmem:[%s3 + $0x24] sm:$0xf] %v1561
  %1762 = vst [vmem:[%s3 + $0x28] sm:$0xf] %v1562
  %1763 = vst [vmem:[%s3 + $0x2c] sm:$0xf] %v1563
  %1764 = vst [vmem:[%s3 + $0x30] sm:$0xf] %v1564
  %1765 = vst [vmem:[%s3 + $0x34] sm:$0xf] %v1565
  %1766 = vst [vmem:[%s3 + $0x38] sm:$0xf] %v1566
  %1767 = vst [vmem:[%s3 + $0x3c] sm:$0xf] %v1567
  %1768 = vst [vmem:[%s3 + $0x40] sm:$0xf] %v1568
  %1769 = vst [vmem:[%s3 + $0x44] sm:$0xf] %v1569
  %1770 = vst [vmem:[%s3 + $0x48] sm:$0xf] %v1570
  %1771 = vst [vmem:[%s3 + $0x4c] sm:$0xf] %v1571
  %1772 = vst [vmem:[%s3 + $0x50] sm:$0xf] %v1572
  %1773 = vst [vmem:[%s3 + $0x54] sm:$0xf] %v1573
  %1774 = vst [vmem:[%s3 + $0x58] sm:$0xf] %v1574
  %1775 = vst [vmem:[%s3 + $0x5c] sm:$0xf] %v1575
  %1776 = vst [vmem:[%s3 + $0x60] sm:$0xf] %v1576
  %1777 = vst [vmem:[%s3 + $0x64] sm:$0xf] %v1577
  %1778 = vst [vmem:[%s3 + $0x68] sm:$0xf] %v1578
  %1779 = vst [vmem:[%s3 + $0x6c] sm:$0xf] %v1579
  %1780 = vst [vmem:[%s3 + $0x70] sm:$0xf] %v1580
  %1781 = vst [vmem:[%s3 + $0x74] sm:$0xf] %v1581
  %1782 = vst [vmem:[%s3 + $0x78] sm:$0xf] %v1582
  %1783 = vst [vmem:[%s3 + $0x7c] sm:$0xf] %v1583
  %1784 = vst [vmem:[%s3 + $0x80] sm:$0xf] %v1584
  %1785 = vst [vmem:[%s3 + $0x84] sm:$0xf] %v1585
  %1786 = vst [vmem:[%s3 + $0x88] sm:$0xf] %v1586
  %1787 = vst [vmem:[%s3 + $0x8c] sm:$0xf] %v1587
  %1788 = vst [vmem:[%s3 + $0x90] sm:$0xf] %v1588
  %1789 = vst [vmem:[%s3 + $0x94] sm:$0xf] %v1589
  %1790 = vst [vmem:[%s3 + $0x98] sm:$0xf] %v1590
  %1791 = vst [vmem:[%s3 + $0x9c] sm:$0xf] %v1591
  %1792 = vst [vmem:[%s3 + $0xa0] sm:$0xf] %v1592
  %1793 = vst [vmem:[%s3 + $0xa4] sm:$0xf] %v1593
  %1794 = vst [vmem:[%s3 + $0xa8] sm:$0xf] %v1594
  %1795 = vst [vmem:[%s3 + $0xac] sm:$0xf] %v1595
  %1796 = vst [vmem:[%s3 + $0xb0] sm:$0xf] %v1596
  %1797 = vst [vmem:[%s3 + $0xb4] sm:$0xf] %v1597
  %1798 = vst [vmem:[%s3 + $0xb8] sm:$0xf] %v1598
  %1799 = vst [vmem:[%s3 + $0xbc] sm:$0xf] %v1599
  %1800 = vst [vmem:[%s3 + $0xc0] sm:$0xf] %v1600
  %1801 = vst [vmem:[%s3 + $0xc4] sm:$0xf] %v1601
  %1802 = vst [vmem:[%s3 + $0xc8] sm:$0xf] %v1602
  %1803 = vst [vmem:[%s3 + $0xcc] sm:$0xf] %v1603
  %1804 = vst [vmem:[%s3 + $0xd0] sm:$0xf] %v1604
  %1805 = vst [vmem:[%s3 + $0xd4] sm:$0xf] %v1605
  %1806 = vst [vmem:[%s3 + $0xd8] sm:$0xf] %v1606
  %1807 = vst [vmem:[%s3 + $0xdc] sm:$0xf] %v1607
  %1808 = vst [vmem:[%s3 + $0xe0] sm:$0xf] %v1608
  %1809 = vst [vmem:[%s3 + $0xe4] sm:$0xf] %v1609
  %1810 = vst [vmem:[%s3 + $0xe8] sm:$0xf] %v1610
  %1811 = vst [vmem:[%s3 + $0xec] sm:$0xf] %v1611
  %1812 = vst [vmem:[%s3 + $0xf0] sm:$0xf] %v1612
  %1813 = vst [vmem:[%s3 + $0xf4] sm:$0xf] %v1613
  %1814 = vst [vmem:[%s3 + $0xf8] sm:$0xf] %v1614
  %1815 = vst [vmem:[%s3 + $0xfc] sm:$0xf] %v1615
  %1816 = vst [vmem:[%s3 + $0x100] sm:$0xf] %v1616
  %1817 = vst [vmem:[%s3 + $0x104] sm:$0xf] %v1617
  %1818 = vst [vmem:[%s3 + $0x108] sm:$0xf] %v1618
  %1819 = vst [vmem:[%s3 + $0x10c] sm:$0xf] %v1619
  %1820 = vst [vmem:[%s3 + $0x110] sm:$0xf] %v1620
  %1821 = vst [vmem:[%s3 + $0x114] sm:$0xf] %v1621
  %1822 = vst [vmem:[%s3 + $0x118] sm:$0xf] %v1622
  %1823 = vst [vmem:[%s3 + $0x11c] sm:$0xf] %v1623
  %1824 = vst [vmem:[%s3 + $0x120] sm:$0xf] %v1624
  %1825 = vst [vmem:[%s3 + $0x124] sm:$0xf] %v1625
  %1826 = vst [vmem:[%s3 + $0x128] sm:$0xf] %v1626
  %1827 = vst [vmem:[%s3 + $0x12c] sm:$0xf] %v1627
  %1828 = vst [vmem:[%s3 + $0x130] sm:$0xf] %v1628
  %1829 = vst [vmem:[%s3 + $0x134] sm:$0xf] %v1629
  %1830 = vst [vmem:[%s3 + $0x138] sm:$0xf] %v1630
  %1831 = vst [vmem:[%s3 + $0x13c] sm:$0xf] %v1631
  %1832 = vst [vmem:[%s3 + $0x140] sm:$0xf] %v1632
  %1833 = vst [vmem:[%s3 + $0x144] sm:$0xf] %v1633
  %1834 = vst [vmem:[%s3 + $0x148] sm:$0xf] %v1634
  %1835 = vst [vmem:[%s3 + $0x14c] sm:$0xf] %v1635
  %1836 = vst [vmem:[%s3 + $0x150] sm:$0xf] %v1636
  %1837 = vst [vmem:[%s3 + $0x154] sm:$0xf] %v1637
  %1838 = vst [vmem:[%s3 + $0x158] sm:$0xf] %v1638
  %1839 = vst [vmem:[%s3 + $0x15c] sm:$0xf] %v1639
  %1840 = vst [vmem:[%s3 + $0x160] sm:$0xf] %v1640
  %1841 = vst [vmem:[%s3 + $0x164] sm:$0xf] %v1641
  %1842 = vst [vmem:[%s3 + $0x168] sm:$0xf] %v1642
  %1843 = vst [vmem:[%s3 + $0x16c] sm:$0xf] %v1643
  %1844 = vst [vmem:[%s3 + $0x170] sm:$0xf] %v1644
  %1845 = vst [vmem:[%s3 + $0x174] sm:$0xf] %v1645
  %1846 = vst [vmem:[%s3 + $0x178] sm:$0xf] %v1646
  %1847 = vst [vmem:[%s3 + $0x17c] sm:$0xf] %v1647
  %1848 = vst [vmem:[%s3 + $0x180] sm:$0xf] %v1648
  %1849 = vst [vmem:[%s3 + $0x184] sm:$0xf] %v1649
  %1850 = vst [vmem:[%s3 + $0x188] sm:$0xf] %v1650
  %1851 = vst [vmem:[%s3 + $0x18c] sm:$0xf] %v1651
  // Predicated region
  $region14: #{forward.4} parent=0 // pred_check
    _
  $region15: #{forward.4} parent=0 // pred_check_branch
    %1853 = sbr.rel (0) target = $region17
  $region16: #{forward.4} parent=0 // pred_region
    _
  $region17: #{forward.4} parent=0 // pred_fallthru
    _
  // Predicated region
  $region18: #{forward.4} parent=0 // pred_check
    _
  $region19: #{forward.4} parent=0 // pred_check_branch
    %1855 = sbr.rel (0) target = $region21
  $region20: #{forward.4} parent=0 // pred_region
    _
  $region21: #{forward.4} parent=0 // pred_fallthru
    _

// kernel: forward.5
$region0: #{forward.5}
  #allocation0 [shape = 'u32[]', space=smem, size = 0x4, offset = 0x4, fixed_abs, tag = 'smem constant byte address 0x4 - core index']
  #allocation1 [shape = 'u32[144,128]{1,0:T(1,128)}', space=vmem, size = 0x12000, scoped, tag = 'internal scratch']
  %s0 = inlined_call_operand.vmem [shape: bf16[162,512], index: 0, kind: input, shape index: {}]
  %s1 = inlined_call_operand.vmem [shape: bf16[512,128], index: 1, kind: input, shape index: {}]
  %s2 = inlined_call_operand.vmem [shape: f32[1,128], index: 2, kind: input, shape index: {}]
  %s3 = inlined_call_operand.vmem [shape: bf16[162,128], index: 3, kind: output, shape index: {}]
  %s4 = sld [smem:[#allocation0]]
  $region22: #{forward.5} parent=0
    _
  %s6 = ssub.s32 1, %s4
  %s7 = scalar_select 0, %s6, %s4
  // Predicated region
  $region2: #{forward.5} parent=0 // pred_check
    _
  $region3: #{forward.5} parent=0 // pred_check_branch
    %9 = sbr.rel (0) target = $region5
  $region4: #{forward.5} parent=0 // pred_region
    _
  $region5: #{forward.5} parent=0 // pred_fallthru
    _
  // Predicated region
  $region6: #{forward.5} parent=0 // pred_check
    _
  $region7: #{forward.5} parent=0 // pred_check_branch
    %11 = sbr.rel (0) target = $region9
  $region8: #{forward.5} parent=0 // pred_region
    _
  $region9: #{forward.5} parent=0 // pred_fallthru
    _
  // Predicated region
  $region10: #{forward.5} parent=0 // pred_check
    _
  $region11: #{forward.5} parent=0 // pred_check_branch
    %13 = sbr.rel (0) target = $region13
  $region12: #{forward.5} parent=0 // pred_region
    _
  $region13: #{forward.5} parent=0 // pred_fallthru
    _
  %v15 = vld [vmem:[%s0] sm:$0xff]
  %v16 = vld [vmem:[%s0 + $0x8] sm:$0xff]
  %v17 = vld [vmem:[%s0 + $0x10] sm:$0xff]
  %v18 = vld [vmem:[%s0 + $0x18] sm:$0xff]
  %v19 = vld [vmem:[%s0 + $0x20] sm:$0xff]
  %v20 = vld [vmem:[%s0 + $0x28] sm:$0xff]
  %v21 = vld [vmem:[%s0 + $0x30] sm:$0xff]
  %v22 = vld [vmem:[%s0 + $0x38] sm:$0xff]
  %v23 = vld [vmem:[%s0 + $0x40] sm:$0xff]
  %v24 = vld [vmem:[%s0 + $0x48] sm:$0xff]
  %v25 = vld [vmem:[%s0 + $0x50] sm:$0xff]
  %v26 = vld [vmem:[%s0 + $0x58] sm:$0xff]
  %v27 = vld [vmem:[%s0 + $0x60] sm:$0xff]
  %v28 = vld [vmem:[%s0 + $0x68] sm:$0xff]
  %v29 = vld [vmem:[%s0 + $0x70] sm:$0xff]
  %v30 = vld [vmem:[%s0 + $0x78] sm:$0xff]
  %v31 = vld [vmem:[%s0 + $0x80] sm:$0xff]
  %v32 = vld [vmem:[%s0 + $0x88] sm:$0xff]
  %v33 = vld [vmem:[%s0 + $0x90] sm:$0xff]
  %v34 = vld [vmem:[%s0 + $0x98] sm:$0xff]
  %v35 = vld [vmem:[%s0 + $0xa0] sm:$0xff]
  %v36 = vld [vmem:[%s0 + $0xa8] sm:$0xff]
  %v37 = vld [vmem:[%s0 + $0xb0] sm:$0xff]
  %v38 = vld [vmem:[%s0 + $0xb8] sm:$0xff]
  %v39 = vld [vmem:[%s0 + $0xc0] sm:$0xff]
  %v40 = vld [vmem:[%s0 + $0xc8] sm:$0xff]
  %v41 = vld [vmem:[%s0 + $0xd0] sm:$0xff]
  %v42 = vld [vmem:[%s0 + $0xd8] sm:$0xff]
  %v43 = vld [vmem:[%s0 + $0xe0] sm:$0xff]
  %v44 = vld [vmem:[%s0 + $0xe8] sm:$0xff]
  %v45 = vld [vmem:[%s0 + $0xf0] sm:$0xff]
  %v46 = vld [vmem:[%s0 + $0xf8] sm:$0xff]
  %v47 = vld [vmem:[%s0 + $0x100] sm:$0xff]
  %v48 = vld [vmem:[%s0 + $0x108] sm:$0xff]
  %v49 = vld [vmem:[%s0 + $0x110] sm:$0xff]
  %v50 = vld [vmem:[%s0 + $0x118] sm:$0xff]
  %v51 = vld [vmem:[%s0 + $0x120] sm:$0xff]
  %v52 = vld [vmem:[%s0 + $0x128] sm:$0xff]
  %v53 = vld [vmem:[%s0 + $0x130] sm:$0xff]
  %v54 = vld [vmem:[%s0 + $0x138] sm:$0xff]
  %v55 = vld [vmem:[%s0 + $0x140] sm:$0x11]
  %v56 = vld [vmem:[%s0 + $0x148] sm:$0x11]
  %v57 = vld [vmem:[%s1] sm:$0xf]
  %v58 = vld [vmem:[%s1 + $0x4] sm:$0xf]
  %v59 = vld [vmem:[%s1 + $0x8] sm:$0xf]
  %v60 = vld [vmem:[%s1 + $0xc] sm:$0xf]
  %v61 = vld [vmem:[%s1 + $0x10] sm:$0xf]
  %v62 = vld [vmem:[%s1 + $0x14] sm:$0xf]
  %v63 = vld [vmem:[%s1 + $0x18] sm:$0xf]
  %v64 = vld [vmem:[%s1 + $0x1c] sm:$0xf]
  %v65 = vld [vmem:[%s1 + $0x20] sm:$0xf]
  %v66 = vld [vmem:[%s1 + $0x24] sm:$0xf]
  %v67 = vld [vmem:[%s1 + $0x28] sm:$0xf]
  %v68 = vld [vmem:[%s1 + $0x2c] sm:$0xf]
  %v69 = vld [vmem:[%s1 + $0x30] sm:$0xf]
  %v70 = vld [vmem:[%s1 + $0x34] sm:$0xf]
  %v71 = vld [vmem:[%s1 + $0x38] sm:$0xf]
  %v72 = vld [vmem:[%s1 + $0x3c] sm:$0xf]
  %v73 = vld [vmem:[%s1 + $0x40] sm:$0xf]
  %v74 = vld [vmem:[%s1 + $0x44] sm:$0xf]
  %v75 = vld [vmem:[%s1 + $0x48] sm:$0xf]
  %v76 = vld [vmem:[%s1 + $0x4c] sm:$0xf]
  %v77 = vld [vmem:[%s1 + $0x50] sm:$0xf]
  %v78 = vld [vmem:[%s1 + $0x54] sm:$0xf]
  %v79 = vld [vmem:[%s1 + $0x58] sm:$0xf]
  %v80 = vld [vmem:[%s1 + $0x5c] sm:$0xf]
  %v81 = vld [vmem:[%s1 + $0x60] sm:$0xf]
  %v82 = vld [vmem:[%s1 + $0x64] sm:$0xf]
  %v83 = vld [vmem:[%s1 + $0x68] sm:$0xf]
  %v84 = vld [vmem:[%s1 + $0x6c] sm:$0xf]
  %v85 = vld [vmem:[%s1 + $0x70] sm:$0xf]
  %v86 = vld [vmem:[%s1 + $0x74] sm:$0xf]
  %v87 = vld [vmem:[%s1 + $0x78] sm:$0xf]
  %v88 = vld [vmem:[%s1 + $0x7c] sm:$0xf]
  %v89 = vld [vmem:[%s1 + $0x80] sm:$0xf]
  %v90 = vld [vmem:[%s1 + $0x84] sm:$0xf]
  %v91 = vld [vmem:[%s1 + $0x88] sm:$0xf]
  %v92 = vld [vmem:[%s1 + $0x8c] sm:$0xf]
  %v93 = vld [vmem:[%s1 + $0x90] sm:$0xf]
  %v94 = vld [vmem:[%s1 + $0x94] sm:$0xf]
  %v95 = vld [vmem:[%s1 + $0x98] sm:$0xf]
  %v96 = vld [vmem:[%s1 + $0x9c] sm:$0xf]
  %v97 = vld [vmem:[%s1 + $0xa0] sm:$0xf]
  %v98 = vld [vmem:[%s1 + $0xa4] sm:$0xf]
  %v99 = vld [vmem:[%s1 + $0xa8] sm:$0xf]
  %v100 = vld [vmem:[%s1 + $0xac] sm:$0xf]
  %v101 = vld [vmem:[%s1 + $0xb0] sm:$0xf]
  %v102 = vld [vmem:[%s1 + $0xb4] sm:$0xf]
  %v103 = vld [vmem:[%s1 + $0xb8] sm:$0xf]
  %v104 = vld [vmem:[%s1 + $0xbc] sm:$0xf]
  %v105 = vld [vmem:[%s1 + $0xc0] sm:$0xf]
  %v106 = vld [vmem:[%s1 + $0xc4] sm:$0xf]
  %v107 = vld [vmem:[%s1 + $0xc8] sm:$0xf]
  %v108 = vld [vmem:[%s1 + $0xcc] sm:$0xf]
  %v109 = vld [vmem:[%s1 + $0xd0] sm:$0xf]
  %v110 = vld [vmem:[%s1 + $0xd4] sm:$0xf]
  %v111 = vld [vmem:[%s1 + $0xd8] sm:$0xf]
  %v112 = vld [vmem:[%s1 + $0xdc] sm:$0xf]
  %v113 = vld [vmem:[%s1 + $0xe0] sm:$0xf]
  %v114 = vld [vmem:[%s1 + $0xe4] sm:$0xf]
  %v115 = vld [vmem:[%s1 + $0xe8] sm:$0xf]
  %v116 = vld [vmem:[%s1 + $0xec] sm:$0xf]
  %v117 = vld [vmem:[%s1 + $0xf0] sm:$0xf]
  %v118 = vld [vmem:[%s1 + $0xf4] sm:$0xf]
  %v119 = vld [vmem:[%s1 + $0xf8] sm:$0xf]
  %v120 = vld [vmem:[%s1 + $0xfc] sm:$0xf]
  %v121 = vld [vmem:[%s2] sm:$0x1]
  %v123 = vlaneseq
  %v124 = vshrl.u32 %v123, 7
  %v125 = vsub.s32 0, %v124
  %v126 = vrot.slane %v121, %v125
  %v170 = vunpack.c.l.b16 %v15
  %v171 = vunpack.c.h.b16 %v15
  %v172 = vunpack.c.l.b16 %v16
  %v173 = vunpack.c.h.b16 %v16
  %v174 = vunpack.c.l.b16 %v17
  %v175 = vunpack.c.h.b16 %v17
  %v176 = vunpack.c.l.b16 %v18
  %v177 = vunpack.c.h.b16 %v18
  %v178 = vunpack.c.l.b16 %v19
  %v179 = vunpack.c.h.b16 %v19
  %v180 = vunpack.c.l.b16 %v20
  %v181 = vunpack.c.h.b16 %v20
  %v182 = vunpack.c.l.b16 %v21
  %v183 = vunpack.c.h.b16 %v21
  %v184 = vunpack.c.l.b16 %v22
  %v185 = vunpack.c.h.b16 %v22
  %v186 = vunpack.c.l.b16 %v23
  %v187 = vunpack.c.h.b16 %v23
  %v188 = vunpack.c.l.b16 %v24
  %v189 = vunpack.c.h.b16 %v24
  %v190 = vunpack.c.l.b16 %v25
  %v191 = vunpack.c.h.b16 %v25
  %v192 = vunpack.c.l.b16 %v26
  %v193 = vunpack.c.h.b16 %v26
  %v194 = vunpack.c.l.b16 %v27
  %v195 = vunpack.c.h.b16 %v27
  %v196 = vunpack.c.l.b16 %v28
  %v197 = vunpack.c.h.b16 %v28
  %v198 = vunpack.c.l.b16 %v29
  %v199 = vunpack.c.h.b16 %v29
  %v200 = vunpack.c.l.b16 %v30
  %v201 = vunpack.c.h.b16 %v30
  %v202 = vunpack.c.l.b16 %v31
  %v203 = vunpack.c.h.b16 %v31
  %v204 = vunpack.c.l.b16 %v32
  %v205 = vunpack.c.h.b16 %v32
  %v206 = vunpack.c.l.b16 %v33
  %v207 = vunpack.c.h.b16 %v33
  %v208 = vunpack.c.l.b16 %v34
  %v209 = vunpack.c.h.b16 %v34
  %v210 = vunpack.c.l.b16 %v35
  %v211 = vunpack.c.h.b16 %v35
  %v212 = vunpack.c.l.b16 %v36
  %v213 = vunpack.c.h.b16 %v36
  %v214 = vunpack.c.l.b16 %v37
  %v215 = vunpack.c.h.b16 %v37
  %v216 = vunpack.c.l.b16 %v38
  %v217 = vunpack.c.h.b16 %v38
  %v218 = vunpack.c.l.b16 %v39
  %v219 = vunpack.c.h.b16 %v39
  %v220 = vunpack.c.l.b16 %v40
  %v221 = vunpack.c.h.b16 %v40
  %v222 = vunpack.c.l.b16 %v41
  %v223 = vunpack.c.h.b16 %v41
  %v224 = vunpack.c.l.b16 %v42
  %v225 = vunpack.c.h.b16 %v42
  %v226 = vunpack.c.l.b16 %v43
  %v227 = vunpack.c.h.b16 %v43
  %v228 = vunpack.c.l.b16 %v44
  %v229 = vunpack.c.h.b16 %v44
  %v230 = vunpack.c.l.b16 %v45
  %v231 = vunpack.c.h.b16 %v45
  %v232 = vunpack.c.l.b16 %v46
  %v233 = vunpack.c.h.b16 %v46
  %v234 = vunpack.c.l.b16 %v47
  %v235 = vunpack.c.h.b16 %v47
  %v236 = vunpack.c.l.b16 %v48
  %v237 = vunpack.c.h.b16 %v48
  %v238 = vunpack.c.l.b16 %v49
  %v239 = vunpack.c.h.b16 %v49
  %v240 = vunpack.c.l.b16 %v50
  %v241 = vunpack.c.h.b16 %v50
  %v242 = vunpack.c.l.b16 %v51
  %v243 = vunpack.c.h.b16 %v51
  %v244 = vunpack.c.l.b16 %v52
  %v245 = vunpack.c.h.b16 %v52
  %v246 = vunpack.c.l.b16 %v53
  %v247 = vunpack.c.h.b16 %v53
  %v248 = vunpack.c.l.b16 %v54
  %v249 = vunpack.c.h.b16 %v54
  %v250 = vunpack.c.l.b16 %v55
  %v251 = vunpack.c.h.b16 %v55
  %v252 = vunpack.c.l.b16 %v56
  %v253 = vunpack.c.h.b16 %v56
  %v254 = vpack.c.b16 %v174, %v170
  %v255 = vpack.c.b16 %v175, %v171
  %v256 = vpack.c.b16 %v176, %v172
  %v257 = vpack.c.b16 %v177, %v173
  %v258 = vpack.c.b16 %v182, %v178
  %v259 = vpack.c.b16 %v183, %v179
  %v260 = vpack.c.b16 %v184, %v180
  %v261 = vpack.c.b16 %v185, %v181
  %v262 = vpack.c.b16 %v190, %v186
  %v263 = vpack.c.b16 %v191, %v187
  %v264 = vpack.c.b16 %v192, %v188
  %v265 = vpack.c.b16 %v193, %v189
  %v266 = vpack.c.b16 %v198, %v194
  %v267 = vpack.c.b16 %v199, %v195
  %v268 = vpack.c.b16 %v200, %v196
  %v269 = vpack.c.b16 %v201, %v197
  %v270 = vpack.c.b16 %v206, %v202
  %v271 = vpack.c.b16 %v207, %v203
  %v272 = vpack.c.b16 %v208, %v204
  %v273 = vpack.c.b16 %v209, %v205
  %v274 = vpack.c.b16 %v214, %v210
  %v275 = vpack.c.b16 %v215, %v211
  %v276 = vpack.c.b16 %v216, %v212
  %v277 = vpack.c.b16 %v217, %v213
  %v278 = vpack.c.b16 %v222, %v218
  %v279 = vpack.c.b16 %v223, %v219
  %v280 = vpack.c.b16 %v224, %v220
  %v281 = vpack.c.b16 %v225, %v221
  %v282 = vpack.c.b16 %v230, %v226
  %v283 = vpack.c.b16 %v231, %v227
  %v284 = vpack.c.b16 %v232, %v228
  %v285 = vpack.c.b16 %v233, %v229
  %v286 = vpack.c.b16 %v238, %v234
  %v287 = vpack.c.b16 %v239, %v235
  %v288 = vpack.c.b16 %v240, %v236
  %v289 = vpack.c.b16 %v241, %v237
  %v290 = vpack.c.b16 %v246, %v242
  %v291 = vpack.c.b16 %v247, %v243
  %v292 = vpack.c.b16 %v248, %v244
  %v293 = vpack.c.b16 %v249, %v245
  %v294 = vpack.c.b16 %v250, %v250
  %v295 = vpack.c.b16 %v251, %v251
  %v296 = vpack.c.b16 %v252, %v252
  %v297 = vpack.c.b16 %v253, %v253
  %v406 = vunpack.c.l.b16 %v57
  %v407 = vunpack.c.l.b16 %v58
  %v408 = vunpack.c.l.b16 %v59
  %v409 = vunpack.c.l.b16 %v60
  %v410 = vunpack.c.l.b16 %v61
  %v411 = vunpack.c.l.b16 %v62
  %v412 = vunpack.c.l.b16 %v63
  %v413 = vunpack.c.l.b16 %v64
  %v414 = vunpack.c.l.b16 %v65
  %v415 = vunpack.c.l.b16 %v66
  %v416 = vunpack.c.l.b16 %v67
  %v417 = vunpack.c.l.b16 %v68
  %v418 = vunpack.c.l.b16 %v69
  %v419 = vunpack.c.l.b16 %v70
  %v420 = vunpack.c.l.b16 %v71
  %v421 = vunpack.c.l.b16 %v72
  %v422 = vunpack.c.l.b16 %v73
  %v423 = vunpack.c.l.b16 %v74
  %v424 = vunpack.c.l.b16 %v75
  %v425 = vunpack.c.l.b16 %v76
  %v426 = vunpack.c.l.b16 %v77
  %v427 = vunpack.c.l.b16 %v78
  %v428 = vunpack.c.l.b16 %v79
  %v429 = vunpack.c.l.b16 %v80
  %v430 = vunpack.c.l.b16 %v81
  %v431 = vunpack.c.l.b16 %v82
  %v432 = vunpack.c.l.b16 %v83
  %v433 = vunpack.c.l.b16 %v84
  %v434 = vunpack.c.l.b16 %v85
  %v435 = vunpack.c.l.b16 %v86
  %v436 = vunpack.c.l.b16 %v87
  %v437 = vunpack.c.l.b16 %v88
  %v438 = vunpack.c.l.b16 %v89
  %v439 = vunpack.c.l.b16 %v90
  %v440 = vunpack.c.l.b16 %v91
  %v441 = vunpack.c.l.b16 %v92
  %v442 = vunpack.c.l.b16 %v93
  %v443 = vunpack.c.l.b16 %v94
  %v444 = vunpack.c.l.b16 %v95
  %v445 = vunpack.c.l.b16 %v96
  %v446 = vunpack.c.l.b16 %v97
  %v447 = vunpack.c.l.b16 %v98
  %v448 = vunpack.c.l.b16 %v99
  %v449 = vunpack.c.l.b16 %v100
  %v450 = vunpack.c.l.b16 %v101
  %v451 = vunpack.c.l.b16 %v102
  %v452 = vunpack.c.l.b16 %v103
  %v453 = vunpack.c.l.b16 %v104
  %v454 = vunpack.c.l.b16 %v105
  %v455 = vunpack.c.l.b16 %v106
  %v456 = vunpack.c.l.b16 %v107
  %v457 = vunpack.c.l.b16 %v108
  %v458 = vunpack.c.l.b16 %v109
  %v459 = vunpack.c.l.b16 %v110
  %v460 = vunpack.c.l.b16 %v111
  %v461 = vunpack.c.l.b16 %v112
  %v462 = vunpack.c.l.b16 %v113
  %v463 = vunpack.c.l.b16 %v114
  %v464 = vunpack.c.l.b16 %v115
  %v465 = vunpack.c.l.b16 %v116
  %v466 = vunpack.c.l.b16 %v117
  %v467 = vunpack.c.l.b16 %v118
  %v468 = vunpack.c.l.b16 %v119
  %v469 = vunpack.c.l.b16 %v120
  %v470 = vpack.c.b16 %v407, %v406
  %v471 = vpack.c.b16 %v409, %v408
  %v472 = vpack.c.b16 %v411, %v410
  %v473 = vpack.c.b16 %v413, %v412
  %v474 = vpack.c.b16 %v415, %v414
  %v475 = vpack.c.b16 %v417, %v416
  %v476 = vpack.c.b16 %v419, %v418
  %v477 = vpack.c.b16 %v421, %v420
  %v478 = vpack.c.b16 %v423, %v422
  %v479 = vpack.c.b16 %v425, %v424
  %v480 = vpack.c.b16 %v427, %v426
  %v481 = vpack.c.b16 %v429, %v428
  %v482 = vpack.c.b16 %v431, %v430
  %v483 = vpack.c.b16 %v433, %v432
  %v484 = vpack.c.b16 %v435, %v434
  %v485 = vpack.c.b16 %v437, %v436
  %v486 = vpack.c.b16 %v439, %v438
  %v487 = vpack.c.b16 %v441, %v440
  %v488 = vpack.c.b16 %v443, %v442
  %v489 = vpack.c.b16 %v445, %v444
  %v490 = vpack.c.b16 %v447, %v446
  %v491 = vpack.c.b16 %v449, %v448
  %v492 = vpack.c.b16 %v451, %v450
  %v493 = vpack.c.b16 %v453, %v452
  %v494 = vpack.c.b16 %v455, %v454
  %v495 = vpack.c.b16 %v457, %v456
  %v496 = vpack.c.b16 %v459, %v458
  %v497 = vpack.c.b16 %v461, %v460
  %v498 = vpack.c.b16 %v463, %v462
  %v499 = vpack.c.b16 %v465, %v464
  %v500 = vpack.c.b16 %v467, %v466
  %v501 = vpack.c.b16 %v469, %v468
  %534 = vmatprep.subr.bf16.mxu0 0
  %535 = vmatpush1.bf16.msra.mxu0 %v470
  %536 = vmatprep.subr.bf16.mxu0 0
  %537 = vmatpush1.bf16.msra.mxu0 %v471
  %538 = vmatprep.subr.bf16.mxu0 0
  %539 = vmatpush1.bf16.msra.mxu0 %v472
  %540 = vmatprep.subr.bf16.mxu0 0
  %541 = vmatpush1.bf16.msra.mxu0 %v473
  %542 = vmatprep.subr.bf16.mxu0 0
  %543 = vmatpush1.bf16.msra.mxu0 %v474
  %544 = vmatprep.subr.bf16.mxu0 0
  %545 = vmatpush1.bf16.msra.mxu0 %v475
  %546 = vmatprep.subr.bf16.mxu0 0
  %547 = vmatpush1.bf16.msra.mxu0 %v476
  %548 = vmatprep.subr.bf16.mxu0 0
  %549 = vmatpush1.bf16.msra.mxu0 %v477
  %550 = vmatprep.subr.bf16.mxu0 0
  %551 = vmatpush1.bf16.msra.mxu0 %v478
  %552 = vmatprep.subr.bf16.mxu0 0
  %553 = vmatpush1.bf16.msra.mxu0 %v479
  %554 = vmatprep.subr.bf16.mxu0 0
  %555 = vmatpush1.bf16.msra.mxu0 %v480
  %556 = vmatprep.subr.bf16.mxu0 0
  %557 = vmatpush1.bf16.msra.mxu0 %v481
  %558 = vmatprep.subr.bf16.mxu0 0
  %559 = vmatpush1.bf16.msra.mxu0 %v482
  %560 = vmatprep.subr.bf16.mxu0 0
  %561 = vmatpush1.bf16.msra.mxu0 %v483
  %562 = vmatprep.subr.bf16.mxu0 0
  %563 = vmatpush1.bf16.msra.mxu0 %v484
  %564 = vmatprep.subr.bf16.mxu0 0
  %565 = vmatpush1.bf16.msra.mxu0 %v485
  %566 = vmatprep.mubr.bf16.mxu0 %v255
  %567 = vmatmul.mubr.bf16.gmra.mrb[0].mxu0 %v254
  %v568 = vpop.f32.mrb[0].mxu0
  %v569 = vadd.f32 %v126, %v568
  %v570 = vpop.f32.mrb[0].mxu0
  %v571 = vpop.f32.mrb[0].mxu0
  %v572 = vadd.f32 %v126, %v571
  %v573 = vpop.f32.mrb[0].mxu0
  %574 = vmatprep.mubr.bf16.mxu0 %v259
  %575 = vmatmul.mubr.bf16.gmra.mrb[0].mxu0 %v258
  %v576 = vpop.f32.mrb[0].mxu0
  %v577 = vadd.f32 %v126, %v576
  %v578 = vpop.f32.mrb[0].mxu0
  %v579 = vpop.f32.mrb[0].mxu0
  %v580 = vadd.f32 %v126, %v579
  %v581 = vpop.f32.mrb[0].mxu0
  %582 = vmatprep.mubr.bf16.mxu0 %v263
  %583 = vmatmul.mubr.bf16.gmra.mrb[0].mxu0 %v262
  %v584 = vpop.f32.mrb[0].mxu0
  %v585 = vadd.f32 %v126, %v584
  %v586 = vpop.f32.mrb[0].mxu0
  %v587 = vpop.f32.mrb[0].mxu0
  %v588 = vadd.f32 %v126, %v587
  %v589 = vpop.f32.mrb[0].mxu0
  %590 = vmatprep.mubr.bf16.mxu0 %v267
  %591 = vmatmul.mubr.bf16.gmra.mrb[0].mxu0 %v266
  %v592 = vpop.f32.mrb[0].mxu0
  %v593 = vadd.f32 %v126, %v592
  %v594 = vpop.f32.mrb[0].mxu0
  %v595 = vpop.f32.mrb[0].mxu0
  %v596 = vadd.f32 %v126, %v595
  %v597 = vpop.f32.mrb[0].mxu0
  %598 = vmatprep.mubr.bf16.mxu0 %v271
  %599 = vmatmul.mubr.bf16.gmra.mrb[0].mxu0 %v270
  %v600 = vpop.f32.mrb[0].mxu0
  %v601 = vadd.f32 %v126, %v600
  %v602 = vpop.f32.mrb[0].mxu0
  %v603 = vpop.f32.mrb[0].mxu0
  %v604 = vadd.f32 %v126, %v603
  %v605 = vpop.f32.mrb[0].mxu0
  %606 = vmatprep.mubr.bf16.mxu0 %v275
  %607 = vmatmul.mubr.bf16.gmra.mrb[0].mxu0 %v274
  %v608 = vpop.f32.mrb[0].mxu0
  %v609 = vadd.f32 %v126, %v608
  %v610 = vpop.f32.mrb[0].mxu0
  %v611 = vpop.f32.mrb[0].mxu0
  %v612 = vadd.f32 %v126, %v611
  %v613 = vpop.f32.mrb[0].mxu0
  %614 = vmatprep.mubr.bf16.mxu0 %v279
  %615 = vmatmul.mubr.bf16.gmra.mrb[0].mxu0 %v278
  %v616 = vpop.f32.mrb[0].mxu0
  %v617 = vadd.f32 %v126, %v616
  %v618 = vpop.f32.mrb[0].mxu0
  %v619 = vpop.f32.mrb[0].mxu0
  %v620 = vadd.f32 %v126, %v619
  %v621 = vpop.f32.mrb[0].mxu0
  %622 = vmatprep.mubr.bf16.mxu0 %v283
  %623 = vmatmul.mubr.bf16.gmra.mrb[0].mxu0 %v282
  %v624 = vpop.f32.mrb[0].mxu0
  %v625 = vadd.f32 %v126, %v624
  %v626 = vpop.f32.mrb[0].mxu0
  %v627 = vpop.f32.mrb[0].mxu0
  %v628 = vadd.f32 %v126, %v627
  %v629 = vpop.f32.mrb[0].mxu0
  %630 = vmatprep.mubr.bf16.mxu0 %v287
  %631 = vmatmul.mubr.bf16.gmra.mrb[0].mxu0 %v286
  %v632 = vpop.f32.mrb[0].mxu0
  %v633 = vadd.f32 %v126, %v632
  %v634 = vpop.f32.mrb[0].mxu0
  %v635 = vpop.f32.mrb[0].mxu0
  %v636 = vadd.f32 %v126, %v635
  %v637 = vpop.f32.mrb[0].mxu0
  %638 = vmatprep.mubr.bf16.mxu0 %v291
  %639 = vmatmul.mubr.bf16.gmra.mrb[0].mxu0 %v290
  %v640 = vpop.f32.mrb[0].mxu0
  %v641 = vadd.f32 %v126, %v640
  %v642 = vpop.f32.mrb[0].mxu0
  %v643 = vpop.f32.mrb[0].mxu0
  %v644 = vadd.f32 %v126, %v643
  %v645 = vpop.f32.mrb[0].mxu0
  %646 = vmatprep.mubr.bf16.mxu0 %v295
  %647 = vmatmul.mubr.bf16.gmra.mrb[0].mxu0 %v294
  %v648 = vpop.f32.mrb[0].mxu0
  %v649 = vadd.f32 %v126, %v648
  %v650 = vpop.f32.mrb[0].mxu0
  %v651 = vpop.f32.mrb[0].mxu0
  %v652 = vpop.f32.mrb[0].mxu0
  %653 = vdwg.mxu0
  %654 = vmatprep.subr.bf16.mxu0 0
  %655 = vmatpush1.bf16.msra.mxu0 %v486
  %656 = vmatprep.subr.bf16.mxu0 0
  %657 = vmatpush1.bf16.msra.mxu0 %v487
  %658 = vmatprep.subr.bf16.mxu0 0
  %659 = vmatpush1.bf16.msra.mxu0 %v488
  %660 = vmatprep.subr.bf16.mxu0 0
  %661 = vmatpush1.bf16.msra.mxu0 %v489
  %662 = vmatprep.subr.bf16.mxu0 0
  %663 = vmatpush1.bf16.msra.mxu0 %v490
  %664 = vmatprep.subr.bf16.mxu0 0
  %665 = vmatpush1.bf16.msra.mxu0 %v491
  %666 = vmatprep.subr.bf16.mxu0 0
  %667 = vmatpush1.bf16.msra.mxu0 %v492
  %668 = vmatprep.subr.bf16.mxu0 0
  %669 = vmatpush1.bf16.msra.mxu0 %v493
  %670 = vmatprep.subr.bf16.mxu0 0
  %671 = vmatpush1.bf16.msra.mxu0 %v494
  %672 = vmatprep.subr.bf16.mxu0 0
  %673 = vmatpush1.bf16.msra.mxu0 %v495
  %674 = vmatprep.subr.bf16.mxu0 0
  %675 = vmatpush1.bf16.msra.mxu0 %v496
  %676 = vmatprep.subr.bf16.mxu0 0
  %677 = vmatpush1.bf16.msra.mxu0 %v497
  %678 = vmatprep.subr.bf16.mxu0 0
  %679 = vmatpush1.bf16.msra.mxu0 %v498
  %680 = vmatprep.subr.bf16.mxu0 0
  %681 = vmatpush1.bf16.msra.mxu0 %v499
  %682 = vmatprep.subr.bf16.mxu0 0
  %683 = vmatpush1.bf16.msra.mxu0 %v500
  %684 = vmatprep.subr.bf16.mxu0 0
  %685 = vmatpush1.bf16.msra.mxu0 %v501
  %686 = vmatprep.mubr.bf16.mxu0 %v257
  %687 = vmatmul.mubr.bf16.gmra.mrb[0].mxu0 %v256
  %v688 = vpop.f32.mrb[0].mxu0
  %v689 = vadd.f32 %v569, %v688
  %v690 = vpop.f32.mrb[0].mxu0
  %v691 = vpop.f32.mrb[0].mxu0
  %v692 = vadd.f32 %v572, %v691
  %v693 = vpop.f32.mrb[0].mxu0
  %694 = vmatprep.mubr.bf16.mxu0 %v261
  %695 = vmatmul.mubr.bf16.gmra.mrb[0].mxu0 %v260
  %v696 = vpop.f32.mrb[0].mxu0
  %v697 = vadd.f32 %v577, %v696
  %v698 = vpop.f32.mrb[0].mxu0
  %v699 = vpop.f32.mrb[0].mxu0
  %v700 = vadd.f32 %v580, %v699
  %v701 = vpop.f32.mrb[0].mxu0
  %702 = vmatprep.mubr.bf16.mxu0 %v265
  %703 = vmatmul.mubr.bf16.gmra.mrb[0].mxu0 %v264
  %v704 = vpop.f32.mrb[0].mxu0
  %v705 = vadd.f32 %v585, %v704
  %v706 = vpop.f32.mrb[0].mxu0
  %v707 = vpop.f32.mrb[0].mxu0
  %v708 = vadd.f32 %v588, %v707
  %v709 = vpop.f32.mrb[0].mxu0
  %710 = vmatprep.mubr.bf16.mxu0 %v269
  %711 = vmatmul.mubr.bf16.gmra.mrb[0].mxu0 %v268
  %v712 = vpop.f32.mrb[0].mxu0
  %v713 = vadd.f32 %v593, %v712
  %v714 = vpop.f32.mrb[0].mxu0
  %v715 = vpop.f32.mrb[0].mxu0
  %v716 = vadd.f32 %v596, %v715
  %v717 = vpop.f32.mrb[0].mxu0
  %718 = vmatprep.mubr.bf16.mxu0 %v273
  %719 = vmatmul.mubr.bf16.gmra.mrb[0].mxu0 %v272
  %v720 = vpop.f32.mrb[0].mxu0
  %v721 = vadd.f32 %v601, %v720
  %v722 = vpop.f32.mrb[0].mxu0
  %v723 = vpop.f32.mrb[0].mxu0
  %v724 = vadd.f32 %v604, %v723
  %v725 = vpop.f32.mrb[0].mxu0
  %726 = vmatprep.mubr.bf16.mxu0 %v277
  %727 = vmatmul.mubr.bf16.gmra.mrb[0].mxu0 %v276
  %v728 = vpop.f32.mrb[0].mxu0
  %v729 = vadd.f32 %v609, %v728
  %v730 = vpop.f32.mrb[0].mxu0
  %v731 = vpop.f32.mrb[0].mxu0
  %v732 = vadd.f32 %v612, %v731
  %v733 = vpop.f32.mrb[0].mxu0
  %734 = vmatprep.mubr.bf16.mxu0 %v281
  %735 = vmatmul.mubr.bf16.gmra.mrb[0].mxu0 %v280
  %v736 = vpop.f32.mrb[0].mxu0
  %v737 = vadd.f32 %v617, %v736
  %v738 = vpop.f32.mrb[0].mxu0
  %v739 = vpop.f32.mrb[0].mxu0
  %v740 = vadd.f32 %v620, %v739
  %v741 = vpop.f32.mrb[0].mxu0
  %742 = vmatprep.mubr.bf16.mxu0 %v285
  %743 = vmatmul.mubr.bf16.gmra.mrb[0].mxu0 %v284
  %v744 = vpop.f32.mrb[0].mxu0
  %v745 = vadd.f32 %v625, %v744
  %v746 = vpop.f32.mrb[0].mxu0
  %v747 = vpop.f32.mrb[0].mxu0
  %v748 = vadd.f32 %v628, %v747
  %v749 = vpop.f32.mrb[0].mxu0
  %750 = vmatprep.mubr.bf16.mxu0 %v289
  %751 = vmatmul.mubr.bf16.gmra.mrb[0].mxu0 %v288
  %v752 = vpop.f32.mrb[0].mxu0
  %v753 = vadd.f32 %v633, %v752
  %v754 = vpop.f32.mrb[0].mxu0
  %v755 = vpop.f32.mrb[0].mxu0
  %v756 = vadd.f32 %v636, %v755
  %v757 = vpop.f32.mrb[0].mxu0
  %758 = vmatprep.mubr.bf16.mxu0 %v293
  %759 = vmatmul.mubr.bf16.gmra.mrb[0].mxu0 %v292
  %v760 = vpop.f32.mrb[0].mxu0
  %v761 = vadd.f32 %v641, %v760
  %v762 = vpop.f32.mrb[0].mxu0
  %v763 = vpop.f32.mrb[0].mxu0
  %v764 = vadd.f32 %v644, %v763
  %v765 = vpop.f32.mrb[0].mxu0
  %766 = vmatprep.mubr.bf16.mxu0 %v297
  %767 = vmatmul.mubr.bf16.gmra.mrb[0].mxu0 %v296
  %v768 = vpop.f32.mrb[0].mxu0
  %v769 = vadd.f32 %v649, %v768
  %v770 = vpop.f32.mrb[0].mxu0
  %v771 = vpop.f32.mrb[0].mxu0
  %v772 = vpop.f32.mrb[0].mxu0
  %773 = vdwg.mxu0
  %v774 = vmax.f32 %v689, 0.0
  %v775 = vmax.f32 %v692, 0.0
  %v776 = vmax.f32 %v697, 0.0
  %v777 = vmax.f32 %v700, 0.0
  %v778 = vmax.f32 %v705, 0.0
  %v779 = vmax.f32 %v708, 0.0
  %v780 = vmax.f32 %v713, 0.0
  %v781 = vmax.f32 %v716, 0.0
  %v782 = vmax.f32 %v721, 0.0
  %v783 = vmax.f32 %v724, 0.0
  %v784 = vmax.f32 %v729, 0.0
  %v785 = vmax.f32 %v732, 0.0
  %v786 = vmax.f32 %v737, 0.0
  %v787 = vmax.f32 %v740, 0.0
  %v788 = vmax.f32 %v745, 0.0
  %v789 = vmax.f32 %v748, 0.0
  %v790 = vmax.f32 %v753, 0.0
  %v791 = vmax.f32 %v756, 0.0
  %v792 = vmax.f32 %v761, 0.0
  %v793 = vmax.f32 %v764, 0.0
  %v794 = vmax.f32 %v769, 0.0
  %v795 = vpack.c.bf16 %v775, %v774
  %v796 = vpack.c.bf16 %v777, %v776
  %v797 = vpack.c.bf16 %v779, %v778
  %v798 = vpack.c.bf16 %v781, %v780
  %v799 = vpack.c.bf16 %v783, %v782
  %v800 = vpack.c.bf16 %v785, %v784
  %v801 = vpack.c.bf16 %v787, %v786
  %v802 = vpack.c.bf16 %v789, %v788
  %v803 = vpack.c.bf16 %v791, %v790
  %v804 = vpack.c.bf16 %v793, %v792
  %v805 = vpack.c.bf16 %v794, %v794
  %v817 = vunpack.c.l.b16 %v795
  %v818 = vunpack.c.h.b16 %v795
  %v819 = vunpack.c.l.b16 %v796
  %v820 = vunpack.c.h.b16 %v796
  %v821 = vunpack.c.l.b16 %v797
  %v822 = vunpack.c.h.b16 %v797
  %v823 = vunpack.c.l.b16 %v798
  %v824 = vunpack.c.h.b16 %v798
  %v825 = vunpack.c.l.b16 %v799
  %v826 = vunpack.c.h.b16 %v799
  %v827 = vunpack.c.l.b16 %v800
  %v828 = vunpack.c.h.b16 %v800
  %v829 = vunpack.c.l.b16 %v801
  %v830 = vunpack.c.h.b16 %v801
  %v831 = vunpack.c.l.b16 %v802
  %v832 = vunpack.c.h.b16 %v802
  %v833 = vunpack.c.l.b16 %v803
  %v834 = vunpack.c.h.b16 %v803
  %v835 = vunpack.c.l.b16 %v804
  %v836 = vunpack.c.h.b16 %v804
  %v837 = vunpack.c.l.b16 %v805
  %v838 = vpack.c.b16 %v817, %v817
  %v839 = vpack.c.b16 %v818, %v818
  %v840 = vpack.c.b16 %v819, %v819
  %v841 = vpack.c.b16 %v820, %v820
  %v842 = vpack.c.b16 %v821, %v821
  %v843 = vpack.c.b16 %v822, %v822
  %v844 = vpack.c.b16 %v823, %v823
  %v845 = vpack.c.b16 %v824, %v824
  %v846 = vpack.c.b16 %v825, %v825
  %v847 = vpack.c.b16 %v826, %v826
  %v848 = vpack.c.b16 %v827, %v827
  %v849 = vpack.c.b16 %v828, %v828
  %v850 = vpack.c.b16 %v829, %v829
  %v851 = vpack.c.b16 %v830, %v830
  %v852 = vpack.c.b16 %v831, %v831
  %v853 = vpack.c.b16 %v832, %v832
  %v854 = vpack.c.b16 %v833, %v833
  %v855 = vpack.c.b16 %v834, %v834
  %v856 = vpack.c.b16 %v835, %v835
  %v857 = vpack.c.b16 %v836, %v836
  %v858 = vpack.c.b16 %v837, %v837
  %880 = vst [vmem:[%s3] sm:$0xf] %v838
  %881 = vst [vmem:[%s3 + $0x4] sm:$0xf] %v839
  %882 = vst [vmem:[%s3 + $0x8] sm:$0xf] %v840
  %883 = vst [vmem:[%s3 + $0xc] sm:$0xf] %v841
  %884 = vst [vmem:[%s3 + $0x10] sm:$0xf] %v842
  %885 = vst [vmem:[%s3 + $0x14] sm:$0xf] %v843
  %886 = vst [vmem:[%s3 + $0x18] sm:$0xf] %v844
  %887 = vst [vmem:[%s3 + $0x1c] sm:$0xf] %v845
  %888 = vst [vmem:[%s3 + $0x20] sm:$0xf] %v846
  %889 = vst [vmem:[%s3 + $0x24] sm:$0xf] %v847
  %890 = vst [vmem:[%s3 + $0x28] sm:$0xf] %v848
  %891 = vst [vmem:[%s3 + $0x2c] sm:$0xf] %v849
  %892 = vst [vmem:[%s3 + $0x30] sm:$0xf] %v850
  %893 = vst [vmem:[%s3 + $0x34] sm:$0xf] %v851
  %894 = vst [vmem:[%s3 + $0x38] sm:$0xf] %v852
  %895 = vst [vmem:[%s3 + $0x3c] sm:$0xf] %v853
  %896 = vst [vmem:[%s3 + $0x40] sm:$0xf] %v854
  %897 = vst [vmem:[%s3 + $0x44] sm:$0xf] %v855
  %898 = vst [vmem:[%s3 + $0x48] sm:$0xf] %v856
  %899 = vst [vmem:[%s3 + $0x4c] sm:$0xf] %v857
  %900 = vst [vmem:[%s3 + $0x50] sm:$0x1] %v858
  // Predicated region
  $region14: #{forward.5} parent=0 // pred_check
    _
  $region15: #{forward.5} parent=0 // pred_check_branch
    %902 = sbr.rel (0) target = $region17
  $region16: #{forward.5} parent=0 // pred_region
    _
  $region17: #{forward.5} parent=0 // pred_fallthru
    _
  // Predicated region
  $region18: #{forward.5} parent=0 // pred_check
    _
  $region19: #{forward.5} parent=0 // pred_check_branch
    %904 = sbr.rel (0) target = $region21
  $region20: #{forward.5} parent=0 // pred_region
    _
  $region21: #{forward.5} parent=0 // pred_fallthru
    _

// kernel: forward.6
$region0: #{forward.6}
  #allocation0 [shape = 'u32[]', space=smem, size = 0x4, offset = 0x4, fixed_abs, tag = 'smem constant byte address 0x4 - core index']
  #allocation1 [shape = 'u32[144,128]{1,0:T(1,128)}', space=vmem, size = 0x12000, scoped, tag = 'internal scratch']
  %s0 = inlined_call_operand.vmem [shape: bf16[98,576], index: 0, kind: input, shape index: {}]
  %s1 = inlined_call_operand.vmem [shape: bf16[576,128], index: 1, kind: input, shape index: {}]
  %s2 = inlined_call_operand.vmem [shape: f32[1,128], index: 2, kind: input, shape index: {}]
  %s3 = inlined_call_operand.vmem [shape: bf16[98,128], index: 3, kind: output, shape index: {}]
  %s4 = sld [smem:[#allocation0]]
  $region22: #{forward.6} parent=0
    _
  %s6 = ssub.s32 1, %s4
  %s7 = scalar_select 0, %s6, %s4
  // Predicated region
  $region2: #{forward.6} parent=0 // pred_check
    _
  $region3: #{forward.6} parent=0 // pred_check_branch
    %9 = sbr.rel (0) target = $region5
  $region4: #{forward.6} parent=0 // pred_region
    _
  $region5: #{forward.6} parent=0 // pred_fallthru
    _
  // Predicated region
  $region6: #{forward.6} parent=0 // pred_check
    _
  $region7: #{forward.6} parent=0 // pred_check_branch
    %11 = sbr.rel (0) target = $region9
  $region8: #{forward.6} parent=0 // pred_region
    _
  $region9: #{forward.6} parent=0 // pred_fallthru
    _
  // Predicated region
  $region10: #{forward.6} parent=0 // pred_check
    _
  $region11: #{forward.6} parent=0 // pred_check_branch
    %13 = sbr.rel (0) target = $region13
  $region12: #{forward.6} parent=0 // pred_region
    _
  $region13: #{forward.6} parent=0 // pred_fallthru
    _
  %v15 = vld [vmem:[%s0] sm:$0xff]
  %v16 = vld [vmem:[%s0 + $0x8] sm:$0xff]
  %v17 = vld [vmem:[%s0 + $0x10] sm:$0xf]
  %v18 = vld [vmem:[%s0 + $0x14] sm:$0xff]
  %v19 = vld [vmem:[%s0 + $0x1c] sm:$0xff]
  %v20 = vld [vmem:[%s0 + $0x24] sm:$0xf]
  %v21 = vld [vmem:[%s0 + $0x28] sm:$0xff]
  %v22 = vld [vmem:[%s0 + $0x30] sm:$0xff]
  %v23 = vld [vmem:[%s0 + $0x38] sm:$0xf]
  %v24 = vld [vmem:[%s0 + $0x3c] sm:$0xff]
  %v25 = vld [vmem:[%s0 + $0x44] sm:$0xff]
  %v26 = vld [vmem:[%s0 + $0x4c] sm:$0xf]
  %v27 = vld [vmem:[%s0 + $0x50] sm:$0xff]
  %v28 = vld [vmem:[%s0 + $0x58] sm:$0xff]
  %v29 = vld [vmem:[%s0 + $0x60] sm:$0xf]
  %v30 = vld [vmem:[%s0 + $0x64] sm:$0xff]
  %v31 = vld [vmem:[%s0 + $0x6c] sm:$0xff]
  %v32 = vld [vmem:[%s0 + $0x74] sm:$0xf]
  %v33 = vld [vmem:[%s0 + $0x78] sm:$0xff]
  %v34 = vld [vmem:[%s0 + $0x80] sm:$0xff]
  %v35 = vld [vmem:[%s0 + $0x88] sm:$0xf]
  %v36 = vld [vmem:[%s0 + $0x8c] sm:$0xff]
  %v37 = vld [vmem:[%s0 + $0x94] sm:$0xff]
  %v38 = vld [vmem:[%s0 + $0x9c] sm:$0xf]
  %v39 = vld [vmem:[%s0 + $0xa0] sm:$0xff]
  %v40 = vld [vmem:[%s0 + $0xa8] sm:$0xff]
  %v41 = vld [vmem:[%s0 + $0xb0] sm:$0xf]
  %v42 = vld [vmem:[%s0 + $0xb4] sm:$0xff]
  %v43 = vld [vmem:[%s0 + $0xbc] sm:$0xff]
  %v44 = vld [vmem:[%s0 + $0xc4] sm:$0xf]
  %v45 = vld [vmem:[%s0 + $0xc8] sm:$0xff]
  %v46 = vld [vmem:[%s0 + $0xd0] sm:$0xff]
  %v47 = vld [vmem:[%s0 + $0xd8] sm:$0xf]
  %v48 = vld [vmem:[%s0 + $0xdc] sm:$0xff]
  %v49 = vld [vmem:[%s0 + $0xe4] sm:$0xff]
  %v50 = vld [vmem:[%s0 + $0xec] sm:$0xf]
  %v51 = vld [vmem:[%s0 + $0xf0] sm:$0x11]
  %v52 = vld [vmem:[%s0 + $0xf8] sm:$0x11]
  %v53 = vld [vmem:[%s0 + $0x100] sm:$0x1]
  %v54 = vld [vmem:[%s1] sm:$0xf]
  %v55 = vld [vmem:[%s1 + $0x4] sm:$0xf]
  %v56 = vld [vmem:[%s1 + $0x8] sm:$0xf]
  %v57 = vld [vmem:[%s1 + $0xc] sm:$0xf]
  %v58 = vld [vmem:[%s1 + $0x10] sm:$0xf]
  %v59 = vld [vmem:[%s1 + $0x14] sm:$0xf]
  %v60 = vld [vmem:[%s1 + $0x18] sm:$0xf]
  %v61 = vld [vmem:[%s1 + $0x1c] sm:$0xf]
  %v62 = vld [vmem:[%s1 + $0x20] sm:$0xf]
  %v63 = vld [vmem:[%s1 + $0x24] sm:$0xf]
  %v64 = vld [vmem:[%s1 + $0x28] sm:$0xf]
  %v65 = vld [vmem:[%s1 + $0x2c] sm:$0xf]
  %v66 = vld [vmem:[%s1 + $0x30] sm:$0xf]
  %v67 = vld [vmem:[%s1 + $0x34] sm:$0xf]
  %v68 = vld [vmem:[%s1 + $0x38] sm:$0xf]
  %v69 = vld [vmem:[%s1 + $0x3c] sm:$0xf]
  %v70 = vld [vmem:[%s1 + $0x40] sm:$0xf]
  %v71 = vld [vmem:[%s1 + $0x44] sm:$0xf]
  %v72 = vld [vmem:[%s1 + $0x48] sm:$0xf]
  %v73 = vld [vmem:[%s1 + $0x4c] sm:$0xf]
  %v74 = vld [vmem:[%s1 + $0x50] sm:$0xf]
  %v75 = vld [vmem:[%s1 + $0x54] sm:$0xf]
  %v76 = vld [vmem:[%s1 + $0x58] sm:$0xf]
  %v77 = vld [vmem:[%s1 + $0x5c] sm:$0xf]
  %v78 = vld [vmem:[%s1 + $0x60] sm:$0xf]
  %v79 = vld [vmem:[%s1 + $0x64] sm:$0xf]
  %v80 = vld [vmem:[%s1 + $0x68] sm:$0xf]
  %v81 = vld [vmem:[%s1 + $0x6c] sm:$0xf]
  %v82 = vld [vmem:[%s1 + $0x70] sm:$0xf]
  %v83 = vld [vmem:[%s1 + $0x74] sm:$0xf]
  %v84 = vld [vmem:[%s1 + $0x78] sm:$0xf]
  %v85 = vld [vmem:[%s1 + $0x7c] sm:$0xf]
  %v86 = vld [vmem:[%s1 + $0x80] sm:$0xf]
  %v87 = vld [vmem:[%s1 + $0x84] sm:$0xf]
  %v88 = vld [vmem:[%s1 + $0x88] sm:$0xf]
  %v89 = vld [vmem:[%s1 + $0x8c] sm:$0xf]
  %v90 = vld [vmem:[%s1 + $0x90] sm:$0xf]
  %v91 = vld [vmem:[%s1 + $0x94] sm:$0xf]
  %v92 = vld [vmem:[%s1 + $0x98] sm:$0xf]
  %v93 = vld [vmem:[%s1 + $0x9c] sm:$0xf]
  %v94 = vld [vmem:[%s1 + $0xa0] sm:$0xf]
  %v95 = vld [vmem:[%s1 + $0xa4] sm:$0xf]
  %v96 = vld [vmem:[%s1 + $0xa8] sm:$0xf]
  %v97 = vld [vmem:[%s1 + $0xac] sm:$0xf]
  %v98 = vld [vmem:[%s1 + $0xb0] sm:$0xf]
  %v99 = vld [vmem:[%s1 + $0xb4] sm:$0xf]
  %v100 = vld [vmem:[%s1 + $0xb8] sm:$0xf]
  %v101 = vld [vmem:[%s1 + $0xbc] sm:$0xf]
  %v102 = vld [vmem:[%s1 + $0xc0] sm:$0xf]
  %v103 = vld [vmem:[%s1 + $0xc4] sm:$0xf]
  %v104 = vld [vmem:[%s1 + $0xc8] sm:$0xf]
  %v105 = vld [vmem:[%s1 + $0xcc] sm:$0xf]
  %v106 = vld [vmem:[%s1 + $0xd0] sm:$0xf]
  %v107 = vld [vmem:[%s1 + $0xd4] sm:$0xf]
  %v108 = vld [vmem:[%s1 + $0xd8] sm:$0xf]
  %v109 = vld [vmem:[%s1 + $0xdc] sm:$0xf]
  %v110 = vld [vmem:[%s1 + $0xe0] sm:$0xf]
  %v111 = vld [vmem:[%s1 + $0xe4] sm:$0xf]
  %v112 = vld [vmem:[%s1 + $0xe8] sm:$0xf]
  %v113 = vld [vmem:[%s1 + $0xec] sm:$0xf]
  %v114 = vld [vmem:[%s1 + $0xf0] sm:$0xf]
  %v115 = vld [vmem:[%s1 + $0xf4] sm:$0xf]
  %v116 = vld [vmem:[%s1 + $0xf8] sm:$0xf]
  %v117 = vld [vmem:[%s1 + $0xfc] sm:$0xf]
  %v118 = vld [vmem:[%s1 + $0x100] sm:$0xf]
  %v119 = vld [vmem:[%s1 + $0x104] sm:$0xf]
  %v120 = vld [vmem:[%s1 + $0x108] sm:$0xf]
  %v121 = vld [vmem:[%s1 + $0x10c] sm:$0xf]
  %v122 = vld [vmem:[%s1 + $0x110] sm:$0xf]
  %v123 = vld [vmem:[%s1 + $0x114] sm:$0xf]
  %v124 = vld [vmem:[%s1 + $0x118] sm:$0xf]
  %v125 = vld [vmem:[%s1 + $0x11c] sm:$0xf]
  %v126 = vld [vmem:[%s2] sm:$0x1]
  %v128 = vlaneseq
  %v129 = vshrl.u32 %v128, 7
  %v130 = vsub.s32 0, %v129
  %v131 = vrot.slane %v126, %v130
  %v172 = vunpack.c.l.b16 %v15
  %v173 = vunpack.c.h.b16 %v15
  %v174 = vunpack.c.l.b16 %v16
  %v175 = vunpack.c.h.b16 %v16
  %v176 = vunpack.c.l.b16 %v17
  %v177 = vunpack.c.l.b16 %v18
  %v178 = vunpack.c.h.b16 %v18
  %v179 = vunpack.c.l.b16 %v19
  %v180 = vunpack.c.h.b16 %v19
  %v181 = vunpack.c.l.b16 %v20
  %v182 = vunpack.c.l.b16 %v21
  %v183 = vunpack.c.h.b16 %v21
  %v184 = vunpack.c.l.b16 %v22
  %v185 = vunpack.c.h.b16 %v22
  %v186 = vunpack.c.l.b16 %v23
  %v187 = vunpack.c.l.b16 %v24
  %v188 = vunpack.c.h.b16 %v24
  %v189 = vunpack.c.l.b16 %v25
  %v190 = vunpack.c.h.b16 %v25
  %v191 = vunpack.c.l.b16 %v26
  %v192 = vunpack.c.l.b16 %v27
  %v193 = vunpack.c.h.b16 %v27
  %v194 = vunpack.c.l.b16 %v28
  %v195 = vunpack.c.h.b16 %v28
  %v196 = vunpack.c.l.b16 %v29
  %v197 = vunpack.c.l.b16 %v30
  %v198 = vunpack.c.h.b16 %v30
  %v199 = vunpack.c.l.b16 %v31
  %v200 = vunpack.c.h.b16 %v31
  %v201 = vunpack.c.l.b16 %v32
  %v202 = vunpack.c.l.b16 %v33
  %v203 = vunpack.c.h.b16 %v33
  %v204 = vunpack.c.l.b16 %v34
  %v205 = vunpack.c.h.b16 %v34
  %v206 = vunpack.c.l.b16 %v35
  %v207 = vunpack.c.l.b16 %v36
  %v208 = vunpack.c.h.b16 %v36
  %v209 = vunpack.c.l.b16 %v37
  %v210 = vunpack.c.h.b16 %v37
  %v211 = vunpack.c.l.b16 %v38
  %v212 = vunpack.c.l.b16 %v39
  %v213 = vunpack.c.h.b16 %v39
  %v214 = vunpack.c.l.b16 %v40
  %v215 = vunpack.c.h.b16 %v40
  %v216 = vunpack.c.l.b16 %v41
  %v217 = vunpack.c.l.b16 %v42
  %v218 = vunpack.c.h.b16 %v42
  %v219 = vunpack.c.l.b16 %v43
  %v220 = vunpack.c.h.b16 %v43
  %v221 = vunpack.c.l.b16 %v44
  %v222 = vunpack.c.l.b16 %v45
  %v223 = vunpack.c.h.b16 %v45
  %v224 = vunpack.c.l.b16 %v46
  %v225 = vunpack.c.h.b16 %v46
  %v226 = vunpack.c.l.b16 %v47
  %v227 = vunpack.c.l.b16 %v48
  %v228 = vunpack.c.h.b16 %v48
  %v229 = vunpack.c.l.b16 %v49
  %v230 = vunpack.c.h.b16 %v49
  %v231 = vunpack.c.l.b16 %v50
  %v232 = vunpack.c.l.b16 %v51
  %v233 = vunpack.c.h.b16 %v51
  %v234 = vunpack.c.l.b16 %v52
  %v235 = vunpack.c.h.b16 %v52
  %v236 = vunpack.c.l.b16 %v53
  %v237 = vpack.c.b16 %v177, %v172
  %v238 = vpack.c.b16 %v178, %v173
  %v239 = vpack.c.b16 %v179, %v174
  %v240 = vpack.c.b16 %v180, %v175
  %v241 = vpack.c.b16 %v181, %v176
  %v242 = vpack.c.b16 %v187, %v182
  %v243 = vpack.c.b16 %v188, %v183
  %v244 = vpack.c.b16 %v189, %v184
  %v245 = vpack.c.b16 %v190, %v185
  %v246 = vpack.c.b16 %v191, %v186
  %v247 = vpack.c.b16 %v197, %v192
  %v248 = vpack.c.b16 %v198, %v193
  %v249 = vpack.c.b16 %v199, %v194
  %v250 = vpack.c.b16 %v200, %v195
  %v251 = vpack.c.b16 %v201, %v196
  %v252 = vpack.c.b16 %v207, %v202
  %v253 = vpack.c.b16 %v208, %v203
  %v254 = vpack.c.b16 %v209, %v204
  %v255 = vpack.c.b16 %v210, %v205
  %v256 = vpack.c.b16 %v211, %v206
  %v257 = vpack.c.b16 %v217, %v212
  %v258 = vpack.c.b16 %v218, %v213
  %v259 = vpack.c.b16 %v219, %v214
  %v260 = vpack.c.b16 %v220, %v215
  %v261 = vpack.c.b16 %v221, %v216
  %v262 = vpack.c.b16 %v227, %v222
  %v263 = vpack.c.b16 %v228, %v223
  %v264 = vpack.c.b16 %v229, %v224
  %v265 = vpack.c.b16 %v230, %v225
  %v266 = vpack.c.b16 %v231, %v226
  %v267 = vpack.c.b16 %v232, %v232
  %v268 = vpack.c.b16 %v233, %v233
  %v269 = vpack.c.b16 %v234, %v234
  %v270 = vpack.c.b16 %v235, %v235
  %v271 = vpack.c.b16 %v236, %v236
  %v372 = vunpack.c.l.b16 %v54
  %v373 = vunpack.c.l.b16 %v55
  %v374 = vunpack.c.l.b16 %v56
  %v375 = vunpack.c.l.b16 %v57
  %v376 = vunpack.c.l.b16 %v58
  %v377 = vunpack.c.l.b16 %v59
  %v378 = vunpack.c.l.b16 %v60
  %v379 = vunpack.c.l.b16 %v61
  %v380 = vunpack.c.l.b16 %v62
  %v381 = vunpack.c.l.b16 %v63
  %v382 = vunpack.c.l.b16 %v64
  %v383 = vunpack.c.l.b16 %v65
  %v384 = vunpack.c.l.b16 %v66
  %v385 = vunpack.c.l.b16 %v67
  %v386 = vunpack.c.l.b16 %v68
  %v387 = vunpack.c.l.b16 %v69
  %v388 = vunpack.c.l.b16 %v70
  %v389 = vunpack.c.l.b16 %v71
  %v390 = vunpack.c.l.b16 %v72
  %v391 = vunpack.c.l.b16 %v73
  %v392 = vunpack.c.l.b16 %v74
  %v393 = vunpack.c.l.b16 %v75
  %v394 = vunpack.c.l.b16 %v76
  %v395 = vunpack.c.l.b16 %v77
  %v396 = vunpack.c.l.b16 %v78
  %v397 = vunpack.c.l.b16 %v79
  %v398 = vunpack.c.l.b16 %v80
  %v399 = vunpack.c.l.b16 %v81
  %v400 = vunpack.c.l.b16 %v82
  %v401 = vunpack.c.l.b16 %v83
  %v402 = vunpack.c.l.b16 %v84
  %v403 = vunpack.c.l.b16 %v85
  %v404 = vunpack.c.l.b16 %v86
  %v405 = vunpack.c.l.b16 %v87
  %v406 = vunpack.c.l.b16 %v88
  %v407 = vunpack.c.l.b16 %v89
  %v408 = vunpack.c.l.b16 %v90
  %v409 = vunpack.c.l.b16 %v91
  %v410 = vunpack.c.l.b16 %v92
  %v411 = vunpack.c.l.b16 %v93
  %v412 = vunpack.c.l.b16 %v94
  %v413 = vunpack.c.l.b16 %v95
  %v414 = vunpack.c.l.b16 %v96
  %v415 = vunpack.c.l.b16 %v97
  %v416 = vunpack.c.l.b16 %v98
  %v417 = vunpack.c.l.b16 %v99
  %v418 = vunpack.c.l.b16 %v100
  %v419 = vunpack.c.l.b16 %v101
  %v420 = vunpack.c.l.b16 %v102
  %v421 = vunpack.c.l.b16 %v103
  %v422 = vunpack.c.l.b16 %v104
  %v423 = vunpack.c.l.b16 %v105
  %v424 = vunpack.c.l.b16 %v106
  %v425 = vunpack.c.l.b16 %v107
  %v426 = vunpack.c.l.b16 %v108
  %v427 = vunpack.c.l.b16 %v109
  %v428 = vunpack.c.l.b16 %v110
  %v429 = vunpack.c.l.b16 %v111
  %v430 = vunpack.c.l.b16 %v112
  %v431 = vunpack.c.l.b16 %v113
  %v432 = vunpack.c.l.b16 %v114
  %v433 = vunpack.c.l.b16 %v115
  %v434 = vunpack.c.l.b16 %v116
  %v435 = vunpack.c.l.b16 %v117
  %v436 = vunpack.c.l.b16 %v118
  %v437 = vunpack.c.l.b16 %v119
  %v438 = vunpack.c.l.b16 %v120
  %v439 = vunpack.c.l.b16 %v121
  %v440 = vunpack.c.l.b16 %v122
  %v441 = vunpack.c.l.b16 %v123
  %v442 = vunpack.c.l.b16 %v124
  %v443 = vunpack.c.l.b16 %v125
  %v444 = vpack.c.b16 %v373, %v372
  %v445 = vpack.c.b16 %v375, %v374
  %v446 = vpack.c.b16 %v377, %v376
  %v447 = vpack.c.b16 %v379, %v378
  %v448 = vpack.c.b16 %v381, %v380
  %v449 = vpack.c.b16 %v383, %v382
  %v450 = vpack.c.b16 %v385, %v384
  %v451 = vpack.c.b16 %v387, %v386
  %v452 = vpack.c.b16 %v389, %v388
  %v453 = vpack.c.b16 %v391, %v390
  %v454 = vpack.c.b16 %v393, %v392
  %v455 = vpack.c.b16 %v395, %v394
  %v456 = vpack.c.b16 %v397, %v396
  %v457 = vpack.c.b16 %v399, %v398
  %v458 = vpack.c.b16 %v401, %v400
  %v459 = vpack.c.b16 %v403, %v402
  %v460 = vpack.c.b16 %v405, %v404
  %v461 = vpack.c.b16 %v407, %v406
  %v462 = vpack.c.b16 %v409, %v408
  %v463 = vpack.c.b16 %v411, %v410
  %v464 = vpack.c.b16 %v413, %v412
  %v465 = vpack.c.b16 %v415, %v414
  %v466 = vpack.c.b16 %v417, %v416
  %v467 = vpack.c.b16 %v419, %v418
  %v468 = vpack.c.b16 %v421, %v420
  %v469 = vpack.c.b16 %v423, %v422
  %v470 = vpack.c.b16 %v425, %v424
  %v471 = vpack.c.b16 %v427, %v426
  %v472 = vpack.c.b16 %v429, %v428
  %v473 = vpack.c.b16 %v431, %v430
  %v474 = vpack.c.b16 %v433, %v432
  %v475 = vpack.c.b16 %v435, %v434
  %v476 = vpack.c.b16 %v437, %v436
  %v477 = vpack.c.b16 %v439, %v438
  %v478 = vpack.c.b16 %v441, %v440
  %v479 = vpack.c.b16 %v443, %v442
  %vm516 = vcmask 523264
  %v518 = vsel %vm516, %v241, 0
  %v521 = vsel %vm516, %v246, 0
  %v524 = vsel %vm516, %v251, 0
  %v527 = vsel %vm516, %v256, 0
  %v530 = vsel %vm516, %v261, 0
  %v533 = vsel %vm516, %v266, 0
  %v536 = vsel %vm516, %v271, 0
  %538 = vmatprep.subr.bf16.mxu0 0
  %539 = vmatpush1.bf16.msra.mxu0 %v444
  %540 = vmatprep.subr.bf16.mxu0 0
  %541 = vmatpush1.bf16.msra.mxu0 %v445
  %542 = vmatprep.subr.bf16.mxu0 0
  %543 = vmatpush1.bf16.msra.mxu0 %v446
  %544 = vmatprep.subr.bf16.mxu0 0
  %545 = vmatpush1.bf16.msra.mxu0 %v447
  %546 = vmatprep.subr.bf16.mxu0 0
  %547 = vmatpush1.bf16.msra.mxu0 %v448
  %548 = vmatprep.subr.bf16.mxu0 0
  %549 = vmatpush1.bf16.msra.mxu0 %v449
  %550 = vmatprep.subr.bf16.mxu0 0
  %551 = vmatpush1.bf16.msra.mxu0 %v450
  %552 = vmatprep.subr.bf16.mxu0 0
  %553 = vmatpush1.bf16.msra.mxu0 %v451
  %554 = vmatprep.subr.bf16.mxu0 0
  %555 = vmatpush1.bf16.msra.mxu0 %v452
  %556 = vmatprep.subr.bf16.mxu0 0
  %557 = vmatpush1.bf16.msra.mxu0 %v453
  %558 = vmatprep.subr.bf16.mxu0 0
  %559 = vmatpush1.bf16.msra.mxu0 %v454
  %560 = vmatprep.subr.bf16.mxu0 0
  %561 = vmatpush1.bf16.msra.mxu0 %v455
  %562 = vmatprep.subr.bf16.mxu0 0
  %563 = vmatpush1.bf16.msra.mxu0 %v456
  %564 = vmatprep.subr.bf16.mxu0 0
  %565 = vmatpush1.bf16.msra.mxu0 %v457
  %566 = vmatprep.subr.bf16.mxu0 0
  %567 = vmatpush1.bf16.msra.mxu0 %v458
  %568 = vmatprep.subr.bf16.mxu0 0
  %569 = vmatpush1.bf16.msra.mxu0 %v459
  %570 = vmatprep.mubr.bf16.mxu0 %v238
  %571 = vmatmul.mubr.bf16.gmra.mrb[0].mxu0 %v237
  %v572 = vpop.f32.mrb[0].mxu0
  %v573 = vadd.f32 %v131, %v572
  %v574 = vpop.f32.mrb[0].mxu0
  %v575 = vpop.f32.mrb[0].mxu0
  %v576 = vadd.f32 %v131, %v575
  %v577 = vpop.f32.mrb[0].mxu0
  %578 = vmatprep.mubr.bf16.mxu0 %v243
  %579 = vmatmul.mubr.bf16.gmra.mrb[0].mxu0 %v242
  %v580 = vpop.f32.mrb[0].mxu0
  %v581 = vadd.f32 %v131, %v580
  %v582 = vpop.f32.mrb[0].mxu0
  %v583 = vpop.f32.mrb[0].mxu0
  %v584 = vadd.f32 %v131, %v583
  %v585 = vpop.f32.mrb[0].mxu0
  %586 = vmatprep.mubr.bf16.mxu0 %v248
  %587 = vmatmul.mubr.bf16.gmra.mrb[0].mxu0 %v247
  %v588 = vpop.f32.mrb[0].mxu0
  %v589 = vadd.f32 %v131, %v588
  %v590 = vpop.f32.mrb[0].mxu0
  %v591 = vpop.f32.mrb[0].mxu0
  %v592 = vadd.f32 %v131, %v591
  %v593 = vpop.f32.mrb[0].mxu0
  %594 = vmatprep.mubr.bf16.mxu0 %v253
  %595 = vmatmul.mubr.bf16.gmra.mrb[0].mxu0 %v252
  %v596 = vpop.f32.mrb[0].mxu0
  %v597 = vadd.f32 %v131, %v596
  %v598 = vpop.f32.mrb[0].mxu0
  %v599 = vpop.f32.mrb[0].mxu0
  %v600 = vadd.f32 %v131, %v599
  %v601 = vpop.f32.mrb[0].mxu0
  %602 = vmatprep.mubr.bf16.mxu0 %v258
  %603 = vmatmul.mubr.bf16.gmra.mrb[0].mxu0 %v257
  %v604 = vpop.f32.mrb[0].mxu0
  %v605 = vadd.f32 %v131, %v604
  %v606 = vpop.f32.mrb[0].mxu0
  %v607 = vpop.f32.mrb[0].mxu0
  %v608 = vadd.f32 %v131, %v607
  %v609 = vpop.f32.mrb[0].mxu0
  %610 = vmatprep.mubr.bf16.mxu0 %v263
  %611 = vmatmul.mubr.bf16.gmra.mrb[0].mxu0 %v262
  %v612 = vpop.f32.mrb[0].mxu0
  %v613 = vadd.f32 %v131, %v612
  %v614 = vpop.f32.mrb[0].mxu0
  %v615 = vpop.f32.mrb[0].mxu0
  %v616 = vadd.f32 %v131, %v615
  %v617 = vpop.f32.mrb[0].mxu0
  %618 = vmatprep.mubr.bf16.mxu0 %v268
  %619 = vmatmul.mubr.bf16.gmra.mrb[0].mxu0 %v267
  %v620 = vpop.f32.mrb[0].mxu0
  %v621 = vadd.f32 %v131, %v620
  %v622 = vpop.f32.mrb[0].mxu0
  %v623 = vpop.f32.mrb[0].mxu0
  %v624 = vpop.f32.mrb[0].mxu0
  %625 = vdwg.mxu0
  %626 = vmatprep.subr.bf16.mxu0 0
  %627 = vmatpush1.bf16.msra.mxu0 %v460
  %628 = vmatprep.subr.bf16.mxu0 0
  %629 = vmatpush1.bf16.msra.mxu0 %v461
  %630 = vmatprep.subr.bf16.mxu0 0
  %631 = vmatpush1.bf16.msra.mxu0 %v462
  %632 = vmatprep.subr.bf16.mxu0 0
  %633 = vmatpush1.bf16.msra.mxu0 %v463
  %634 = vmatprep.subr.bf16.mxu0 0
  %635 = vmatpush1.bf16.msra.mxu0 %v464
  %636 = vmatprep.subr.bf16.mxu0 0
  %637 = vmatpush1.bf16.msra.mxu0 %v465
  %638 = vmatprep.subr.bf16.mxu0 0
  %639 = vmatpush1.bf16.msra.mxu0 %v466
  %640 = vmatprep.subr.bf16.mxu0 0
  %641 = vmatpush1.bf16.msra.mxu0 %v467
  %642 = vmatprep.subr.bf16.mxu0 0
  %643 = vmatpush1.bf16.msra.mxu0 %v468
  %644 = vmatprep.subr.bf16.mxu0 0
  %645 = vmatpush1.bf16.msra.mxu0 %v469
  %646 = vmatprep.subr.bf16.mxu0 0
  %647 = vmatpush1.bf16.msra.mxu0 %v470
  %648 = vmatprep.subr.bf16.mxu0 0
  %649 = vmatpush1.bf16.msra.mxu0 %v471
  %650 = vmatprep.subr.bf16.mxu0 0
  %651 = vmatpush1.bf16.msra.mxu0 %v472
  %652 = vmatprep.subr.bf16.mxu0 0
  %653 = vmatpush1.bf16.msra.mxu0 %v473
  %654 = vmatprep.subr.bf16.mxu0 0
  %655 = vmatpush1.bf16.msra.mxu0 %v474
  %656 = vmatprep.subr.bf16.mxu0 0
  %657 = vmatpush1.bf16.msra.mxu0 %v475
  %658 = vmatprep.mubr.bf16.mxu0 %v240
  %659 = vmatmul.mubr.bf16.gmra.mrb[0].mxu0 %v239
  %v660 = vpop.f32.mrb[0].mxu0
  %v661 = vadd.f32 %v573, %v660
  %v662 = vpop.f32.mrb[0].mxu0
  %v663 = vpop.f32.mrb[0].mxu0
  %v664 = vadd.f32 %v576, %v663
  %v665 = vpop.f32.mrb[0].mxu0
  %666 = vmatprep.mubr.bf16.mxu0 %v245
  %667 = vmatmul.mubr.bf16.gmra.mrb[0].mxu0 %v244
  %v668 = vpop.f32.mrb[0].mxu0
  %v669 = vadd.f32 %v581, %v668
  %v670 = vpop.f32.mrb[0].mxu0
  %v671 = vpop.f32.mrb[0].mxu0
  %v672 = vadd.f32 %v584, %v671
  %v673 = vpop.f32.mrb[0].mxu0
  %674 = vmatprep.mubr.bf16.mxu0 %v250
  %675 = vmatmul.mubr.bf16.gmra.mrb[0].mxu0 %v249
  %v676 = vpop.f32.mrb[0].mxu0
  %v677 = vadd.f32 %v589, %v676
  %v678 = vpop.f32.mrb[0].mxu0
  %v679 = vpop.f32.mrb[0].mxu0
  %v680 = vadd.f32 %v592, %v679
  %v681 = vpop.f32.mrb[0].mxu0
  %682 = vmatprep.mubr.bf16.mxu0 %v255
  %683 = vmatmul.mubr.bf16.gmra.mrb[0].mxu0 %v254
  %v684 = vpop.f32.mrb[0].mxu0
  %v685 = vadd.f32 %v597, %v684
  %v686 = vpop.f32.mrb[0].mxu0
  %v687 = vpop.f32.mrb[0].mxu0
  %v688 = vadd.f32 %v600, %v687
  %v689 = vpop.f32.mrb[0].mxu0
  %690 = vmatprep.mubr.bf16.mxu0 %v260
  %691 = vmatmul.mubr.bf16.gmra.mrb[0].mxu0 %v259
  %v692 = vpop.f32.mrb[0].mxu0
  %v693 = vadd.f32 %v605, %v692
  %v694 = vpop.f32.mrb[0].mxu0
  %v695 = vpop.f32.mrb[0].mxu0
  %v696 = vadd.f32 %v608, %v695
  %v697 = vpop.f32.mrb[0].mxu0
  %698 = vmatprep.mubr.bf16.mxu0 %v265
  %699 = vmatmul.mubr.bf16.gmra.mrb[0].mxu0 %v264
  %v700 = vpop.f32.mrb[0].mxu0
  %v701 = vadd.f32 %v613, %v700
  %v702 = vpop.f32.mrb[0].mxu0
  %v703 = vpop.f32.mrb[0].mxu0
  %v704 = vadd.f32 %v616, %v703
  %v705 = vpop.f32.mrb[0].mxu0
  %706 = vmatprep.mubr.bf16.mxu0 %v270
  %707 = vmatmul.mubr.bf16.gmra.mrb[0].mxu0 %v269
  %v708 = vpop.f32.mrb[0].mxu0
  %v709 = vadd.f32 %v621, %v708
  %v710 = vpop.f32.mrb[0].mxu0
  %v711 = vpop.f32.mrb[0].mxu0
  %v712 = vpop.f32.mrb[0].mxu0
  %713 = vdwg.mxu0
  %714 = vmatprep.subr.bf16.mxu0 0
  %715 = vmatpush1.bf16.msra.mxu0 %v476
  %716 = vmatprep.subr.bf16.mxu0 0
  %717 = vmatpush1.bf16.msra.mxu0 %v477
  %718 = vmatprep.subr.bf16.mxu0 0
  %719 = vmatpush1.bf16.msra.mxu0 %v478
  %720 = vmatprep.subr.bf16.mxu0 0
  %721 = vmatpush1.bf16.msra.mxu0 %v479
  %722 = vmatprep.subr.bf16.mxu0 0
  %723 = vmatpush1.bf16.msra.mxu0 0
  %724 = vmatprep.subr.bf16.mxu0 0
  %725 = vmatpush1.bf16.msra.mxu0 0
  %726 = vmatprep.subr.bf16.mxu0 0
  %727 = vmatpush1.bf16.msra.mxu0 0
  %728 = vmatprep.subr.bf16.mxu0 0
  %729 = vmatpush1.bf16.msra.mxu0 0
  %730 = vmatprep.subr.bf16.mxu0 0
  %731 = vmatpush1.bf16.msra.mxu0 0
  %732 = vmatprep.subr.bf16.mxu0 0
  %733 = vmatpush1.bf16.msra.mxu0 0
  %734 = vmatprep.subr.bf16.mxu0 0
  %735 = vmatpush1.bf16.msra.mxu0 0
  %736 = vmatprep.subr.bf16.mxu0 0
  %737 = vmatpush1.bf16.msra.mxu0 0
  %738 = vmatprep.subr.bf16.mxu0 0
  %739 = vmatpush1.bf16.msra.mxu0 0
  %740 = vmatprep.subr.bf16.mxu0 0
  %741 = vmatpush1.bf16.msra.mxu0 0
  %742 = vmatprep.subr.bf16.mxu0 0
  %743 = vmatpush1.bf16.msra.mxu0 0
  %744 = vmatprep.subr.bf16.mxu0 0
  %745 = vmatpush1.bf16.msra.mxu0 0
  %746 = vmatprep.mubr.bf16.mxu0 0
  %747 = vmatmul.mubr.bf16.gmra.mrb[0].mxu0 %v518
  %v748 = vpop.f32.mrb[0].mxu0
  %v749 = vadd.f32 %v661, %v748
  %v750 = vpop.f32.mrb[0].mxu0
  %v751 = vpop.f32.mrb[0].mxu0
  %v752 = vadd.f32 %v664, %v751
  %v753 = vpop.f32.mrb[0].mxu0
  %754 = vmatprep.mubr.bf16.mxu0 0
  %755 = vmatmul.mubr.bf16.gmra.mrb[0].mxu0 %v521
  %v756 = vpop.f32.mrb[0].mxu0
  %v757 = vadd.f32 %v669, %v756
  %v758 = vpop.f32.mrb[0].mxu0
  %v759 = vpop.f32.mrb[0].mxu0
  %v760 = vadd.f32 %v672, %v759
  %v761 = vpop.f32.mrb[0].mxu0
  %762 = vmatprep.mubr.bf16.mxu0 0
  %763 = vmatmul.mubr.bf16.gmra.mrb[0].mxu0 %v524
  %v764 = vpop.f32.mrb[0].mxu0
  %v765 = vadd.f32 %v677, %v764
  %v766 = vpop.f32.mrb[0].mxu0
  %v767 = vpop.f32.mrb[0].mxu0
  %v768 = vadd.f32 %v680, %v767
  %v769 = vpop.f32.mrb[0].mxu0
  %770 = vmatprep.mubr.bf16.mxu0 0
  %771 = vmatmul.mubr.bf16.gmra.mrb[0].mxu0 %v527
  %v772 = vpop.f32.mrb[0].mxu0
  %v773 = vadd.f32 %v685, %v772
  %v774 = vpop.f32.mrb[0].mxu0
  %v775 = vpop.f32.mrb[0].mxu0
  %v776 = vadd.f32 %v688, %v775
  %v777 = vpop.f32.mrb[0].mxu0
  %778 = vmatprep.mubr.bf16.mxu0 0
  %779 = vmatmul.mubr.bf16.gmra.mrb[0].mxu0 %v530
  %v780 = vpop.f32.mrb[0].mxu0
  %v781 = vadd.f32 %v693, %v780
  %v782 = vpop.f32.mrb[0].mxu0
  %v783 = vpop.f32.mrb[0].mxu0
  %v784 = vadd.f32 %v696, %v783
  %v785 = vpop.f32.mrb[0].mxu0
  %786 = vmatprep.mubr.bf16.mxu0 0
  %787 = vmatmul.mubr.bf16.gmra.mrb[0].mxu0 %v533
  %v788 = vpop.f32.mrb[0].mxu0
  %v789 = vadd.f32 %v701, %v788
  %v790 = vpop.f32.mrb[0].mxu0
  %v791 = vpop.f32.mrb[0].mxu0
  %v792 = vadd.f32 %v704, %v791
  %v793 = vpop.f32.mrb[0].mxu0
  %794 = vmatprep.mubr.bf16.mxu0 0
  %795 = vmatmul.mubr.bf16.gmra.mrb[0].mxu0 %v536
  %v796 = vpop.f32.mrb[0].mxu0
  %v797 = vadd.f32 %v709, %v796
  %v798 = vpop.f32.mrb[0].mxu0
  %v799 = vpop.f32.mrb[0].mxu0
  %v800 = vpop.f32.mrb[0].mxu0
  %801 = vdwg.mxu0
  %v802 = vmax.f32 %v749, 0.0
  %v803 = vmax.f32 %v752, 0.0
  %v804 = vmax.f32 %v757, 0.0
  %v805 = vmax.f32 %v760, 0.0
  %v806 = vmax.f32 %v765, 0.0
  %v807 = vmax.f32 %v768, 0.0
  %v808 = vmax.f32 %v773, 0.0
  %v809 = vmax.f32 %v776, 0.0
  %v810 = vmax.f32 %v781, 0.0
  %v811 = vmax.f32 %v784, 0.0
  %v812 = vmax.f32 %v789, 0.0
  %v813 = vmax.f32 %v792, 0.0
  %v814 = vmax.f32 %v797, 0.0
  %v815 = vpack.c.bf16 %v803, %v802
  %v816 = vpack.c.bf16 %v805, %v804
  %v817 = vpack.c.bf16 %v807, %v806
  %v818 = vpack.c.bf16 %v809, %v808
  %v819 = vpack.c.bf16 %v811, %v810
  %v820 = vpack.c.bf16 %v813, %v812
  %v821 = vpack.c.bf16 %v814, %v814
  %v829 = vunpack.c.l.b16 %v815
  %v830 = vunpack.c.h.b16 %v815
  %v831 = vunpack.c.l.b16 %v816
  %v832 = vunpack.c.h.b16 %v816
  %v833 = vunpack.c.l.b16 %v817
  %v834 = vunpack.c.h.b16 %v817
  %v835 = vunpack.c.l.b16 %v818
  %v836 = vunpack.c.h.b16 %v818
  %v837 = vunpack.c.l.b16 %v819
  %v838 = vunpack.c.h.b16 %v819
  %v839 = vunpack.c.l.b16 %v820
  %v840 = vunpack.c.h.b16 %v820
  %v841 = vunpack.c.l.b16 %v821
  %v842 = vpack.c.b16 %v829, %v829
  %v843 = vpack.c.b16 %v830, %v830
  %v844 = vpack.c.b16 %v831, %v831
  %v845 = vpack.c.b16 %v832, %v832
  %v846 = vpack.c.b16 %v833, %v833
  %v847 = vpack.c.b16 %v834, %v834
  %v848 = vpack.c.b16 %v835, %v835
  %v849 = vpack.c.b16 %v836, %v836
  %v850 = vpack.c.b16 %v837, %v837
  %v851 = vpack.c.b16 %v838, %v838
  %v852 = vpack.c.b16 %v839, %v839
  %v853 = vpack.c.b16 %v840, %v840
  %v854 = vpack.c.b16 %v841, %v841
  %868 = vst [vmem:[%s3] sm:$0xf] %v842
  %869 = vst [vmem:[%s3 + $0x4] sm:$0xf] %v843
  %870 = vst [vmem:[%s3 + $0x8] sm:$0xf] %v844
  %871 = vst [vmem:[%s3 + $0xc] sm:$0xf] %v845
  %872 = vst [vmem:[%s3 + $0x10] sm:$0xf] %v846
  %873 = vst [vmem:[%s3 + $0x14] sm:$0xf] %v847
  %874 = vst [vmem:[%s3 + $0x18] sm:$0xf] %v848
  %875 = vst [vmem:[%s3 + $0x1c] sm:$0xf] %v849
  %876 = vst [vmem:[%s3 + $0x20] sm:$0xf] %v850
  %877 = vst [vmem:[%s3 + $0x24] sm:$0xf] %v851
  %878 = vst [vmem:[%s3 + $0x28] sm:$0xf] %v852
  %879 = vst [vmem:[%s3 + $0x2c] sm:$0xf] %v853
  %880 = vst [vmem:[%s3 + $0x30] sm:$0x1] %v854
  // Predicated region
  $region14: #{forward.6} parent=0 // pred_check
    _
  $region15: #{forward.6} parent=0 // pred_check_branch
    %882 = sbr.rel (0) target = $region17
  $region16: #{forward.6} parent=0 // pred_region
    _
  $region17: #{forward.6} parent=0 // pred_fallthru
    _
  // Predicated region
  $region18: #{forward.6} parent=0 // pred_check
    _
  $region19: #{forward.6} parent=0 // pred_check_branch
    %884 = sbr.rel (0) target = $region21
  $region20: #{forward.6} parent=0 // pred_region
    _
  $region21: #{forward.6} parent=0 // pred_fallthru
    _

// kernel: forward.7
$region0: #{forward.7}
  #allocation0 [shape = 'u32[]', space=smem, size = 0x4, offset = 0x4, fixed_abs, tag = 'smem constant byte address 0x4 - core index']
  #allocation1 [shape = 'u32[144,128]{1,0:T(1,128)}', space=vmem, size = 0x12000, scoped, tag = 'internal scratch']
  %s0 = inlined_call_operand.vmem [shape: bf16[2,3136], index: 0, kind: input, shape index: {}]
  %s1 = inlined_call_operand.vmem [shape: bf16[3136,512], index: 1, kind: input, shape index: {}]
  %s2 = inlined_call_operand.vmem [shape: f32[1,512], index: 2, kind: input, shape index: {}]
  %s3 = inlined_call_operand.vmem [shape: bf16[512,128], index: 3, kind: input, shape index: {}]
  %s4 = inlined_call_operand.vmem [shape: f32[1,128], index: 4, kind: input, shape index: {}]
  %s5 = inlined_call_operand.hbm [shape: f32[2,128], index: 5, kind: output, shape index: {}]
  %s6 = sld [smem:[#allocation0]]
  $region30: #{forward.7} parent=0
    _
  %s8 = ssub.s32 1, %s6
  %s9 = scalar_select 0, %s8, %s6
  $region1: #{forward.7} parent=0
    #allocation2 [shape = 'u8[1024]{0}', space=vmem, size = 0x400, scoped, tag = 'output window, operand 0, single buffered']
    #allocation3 [shape = 's32[1]{0}', space=sflag, size = 0x4, scoped, tag = 'scoped memory for forward.7']
    %10 = vsyncpa [#allocation3], 0
    // Predicated region
    $region2: #{forward.7} parent=1 // pred_check
      _
    $region3: #{forward.7} parent=1 // pred_check_branch
      %12 = sbr.rel (0) target = $region5
    $region4: #{forward.7} parent=1 // pred_region
      _
    $region5: #{forward.7} parent=1 // pred_fallthru
      _
    // Predicated region
    $region6: #{forward.7} parent=1 // pred_check
      _
    $region7: #{forward.7} parent=1 // pred_check_branch
      %14 = sbr.rel (0) target = $region9
    $region8: #{forward.7} parent=1 // pred_region
      _
    $region9: #{forward.7} parent=1 // pred_fallthru
      _
    // Predicated region
    $region10: #{forward.7} parent=1 // pred_check
      _
    $region11: #{forward.7} parent=1 // pred_check_branch
      %16 = sbr.rel (0) target = $region13
    $region12: #{forward.7} parent=1 // pred_region
      _
    $region13: #{forward.7} parent=1 // pred_fallthru
      _
    // Predicated region
    $region14: #{forward.7} parent=1 // pred_check
      _
    $region15: #{forward.7} parent=1 // pred_check_branch
      %18 = sbr.rel (0) target = $region17
    $region16: #{forward.7} parent=1 // pred_region
      _
    $region17: #{forward.7} parent=1 // pred_fallthru
      _
    // Predicated region
    $region18: #{forward.7} parent=1 // pred_check
      _
    $region19: #{forward.7} parent=1 // pred_check_branch
      %20 = sbr.rel (0) target = $region21
    $region20: #{forward.7} parent=1 // pred_region
      _
    $region21: #{forward.7} parent=1 // pred_fallthru
      _
    %v22 = vld [vmem:[%s0] sm:$0xff]
    %v23 = vld [vmem:[%s0 + $0x8] sm:$0xff]
    %v24 = vld [vmem:[%s0 + $0x10] sm:$0xff]
    %v25 = vld [vmem:[%s0 + $0x18] sm:$0x1]
    %v26 = vld [vmem:[%s1] sm:$0xff]
    %v27 = vld [vmem:[%s1 + $0x8] sm:$0xff]
    %v28 = vld [vmem:[%s1 + $0x10] sm:$0xff]
    %v29 = vld [vmem:[%s1 + $0x18] sm:$0xff]
    %v30 = vld [vmem:[%s1 + $0x20] sm:$0xff]
    %v31 = vld [vmem:[%s1 + $0x28] sm:$0xff]
    %v32 = vld [vmem:[%s1 + $0x30] sm:$0xff]
    %v33 = vld [vmem:[%s1 + $0x38] sm:$0xff]
    %v34 = vld [vmem:[%s1 + $0x40] sm:$0xff]
    %v35 = vld [vmem:[%s1 + $0x48] sm:$0xff]
    %v36 = vld [vmem:[%s1 + $0x50] sm:$0xff]
    %v37 = vld [vmem:[%s1 + $0x58] sm:$0xff]
    %v38 = vld [vmem:[%s1 + $0x60] sm:$0xff]
    %v39 = vld [vmem:[%s1 + $0x68] sm:$0xff]
    %v40 = vld [vmem:[%s1 + $0x70] sm:$0xff]
    %v41 = vld [vmem:[%s1 + $0x78] sm:$0xff]
    %v42 = vld [vmem:[%s1 + $0x80] sm:$0xff]
    %v43 = vld [vmem:[%s1 + $0x88] sm:$0xff]
    %v44 = vld [vmem:[%s1 + $0x90] sm:$0xff]
    %v45 = vld [vmem:[%s1 + $0x98] sm:$0xff]
    %v46 = vld [vmem:[%s1 + $0xa0] sm:$0xff]
    %v47 = vld [vmem:[%s1 + $0xa8] sm:$0xff]
    %v48 = vld [vmem:[%s1 + $0xb0] sm:$0xff]
    %v49 = vld [vmem:[%s1 + $0xb8] sm:$0xff]
    %v50 = vld [vmem:[%s1 + $0xc0] sm:$0xff]
    %v51 = vld [vmem:[%s1 + $0xc8] sm:$0xff]
    %v52 = vld [vmem:[%s1 + $0xd0] sm:$0xff]
    %v53 = vld [vmem:[%s1 + $0xd8] sm:$0xff]
    %v54 = vld [vmem:[%s1 + $0xe0] sm:$0xff]
    %v55 = vld [vmem:[%s1 + $0xe8] sm:$0xff]
    %v56 = vld [vmem:[%s1 + $0xf0] sm:$0xff]
    %v57 = vld [vmem:[%s1 + $0xf8] sm:$0xff]
    %v58 = vld [vmem:[%s1 + $0x100] sm:$0xff]
    %v59 = vld [vmem:[%s1 + $0x108] sm:$0xff]
    %v60 = vld [vmem:[%s1 + $0x110] sm:$0xff]
    %v61 = vld [vmem:[%s1 + $0x118] sm:$0xff]
    %v62 = vld [vmem:[%s1 + $0x120] sm:$0xff]
    %v63 = vld [vmem:[%s1 + $0x128] sm:$0xff]
    %v64 = vld [vmem:[%s1 + $0x130] sm:$0xff]
    %v65 = vld [vmem:[%s1 + $0x138] sm:$0xff]
    %v66 = vld [vmem:[%s1 + $0x140] sm:$0xff]
    %v67 = vld [vmem:[%s1 + $0x148] sm:$0xff]
    %v68 = vld [vmem:[%s1 + $0x150] sm:$0xff]
    %v69 = vld [vmem:[%s1 + $0x158] sm:$0xff]
    %v70 = vld [vmem:[%s1 + $0x160] sm:$0xff]
    %v71 = vld [vmem:[%s1 + $0x168] sm:$0xff]
    %v72 = vld [vmem:[%s1 + $0x170] sm:$0xff]
    %v73 = vld [vmem:[%s1 + $0x178] sm:$0xff]
    %v74 = vld [vmem:[%s1 + $0x180] sm:$0xff]
    %v75 = vld [vmem:[%s1 + $0x188] sm:$0xff]
    %v76 = vld [vmem:[%s1 + $0x190] sm:$0xff]
    %v77 = vld [vmem:[%s1 + $0x198] sm:$0xff]
    %v78 = vld [vmem:[%s1 + $0x1a0] sm:$0xff]
    %v79 = vld [vmem:[%s1 + $0x1a8] sm:$0xff]
    %v80 = vld [vmem:[%s1 + $0x1b0] sm:$0xff]
    %v81 = vld [vmem:[%s1 + $0x1b8] sm:$0xff]
    %v82 = vld [vmem:[%s1 + $0x1c0] sm:$0xff]
    %v83 = vld [vmem:[%s1 + $0x1c8] sm:$0xff]
    %v84 = vld [vmem:[%s1 + $0x1d0] sm:$0xff]
    %v85 = vld [vmem:[%s1 + $0x1d8] sm:$0xff]
    %v86 = vld [vmem:[%s1 + $0x1e0] sm:$0xff]
    %v87 = vld [vmem:[%s1 + $0x1e8] sm:$0xff]
    %v88 = vld [vmem:[%s1 + $0x1f0] sm:$0xff]
    %v89 = vld [vmem:[%s1 + $0x1f8] sm:$0xff]
    %v90 = vld [vmem:[%s1 + $0x200] sm:$0xff]
    %v91 = vld [vmem:[%s1 + $0x208] sm:$0xff]
    %v92 = vld [vmem:[%s1 + $0x210] sm:$0xff]
    %v93 = vld [vmem:[%s1 + $0x218] sm:$0xff]
    %v94 = vld [vmem:[%s1 + $0x220] sm:$0xff]
    %v95 = vld [vmem:[%s1 + $0x228] sm:$0xff]
    %v96 = vld [vmem:[%s1 + $0x230] sm:$0xff]
    %v97 = vld [vmem:[%s1 + $0x238] sm:$0xff]
    %v98 = vld [vmem:[%s1 + $0x240] sm:$0xff]
    %v99 = vld [vmem:[%s1 + $0x248] sm:$0xff]
    %v100 = vld [vmem:[%s1 + $0x250] sm:$0xff]
    %v101 = vld [vmem:[%s1 + $0x258] sm:$0xff]
    %v102 = vld [vmem:[%s1 + $0x260] sm:$0xff]
    %v103 = vld [vmem:[%s1 + $0x268] sm:$0xff]
    %v104 = vld [vmem:[%s1 + $0x270] sm:$0xff]
    %v105 = vld [vmem:[%s1 + $0x278] sm:$0xff]
    %v106 = vld [vmem:[%s1 + $0x280] sm:$0xff]
    %v107 = vld [vmem:[%s1 + $0x288] sm:$0xff]
    %v108 = vld [vmem:[%s1 + $0x290] sm:$0xff]
    %v109 = vld [vmem:[%s1 + $0x298] sm:$0xff]
    %v110 = vld [vmem:[%s1 + $0x2a0] sm:$0xff]
    %v111 = vld [vmem:[%s1 + $0x2a8] sm:$0xff]
    %v112 = vld [vmem:[%s1 + $0x2b0] sm:$0xff]
    %v113 = vld [vmem:[%s1 + $0x2b8] sm:$0xff]
    %v114 = vld [vmem:[%s1 + $0x2c0] sm:$0xff]
    %v115 = vld [vmem:[%s1 + $0x2c8] sm:$0xff]
    %v116 = vld [vmem:[%s1 + $0x2d0] sm:$0xff]
    %v117 = vld [vmem:[%s1 + $0x2d8] sm:$0xff]
    %v118 = vld [vmem:[%s1 + $0x2e0] sm:$0xff]
    %v119 = vld [vmem:[%s1 + $0x2e8] sm:$0xff]
    %v120 = vld [vmem:[%s1 + $0x2f0] sm:$0xff]
    %v121 = vld [vmem:[%s1 + $0x2f8] sm:$0xff]
    %v122 = vld [vmem:[%s1 + $0x300] sm:$0xff]
    %v123 = vld [vmem:[%s1 + $0x308] sm:$0xff]
    %v124 = vld [vmem:[%s1 + $0x310] sm:$0xff]
    %v125 = vld [vmem:[%s1 + $0x318] sm:$0xff]
    %v126 = vld [vmem:[%s1 + $0x320] sm:$0xff]
    %v127 = vld [vmem:[%s1 + $0x328] sm:$0xff]
    %v128 = vld [vmem:[%s1 + $0x330] sm:$0xff]
    %v129 = vld [vmem:[%s1 + $0x338] sm:$0xff]
    %v130 = vld [vmem:[%s1 + $0x340] sm:$0xff]
    %v131 = vld [vmem:[%s1 + $0x348] sm:$0xff]
    %v132 = vld [vmem:[%s1 + $0x350] sm:$0xff]
    %v133 = vld [vmem:[%s1 + $0x358] sm:$0xff]
    %v134 = vld [vmem:[%s1 + $0x360] sm:$0xff]
    %v135 = vld [vmem:[%s1 + $0x368] sm:$0xff]
    %v136 = vld [vmem:[%s1 + $0x370] sm:$0xff]
    %v137 = vld [vmem:[%s1 + $0x378] sm:$0xff]
    %v138 = vld [vmem:[%s1 + $0x380] sm:$0xff]
    %v139 = vld [vmem:[%s1 + $0x388] sm:$0xff]
    %v140 = vld [vmem:[%s1 + $0x390] sm:$0xff]
    %v141 = vld [vmem:[%s1 + $0x398] sm:$0xff]
    %v142 = vld [vmem:[%s1 + $0x3a0] sm:$0xff]
    %v143 = vld [vmem:[%s1 + $0x3a8] sm:$0xff]
    %v144 = vld [vmem:[%s1 + $0x3b0] sm:$0xff]
    %v145 = vld [vmem:[%s1 + $0x3b8] sm:$0xff]
    %v146 = vld [vmem:[%s1 + $0x3c0] sm:$0xff]
    %v147 = vld [vmem:[%s1 + $0x3c8] sm:$0xff]
    %v148 = vld [vmem:[%s1 + $0x3d0] sm:$0xff]
    %v149 = vld [vmem:[%s1 + $0x3d8] sm:$0xff]
    %v150 = vld [vmem:[%s1 + $0x3e0] sm:$0xff]
    %v151 = vld [vmem:[%s1 + $0x3e8] sm:$0xff]
    %v152 = vld [vmem:[%s1 + $0x3f0] sm:$0xff]
    %v153 = vld [vmem:[%s1 + $0x3f8] sm:$0xff]
    %v154 = vld [vmem:[%s1 + $0x400] sm:$0xff]
    %v155 = vld [vmem:[%s1 + $0x408] sm:$0xff]
    %v156 = vld [vmem:[%s1 + $0x410] sm:$0xff]
    %v157 = vld [vmem:[%s1 + $0x418] sm:$0xff]
    %v158 = vld [vmem:[%s1 + $0x420] sm:$0xff]
    %v159 = vld [vmem:[%s1 + $0x428] sm:$0xff]
    %v160 = vld [vmem:[%s1 + $0x430] sm:$0xff]
    %v161 = vld [vmem:[%s1 + $0x438] sm:$0xff]
    %v162 = vld [vmem:[%s1 + $0x440] sm:$0xff]
    %v163 = vld [vmem:[%s1 + $0x448] sm:$0xff]
    %v164 = vld [vmem:[%s1 + $0x450] sm:$0xff]
    %v165 = vld [vmem:[%s1 + $0x458] sm:$0xff]
    %v166 = vld [vmem:[%s1 + $0x460] sm:$0xff]
    %v167 = vld [vmem:[%s1 + $0x468] sm:$0xff]
    %v168 = vld [vmem:[%s1 + $0x470] sm:$0xff]
    %v169 = vld [vmem:[%s1 + $0x478] sm:$0xff]
    %v170 = vld [vmem:[%s1 + $0x480] sm:$0xff]
    %v171 = vld [vmem:[%s1 + $0x488] sm:$0xff]
    %v172 = vld [vmem:[%s1 + $0x490] sm:$0xff]
    %v173 = vld [vmem:[%s1 + $0x498] sm:$0xff]
    %v174 = vld [vmem:[%s1 + $0x4a0] sm:$0xff]
    %v175 = vld [vmem:[%s1 + $0x4a8] sm:$0xff]
    %v176 = vld [vmem:[%s1 + $0x4b0] sm:$0xff]
    %v177 = vld [vmem:[%s1 + $0x4b8] sm:$0xff]
    %v178 = vld [vmem:[%s1 + $0x4c0] sm:$0xff]
    %v179 = vld [vmem:[%s1 + $0x4c8] sm:$0xff]
    %v180 = vld [vmem:[%s1 + $0x4d0] sm:$0xff]
    %v181 = vld [vmem:[%s1 + $0x4d8] sm:$0xff]
    %v182 = vld [vmem:[%s1 + $0x4e0] sm:$0xff]
    %v183 = vld [vmem:[%s1 + $0x4e8] sm:$0xff]
    %v184 = vld [vmem:[%s1 + $0x4f0] sm:$0xff]
    %v185 = vld [vmem:[%s1 + $0x4f8] sm:$0xff]
    %v186 = vld [vmem:[%s1 + $0x500] sm:$0xff]
    %v187 = vld [vmem:[%s1 + $0x508] sm:$0xff]
    %v188 = vld [vmem:[%s1 + $0x510] sm:$0xff]
    %v189 = vld [vmem:[%s1 + $0x518] sm:$0xff]
    %v190 = vld [vmem:[%s1 + $0x520] sm:$0xff]
    %v191 = vld [vmem:[%s1 + $0x528] sm:$0xff]
    %v192 = vld [vmem:[%s1 + $0x530] sm:$0xff]
    %v193 = vld [vmem:[%s1 + $0x538] sm:$0xff]
    %v194 = vld [vmem:[%s1 + $0x540] sm:$0xff]
    %v195 = vld [vmem:[%s1 + $0x548] sm:$0xff]
    %v196 = vld [vmem:[%s1 + $0x550] sm:$0xff]
    %v197 = vld [vmem:[%s1 + $0x558] sm:$0xff]
    %v198 = vld [vmem:[%s1 + $0x560] sm:$0xff]
    %v199 = vld [vmem:[%s1 + $0x568] sm:$0xff]
    %v200 = vld [vmem:[%s1 + $0x570] sm:$0xff]
    %v201 = vld [vmem:[%s1 + $0x578] sm:$0xff]
    %v202 = vld [vmem:[%s1 + $0x580] sm:$0xff]
    %v203 = vld [vmem:[%s1 + $0x588] sm:$0xff]
    %v204 = vld [vmem:[%s1 + $0x590] sm:$0xff]
    %v205 = vld [vmem:[%s1 + $0x598] sm:$0xff]
    %v206 = vld [vmem:[%s1 + $0x5a0] sm:$0xff]
    %v207 = vld [vmem:[%s1 + $0x5a8] sm:$0xff]
    %v208 = vld [vmem:[%s1 + $0x5b0] sm:$0xff]
    %v209 = vld [vmem:[%s1 + $0x5b8] sm:$0xff]
    %v210 = vld [vmem:[%s1 + $0x5c0] sm:$0xff]
    %v211 = vld [vmem:[%s1 + $0x5c8] sm:$0xff]
    %v212 = vld [vmem:[%s1 + $0x5d0] sm:$0xff]
    %v213 = vld [vmem:[%s1 + $0x5d8] sm:$0xff]
    %v214 = vld [vmem:[%s1 + $0x5e0] sm:$0xff]
    %v215 = vld [vmem:[%s1 + $0x5e8] sm:$0xff]
    %v216 = vld [vmem:[%s1 + $0x5f0] sm:$0xff]
    %v217 = vld [vmem:[%s1 + $0x5f8] sm:$0xff]
    %v218 = vld [vmem:[%s1 + $0x600] sm:$0xff]
    %v219 = vld [vmem:[%s1 + $0x608] sm:$0xff]
    %v220 = vld [vmem:[%s1 + $0x610] sm:$0xff]
    %v221 = vld [vmem:[%s1 + $0x618] sm:$0xff]
    %v222 = vld [vmem:[%s1 + $0x620] sm:$0xff]
    %v223 = vld [vmem:[%s1 + $0x628] sm:$0xff]
    %v224 = vld [vmem:[%s1 + $0x630] sm:$0xff]
    %v225 = vld [vmem:[%s1 + $0x638] sm:$0xff]
    %v226 = vld [vmem:[%s1 + $0x640] sm:$0xff]
    %v227 = vld [vmem:[%s1 + $0x648] sm:$0xff]
    %v228 = vld [vmem:[%s1 + $0x650] sm:$0xff]
    %v229 = vld [vmem:[%s1 + $0x658] sm:$0xff]
    %v230 = vld [vmem:[%s1 + $0x660] sm:$0xff]
    %v231 = vld [vmem:[%s1 + $0x668] sm:$0xff]
    %v232 = vld [vmem:[%s1 + $0x670] sm:$0xff]
    %v233 = vld [vmem:[%s1 + $0x678] sm:$0xff]
    %v234 = vld [vmem:[%s1 + $0x680] sm:$0xff]
    %v235 = vld [vmem:[%s1 + $0x688] sm:$0xff]
    %v236 = vld [vmem:[%s1 + $0x690] sm:$0xff]
    %v237 = vld [vmem:[%s1 + $0x698] sm:$0xff]
    %v238 = vld [vmem:[%s1 + $0x6a0] sm:$0xff]
    %v239 = vld [vmem:[%s1 + $0x6a8] sm:$0xff]
    %v240 = vld [vmem:[%s1 + $0x6b0] sm:$0xff]
    %v241 = vld [vmem:[%s1 + $0x6b8] sm:$0xff]
    %v242 = vld [vmem:[%s1 + $0x6c0] sm:$0xff]
    %v243 = vld [vmem:[%s1 + $0x6c8] sm:$0xff]
    %v244 = vld [vmem:[%s1 + $0x6d0] sm:$0xff]
    %v245 = vld [vmem:[%s1 + $0x6d8] sm:$0xff]
    %v246 = vld [vmem:[%s1 + $0x6e0] sm:$0xff]
    %v247 = vld [vmem:[%s1 + $0x6e8] sm:$0xff]
    %v248 = vld [vmem:[%s1 + $0x6f0] sm:$0xff]
    %v249 = vld [vmem:[%s1 + $0x6f8] sm:$0xff]
    %v250 = vld [vmem:[%s1 + $0x700] sm:$0xff]
    %v251 = vld [vmem:[%s1 + $0x708] sm:$0xff]
    %v252 = vld [vmem:[%s1 + $0x710] sm:$0xff]
    %v253 = vld [vmem:[%s1 + $0x718] sm:$0xff]
    %v254 = vld [vmem:[%s1 + $0x720] sm:$0xff]
    %v255 = vld [vmem:[%s1 + $0x728] sm:$0xff]
    %v256 = vld [vmem:[%s1 + $0x730] sm:$0xff]
    %v257 = vld [vmem:[%s1 + $0x738] sm:$0xff]
    %v258 = vld [vmem:[%s1 + $0x740] sm:$0xff]
    %v259 = vld [vmem:[%s1 + $0x748] sm:$0xff]
    %v260 = vld [vmem:[%s1 + $0x750] sm:$0xff]
    %v261 = vld [vmem:[%s1 + $0x758] sm:$0xff]
    %v262 = vld [vmem:[%s1 + $0x760] sm:$0xff]
    %v263 = vld [vmem:[%s1 + $0x768] sm:$0xff]
    %v264 = vld [vmem:[%s1 + $0x770] sm:$0xff]
    %v265 = vld [vmem:[%s1 + $0x778] sm:$0xff]
    %v266 = vld [vmem:[%s1 + $0x780] sm:$0xff]
    %v267 = vld [vmem:[%s1 + $0x788] sm:$0xff]
    %v268 = vld [vmem:[%s1 + $0x790] sm:$0xff]
    %v269 = vld [vmem:[%s1 + $0x798] sm:$0xff]
    %v270 = vld [vmem:[%s1 + $0x7a0] sm:$0xff]
    %v271 = vld [vmem:[%s1 + $0x7a8] sm:$0xff]
    %v272 = vld [vmem:[%s1 + $0x7b0] sm:$0xff]
    %v273 = vld [vmem:[%s1 + $0x7b8] sm:$0xff]
    %v274 = vld [vmem:[%s1 + $0x7c0] sm:$0xff]
    %v275 = vld [vmem:[%s1 + $0x7c8] sm:$0xff]
    %v276 = vld [vmem:[%s1 + $0x7d0] sm:$0xff]
    %v277 = vld [vmem:[%s1 + $0x7d8] sm:$0xff]
    %v278 = vld [vmem:[%s1 + $0x7e0] sm:$0xff]
    %v279 = vld [vmem:[%s1 + $0x7e8] sm:$0xff]
    %v280 = vld [vmem:[%s1 + $0x7f0] sm:$0xff]
    %v281 = vld [vmem:[%s1 + $0x7f8] sm:$0xff]
    %v282 = vld [vmem:[%s1 + $0x800] sm:$0xff]
    %v283 = vld [vmem:[%s1 + $0x808] sm:$0xff]
    %v284 = vld [vmem:[%s1 + $0x810] sm:$0xff]
    %v285 = vld [vmem:[%s1 + $0x818] sm:$0xff]
    %v286 = vld [vmem:[%s1 + $0x820] sm:$0xff]
    %v287 = vld [vmem:[%s1 + $0x828] sm:$0xff]
    %v288 = vld [vmem:[%s1 + $0x830] sm:$0xff]
    %v289 = vld [vmem:[%s1 + $0x838] sm:$0xff]
    %v290 = vld [vmem:[%s1 + $0x840] sm:$0xff]
    %v291 = vld [vmem:[%s1 + $0x848] sm:$0xff]
    %v292 = vld [vmem:[%s1 + $0x850] sm:$0xff]
    %v293 = vld [vmem:[%s1 + $0x858] sm:$0xff]
    %v294 = vld [vmem:[%s1 + $0x860] sm:$0xff]
    %v295 = vld [vmem:[%s1 + $0x868] sm:$0xff]
    %v296 = vld [vmem:[%s1 + $0x870] sm:$0xff]
    %v297 = vld [vmem:[%s1 + $0x878] sm:$0xff]
    %v298 = vld [vmem:[%s1 + $0x880] sm:$0xff]
    %v299 = vld [vmem:[%s1 + $0x888] sm:$0xff]
    %v300 = vld [vmem:[%s1 + $0x890] sm:$0xff]
    %v301 = vld [vmem:[%s1 + $0x898] sm:$0xff]
    %v302 = vld [vmem:[%s1 + $0x8a0] sm:$0xff]
    %v303 = vld [vmem:[%s1 + $0x8a8] sm:$0xff]
    %v304 = vld [vmem:[%s1 + $0x8b0] sm:$0xff]
    %v305 = vld [vmem:[%s1 + $0x8b8] sm:$0xff]
    %v306 = vld [vmem:[%s1 + $0x8c0] sm:$0xff]
    %v307 = vld [vmem:[%s1 + $0x8c8] sm:$0xff]
    %v308 = vld [vmem:[%s1 + $0x8d0] sm:$0xff]
    %v309 = vld [vmem:[%s1 + $0x8d8] sm:$0xff]
    %v310 = vld [vmem:[%s1 + $0x8e0] sm:$0xff]
    %v311 = vld [vmem:[%s1 + $0x8e8] sm:$0xff]
    %v312 = vld [vmem:[%s1 + $0x8f0] sm:$0xff]
    %v313 = vld [vmem:[%s1 + $0x8f8] sm:$0xff]
    %v314 = vld [vmem:[%s1 + $0x900] sm:$0xff]
    %v315 = vld [vmem:[%s1 + $0x908] sm:$0xff]
    %v316 = vld [vmem:[%s1 + $0x910] sm:$0xff]
    %v317 = vld [vmem:[%s1 + $0x918] sm:$0xff]
    %v318 = vld [vmem:[%s1 + $0x920] sm:$0xff]
    %v319 = vld [vmem:[%s1 + $0x928] sm:$0xff]
    %v320 = vld [vmem:[%s1 + $0x930] sm:$0xff]
    %v321 = vld [vmem:[%s1 + $0x938] sm:$0xff]
    %v322 = vld [vmem:[%s1 + $0x940] sm:$0xff]
    %v323 = vld [vmem:[%s1 + $0x948] sm:$0xff]
    %v324 = vld [vmem:[%s1 + $0x950] sm:$0xff]
    %v325 = vld [vmem:[%s1 + $0x958] sm:$0xff]
    %v326 = vld [vmem:[%s1 + $0x960] sm:$0xff]
    %v327 = vld [vmem:[%s1 + $0x968] sm:$0xff]
    %v328 = vld [vmem:[%s1 + $0x970] sm:$0xff]
    %v329 = vld [vmem:[%s1 + $0x978] sm:$0xff]
    %v330 = vld [vmem:[%s1 + $0x980] sm:$0xff]
    %v331 = vld [vmem:[%s1 + $0x988] sm:$0xff]
    %v332 = vld [vmem:[%s1 + $0x990] sm:$0xff]
    %v333 = vld [vmem:[%s1 + $0x998] sm:$0xff]
    %v334 = vld [vmem:[%s1 + $0x9a0] sm:$0xff]
    %v335 = vld [vmem:[%s1 + $0x9a8] sm:$0xff]
    %v336 = vld [vmem:[%s1 + $0x9b0] sm:$0xff]
    %v337 = vld [vmem:[%s1 + $0x9b8] sm:$0xff]
    %v338 = vld [vmem:[%s1 + $0x9c0] sm:$0xff]
    %v339 = vld [vmem:[%s1 + $0x9c8] sm:$0xff]
    %v340 = vld [vmem:[%s1 + $0x9d0] sm:$0xff]
    %v341 = vld [vmem:[%s1 + $0x9d8] sm:$0xff]
    %v342 = vld [vmem:[%s1 + $0x9e0] sm:$0xff]
    %v343 = vld [vmem:[%s1 + $0x9e8] sm:$0xff]
    %v344 = vld [vmem:[%s1 + $0x9f0] sm:$0xff]
    %v345 = vld [vmem:[%s1 + $0x9f8] sm:$0xff]
    %v346 = vld [vmem:[%s1 + $0xa00] sm:$0xff]
    %v347 = vld [vmem:[%s1 + $0xa08] sm:$0xff]
    %v348 = vld [vmem:[%s1 + $0xa10] sm:$0xff]
    %v349 = vld [vmem:[%s1 + $0xa18] sm:$0xff]
    %v350 = vld [vmem:[%s1 + $0xa20] sm:$0xff]
    %v351 = vld [vmem:[%s1 + $0xa28] sm:$0xff]
    %v352 = vld [vmem:[%s1 + $0xa30] sm:$0xff]
    %v353 = vld [vmem:[%s1 + $0xa38] sm:$0xff]
    %v354 = vld [vmem:[%s1 + $0xa40] sm:$0xff]
    %v355 = vld [vmem:[%s1 + $0xa48] sm:$0xff]
    %v356 = vld [vmem:[%s1 + $0xa50] sm:$0xff]
    %v357 = vld [vmem:[%s1 + $0xa58] sm:$0xff]
    %v358 = vld [vmem:[%s1 + $0xa60] sm:$0xff]
    %v359 = vld [vmem:[%s1 + $0xa68] sm:$0xff]
    %v360 = vld [vmem:[%s1 + $0xa70] sm:$0xff]
    %v361 = vld [vmem:[%s1 + $0xa78] sm:$0xff]
    %v362 = vld [vmem:[%s1 + $0xa80] sm:$0xff]
    %v363 = vld [vmem:[%s1 + $0xa88] sm:$0xff]
    %v364 = vld [vmem:[%s1 + $0xa90] sm:$0xff]
    %v365 = vld [vmem:[%s1 + $0xa98] sm:$0xff]
    %v366 = vld [vmem:[%s1 + $0xaa0] sm:$0xff]
    %v367 = vld [vmem:[%s1 + $0xaa8] sm:$0xff]
    %v368 = vld [vmem:[%s1 + $0xab0] sm:$0xff]
    %v369 = vld [vmem:[%s1 + $0xab8] sm:$0xff]
    %v370 = vld [vmem:[%s1 + $0xac0] sm:$0xff]
    %v371 = vld [vmem:[%s1 + $0xac8] sm:$0xff]
    %v372 = vld [vmem:[%s1 + $0xad0] sm:$0xff]
    %v373 = vld [vmem:[%s1 + $0xad8] sm:$0xff]
    %v374 = vld [vmem:[%s1 + $0xae0] sm:$0xff]
    %v375 = vld [vmem:[%s1 + $0xae8] sm:$0xff]
    %v376 = vld [vmem:[%s1 + $0xaf0] sm:$0xff]
    %v377 = vld [vmem:[%s1 + $0xaf8] sm:$0xff]
    %v378 = vld [vmem:[%s1 + $0xb00] sm:$0xff]
    %v379 = vld [vmem:[%s1 + $0xb08] sm:$0xff]
    %v380 = vld [vmem:[%s1 + $0xb10] sm:$0xff]
    %v381 = vld [vmem:[%s1 + $0xb18] sm:$0xff]
    %v382 = vld [vmem:[%s1 + $0xb20] sm:$0xff]
    %v383 = vld [vmem:[%s1 + $0xb28] sm:$0xff]
    %v384 = vld [vmem:[%s1 + $0xb30] sm:$0xff]
    %v385 = vld [vmem:[%s1 + $0xb38] sm:$0xff]
    %v386 = vld [vmem:[%s1 + $0xb40] sm:$0xff]
    %v387 = vld [vmem:[%s1 + $0xb48] sm:$0xff]
    %v388 = vld [vmem:[%s1 + $0xb50] sm:$0xff]
    %v389 = vld [vmem:[%s1 + $0xb58] sm:$0xff]
    %v390 = vld [vmem:[%s1 + $0xb60] sm:$0xff]
    %v391 = vld [vmem:[%s1 + $0xb68] sm:$0xff]
    %v392 = vld [vmem:[%s1 + $0xb70] sm:$0xff]
    %v393 = vld [vmem:[%s1 + $0xb78] sm:$0xff]
    %v394 = vld [vmem:[%s1 + $0xb80] sm:$0xff]
    %v395 = vld [vmem:[%s1 + $0xb88] sm:$0xff]
    %v396 = vld [vmem:[%s1 + $0xb90] sm:$0xff]
    %v397 = vld [vmem:[%s1 + $0xb98] sm:$0xff]
    %v398 = vld [vmem:[%s1 + $0xba0] sm:$0xff]
    %v399 = vld [vmem:[%s1 + $0xba8] sm:$0xff]
    %v400 = vld [vmem:[%s1 + $0xbb0] sm:$0xff]
    %v401 = vld [vmem:[%s1 + $0xbb8] sm:$0xff]
    %v402 = vld [vmem:[%s1 + $0xbc0] sm:$0xff]
    %v403 = vld [vmem:[%s1 + $0xbc8] sm:$0xff]
    %v404 = vld [vmem:[%s1 + $0xbd0] sm:$0xff]
    %v405 = vld [vmem:[%s1 + $0xbd8] sm:$0xff]
    %v406 = vld [vmem:[%s1 + $0xbe0] sm:$0xff]
    %v407 = vld [vmem:[%s1 + $0xbe8] sm:$0xff]
    %v408 = vld [vmem:[%s1 + $0xbf0] sm:$0xff]
    %v409 = vld [vmem:[%s1 + $0xbf8] sm:$0xff]
    %v410 = vld [vmem:[%s1 + $0xc00] sm:$0xff]
    %v411 = vld [vmem:[%s1 + $0xc08] sm:$0xff]
    %v412 = vld [vmem:[%s1 + $0xc10] sm:$0xff]
    %v413 = vld [vmem:[%s1 + $0xc18] sm:$0xff]
    %v414 = vld [vmem:[%s1 + $0xc20] sm:$0xff]
    %v415 = vld [vmem:[%s1 + $0xc28] sm:$0xff]
    %v416 = vld [vmem:[%s1 + $0xc30] sm:$0xff]
    %v417 = vld [vmem:[%s1 + $0xc38] sm:$0xff]
    %v418 = vld [vmem:[%s1 + $0xc40] sm:$0xff]
    %v419 = vld [vmem:[%s1 + $0xc48] sm:$0xff]
    %v420 = vld [vmem:[%s1 + $0xc50] sm:$0xff]
    %v421 = vld [vmem:[%s1 + $0xc58] sm:$0xff]
    %v422 = vld [vmem:[%s1 + $0xc60] sm:$0xff]
    %v423 = vld [vmem:[%s1 + $0xc68] sm:$0xff]
    %v424 = vld [vmem:[%s1 + $0xc70] sm:$0xff]
    %v425 = vld [vmem:[%s1 + $0xc78] sm:$0xff]
    %v426 = vld [vmem:[%s1 + $0xc80] sm:$0xff]
    %v427 = vld [vmem:[%s1 + $0xc88] sm:$0xff]
    %v428 = vld [vmem:[%s1 + $0xc90] sm:$0xff]
    %v429 = vld [vmem:[%s1 + $0xc98] sm:$0xff]
    %v430 = vld [vmem:[%s1 + $0xca0] sm:$0xff]
    %v431 = vld [vmem:[%s1 + $0xca8] sm:$0xff]
    %v432 = vld [vmem:[%s1 + $0xcb0] sm:$0xff]
    %v433 = vld [vmem:[%s1 + $0xcb8] sm:$0xff]
    %v434 = vld [vmem:[%s1 + $0xcc0] sm:$0xff]
    %v435 = vld [vmem:[%s1 + $0xcc8] sm:$0xff]
    %v436 = vld [vmem:[%s1 + $0xcd0] sm:$0xff]
    %v437 = vld [vmem:[%s1 + $0xcd8] sm:$0xff]
    %v438 = vld [vmem:[%s1 + $0xce0] sm:$0xff]
    %v439 = vld [vmem:[%s1 + $0xce8] sm:$0xff]
    %v440 = vld [vmem:[%s1 + $0xcf0] sm:$0xff]
    %v441 = vld [vmem:[%s1 + $0xcf8] sm:$0xff]
    %v442 = vld [vmem:[%s1 + $0xd00] sm:$0xff]
    %v443 = vld [vmem:[%s1 + $0xd08] sm:$0xff]
    %v444 = vld [vmem:[%s1 + $0xd10] sm:$0xff]
    %v445 = vld [vmem:[%s1 + $0xd18] sm:$0xff]
    %v446 = vld [vmem:[%s1 + $0xd20] sm:$0xff]
    %v447 = vld [vmem:[%s1 + $0xd28] sm:$0xff]
    %v448 = vld [vmem:[%s1 + $0xd30] sm:$0xff]
    %v449 = vld [vmem:[%s1 + $0xd38] sm:$0xff]
    %v450 = vld [vmem:[%s1 + $0xd40] sm:$0xff]
    %v451 = vld [vmem:[%s1 + $0xd48] sm:$0xff]
    %v452 = vld [vmem:[%s1 + $0xd50] sm:$0xff]
    %v453 = vld [vmem:[%s1 + $0xd58] sm:$0xff]
    %v454 = vld [vmem:[%s1 + $0xd60] sm:$0xff]
    %v455 = vld [vmem:[%s1 + $0xd68] sm:$0xff]
    %v456 = vld [vmem:[%s1 + $0xd70] sm:$0xff]
    %v457 = vld [vmem:[%s1 + $0xd78] sm:$0xff]
    %v458 = vld [vmem:[%s1 + $0xd80] sm:$0xff]
    %v459 = vld [vmem:[%s1 + $0xd88] sm:$0xff]
    %v460 = vld [vmem:[%s1 + $0xd90] sm:$0xff]
    %v461 = vld [vmem:[%s1 + $0xd98] sm:$0xff]
    %v462 = vld [vmem:[%s1 + $0xda0] sm:$0xff]
    %v463 = vld [vmem:[%s1 + $0xda8] sm:$0xff]
    %v464 = vld [vmem:[%s1 + $0xdb0] sm:$0xff]
    %v465 = vld [vmem:[%s1 + $0xdb8] sm:$0xff]
    %v466 = vld [vmem:[%s1 + $0xdc0] sm:$0xff]
    %v467 = vld [vmem:[%s1 + $0xdc8] sm:$0xff]
    %v468 = vld [vmem:[%s1 + $0xdd0] sm:$0xff]
    %v469 = vld [vmem:[%s1 + $0xdd8] sm:$0xff]
    %v470 = vld [vmem:[%s1 + $0xde0] sm:$0xff]
    %v471 = vld [vmem:[%s1 + $0xde8] sm:$0xff]
    %v472 = vld [vmem:[%s1 + $0xdf0] sm:$0xff]
    %v473 = vld [vmem:[%s1 + $0xdf8] sm:$0xff]
    %v474 = vld [vmem:[%s1 + $0xe00] sm:$0xff]
    %v475 = vld [vmem:[%s1 + $0xe08] sm:$0xff]
    %v476 = vld [vmem:[%s1 + $0xe10] sm:$0xff]
    %v477 = vld [vmem:[%s1 + $0xe18] sm:$0xff]
    %v478 = vld [vmem:[%s1 + $0xe20] sm:$0xff]
    %v479 = vld [vmem:[%s1 + $0xe28] sm:$0xff]
    %v480 = vld [vmem:[%s1 + $0xe30] sm:$0xff]
    %v481 = vld [vmem:[%s1 + $0xe38] sm:$0xff]
    %v482 = vld [vmem:[%s1 + $0xe40] sm:$0xff]
    %v483 = vld [vmem:[%s1 + $0xe48] sm:$0xff]
    %v484 = vld [vmem:[%s1 + $0xe50] sm:$0xff]
    %v485 = vld [vmem:[%s1 + $0xe58] sm:$0xff]
    %v486 = vld [vmem:[%s1 + $0xe60] sm:$0xff]
    %v487 = vld [vmem:[%s1 + $0xe68] sm:$0xff]
    %v488 = vld [vmem:[%s1 + $0xe70] sm:$0xff]
    %v489 = vld [vmem:[%s1 + $0xe78] sm:$0xff]
    %v490 = vld [vmem:[%s1 + $0xe80] sm:$0xff]
    %v491 = vld [vmem:[%s1 + $0xe88] sm:$0xff]
    %v492 = vld [vmem:[%s1 + $0xe90] sm:$0xff]
    %v493 = vld [vmem:[%s1 + $0xe98] sm:$0xff]
    %v494 = vld [vmem:[%s1 + $0xea0] sm:$0xff]
    %v495 = vld [vmem:[%s1 + $0xea8] sm:$0xff]
    %v496 = vld [vmem:[%s1 + $0xeb0] sm:$0xff]
    %v497 = vld [vmem:[%s1 + $0xeb8] sm:$0xff]
    %v498 = vld [vmem:[%s1 + $0xec0] sm:$0xff]
    %v499 = vld [vmem:[%s1 + $0xec8] sm:$0xff]
    %v500 = vld [vmem:[%s1 + $0xed0] sm:$0xff]
    %v501 = vld [vmem:[%s1 + $0xed8] sm:$0xff]
    %v502 = vld [vmem:[%s1 + $0xee0] sm:$0xff]
    %v503 = vld [vmem:[%s1 + $0xee8] sm:$0xff]
    %v504 = vld [vmem:[%s1 + $0xef0] sm:$0xff]
    %v505 = vld [vmem:[%s1 + $0xef8] sm:$0xff]
    %v506 = vld [vmem:[%s1 + $0xf00] sm:$0xff]
    %v507 = vld [vmem:[%s1 + $0xf08] sm:$0xff]
    %v508 = vld [vmem:[%s1 + $0xf10] sm:$0xff]
    %v509 = vld [vmem:[%s1 + $0xf18] sm:$0xff]
    %v510 = vld [vmem:[%s1 + $0xf20] sm:$0xff]
    %v511 = vld [vmem:[%s1 + $0xf28] sm:$0xff]
    %v512 = vld [vmem:[%s1 + $0xf30] sm:$0xff]
    %v513 = vld [vmem:[%s1 + $0xf38] sm:$0xff]
    %v514 = vld [vmem:[%s1 + $0xf40] sm:$0xff]
    %v515 = vld [vmem:[%s1 + $0xf48] sm:$0xff]
    %v516 = vld [vmem:[%s1 + $0xf50] sm:$0xff]
    %v517 = vld [vmem:[%s1 + $0xf58] sm:$0xff]
    %v518 = vld [vmem:[%s1 + $0xf60] sm:$0xff]
    %v519 = vld [vmem:[%s1 + $0xf68] sm:$0xff]
    %v520 = vld [vmem:[%s1 + $0xf70] sm:$0xff]
    %v521 = vld [vmem:[%s1 + $0xf78] sm:$0xff]
    %v522 = vld [vmem:[%s1 + $0xf80] sm:$0xff]
    %v523 = vld [vmem:[%s1 + $0xf88] sm:$0xff]
    %v524 = vld [vmem:[%s1 + $0xf90] sm:$0xff]
    %v525 = vld [vmem:[%s1 + $0xf98] sm:$0xff]
    %v526 = vld [vmem:[%s1 + $0xfa0] sm:$0xff]
    %v527 = vld [vmem:[%s1 + $0xfa8] sm:$0xff]
    %v528 = vld [vmem:[%s1 + $0xfb0] sm:$0xff]
    %v529 = vld [vmem:[%s1 + $0xfb8] sm:$0xff]
    %v530 = vld [vmem:[%s1 + $0xfc0] sm:$0xff]
    %v531 = vld [vmem:[%s1 + $0xfc8] sm:$0xff]
    %v532 = vld [vmem:[%s1 + $0xfd0] sm:$0xff]
    %v533 = vld [vmem:[%s1 + $0xfd8] sm:$0xff]
    %v534 = vld [vmem:[%s1 + $0xfe0] sm:$0xff]
    %v535 = vld [vmem:[%s1 + $0xfe8] sm:$0xff]
    %v536 = vld [vmem:[%s1 + $0xff0] sm:$0xff]
    %v537 = vld [vmem:[%s1 + $0xff8] sm:$0xff]
    %v538 = vld [vmem:[%s1 + $0x1000] sm:$0xff]
    %v539 = vld [vmem:[%s1 + $0x1008] sm:$0xff]
    %v540 = vld [vmem:[%s1 + $0x1010] sm:$0xff]
    %v541 = vld [vmem:[%s1 + $0x1018] sm:$0xff]
    %v542 = vld [vmem:[%s1 + $0x1020] sm:$0xff]
    %v543 = vld [vmem:[%s1 + $0x1028] sm:$0xff]
    %v544 = vld [vmem:[%s1 + $0x1030] sm:$0xff]
    %v545 = vld [vmem:[%s1 + $0x1038] sm:$0xff]
    %v546 = vld [vmem:[%s1 + $0x1040] sm:$0xff]
    %v547 = vld [vmem:[%s1 + $0x1048] sm:$0xff]
    %v548 = vld [vmem:[%s1 + $0x1050] sm:$0xff]
    %v549 = vld [vmem:[%s1 + $0x1058] sm:$0xff]
    %v550 = vld [vmem:[%s1 + $0x1060] sm:$0xff]
    %v551 = vld [vmem:[%s1 + $0x1068] sm:$0xff]
    %v552 = vld [vmem:[%s1 + $0x1070] sm:$0xff]
    %v553 = vld [vmem:[%s1 + $0x1078] sm:$0xff]
    %v554 = vld [vmem:[%s1 + $0x1080] sm:$0xff]
    %v555 = vld [vmem:[%s1 + $0x1088] sm:$0xff]
    %v556 = vld [vmem:[%s1 + $0x1090] sm:$0xff]
    %v557 = vld [vmem:[%s1 + $0x1098] sm:$0xff]
    %v558 = vld [vmem:[%s1 + $0x10a0] sm:$0xff]
    %v559 = vld [vmem:[%s1 + $0x10a8] sm:$0xff]
    %v560 = vld [vmem:[%s1 + $0x10b0] sm:$0xff]
    %v561 = vld [vmem:[%s1 + $0x10b8] sm:$0xff]
    %v562 = vld [vmem:[%s1 + $0x10c0] sm:$0xff]
    %v563 = vld [vmem:[%s1 + $0x10c8] sm:$0xff]
    %v564 = vld [vmem:[%s1 + $0x10d0] sm:$0xff]
    %v565 = vld [vmem:[%s1 + $0x10d8] sm:$0xff]
    %v566 = vld [vmem:[%s1 + $0x10e0] sm:$0xff]
    %v567 = vld [vmem:[%s1 + $0x10e8] sm:$0xff]
    %v568 = vld [vmem:[%s1 + $0x10f0] sm:$0xff]
    %v569 = vld [vmem:[%s1 + $0x10f8] sm:$0xff]
    %v570 = vld [vmem:[%s1 + $0x1100] sm:$0xff]
    %v571 = vld [vmem:[%s1 + $0x1108] sm:$0xff]
    %v572 = vld [vmem:[%s1 + $0x1110] sm:$0xff]
    %v573 = vld [vmem:[%s1 + $0x1118] sm:$0xff]
    %v574 = vld [vmem:[%s1 + $0x1120] sm:$0xff]
    %v575 = vld [vmem:[%s1 + $0x1128] sm:$0xff]
    %v576 = vld [vmem:[%s1 + $0x1130] sm:$0xff]
    %v577 = vld [vmem:[%s1 + $0x1138] sm:$0xff]
    %v578 = vld [vmem:[%s1 + $0x1140] sm:$0xff]
    %v579 = vld [vmem:[%s1 + $0x1148] sm:$0xff]
    %v580 = vld [vmem:[%s1 + $0x1150] sm:$0xff]
    %v581 = vld [vmem:[%s1 + $0x1158] sm:$0xff]
    %v582 = vld [vmem:[%s1 + $0x1160] sm:$0xff]
    %v583 = vld [vmem:[%s1 + $0x1168] sm:$0xff]
    %v584 = vld [vmem:[%s1 + $0x1170] sm:$0xff]
    %v585 = vld [vmem:[%s1 + $0x1178] sm:$0xff]
    %v586 = vld [vmem:[%s1 + $0x1180] sm:$0xff]
    %v587 = vld [vmem:[%s1 + $0x1188] sm:$0xff]
    %v588 = vld [vmem:[%s1 + $0x1190] sm:$0xff]
    %v589 = vld [vmem:[%s1 + $0x1198] sm:$0xff]
    %v590 = vld [vmem:[%s1 + $0x11a0] sm:$0xff]
    %v591 = vld [vmem:[%s1 + $0x11a8] sm:$0xff]
    %v592 = vld [vmem:[%s1 + $0x11b0] sm:$0xff]
    %v593 = vld [vmem:[%s1 + $0x11b8] sm:$0xff]
    %v594 = vld [vmem:[%s1 + $0x11c0] sm:$0xff]
    %v595 = vld [vmem:[%s1 + $0x11c8] sm:$0xff]
    %v596 = vld [vmem:[%s1 + $0x11d0] sm:$0xff]
    %v597 = vld [vmem:[%s1 + $0x11d8] sm:$0xff]
    %v598 = vld [vmem:[%s1 + $0x11e0] sm:$0xff]
    %v599 = vld [vmem:[%s1 + $0x11e8] sm:$0xff]
    %v600 = vld [vmem:[%s1 + $0x11f0] sm:$0xff]
    %v601 = vld [vmem:[%s1 + $0x11f8] sm:$0xff]
    %v602 = vld [vmem:[%s1 + $0x1200] sm:$0xff]
    %v603 = vld [vmem:[%s1 + $0x1208] sm:$0xff]
    %v604 = vld [vmem:[%s1 + $0x1210] sm:$0xff]
    %v605 = vld [vmem:[%s1 + $0x1218] sm:$0xff]
    %v606 = vld [vmem:[%s1 + $0x1220] sm:$0xff]
    %v607 = vld [vmem:[%s1 + $0x1228] sm:$0xff]
    %v608 = vld [vmem:[%s1 + $0x1230] sm:$0xff]
    %v609 = vld [vmem:[%s1 + $0x1238] sm:$0xff]
    %v610 = vld [vmem:[%s1 + $0x1240] sm:$0xff]
    %v611 = vld [vmem:[%s1 + $0x1248] sm:$0xff]
    %v612 = vld [vmem:[%s1 + $0x1250] sm:$0xff]
    %v613 = vld [vmem:[%s1 + $0x1258] sm:$0xff]
    %v614 = vld [vmem:[%s1 + $0x1260] sm:$0xff]
    %v615 = vld [vmem:[%s1 + $0x1268] sm:$0xff]
    %v616 = vld [vmem:[%s1 + $0x1270] sm:$0xff]
    %v617 = vld [vmem:[%s1 + $0x1278] sm:$0xff]
    %v618 = vld [vmem:[%s1 + $0x1280] sm:$0xff]
    %v619 = vld [vmem:[%s1 + $0x1288] sm:$0xff]
    %v620 = vld [vmem:[%s1 + $0x1290] sm:$0xff]
    %v621 = vld [vmem:[%s1 + $0x1298] sm:$0xff]
    %v622 = vld [vmem:[%s1 + $0x12a0] sm:$0xff]
    %v623 = vld [vmem:[%s1 + $0x12a8] sm:$0xff]
    %v624 = vld [vmem:[%s1 + $0x12b0] sm:$0xff]
    %v625 = vld [vmem:[%s1 + $0x12b8] sm:$0xff]
    %v626 = vld [vmem:[%s1 + $0x12c0] sm:$0xff]
    %v627 = vld [vmem:[%s1 + $0x12c8] sm:$0xff]
    %v628 = vld [vmem:[%s1 + $0x12d0] sm:$0xff]
    %v629 = vld [vmem:[%s1 + $0x12d8] sm:$0xff]
    %v630 = vld [vmem:[%s1 + $0x12e0] sm:$0xff]
    %v631 = vld [vmem:[%s1 + $0x12e8] sm:$0xff]
    %v632 = vld [vmem:[%s1 + $0x12f0] sm:$0xff]
    %v633 = vld [vmem:[%s1 + $0x12f8] sm:$0xff]
    %v634 = vld [vmem:[%s1 + $0x1300] sm:$0xff]
    %v635 = vld [vmem:[%s1 + $0x1308] sm:$0xff]
    %v636 = vld [vmem:[%s1 + $0x1310] sm:$0xff]
    %v637 = vld [vmem:[%s1 + $0x1318] sm:$0xff]
    %v638 = vld [vmem:[%s1 + $0x1320] sm:$0xff]
    %v639 = vld [vmem:[%s1 + $0x1328] sm:$0xff]
    %v640 = vld [vmem:[%s1 + $0x1330] sm:$0xff]
    %v641 = vld [vmem:[%s1 + $0x1338] sm:$0xff]
    %v642 = vld [vmem:[%s1 + $0x1340] sm:$0xff]
    %v643 = vld [vmem:[%s1 + $0x1348] sm:$0xff]
    %v644 = vld [vmem:[%s1 + $0x1350] sm:$0xff]
    %v645 = vld [vmem:[%s1 + $0x1358] sm:$0xff]
    %v646 = vld [vmem:[%s1 + $0x1360] sm:$0xff]
    %v647 = vld [vmem:[%s1 + $0x1368] sm:$0xff]
    %v648 = vld [vmem:[%s1 + $0x1370] sm:$0xff]
    %v649 = vld [vmem:[%s1 + $0x1378] sm:$0xff]
    %v650 = vld [vmem:[%s1 + $0x1380] sm:$0xff]
    %v651 = vld [vmem:[%s1 + $0x1388] sm:$0xff]
    %v652 = vld [vmem:[%s1 + $0x1390] sm:$0xff]
    %v653 = vld [vmem:[%s1 + $0x1398] sm:$0xff]
    %v654 = vld [vmem:[%s1 + $0x13a0] sm:$0xff]
    %v655 = vld [vmem:[%s1 + $0x13a8] sm:$0xff]
    %v656 = vld [vmem:[%s1 + $0x13b0] sm:$0xff]
    %v657 = vld [vmem:[%s1 + $0x13b8] sm:$0xff]
    %v658 = vld [vmem:[%s1 + $0x13c0] sm:$0xff]
    %v659 = vld [vmem:[%s1 + $0x13c8] sm:$0xff]
    %v660 = vld [vmem:[%s1 + $0x13d0] sm:$0xff]
    %v661 = vld [vmem:[%s1 + $0x13d8] sm:$0xff]
    %v662 = vld [vmem:[%s1 + $0x13e0] sm:$0xff]
    %v663 = vld [vmem:[%s1 + $0x13e8] sm:$0xff]
    %v664 = vld [vmem:[%s1 + $0x13f0] sm:$0xff]
    %v665 = vld [vmem:[%s1 + $0x13f8] sm:$0xff]
    %v666 = vld [vmem:[%s1 + $0x1400] sm:$0xff]
    %v667 = vld [vmem:[%s1 + $0x1408] sm:$0xff]
    %v668 = vld [vmem:[%s1 + $0x1410] sm:$0xff]
    %v669 = vld [vmem:[%s1 + $0x1418] sm:$0xff]
    %v670 = vld [vmem:[%s1 + $0x1420] sm:$0xff]
    %v671 = vld [vmem:[%s1 + $0x1428] sm:$0xff]
    %v672 = vld [vmem:[%s1 + $0x1430] sm:$0xff]
    %v673 = vld [vmem:[%s1 + $0x1438] sm:$0xff]
    %v674 = vld [vmem:[%s1 + $0x1440] sm:$0xff]
    %v675 = vld [vmem:[%s1 + $0x1448] sm:$0xff]
    %v676 = vld [vmem:[%s1 + $0x1450] sm:$0xff]
    %v677 = vld [vmem:[%s1 + $0x1458] sm:$0xff]
    %v678 = vld [vmem:[%s1 + $0x1460] sm:$0xff]
    %v679 = vld [vmem:[%s1 + $0x1468] sm:$0xff]
    %v680 = vld [vmem:[%s1 + $0x1470] sm:$0xff]
    %v681 = vld [vmem:[%s1 + $0x1478] sm:$0xff]
    %v682 = vld [vmem:[%s1 + $0x1480] sm:$0xff]
    %v683 = vld [vmem:[%s1 + $0x1488] sm:$0xff]
    %v684 = vld [vmem:[%s1 + $0x1490] sm:$0xff]
    %v685 = vld [vmem:[%s1 + $0x1498] sm:$0xff]
    %v686 = vld [vmem:[%s1 + $0x14a0] sm:$0xff]
    %v687 = vld [vmem:[%s1 + $0x14a8] sm:$0xff]
    %v688 = vld [vmem:[%s1 + $0x14b0] sm:$0xff]
    %v689 = vld [vmem:[%s1 + $0x14b8] sm:$0xff]
    %v690 = vld [vmem:[%s1 + $0x14c0] sm:$0xff]
    %v691 = vld [vmem:[%s1 + $0x14c8] sm:$0xff]
    %v692 = vld [vmem:[%s1 + $0x14d0] sm:$0xff]
    %v693 = vld [vmem:[%s1 + $0x14d8] sm:$0xff]
    %v694 = vld [vmem:[%s1 + $0x14e0] sm:$0xff]
    %v695 = vld [vmem:[%s1 + $0x14e8] sm:$0xff]
    %v696 = vld [vmem:[%s1 + $0x14f0] sm:$0xff]
    %v697 = vld [vmem:[%s1 + $0x14f8] sm:$0xff]
    %v698 = vld [vmem:[%s1 + $0x1500] sm:$0xff]
    %v699 = vld [vmem:[%s1 + $0x1508] sm:$0xff]
    %v700 = vld [vmem:[%s1 + $0x1510] sm:$0xff]
    %v701 = vld [vmem:[%s1 + $0x1518] sm:$0xff]
    %v702 = vld [vmem:[%s1 + $0x1520] sm:$0xff]
    %v703 = vld [vmem:[%s1 + $0x1528] sm:$0xff]
    %v704 = vld [vmem:[%s1 + $0x1530] sm:$0xff]
    %v705 = vld [vmem:[%s1 + $0x1538] sm:$0xff]
    %v706 = vld [vmem:[%s1 + $0x1540] sm:$0xff]
    %v707 = vld [vmem:[%s1 + $0x1548] sm:$0xff]
    %v708 = vld [vmem:[%s1 + $0x1550] sm:$0xff]
    %v709 = vld [vmem:[%s1 + $0x1558] sm:$0xff]
    %v710 = vld [vmem:[%s1 + $0x1560] sm:$0xff]
    %v711 = vld [vmem:[%s1 + $0x1568] sm:$0xff]
    %v712 = vld [vmem:[%s1 + $0x1570] sm:$0xff]
    %v713 = vld [vmem:[%s1 + $0x1578] sm:$0xff]
    %v714 = vld [vmem:[%s1 + $0x1580] sm:$0xff]
    %v715 = vld [vmem:[%s1 + $0x1588] sm:$0xff]
    %v716 = vld [vmem:[%s1 + $0x1590] sm:$0xff]
    %v717 = vld [vmem:[%s1 + $0x1598] sm:$0xff]
    %v718 = vld [vmem:[%s1 + $0x15a0] sm:$0xff]
    %v719 = vld [vmem:[%s1 + $0x15a8] sm:$0xff]
    %v720 = vld [vmem:[%s1 + $0x15b0] sm:$0xff]
    %v721 = vld [vmem:[%s1 + $0x15b8] sm:$0xff]
    %v722 = vld [vmem:[%s1 + $0x15c0] sm:$0xff]
    %v723 = vld [vmem:[%s1 + $0x15c8] sm:$0xff]
    %v724 = vld [vmem:[%s1 + $0x15d0] sm:$0xff]
    %v725 = vld [vmem:[%s1 + $0x15d8] sm:$0xff]
    %v726 = vld [vmem:[%s1 + $0x15e0] sm:$0xff]
    %v727 = vld [vmem:[%s1 + $0x15e8] sm:$0xff]
    %v728 = vld [vmem:[%s1 + $0x15f0] sm:$0xff]
    %v729 = vld [vmem:[%s1 + $0x15f8] sm:$0xff]
    %v730 = vld [vmem:[%s1 + $0x1600] sm:$0xff]
    %v731 = vld [vmem:[%s1 + $0x1608] sm:$0xff]
    %v732 = vld [vmem:[%s1 + $0x1610] sm:$0xff]
    %v733 = vld [vmem:[%s1 + $0x1618] sm:$0xff]
    %v734 = vld [vmem:[%s1 + $0x1620] sm:$0xff]
    %v735 = vld [vmem:[%s1 + $0x1628] sm:$0xff]
    %v736 = vld [vmem:[%s1 + $0x1630] sm:$0xff]
    %v737 = vld [vmem:[%s1 + $0x1638] sm:$0xff]
    %v738 = vld [vmem:[%s1 + $0x1640] sm:$0xff]
    %v739 = vld [vmem:[%s1 + $0x1648] sm:$0xff]
    %v740 = vld [vmem:[%s1 + $0x1650] sm:$0xff]
    %v741 = vld [vmem:[%s1 + $0x1658] sm:$0xff]
    %v742 = vld [vmem:[%s1 + $0x1660] sm:$0xff]
    %v743 = vld [vmem:[%s1 + $0x1668] sm:$0xff]
    %v744 = vld [vmem:[%s1 + $0x1670] sm:$0xff]
    %v745 = vld [vmem:[%s1 + $0x1678] sm:$0xff]
    %v746 = vld [vmem:[%s1 + $0x1680] sm:$0xff]
    %v747 = vld [vmem:[%s1 + $0x1688] sm:$0xff]
    %v748 = vld [vmem:[%s1 + $0x1690] sm:$0xff]
    %v749 = vld [vmem:[%s1 + $0x1698] sm:$0xff]
    %v750 = vld [vmem:[%s1 + $0x16a0] sm:$0xff]
    %v751 = vld [vmem:[%s1 + $0x16a8] sm:$0xff]
    %v752 = vld [vmem:[%s1 + $0x16b0] sm:$0xff]
    %v753 = vld [vmem:[%s1 + $0x16b8] sm:$0xff]
    %v754 = vld [vmem:[%s1 + $0x16c0] sm:$0xff]
    %v755 = vld [vmem:[%s1 + $0x16c8] sm:$0xff]
    %v756 = vld [vmem:[%s1 + $0x16d0] sm:$0xff]
    %v757 = vld [vmem:[%s1 + $0x16d8] sm:$0xff]
    %v758 = vld [vmem:[%s1 + $0x16e0] sm:$0xff]
    %v759 = vld [vmem:[%s1 + $0x16e8] sm:$0xff]
    %v760 = vld [vmem:[%s1 + $0x16f0] sm:$0xff]
    %v761 = vld [vmem:[%s1 + $0x16f8] sm:$0xff]
    %v762 = vld [vmem:[%s1 + $0x1700] sm:$0xff]
    %v763 = vld [vmem:[%s1 + $0x1708] sm:$0xff]
    %v764 = vld [vmem:[%s1 + $0x1710] sm:$0xff]
    %v765 = vld [vmem:[%s1 + $0x1718] sm:$0xff]
    %v766 = vld [vmem:[%s1 + $0x1720] sm:$0xff]
    %v767 = vld [vmem:[%s1 + $0x1728] sm:$0xff]
    %v768 = vld [vmem:[%s1 + $0x1730] sm:$0xff]
    %v769 = vld [vmem:[%s1 + $0x1738] sm:$0xff]
    %v770 = vld [vmem:[%s1 + $0x1740] sm:$0xff]
    %v771 = vld [vmem:[%s1 + $0x1748] sm:$0xff]
    %v772 = vld [vmem:[%s1 + $0x1750] sm:$0xff]
    %v773 = vld [vmem:[%s1 + $0x1758] sm:$0xff]
    %v774 = vld [vmem:[%s1 + $0x1760] sm:$0xff]
    %v775 = vld [vmem:[%s1 + $0x1768] sm:$0xff]
    %v776 = vld [vmem:[%s1 + $0x1770] sm:$0xff]
    %v777 = vld [vmem:[%s1 + $0x1778] sm:$0xff]
    %v778 = vld [vmem:[%s1 + $0x1780] sm:$0xff]
    %v779 = vld [vmem:[%s1 + $0x1788] sm:$0xff]
    %v780 = vld [vmem:[%s1 + $0x1790] sm:$0xff]
    %v781 = vld [vmem:[%s1 + $0x1798] sm:$0xff]
    %v782 = vld [vmem:[%s1 + $0x17a0] sm:$0xff]
    %v783 = vld [vmem:[%s1 + $0x17a8] sm:$0xff]
    %v784 = vld [vmem:[%s1 + $0x17b0] sm:$0xff]
    %v785 = vld [vmem:[%s1 + $0x17b8] sm:$0xff]
    %v786 = vld [vmem:[%s1 + $0x17c0] sm:$0xff]
    %v787 = vld [vmem:[%s1 + $0x17c8] sm:$0xff]
    %v788 = vld [vmem:[%s1 + $0x17d0] sm:$0xff]
    %v789 = vld [vmem:[%s1 + $0x17d8] sm:$0xff]
    %v790 = vld [vmem:[%s1 + $0x17e0] sm:$0xff]
    %v791 = vld [vmem:[%s1 + $0x17e8] sm:$0xff]
    %v792 = vld [vmem:[%s1 + $0x17f0] sm:$0xff]
    %v793 = vld [vmem:[%s1 + $0x17f8] sm:$0xff]
    %v794 = vld [vmem:[%s1 + $0x1800] sm:$0xff]
    %v795 = vld [vmem:[%s1 + $0x1808] sm:$0xff]
    %v796 = vld [vmem:[%s1 + $0x1810] sm:$0xff]
    %v797 = vld [vmem:[%s1 + $0x1818] sm:$0xff]
    %v798 = vld [vmem:[%s1 + $0x1820] sm:$0xff]
    %v799 = vld [vmem:[%s1 + $0x1828] sm:$0xff]
    %v800 = vld [vmem:[%s1 + $0x1830] sm:$0xff]
    %v801 = vld [vmem:[%s1 + $0x1838] sm:$0xff]
    %v802 = vld [vmem:[%s1 + $0x1840] sm:$0xff]
    %v803 = vld [vmem:[%s1 + $0x1848] sm:$0xff]
    %v804 = vld [vmem:[%s1 + $0x1850] sm:$0xff]
    %v805 = vld [vmem:[%s1 + $0x1858] sm:$0xff]
    %v806 = vld [vmem:[%s1 + $0x1860] sm:$0xff]
    %v807 = vld [vmem:[%s1 + $0x1868] sm:$0xff]
    %v808 = vld [vmem:[%s1 + $0x1870] sm:$0xff]
    %v809 = vld [vmem:[%s1 + $0x1878] sm:$0xff]
    %v810 = vld [vmem:[%s2] sm:$0xf]
    %v812 = vlaneseq
    %v813 = vshrl.u32 %v812, 7
    %v814 = vsub.s32 0, %v813
    %v815 = vrot.slane %v810, %v814
    %v816 = vlaneseq
    %v817 = vshrl.u32 %v816, 7
    %v818 = vsub.s32 1, %v817
    %v819 = vrot.slane %v810, %v818
    %v820 = vlaneseq
    %v821 = vshrl.u32 %v820, 7
    %v822 = vsub.s32 2, %v821
    %v823 = vrot.slane %v810, %v822
    %v824 = vlaneseq
    %v825 = vshrl.u32 %v824, 7
    %v826 = vsub.s32 3, %v825
    %v827 = vrot.slane %v810, %v826
    %v836 = vcombine.high %v22, %v22
    %v838 = vunpack.c.l.s4 1966171168
    %v839 = vunpack.c.0.s8 %v838
    %v840 = vlaneseq
    %v841 = vshrl.u32 %v840, 7
    %v842 = vsub.s32 %v839, %v841
    %v843 = vrot.slane %v22, %v842
    %v845 = vunpack.c.l.s4 1966171168
    %v846 = vunpack.c.0.s8 %v845
    %v847 = vlaneseq
    %v848 = vshrl.u32 %v847, 7
    %v849 = vsub.s32 %v846, %v848
    %v850 = vrot.slane %v836, %v849
    %v851 = vcombine.high %v843, %v843
    %v852 = vcombine.high %v850, %v850
    %v854 = vunpack.c.l.s4 1966171168
    %v855 = vunpack.c.0.s8 %v854
    %v856 = vlaneseq
    %v857 = vshrl.u32 %v856, 7
    %v858 = vsub.s32 %v855, %v857
    %v859 = vrot.slane %v843, %v858
    %v861 = vunpack.c.l.s4 1966171168
    %v862 = vunpack.c.0.s8 %v861
    %v863 = vlaneseq
    %v864 = vshrl.u32 %v863, 7
    %v865 = vsub.s32 %v862, %v864
    %v866 = vrot.slane %v850, %v865
    %v868 = vunpack.c.l.s4 1966171168
    %v869 = vunpack.c.0.s8 %v868
    %v870 = vlaneseq
    %v871 = vshrl.u32 %v870, 7
    %v872 = vsub.s32 %v869, %v871
    %v873 = vrot.slane %v851, %v872
    %v875 = vunpack.c.l.s4 1966171168
    %v876 = vunpack.c.0.s8 %v875
    %v877 = vlaneseq
    %v878 = vshrl.u32 %v877, 7
    %v879 = vsub.s32 %v876, %v878
    %v880 = vrot.slane %v852, %v879
    %v881 = vcombine.high %v859, %v859
    %v882 = vcombine.high %v866, %v866
    %v883 = vcombine.high %v873, %v873
    %v884 = vcombine.high %v880, %v880
    %v885 = vcombine.high %v23, %v23
    %v887 = vunpack.c.l.s4 1966171168
    %v888 = vunpack.c.0.s8 %v887
    %v889 = vlaneseq
    %v890 = vshrl.u32 %v889, 7
    %v891 = vsub.s32 %v888, %v890
    %v892 = vrot.slane %v23, %v891
    %v894 = vunpack.c.l.s4 1966171168
    %v895 = vunpack.c.0.s8 %v894
    %v896 = vlaneseq
    %v897 = vshrl.u32 %v896, 7
    %v898 = vsub.s32 %v895, %v897
    %v899 = vrot.slane %v885, %v898
    %v900 = vcombine.high %v892, %v892
    %v901 = vcombine.high %v899, %v899
    %v903 = vunpack.c.l.s4 1966171168
    %v904 = vunpack.c.0.s8 %v903
    %v905 = vlaneseq
    %v906 = vshrl.u32 %v905, 7
    %v907 = vsub.s32 %v904, %v906
    %v908 = vrot.slane %v892, %v907
    %v910 = vunpack.c.l.s4 1966171168
    %v911 = vunpack.c.0.s8 %v910
    %v912 = vlaneseq
    %v913 = vshrl.u32 %v912, 7
    %v914 = vsub.s32 %v911, %v913
    %v915 = vrot.slane %v899, %v914
    %v917 = vunpack.c.l.s4 1966171168
    %v918 = vunpack.c.0.s8 %v917
    %v919 = vlaneseq
    %v920 = vshrl.u32 %v919, 7
    %v921 = vsub.s32 %v918, %v920
    %v922 = vrot.slane %v900, %v921
    %v924 = vunpack.c.l.s4 1966171168
    %v925 = vunpack.c.0.s8 %v924
    %v926 = vlaneseq
    %v927 = vshrl.u32 %v926, 7
    %v928 = vsub.s32 %v925, %v927
    %v929 = vrot.slane %v901, %v928
    %v930 = vcombine.high %v908, %v908
    %v931 = vcombine.high %v915, %v915
    %v932 = vcombine.high %v922, %v922
    %v933 = vcombine.high %v929, %v929
    %v934 = vcombine.high %v24, %v24
    %v936 = vunpack.c.l.s4 1966171168
    %v937 = vunpack.c.0.s8 %v936
    %v938 = vlaneseq
    %v939 = vshrl.u32 %v938, 7
    %v940 = vsub.s32 %v937, %v939
    %v941 = vrot.slane %v24, %v940
    %v943 = vunpack.c.l.s4 1966171168
    %v944 = vunpack.c.0.s8 %v943
    %v945 = vlaneseq
    %v946 = vshrl.u32 %v945, 7
    %v947 = vsub.s32 %v944, %v946
    %v948 = vrot.slane %v934, %v947
    %v949 = vcombine.high %v941, %v941
    %v950 = vcombine.high %v948, %v948
    %v952 = vunpack.c.l.s4 1966171168
    %v953 = vunpack.c.0.s8 %v952
    %v954 = vlaneseq
    %v955 = vshrl.u32 %v954, 7
    %v956 = vsub.s32 %v953, %v955
    %v957 = vrot.slane %v941, %v956
    %v959 = vunpack.c.l.s4 1966171168
    %v960 = vunpack.c.0.s8 %v959
    %v961 = vlaneseq
    %v962 = vshrl.u32 %v961, 7
    %v963 = vsub.s32 %v960, %v962
    %v964 = vrot.slane %v948, %v963
    %v966 = vunpack.c.l.s4 1966171168
    %v967 = vunpack.c.0.s8 %v966
    %v968 = vlaneseq
    %v969 = vshrl.u32 %v968, 7
    %v970 = vsub.s32 %v967, %v969
    %v971 = vrot.slane %v949, %v970
    %v973 = vunpack.c.l.s4 1966171168
    %v974 = vunpack.c.0.s8 %v973
    %v975 = vlaneseq
    %v976 = vshrl.u32 %v975, 7
    %v977 = vsub.s32 %v974, %v976
    %v978 = vrot.slane %v950, %v977
    %v979 = vcombine.high %v957, %v957
    %v980 = vcombine.high %v964, %v964
    %v981 = vcombine.high %v971, %v971
    %v982 = vcombine.high %v978, %v978
    %v984 = vunpack.c.l.s4 1966171168
    %v985 = vunpack.c.0.s8 %v984
    %v986 = vlaneseq
    %v987 = vshrl.u32 %v986, 7
    %v988 = vsub.s32 %v985, %v987
    %v989 = vrot.slane %v25, %v988
    %v991 = vunpack.c.l.s4 1966171168
    %v992 = vunpack.c.0.s8 %v991
    %v993 = vlaneseq
    %v994 = vshrl.u32 %v993, 7
    %v995 = vsub.s32 %v992, %v994
    %v996 = vrot.slane %v989, %v995
    %v1805 = vunpack.c.l.b16 %v26
    %v1806 = vunpack.c.h.b16 %v26
    %v1807 = vunpack.c.l.b16 %v27
    %v1808 = vunpack.c.h.b16 %v27
    %v1809 = vunpack.c.l.b16 %v28
    %v1810 = vunpack.c.h.b16 %v28
    %v1811 = vunpack.c.l.b16 %v29
    %v1812 = vunpack.c.h.b16 %v29
    %v1813 = vunpack.c.l.b16 %v30
    %v1814 = vunpack.c.h.b16 %v30
    %v1815 = vunpack.c.l.b16 %v31
    %v1816 = vunpack.c.h.b16 %v31
    %v1817 = vunpack.c.l.b16 %v32
    %v1818 = vunpack.c.h.b16 %v32
    %v1819 = vunpack.c.l.b16 %v33
    %v1820 = vunpack.c.h.b16 %v33
    %v1821 = vunpack.c.l.b16 %v34
    %v1822 = vunpack.c.h.b16 %v34
    %v1823 = vunpack.c.l.b16 %v35
    %v1824 = vunpack.c.h.b16 %v35
    %v1825 = vunpack.c.l.b16 %v36
    %v1826 = vunpack.c.h.b16 %v36
    %v1827 = vunpack.c.l.b16 %v37
    %v1828 = vunpack.c.h.b16 %v37
    %v1829 = vunpack.c.l.b16 %v38
    %v1830 = vunpack.c.h.b16 %v38
    %v1831 = vunpack.c.l.b16 %v39
    %v1832 = vunpack.c.h.b16 %v39
    %v1833 = vunpack.c.l.b16 %v40
    %v1834 = vunpack.c.h.b16 %v40
    %v1835 = vunpack.c.l.b16 %v41
    %v1836 = vunpack.c.h.b16 %v41
    %v1837 = vunpack.c.l.b16 %v42
    %v1838 = vunpack.c.h.b16 %v42
    %v1839 = vunpack.c.l.b16 %v43
    %v1840 = vunpack.c.h.b16 %v43
    %v1841 = vunpack.c.l.b16 %v44
    %v1842 = vunpack.c.h.b16 %v44
    %v1843 = vunpack.c.l.b16 %v45
    %v1844 = vunpack.c.h.b16 %v45
    %v1845 = vunpack.c.l.b16 %v46
    %v1846 = vunpack.c.h.b16 %v46
    %v1847 = vunpack.c.l.b16 %v47
    %v1848 = vunpack.c.h.b16 %v47
    %v1849 = vunpack.c.l.b16 %v48
    %v1850 = vunpack.c.h.b16 %v48
    %v1851 = vunpack.c.l.b16 %v49
    %v1852 = vunpack.c.h.b16 %v49
    %v1853 = vunpack.c.l.b16 %v50
    %v1854 = vunpack.c.h.b16 %v50
    %v1855 = vunpack.c.l.b16 %v51
    %v1856 = vunpack.c.h.b16 %v51
    %v1857 = vunpack.c.l.b16 %v52
    %v1858 = vunpack.c.h.b16 %v52
    %v1859 = vunpack.c.l.b16 %v53
    %v1860 = vunpack.c.h.b16 %v53
    %v1861 = vunpack.c.l.b16 %v54
    %v1862 = vunpack.c.h.b16 %v54
    %v1863 = vunpack.c.l.b16 %v55
    %v1864 = vunpack.c.h.b16 %v55
    %v1865 = vunpack.c.l.b16 %v56
    %v1866 = vunpack.c.h.b16 %v56
    %v1867 = vunpack.c.l.b16 %v57
    %v1868 = vunpack.c.h.b16 %v57
    %v1869 = vunpack.c.l.b16 %v58
    %v1870 = vunpack.c.h.b16 %v58
    %v1871 = vunpack.c.l.b16 %v59
    %v1872 = vunpack.c.h.b16 %v59
    %v1873 = vunpack.c.l.b16 %v60
    %v1874 = vunpack.c.h.b16 %v60
    %v1875 = vunpack.c.l.b16 %v61
    %v1876 = vunpack.c.h.b16 %v61
    %v1877 = vunpack.c.l.b16 %v62
    %v1878 = vunpack.c.h.b16 %v62
    %v1879 = vunpack.c.l.b16 %v63
    %v1880 = vunpack.c.h.b16 %v63
    %v1881 = vunpack.c.l.b16 %v64
    %v1882 = vunpack.c.h.b16 %v64
    %v1883 = vunpack.c.l.b16 %v65
    %v1884 = vunpack.c.h.b16 %v65
    %v1885 = vunpack.c.l.b16 %v66
    %v1886 = vunpack.c.h.b16 %v66
    %v1887 = vunpack.c.l.b16 %v67
    %v1888 = vunpack.c.h.b16 %v67
    %v1889 = vunpack.c.l.b16 %v68
    %v1890 = vunpack.c.h.b16 %v68
    %v1891 = vunpack.c.l.b16 %v69
    %v1892 = vunpack.c.h.b16 %v69
    %v1893 = vunpack.c.l.b16 %v70
    %v1894 = vunpack.c.h.b16 %v70
    %v1895 = vunpack.c.l.b16 %v71
    %v1896 = vunpack.c.h.b16 %v71
    %v1897 = vunpack.c.l.b16 %v72
    %v1898 = vunpack.c.h.b16 %v72
    %v1899 = vunpack.c.l.b16 %v73
    %v1900 = vunpack.c.h.b16 %v73
    %v1901 = vunpack.c.l.b16 %v74
    %v1902 = vunpack.c.h.b16 %v74
    %v1903 = vunpack.c.l.b16 %v75
    %v1904 = vunpack.c.h.b16 %v75
    %v1905 = vunpack.c.l.b16 %v76
    %v1906 = vunpack.c.h.b16 %v76
    %v1907 = vunpack.c.l.b16 %v77
    %v1908 = vunpack.c.h.b16 %v77
    %v1909 = vunpack.c.l.b16 %v78
    %v1910 = vunpack.c.h.b16 %v78
    %v1911 = vunpack.c.l.b16 %v79
    %v1912 = vunpack.c.h.b16 %v79
    %v1913 = vunpack.c.l.b16 %v80
    %v1914 = vunpack.c.h.b16 %v80
    %v1915 = vunpack.c.l.b16 %v81
    %v1916 = vunpack.c.h.b16 %v81
    %v1917 = vunpack.c.l.b16 %v82
    %v1918 = vunpack.c.h.b16 %v82
    %v1919 = vunpack.c.l.b16 %v83
    %v1920 = vunpack.c.h.b16 %v83
    %v1921 = vunpack.c.l.b16 %v84
    %v1922 = vunpack.c.h.b16 %v84
    %v1923 = vunpack.c.l.b16 %v85
    %v1924 = vunpack.c.h.b16 %v85
    %v1925 = vunpack.c.l.b16 %v86
    %v1926 = vunpack.c.h.b16 %v86
    %v1927 = vunpack.c.l.b16 %v87
    %v1928 = vunpack.c.h.b16 %v87
    %v1929 = vunpack.c.l.b16 %v88
    %v1930 = vunpack.c.h.b16 %v88
    %v1931 = vunpack.c.l.b16 %v89
    %v1932 = vunpack.c.h.b16 %v89
    %v1933 = vunpack.c.l.b16 %v90
    %v1934 = vunpack.c.h.b16 %v90
    %v1935 = vunpack.c.l.b16 %v91
    %v1936 = vunpack.c.h.b16 %v91
    %v1937 = vunpack.c.l.b16 %v92
    %v1938 = vunpack.c.h.b16 %v92
    %v1939 = vunpack.c.l.b16 %v93
    %v1940 = vunpack.c.h.b16 %v93
    %v1941 = vunpack.c.l.b16 %v94
    %v1942 = vunpack.c.h.b16 %v94
    %v1943 = vunpack.c.l.b16 %v95
    %v1944 = vunpack.c.h.b16 %v95
    %v1945 = vunpack.c.l.b16 %v96
    %v1946 = vunpack.c.h.b16 %v96
    %v1947 = vunpack.c.l.b16 %v97
    %v1948 = vunpack.c.h.b16 %v97
    %v1949 = vunpack.c.l.b16 %v98
    %v1950 = vunpack.c.h.b16 %v98
    %v1951 = vunpack.c.l.b16 %v99
    %v1952 = vunpack.c.h.b16 %v99
    %v1953 = vunpack.c.l.b16 %v100
    %v1954 = vunpack.c.h.b16 %v100
    %v1955 = vunpack.c.l.b16 %v101
    %v1956 = vunpack.c.h.b16 %v101
    %v1957 = vunpack.c.l.b16 %v102
    %v1958 = vunpack.c.h.b16 %v102
    %v1959 = vunpack.c.l.b16 %v103
    %v1960 = vunpack.c.h.b16 %v103
    %v1961 = vunpack.c.l.b16 %v104
    %v1962 = vunpack.c.h.b16 %v104
    %v1963 = vunpack.c.l.b16 %v105
    %v1964 = vunpack.c.h.b16 %v105
    %v1965 = vunpack.c.l.b16 %v106
    %v1966 = vunpack.c.h.b16 %v106
    %v1967 = vunpack.c.l.b16 %v107
    %v1968 = vunpack.c.h.b16 %v107
    %v1969 = vunpack.c.l.b16 %v108
    %v1970 = vunpack.c.h.b16 %v108
    %v1971 = vunpack.c.l.b16 %v109
    %v1972 = vunpack.c.h.b16 %v109
    %v1973 = vunpack.c.l.b16 %v110
    %v1974 = vunpack.c.h.b16 %v110
    %v1975 = vunpack.c.l.b16 %v111
    %v1976 = vunpack.c.h.b16 %v111
    %v1977 = vunpack.c.l.b16 %v112
    %v1978 = vunpack.c.h.b16 %v112
    %v1979 = vunpack.c.l.b16 %v113
    %v1980 = vunpack.c.h.b16 %v113
    %v1981 = vunpack.c.l.b16 %v114
    %v1982 = vunpack.c.h.b16 %v114
    %v1983 = vunpack.c.l.b16 %v115
    %v1984 = vunpack.c.h.b16 %v115
    %v1985 = vunpack.c.l.b16 %v116
    %v1986 = vunpack.c.h.b16 %v116
    %v1987 = vunpack.c.l.b16 %v117
    %v1988 = vunpack.c.h.b16 %v117
    %v1989 = vunpack.c.l.b16 %v118
    %v1990 = vunpack.c.h.b16 %v118
    %v1991 = vunpack.c.l.b16 %v119
    %v1992 = vunpack.c.h.b16 %v119
    %v1993 = vunpack.c.l.b16 %v120
    %v1994 = vunpack.c.h.b16 %v120
    %v1995 = vunpack.c.l.b16 %v121
    %v1996 = vunpack.c.h.b16 %v121
    %v1997 = vunpack.c.l.b16 %v122
    %v1998 = vunpack.c.h.b16 %v122
    %v1999 = vunpack.c.l.b16 %v123
    %v2000 = vunpack.c.h.b16 %v123
    %v2001 = vunpack.c.l.b16 %v124
    %v2002 = vunpack.c.h.b16 %v124
    %v2003 = vunpack.c.l.b16 %v125
    %v2004 = vunpack.c.h.b16 %v125
    %v2005 = vunpack.c.l.b16 %v126
    %v2006 = vunpack.c.h.b16 %v126
    %v2007 = vunpack.c.l.b16 %v127
    %v2008 = vunpack.c.h.b16 %v127
    %v2009 = vunpack.c.l.b16 %v128
    %v2010 = vunpack.c.h.b16 %v128
    %v2011 = vunpack.c.l.b16 %v129
    %v2012 = vunpack.c.h.b16 %v129
    %v2013 = vunpack.c.l.b16 %v130
    %v2014 = vunpack.c.h.b16 %v130
    %v2015 = vunpack.c.l.b16 %v131
    %v2016 = vunpack.c.h.b16 %v131
    %v2017 = vunpack.c.l.b16 %v132
    %v2018 = vunpack.c.h.b16 %v132
    %v2019 = vunpack.c.l.b16 %v133
    %v2020 = vunpack.c.h.b16 %v133
    %v2021 = vunpack.c.l.b16 %v134
    %v2022 = vunpack.c.h.b16 %v134
    %v2023 = vunpack.c.l.b16 %v135
    %v2024 = vunpack.c.h.b16 %v135
    %v2025 = vunpack.c.l.b16 %v136
    %v2026 = vunpack.c.h.b16 %v136
    %v2027 = vunpack.c.l.b16 %v137
    %v2028 = vunpack.c.h.b16 %v137
    %v2029 = vunpack.c.l.b16 %v138
    %v2030 = vunpack.c.h.b16 %v138
    %v2031 = vunpack.c.l.b16 %v139
    %v2032 = vunpack.c.h.b16 %v139
    %v2033 = vunpack.c.l.b16 %v140
    %v2034 = vunpack.c.h.b16 %v140
    %v2035 = vunpack.c.l.b16 %v141
    %v2036 = vunpack.c.h.b16 %v141
    %v2037 = vunpack.c.l.b16 %v142
    %v2038 = vunpack.c.h.b16 %v142
    %v2039 = vunpack.c.l.b16 %v143
    %v2040 = vunpack.c.h.b16 %v143
    %v2041 = vunpack.c.l.b16 %v144
    %v2042 = vunpack.c.h.b16 %v144
    %v2043 = vunpack.c.l.b16 %v145
    %v2044 = vunpack.c.h.b16 %v145
    %v2045 = vunpack.c.l.b16 %v146
    %v2046 = vunpack.c.h.b16 %v146
    %v2047 = vunpack.c.l.b16 %v147
    %v2048 = vunpack.c.h.b16 %v147
    %v2049 = vunpack.c.l.b16 %v148
    %v2050 = vunpack.c.h.b16 %v148
    %v2051 = vunpack.c.l.b16 %v149
    %v2052 = vunpack.c.h.b16 %v149
    %v2053 = vunpack.c.l.b16 %v150
    %v2054 = vunpack.c.h.b16 %v150
    %v2055 = vunpack.c.l.b16 %v151
    %v2056 = vunpack.c.h.b16 %v151
    %v2057 = vunpack.c.l.b16 %v152
    %v2058 = vunpack.c.h.b16 %v152
    %v2059 = vunpack.c.l.b16 %v153
    %v2060 = vunpack.c.h.b16 %v153
    %v2061 = vunpack.c.l.b16 %v154
    %v2062 = vunpack.c.h.b16 %v154
    %v2063 = vunpack.c.l.b16 %v155
    %v2064 = vunpack.c.h.b16 %v155
    %v2065 = vunpack.c.l.b16 %v156
    %v2066 = vunpack.c.h.b16 %v156
    %v2067 = vunpack.c.l.b16 %v157
    %v2068 = vunpack.c.h.b16 %v157
    %v2069 = vunpack.c.l.b16 %v158
    %v2070 = vunpack.c.h.b16 %v158
    %v2071 = vunpack.c.l.b16 %v159
    %v2072 = vunpack.c.h.b16 %v159
    %v2073 = vunpack.c.l.b16 %v160
    %v2074 = vunpack.c.h.b16 %v160
    %v2075 = vunpack.c.l.b16 %v161
    %v2076 = vunpack.c.h.b16 %v161
    %v2077 = vunpack.c.l.b16 %v162
    %v2078 = vunpack.c.h.b16 %v162
    %v2079 = vunpack.c.l.b16 %v163
    %v2080 = vunpack.c.h.b16 %v163
    %v2081 = vunpack.c.l.b16 %v164
    %v2082 = vunpack.c.h.b16 %v164
    %v2083 = vunpack.c.l.b16 %v165
    %v2084 = vunpack.c.h.b16 %v165
    %v2085 = vunpack.c.l.b16 %v166
    %v2086 = vunpack.c.h.b16 %v166
    %v2087 = vunpack.c.l.b16 %v167
    %v2088 = vunpack.c.h.b16 %v167
    %v2089 = vunpack.c.l.b16 %v168
    %v2090 = vunpack.c.h.b16 %v168
    %v2091 = vunpack.c.l.b16 %v169
    %v2092 = vunpack.c.h.b16 %v169
    %v2093 = vunpack.c.l.b16 %v170
    %v2094 = vunpack.c.h.b16 %v170
    %v2095 = vunpack.c.l.b16 %v171
    %v2096 = vunpack.c.h.b16 %v171
    %v2097 = vunpack.c.l.b16 %v172
    %v2098 = vunpack.c.h.b16 %v172
    %v2099 = vunpack.c.l.b16 %v173
    %v2100 = vunpack.c.h.b16 %v173
    %v2101 = vunpack.c.l.b16 %v174
    %v2102 = vunpack.c.h.b16 %v174
    %v2103 = vunpack.c.l.b16 %v175
    %v2104 = vunpack.c.h.b16 %v175
    %v2105 = vunpack.c.l.b16 %v176
    %v2106 = vunpack.c.h.b16 %v176
    %v2107 = vunpack.c.l.b16 %v177
    %v2108 = vunpack.c.h.b16 %v177
    %v2109 = vunpack.c.l.b16 %v178
    %v2110 = vunpack.c.h.b16 %v178
    %v2111 = vunpack.c.l.b16 %v179
    %v2112 = vunpack.c.h.b16 %v179
    %v2113 = vunpack.c.l.b16 %v180
    %v2114 = vunpack.c.h.b16 %v180
    %v2115 = vunpack.c.l.b16 %v181
    %v2116 = vunpack.c.h.b16 %v181
    %v2117 = vunpack.c.l.b16 %v182
    %v2118 = vunpack.c.h.b16 %v182
    %v2119 = vunpack.c.l.b16 %v183
    %v2120 = vunpack.c.h.b16 %v183
    %v2121 = vunpack.c.l.b16 %v184
    %v2122 = vunpack.c.h.b16 %v184
    %v2123 = vunpack.c.l.b16 %v185
    %v2124 = vunpack.c.h.b16 %v185
    %v2125 = vunpack.c.l.b16 %v186
    %v2126 = vunpack.c.h.b16 %v186
    %v2127 = vunpack.c.l.b16 %v187
    %v2128 = vunpack.c.h.b16 %v187
    %v2129 = vunpack.c.l.b16 %v188
    %v2130 = vunpack.c.h.b16 %v188
    %v2131 = vunpack.c.l.b16 %v189
    %v2132 = vunpack.c.h.b16 %v189
    %v2133 = vunpack.c.l.b16 %v190
    %v2134 = vunpack.c.h.b16 %v190
    %v2135 = vunpack.c.l.b16 %v191
    %v2136 = vunpack.c.h.b16 %v191
    %v2137 = vunpack.c.l.b16 %v192
    %v2138 = vunpack.c.h.b16 %v192
    %v2139 = vunpack.c.l.b16 %v193
    %v2140 = vunpack.c.h.b16 %v193
    %v2141 = vunpack.c.l.b16 %v194
    %v2142 = vunpack.c.h.b16 %v194
    %v2143 = vunpack.c.l.b16 %v195
    %v2144 = vunpack.c.h.b16 %v195
    %v2145 = vunpack.c.l.b16 %v196
    %v2146 = vunpack.c.h.b16 %v196
    %v2147 = vunpack.c.l.b16 %v197
    %v2148 = vunpack.c.h.b16 %v197
    %v2149 = vunpack.c.l.b16 %v198
    %v2150 = vunpack.c.h.b16 %v198
    %v2151 = vunpack.c.l.b16 %v199
    %v2152 = vunpack.c.h.b16 %v199
    %v2153 = vunpack.c.l.b16 %v200
    %v2154 = vunpack.c.h.b16 %v200
    %v2155 = vunpack.c.l.b16 %v201
    %v2156 = vunpack.c.h.b16 %v201
    %v2157 = vunpack.c.l.b16 %v202
    %v2158 = vunpack.c.h.b16 %v202
    %v2159 = vunpack.c.l.b16 %v203
    %v2160 = vunpack.c.h.b16 %v203
    %v2161 = vunpack.c.l.b16 %v204
    %v2162 = vunpack.c.h.b16 %v204
    %v2163 = vunpack.c.l.b16 %v205
    %v2164 = vunpack.c.h.b16 %v205
    %v2165 = vunpack.c.l.b16 %v206
    %v2166 = vunpack.c.h.b16 %v206
    %v2167 = vunpack.c.l.b16 %v207
    %v2168 = vunpack.c.h.b16 %v207
    %v2169 = vunpack.c.l.b16 %v208
    %v2170 = vunpack.c.h.b16 %v208
    %v2171 = vunpack.c.l.b16 %v209
    %v2172 = vunpack.c.h.b16 %v209
    %v2173 = vunpack.c.l.b16 %v210
    %v2174 = vunpack.c.h.b16 %v210
    %v2175 = vunpack.c.l.b16 %v211
    %v2176 = vunpack.c.h.b16 %v211
    %v2177 = vunpack.c.l.b16 %v212
    %v2178 = vunpack.c.h.b16 %v212
    %v2179 = vunpack.c.l.b16 %v213
    %v2180 = vunpack.c.h.b16 %v213
    %v2181 = vunpack.c.l.b16 %v214
    %v2182 = vunpack.c.h.b16 %v214
    %v2183 = vunpack.c.l.b16 %v215
    %v2184 = vunpack.c.h.b16 %v215
    %v2185 = vunpack.c.l.b16 %v216
    %v2186 = vunpack.c.h.b16 %v216
    %v2187 = vunpack.c.l.b16 %v217
    %v2188 = vunpack.c.h.b16 %v217
    %v2189 = vunpack.c.l.b16 %v218
    %v2190 = vunpack.c.h.b16 %v218
    %v2191 = vunpack.c.l.b16 %v219
    %v2192 = vunpack.c.h.b16 %v219
    %v2193 = vunpack.c.l.b16 %v220
    %v2194 = vunpack.c.h.b16 %v220
    %v2195 = vunpack.c.l.b16 %v221
    %v2196 = vunpack.c.h.b16 %v221
    %v2197 = vunpack.c.l.b16 %v222
    %v2198 = vunpack.c.h.b16 %v222
    %v2199 = vunpack.c.l.b16 %v223
    %v2200 = vunpack.c.h.b16 %v223
    %v2201 = vunpack.c.l.b16 %v224
    %v2202 = vunpack.c.h.b16 %v224
    %v2203 = vunpack.c.l.b16 %v225
    %v2204 = vunpack.c.h.b16 %v225
    %v2205 = vunpack.c.l.b16 %v226
    %v2206 = vunpack.c.h.b16 %v226
    %v2207 = vunpack.c.l.b16 %v227
    %v2208 = vunpack.c.h.b16 %v227
    %v2209 = vunpack.c.l.b16 %v228
    %v2210 = vunpack.c.h.b16 %v228
    %v2211 = vunpack.c.l.b16 %v229
    %v2212 = vunpack.c.h.b16 %v229
    %v2213 = vunpack.c.l.b16 %v230
    %v2214 = vunpack.c.h.b16 %v230
    %v2215 = vunpack.c.l.b16 %v231
    %v2216 = vunpack.c.h.b16 %v231
    %v2217 = vunpack.c.l.b16 %v232
    %v2218 = vunpack.c.h.b16 %v232
    %v2219 = vunpack.c.l.b16 %v233
    %v2220 = vunpack.c.h.b16 %v233
    %v2221 = vunpack.c.l.b16 %v234
    %v2222 = vunpack.c.h.b16 %v234
    %v2223 = vunpack.c.l.b16 %v235
    %v2224 = vunpack.c.h.b16 %v235
    %v2225 = vunpack.c.l.b16 %v236
    %v2226 = vunpack.c.h.b16 %v236
    %v2227 = vunpack.c.l.b16 %v237
    %v2228 = vunpack.c.h.b16 %v237
    %v2229 = vunpack.c.l.b16 %v238
    %v2230 = vunpack.c.h.b16 %v238
    %v2231 = vunpack.c.l.b16 %v239
    %v2232 = vunpack.c.h.b16 %v239
    %v2233 = vunpack.c.l.b16 %v240
    %v2234 = vunpack.c.h.b16 %v240
    %v2235 = vunpack.c.l.b16 %v241
    %v2236 = vunpack.c.h.b16 %v241
    %v2237 = vunpack.c.l.b16 %v242
    %v2238 = vunpack.c.h.b16 %v242
    %v2239 = vunpack.c.l.b16 %v243
    %v2240 = vunpack.c.h.b16 %v243
    %v2241 = vunpack.c.l.b16 %v244
    %v2242 = vunpack.c.h.b16 %v244
    %v2243 = vunpack.c.l.b16 %v245
    %v2244 = vunpack.c.h.b16 %v245
    %v2245 = vunpack.c.l.b16 %v246
    %v2246 = vunpack.c.h.b16 %v246
    %v2247 = vunpack.c.l.b16 %v247
    %v2248 = vunpack.c.h.b16 %v247
    %v2249 = vunpack.c.l.b16 %v248
    %v2250 = vunpack.c.h.b16 %v248
    %v2251 = vunpack.c.l.b16 %v249
    %v2252 = vunpack.c.h.b16 %v249
    %v2253 = vunpack.c.l.b16 %v250
    %v2254 = vunpack.c.h.b16 %v250
    %v2255 = vunpack.c.l.b16 %v251
    %v2256 = vunpack.c.h.b16 %v251
    %v2257 = vunpack.c.l.b16 %v252
    %v2258 = vunpack.c.h.b16 %v252
    %v2259 = vunpack.c.l.b16 %v253
    %v2260 = vunpack.c.h.b16 %v253
    %v2261 = vunpack.c.l.b16 %v254
    %v2262 = vunpack.c.h.b16 %v254
    %v2263 = vunpack.c.l.b16 %v255
    %v2264 = vunpack.c.h.b16 %v255
    %v2265 = vunpack.c.l.b16 %v256
    %v2266 = vunpack.c.h.b16 %v256
    %v2267 = vunpack.c.l.b16 %v257
    %v2268 = vunpack.c.h.b16 %v257
    %v2269 = vunpack.c.l.b16 %v258
    %v2270 = vunpack.c.h.b16 %v258
    %v2271 = vunpack.c.l.b16 %v259
    %v2272 = vunpack.c.h.b16 %v259
    %v2273 = vunpack.c.l.b16 %v260
    %v2274 = vunpack.c.h.b16 %v260
    %v2275 = vunpack.c.l.b16 %v261
    %v2276 = vunpack.c.h.b16 %v261
    %v2277 = vunpack.c.l.b16 %v262
    %v2278 = vunpack.c.h.b16 %v262
    %v2279 = vunpack.c.l.b16 %v263
    %v2280 = vunpack.c.h.b16 %v263
    %v2281 = vunpack.c.l.b16 %v264
    %v2282 = vunpack.c.h.b16 %v264
    %v2283 = vunpack.c.l.b16 %v265
    %v2284 = vunpack.c.h.b16 %v265
    %v2285 = vunpack.c.l.b16 %v266
    %v2286 = vunpack.c.h.b16 %v266
    %v2287 = vunpack.c.l.b16 %v267
    %v2288 = vunpack.c.h.b16 %v267
    %v2289 = vunpack.c.l.b16 %v268
    %v2290 = vunpack.c.h.b16 %v268
    %v2291 = vunpack.c.l.b16 %v269
    %v2292 = vunpack.c.h.b16 %v269
    %v2293 = vunpack.c.l.b16 %v270
    %v2294 = vunpack.c.h.b16 %v270
    %v2295 = vunpack.c.l.b16 %v271
    %v2296 = vunpack.c.h.b16 %v271
    %v2297 = vunpack.c.l.b16 %v272
    %v2298 = vunpack.c.h.b16 %v272
    %v2299 = vunpack.c.l.b16 %v273
    %v2300 = vunpack.c.h.b16 %v273
    %v2301 = vunpack.c.l.b16 %v274
    %v2302 = vunpack.c.h.b16 %v274
    %v2303 = vunpack.c.l.b16 %v275
    %v2304 = vunpack.c.h.b16 %v275
    %v2305 = vunpack.c.l.b16 %v276
    %v2306 = vunpack.c.h.b16 %v276
    %v2307 = vunpack.c.l.b16 %v277
    %v2308 = vunpack.c.h.b16 %v277
    %v2309 = vunpack.c.l.b16 %v278
    %v2310 = vunpack.c.h.b16 %v278
    %v2311 = vunpack.c.l.b16 %v279
    %v2312 = vunpack.c.h.b16 %v279
    %v2313 = vunpack.c.l.b16 %v280
    %v2314 = vunpack.c.h.b16 %v280
    %v2315 = vunpack.c.l.b16 %v281
    %v2316 = vunpack.c.h.b16 %v281
    %v2317 = vunpack.c.l.b16 %v282
    %v2318 = vunpack.c.h.b16 %v282
    %v2319 = vunpack.c.l.b16 %v283
    %v2320 = vunpack.c.h.b16 %v283
    %v2321 = vunpack.c.l.b16 %v284
    %v2322 = vunpack.c.h.b16 %v284
    %v2323 = vunpack.c.l.b16 %v285
    %v2324 = vunpack.c.h.b16 %v285
    %v2325 = vunpack.c.l.b16 %v286
    %v2326 = vunpack.c.h.b16 %v286
    %v2327 = vunpack.c.l.b16 %v287
    %v2328 = vunpack.c.h.b16 %v287
    %v2329 = vunpack.c.l.b16 %v288
    %v2330 = vunpack.c.h.b16 %v288
    %v2331 = vunpack.c.l.b16 %v289
    %v2332 = vunpack.c.h.b16 %v289
    %v2333 = vunpack.c.l.b16 %v290
    %v2334 = vunpack.c.h.b16 %v290
    %v2335 = vunpack.c.l.b16 %v291
    %v2336 = vunpack.c.h.b16 %v291
    %v2337 = vunpack.c.l.b16 %v292
    %v2338 = vunpack.c.h.b16 %v292
    %v2339 = vunpack.c.l.b16 %v293
    %v2340 = vunpack.c.h.b16 %v293
    %v2341 = vunpack.c.l.b16 %v294
    %v2342 = vunpack.c.h.b16 %v294
    %v2343 = vunpack.c.l.b16 %v295
    %v2344 = vunpack.c.h.b16 %v295
    %v2345 = vunpack.c.l.b16 %v296
    %v2346 = vunpack.c.h.b16 %v296
    %v2347 = vunpack.c.l.b16 %v297
    %v2348 = vunpack.c.h.b16 %v297
    %v2349 = vunpack.c.l.b16 %v298
    %v2350 = vunpack.c.h.b16 %v298
    %v2351 = vunpack.c.l.b16 %v299
    %v2352 = vunpack.c.h.b16 %v299
    %v2353 = vunpack.c.l.b16 %v300
    %v2354 = vunpack.c.h.b16 %v300
    %v2355 = vunpack.c.l.b16 %v301
    %v2356 = vunpack.c.h.b16 %v301
    %v2357 = vunpack.c.l.b16 %v302
    %v2358 = vunpack.c.h.b16 %v302
    %v2359 = vunpack.c.l.b16 %v303
    %v2360 = vunpack.c.h.b16 %v303
    %v2361 = vunpack.c.l.b16 %v304
    %v2362 = vunpack.c.h.b16 %v304
    %v2363 = vunpack.c.l.b16 %v305
    %v2364 = vunpack.c.h.b16 %v305
    %v2365 = vunpack.c.l.b16 %v306
    %v2366 = vunpack.c.h.b16 %v306
    %v2367 = vunpack.c.l.b16 %v307
    %v2368 = vunpack.c.h.b16 %v307
    %v2369 = vunpack.c.l.b16 %v308
    %v2370 = vunpack.c.h.b16 %v308
    %v2371 = vunpack.c.l.b16 %v309
    %v2372 = vunpack.c.h.b16 %v309
    %v2373 = vunpack.c.l.b16 %v310
    %v2374 = vunpack.c.h.b16 %v310
    %v2375 = vunpack.c.l.b16 %v311
    %v2376 = vunpack.c.h.b16 %v311
    %v2377 = vunpack.c.l.b16 %v312
    %v2378 = vunpack.c.h.b16 %v312
    %v2379 = vunpack.c.l.b16 %v313
    %v2380 = vunpack.c.h.b16 %v313
    %v2381 = vunpack.c.l.b16 %v314
    %v2382 = vunpack.c.h.b16 %v314
    %v2383 = vunpack.c.l.b16 %v315
    %v2384 = vunpack.c.h.b16 %v315
    %v2385 = vunpack.c.l.b16 %v316
    %v2386 = vunpack.c.h.b16 %v316
    %v2387 = vunpack.c.l.b16 %v317
    %v2388 = vunpack.c.h.b16 %v317
    %v2389 = vunpack.c.l.b16 %v318
    %v2390 = vunpack.c.h.b16 %v318
    %v2391 = vunpack.c.l.b16 %v319
    %v2392 = vunpack.c.h.b16 %v319
    %v2393 = vunpack.c.l.b16 %v320
    %v2394 = vunpack.c.h.b16 %v320
    %v2395 = vunpack.c.l.b16 %v321
    %v2396 = vunpack.c.h.b16 %v321
    %v2397 = vunpack.c.l.b16 %v322
    %v2398 = vunpack.c.h.b16 %v322
    %v2399 = vunpack.c.l.b16 %v323
    %v2400 = vunpack.c.h.b16 %v323
    %v2401 = vunpack.c.l.b16 %v324
    %v2402 = vunpack.c.h.b16 %v324
    %v2403 = vunpack.c.l.b16 %v325
    %v2404 = vunpack.c.h.b16 %v325
    %v2405 = vunpack.c.l.b16 %v326
    %v2406 = vunpack.c.h.b16 %v326
    %v2407 = vunpack.c.l.b16 %v327
    %v2408 = vunpack.c.h.b16 %v327
    %v2409 = vunpack.c.l.b16 %v328
    %v2410 = vunpack.c.h.b16 %v328
    %v2411 = vunpack.c.l.b16 %v329
    %v2412 = vunpack.c.h.b16 %v329
    %v2413 = vunpack.c.l.b16 %v330
    %v2414 = vunpack.c.h.b16 %v330
    %v2415 = vunpack.c.l.b16 %v331
    %v2416 = vunpack.c.h.b16 %v331
    %v2417 = vunpack.c.l.b16 %v332
    %v2418 = vunpack.c.h.b16 %v332
    %v2419 = vunpack.c.l.b16 %v333
    %v2420 = vunpack.c.h.b16 %v333
    %v2421 = vunpack.c.l.b16 %v334
    %v2422 = vunpack.c.h.b16 %v334
    %v2423 = vunpack.c.l.b16 %v335
    %v2424 = vunpack.c.h.b16 %v335
    %v2425 = vunpack.c.l.b16 %v336
    %v2426 = vunpack.c.h.b16 %v336
    %v2427 = vunpack.c.l.b16 %v337
    %v2428 = vunpack.c.h.b16 %v337
    %v2429 = vunpack.c.l.b16 %v338
    %v2430 = vunpack.c.h.b16 %v338
    %v2431 = vunpack.c.l.b16 %v339
    %v2432 = vunpack.c.h.b16 %v339
    %v2433 = vunpack.c.l.b16 %v340
    %v2434 = vunpack.c.h.b16 %v340
    %v2435 = vunpack.c.l.b16 %v341
    %v2436 = vunpack.c.h.b16 %v341
    %v2437 = vunpack.c.l.b16 %v342
    %v2438 = vunpack.c.h.b16 %v342
    %v2439 = vunpack.c.l.b16 %v343
    %v2440 = vunpack.c.h.b16 %v343
    %v2441 = vunpack.c.l.b16 %v344
    %v2442 = vunpack.c.h.b16 %v344
    %v2443 = vunpack.c.l.b16 %v345
    %v2444 = vunpack.c.h.b16 %v345
    %v2445 = vunpack.c.l.b16 %v346
    %v2446 = vunpack.c.h.b16 %v346
    %v2447 = vunpack.c.l.b16 %v347
    %v2448 = vunpack.c.h.b16 %v347
    %v2449 = vunpack.c.l.b16 %v348
    %v2450 = vunpack.c.h.b16 %v348
    %v2451 = vunpack.c.l.b16 %v349
    %v2452 = vunpack.c.h.b16 %v349
    %v2453 = vunpack.c.l.b16 %v350
    %v2454 = vunpack.c.h.b16 %v350
    %v2455 = vunpack.c.l.b16 %v351
    %v2456 = vunpack.c.h.b16 %v351
    %v2457 = vunpack.c.l.b16 %v352
    %v2458 = vunpack.c.h.b16 %v352
    %v2459 = vunpack.c.l.b16 %v353
    %v2460 = vunpack.c.h.b16 %v353
    %v2461 = vunpack.c.l.b16 %v354
    %v2462 = vunpack.c.h.b16 %v354
    %v2463 = vunpack.c.l.b16 %v355
    %v2464 = vunpack.c.h.b16 %v355
    %v2465 = vunpack.c.l.b16 %v356
    %v2466 = vunpack.c.h.b16 %v356
    %v2467 = vunpack.c.l.b16 %v357
    %v2468 = vunpack.c.h.b16 %v357
    %v2469 = vunpack.c.l.b16 %v358
    %v2470 = vunpack.c.h.b16 %v358
    %v2471 = vunpack.c.l.b16 %v359
    %v2472 = vunpack.c.h.b16 %v359
    %v2473 = vunpack.c.l.b16 %v360
    %v2474 = vunpack.c.h.b16 %v360
    %v2475 = vunpack.c.l.b16 %v361
    %v2476 = vunpack.c.h.b16 %v361
    %v2477 = vunpack.c.l.b16 %v362
    %v2478 = vunpack.c.h.b16 %v362
    %v2479 = vunpack.c.l.b16 %v363
    %v2480 = vunpack.c.h.b16 %v363
    %v2481 = vunpack.c.l.b16 %v364
    %v2482 = vunpack.c.h.b16 %v364
    %v2483 = vunpack.c.l.b16 %v365
    %v2484 = vunpack.c.h.b16 %v365
    %v2485 = vunpack.c.l.b16 %v366
    %v2486 = vunpack.c.h.b16 %v366
    %v2487 = vunpack.c.l.b16 %v367
    %v2488 = vunpack.c.h.b16 %v367
    %v2489 = vunpack.c.l.b16 %v368
    %v2490 = vunpack.c.h.b16 %v368
    %v2491 = vunpack.c.l.b16 %v369
    %v2492 = vunpack.c.h.b16 %v369
    %v2493 = vunpack.c.l.b16 %v370
    %v2494 = vunpack.c.h.b16 %v370
    %v2495 = vunpack.c.l.b16 %v371
    %v2496 = vunpack.c.h.b16 %v371
    %v2497 = vunpack.c.l.b16 %v372
    %v2498 = vunpack.c.h.b16 %v372
    %v2499 = vunpack.c.l.b16 %v373
    %v2500 = vunpack.c.h.b16 %v373
    %v2501 = vunpack.c.l.b16 %v374
    %v2502 = vunpack.c.h.b16 %v374
    %v2503 = vunpack.c.l.b16 %v375
    %v2504 = vunpack.c.h.b16 %v375
    %v2505 = vunpack.c.l.b16 %v376
    %v2506 = vunpack.c.h.b16 %v376
    %v2507 = vunpack.c.l.b16 %v377
    %v2508 = vunpack.c.h.b16 %v377
    %v2509 = vunpack.c.l.b16 %v378
    %v2510 = vunpack.c.h.b16 %v378
    %v2511 = vunpack.c.l.b16 %v379
    %v2512 = vunpack.c.h.b16 %v379
    %v2513 = vunpack.c.l.b16 %v380
    %v2514 = vunpack.c.h.b16 %v380
    %v2515 = vunpack.c.l.b16 %v381
    %v2516 = vunpack.c.h.b16 %v381
    %v2517 = vunpack.c.l.b16 %v382
    %v2518 = vunpack.c.h.b16 %v382
    %v2519 = vunpack.c.l.b16 %v383
    %v2520 = vunpack.c.h.b16 %v383
    %v2521 = vunpack.c.l.b16 %v384
    %v2522 = vunpack.c.h.b16 %v384
    %v2523 = vunpack.c.l.b16 %v385
    %v2524 = vunpack.c.h.b16 %v385
    %v2525 = vunpack.c.l.b16 %v386
    %v2526 = vunpack.c.h.b16 %v386
    %v2527 = vunpack.c.l.b16 %v387
    %v2528 = vunpack.c.h.b16 %v387
    %v2529 = vunpack.c.l.b16 %v388
    %v2530 = vunpack.c.h.b16 %v388
    %v2531 = vunpack.c.l.b16 %v389
    %v2532 = vunpack.c.h.b16 %v389
    %v2533 = vunpack.c.l.b16 %v390
    %v2534 = vunpack.c.h.b16 %v390
    %v2535 = vunpack.c.l.b16 %v391
    %v2536 = vunpack.c.h.b16 %v391
    %v2537 = vunpack.c.l.b16 %v392
    %v2538 = vunpack.c.h.b16 %v392
    %v2539 = vunpack.c.l.b16 %v393
    %v2540 = vunpack.c.h.b16 %v393
    %v2541 = vunpack.c.l.b16 %v394
    %v2542 = vunpack.c.h.b16 %v394
    %v2543 = vunpack.c.l.b16 %v395
    %v2544 = vunpack.c.h.b16 %v395
    %v2545 = vunpack.c.l.b16 %v396
    %v2546 = vunpack.c.h.b16 %v396
    %v2547 = vunpack.c.l.b16 %v397
    %v2548 = vunpack.c.h.b16 %v397
    %v2549 = vunpack.c.l.b16 %v398
    %v2550 = vunpack.c.h.b16 %v398
    %v2551 = vunpack.c.l.b16 %v399
    %v2552 = vunpack.c.h.b16 %v399
    %v2553 = vunpack.c.l.b16 %v400
    %v2554 = vunpack.c.h.b16 %v400
    %v2555 = vunpack.c.l.b16 %v401
    %v2556 = vunpack.c.h.b16 %v401
    %v2557 = vunpack.c.l.b16 %v402
    %v2558 = vunpack.c.h.b16 %v402
    %v2559 = vunpack.c.l.b16 %v403
    %v2560 = vunpack.c.h.b16 %v403
    %v2561 = vunpack.c.l.b16 %v404
    %v2562 = vunpack.c.h.b16 %v404
    %v2563 = vunpack.c.l.b16 %v405
    %v2564 = vunpack.c.h.b16 %v405
    %v2565 = vunpack.c.l.b16 %v406
    %v2566 = vunpack.c.h.b16 %v406
    %v2567 = vunpack.c.l.b16 %v407
    %v2568 = vunpack.c.h.b16 %v407
    %v2569 = vunpack.c.l.b16 %v408
    %v2570 = vunpack.c.h.b16 %v408
    %v2571 = vunpack.c.l.b16 %v409
    %v2572 = vunpack.c.h.b16 %v409
    %v2573 = vunpack.c.l.b16 %v410
    %v2574 = vunpack.c.h.b16 %v410
    %v2575 = vunpack.c.l.b16 %v411
    %v2576 = vunpack.c.h.b16 %v411
    %v2577 = vunpack.c.l.b16 %v412
    %v2578 = vunpack.c.h.b16 %v412
    %v2579 = vunpack.c.l.b16 %v413
    %v2580 = vunpack.c.h.b16 %v413
    %v2581 = vunpack.c.l.b16 %v414
    %v2582 = vunpack.c.h.b16 %v414
    %v2583 = vunpack.c.l.b16 %v415
    %v2584 = vunpack.c.h.b16 %v415
    %v2585 = vunpack.c.l.b16 %v416
    %v2586 = vunpack.c.h.b16 %v416
    %v2587 = vunpack.c.l.b16 %v417
    %v2588 = vunpack.c.h.b16 %v417
    %v2589 = vunpack.c.l.b16 %v418
    %v2590 = vunpack.c.h.b16 %v418
    %v2591 = vunpack.c.l.b16 %v419
    %v2592 = vunpack.c.h.b16 %v419
    %v2593 = vunpack.c.l.b16 %v420
    %v2594 = vunpack.c.h.b16 %v420
    %v2595 = vunpack.c.l.b16 %v421
    %v2596 = vunpack.c.h.b16 %v421
    %v2597 = vunpack.c.l.b16 %v422
    %v2598 = vunpack.c.h.b16 %v422
    %v2599 = vunpack.c.l.b16 %v423
    %v2600 = vunpack.c.h.b16 %v423
    %v2601 = vunpack.c.l.b16 %v424
    %v2602 = vunpack.c.h.b16 %v424
    %v2603 = vunpack.c.l.b16 %v425
    %v2604 = vunpack.c.h.b16 %v425
    %v2605 = vunpack.c.l.b16 %v426
    %v2606 = vunpack.c.h.b16 %v426
    %v2607 = vunpack.c.l.b16 %v427
    %v2608 = vunpack.c.h.b16 %v427
    %v2609 = vunpack.c.l.b16 %v428
    %v2610 = vunpack.c.h.b16 %v428
    %v2611 = vunpack.c.l.b16 %v429
    %v2612 = vunpack.c.h.b16 %v429
    %v2613 = vunpack.c.l.b16 %v430
    %v2614 = vunpack.c.h.b16 %v430
    %v2615 = vunpack.c.l.b16 %v431
    %v2616 = vunpack.c.h.b16 %v431
    %v2617 = vunpack.c.l.b16 %v432
    %v2618 = vunpack.c.h.b16 %v432
    %v2619 = vunpack.c.l.b16 %v433
    %v2620 = vunpack.c.h.b16 %v433
    %v2621 = vunpack.c.l.b16 %v434
    %v2622 = vunpack.c.h.b16 %v434
    %v2623 = vunpack.c.l.b16 %v435
    %v2624 = vunpack.c.h.b16 %v435
    %v2625 = vunpack.c.l.b16 %v436
    %v2626 = vunpack.c.h.b16 %v436
    %v2627 = vunpack.c.l.b16 %v437
    %v2628 = vunpack.c.h.b16 %v437
    %v2629 = vunpack.c.l.b16 %v438
    %v2630 = vunpack.c.h.b16 %v438
    %v2631 = vunpack.c.l.b16 %v439
    %v2632 = vunpack.c.h.b16 %v439
    %v2633 = vunpack.c.l.b16 %v440
    %v2634 = vunpack.c.h.b16 %v440
    %v2635 = vunpack.c.l.b16 %v441
    %v2636 = vunpack.c.h.b16 %v441
    %v2637 = vunpack.c.l.b16 %v442
    %v2638 = vunpack.c.h.b16 %v442
    %v2639 = vunpack.c.l.b16 %v443
    %v2640 = vunpack.c.h.b16 %v443
    %v2641 = vunpack.c.l.b16 %v444
    %v2642 = vunpack.c.h.b16 %v444
    %v2643 = vunpack.c.l.b16 %v445
    %v2644 = vunpack.c.h.b16 %v445
    %v2645 = vunpack.c.l.b16 %v446
    %v2646 = vunpack.c.h.b16 %v446
    %v2647 = vunpack.c.l.b16 %v447
    %v2648 = vunpack.c.h.b16 %v447
    %v2649 = vunpack.c.l.b16 %v448
    %v2650 = vunpack.c.h.b16 %v448
    %v2651 = vunpack.c.l.b16 %v449
    %v2652 = vunpack.c.h.b16 %v449
    %v2653 = vunpack.c.l.b16 %v450
    %v2654 = vunpack.c.h.b16 %v450
    %v2655 = vunpack.c.l.b16 %v451
    %v2656 = vunpack.c.h.b16 %v451
    %v2657 = vunpack.c.l.b16 %v452
    %v2658 = vunpack.c.h.b16 %v452
    %v2659 = vunpack.c.l.b16 %v453
    %v2660 = vunpack.c.h.b16 %v453
    %v2661 = vunpack.c.l.b16 %v454
    %v2662 = vunpack.c.h.b16 %v454
    %v2663 = vunpack.c.l.b16 %v455
    %v2664 = vunpack.c.h.b16 %v455
    %v2665 = vunpack.c.l.b16 %v456
    %v2666 = vunpack.c.h.b16 %v456
    %v2667 = vunpack.c.l.b16 %v457
    %v2668 = vunpack.c.h.b16 %v457
    %v2669 = vunpack.c.l.b16 %v458
    %v2670 = vunpack.c.h.b16 %v458
    %v2671 = vunpack.c.l.b16 %v459
    %v2672 = vunpack.c.h.b16 %v459
    %v2673 = vunpack.c.l.b16 %v460
    %v2674 = vunpack.c.h.b16 %v460
    %v2675 = vunpack.c.l.b16 %v461
    %v2676 = vunpack.c.h.b16 %v461
    %v2677 = vunpack.c.l.b16 %v462
    %v2678 = vunpack.c.h.b16 %v462
    %v2679 = vunpack.c.l.b16 %v463
    %v2680 = vunpack.c.h.b16 %v463
    %v2681 = vunpack.c.l.b16 %v464
    %v2682 = vunpack.c.h.b16 %v464
    %v2683 = vunpack.c.l.b16 %v465
    %v2684 = vunpack.c.h.b16 %v465
    %v2685 = vunpack.c.l.b16 %v466
    %v2686 = vunpack.c.h.b16 %v466
    %v2687 = vunpack.c.l.b16 %v467
    %v2688 = vunpack.c.h.b16 %v467
    %v2689 = vunpack.c.l.b16 %v468
    %v2690 = vunpack.c.h.b16 %v468
    %v2691 = vunpack.c.l.b16 %v469
    %v2692 = vunpack.c.h.b16 %v469
    %v2693 = vunpack.c.l.b16 %v470
    %v2694 = vunpack.c.h.b16 %v470
    %v2695 = vunpack.c.l.b16 %v471
    %v2696 = vunpack.c.h.b16 %v471
    %v2697 = vunpack.c.l.b16 %v472
    %v2698 = vunpack.c.h.b16 %v472
    %v2699 = vunpack.c.l.b16 %v473
    %v2700 = vunpack.c.h.b16 %v473
    %v2701 = vunpack.c.l.b16 %v474
    %v2702 = vunpack.c.h.b16 %v474
    %v2703 = vunpack.c.l.b16 %v475
    %v2704 = vunpack.c.h.b16 %v475
    %v2705 = vunpack.c.l.b16 %v476
    %v2706 = vunpack.c.h.b16 %v476
    %v2707 = vunpack.c.l.b16 %v477
    %v2708 = vunpack.c.h.b16 %v477
    %v2709 = vunpack.c.l.b16 %v478
    %v2710 = vunpack.c.h.b16 %v478
    %v2711 = vunpack.c.l.b16 %v479
    %v2712 = vunpack.c.h.b16 %v479
    %v2713 = vunpack.c.l.b16 %v480
    %v2714 = vunpack.c.h.b16 %v480
    %v2715 = vunpack.c.l.b16 %v481
    %v2716 = vunpack.c.h.b16 %v481
    %v2717 = vunpack.c.l.b16 %v482
    %v2718 = vunpack.c.h.b16 %v482
    %v2719 = vunpack.c.l.b16 %v483
    %v2720 = vunpack.c.h.b16 %v483
    %v2721 = vunpack.c.l.b16 %v484
    %v2722 = vunpack.c.h.b16 %v484
    %v2723 = vunpack.c.l.b16 %v485
    %v2724 = vunpack.c.h.b16 %v485
    %v2725 = vunpack.c.l.b16 %v486
    %v2726 = vunpack.c.h.b16 %v486
    %v2727 = vunpack.c.l.b16 %v487
    %v2728 = vunpack.c.h.b16 %v487
    %v2729 = vunpack.c.l.b16 %v488
    %v2730 = vunpack.c.h.b16 %v488
    %v2731 = vunpack.c.l.b16 %v489
    %v2732 = vunpack.c.h.b16 %v489
    %v2733 = vunpack.c.l.b16 %v490
    %v2734 = vunpack.c.h.b16 %v490
    %v2735 = vunpack.c.l.b16 %v491
    %v2736 = vunpack.c.h.b16 %v491
    %v2737 = vunpack.c.l.b16 %v492
    %v2738 = vunpack.c.h.b16 %v492
    %v2739 = vunpack.c.l.b16 %v493
    %v2740 = vunpack.c.h.b16 %v493
    %v2741 = vunpack.c.l.b16 %v494
    %v2742 = vunpack.c.h.b16 %v494
    %v2743 = vunpack.c.l.b16 %v495
    %v2744 = vunpack.c.h.b16 %v495
    %v2745 = vunpack.c.l.b16 %v496
    %v2746 = vunpack.c.h.b16 %v496
    %v2747 = vunpack.c.l.b16 %v497
    %v2748 = vunpack.c.h.b16 %v497
    %v2749 = vunpack.c.l.b16 %v498
    %v2750 = vunpack.c.h.b16 %v498
    %v2751 = vunpack.c.l.b16 %v499
    %v2752 = vunpack.c.h.b16 %v499
    %v2753 = vunpack.c.l.b16 %v500
    %v2754 = vunpack.c.h.b16 %v500
    %v2755 = vunpack.c.l.b16 %v501
    %v2756 = vunpack.c.h.b16 %v501
    %v2757 = vunpack.c.l.b16 %v502
    %v2758 = vunpack.c.h.b16 %v502
    %v2759 = vunpack.c.l.b16 %v503
    %v2760 = vunpack.c.h.b16 %v503
    %v2761 = vunpack.c.l.b16 %v504
    %v2762 = vunpack.c.h.b16 %v504
    %v2763 = vunpack.c.l.b16 %v505
    %v2764 = vunpack.c.h.b16 %v505
    %v2765 = vunpack.c.l.b16 %v506
    %v2766 = vunpack.c.h.b16 %v506
    %v2767 = vunpack.c.l.b16 %v507
    %v2768 = vunpack.c.h.b16 %v507
    %v2769 = vunpack.c.l.b16 %v508
    %v2770 = vunpack.c.h.b16 %v508
    %v2771 = vunpack.c.l.b16 %v509
    %v2772 = vunpack.c.h.b16 %v509
    %v2773 = vunpack.c.l.b16 %v510
    %v2774 = vunpack.c.h.b16 %v510
    %v2775 = vunpack.c.l.b16 %v511
    %v2776 = vunpack.c.h.b16 %v511
    %v2777 = vunpack.c.l.b16 %v512
    %v2778 = vunpack.c.h.b16 %v512
    %v2779 = vunpack.c.l.b16 %v513
    %v2780 = vunpack.c.h.b16 %v513
    %v2781 = vunpack.c.l.b16 %v514
    %v2782 = vunpack.c.h.b16 %v514
    %v2783 = vunpack.c.l.b16 %v515
    %v2784 = vunpack.c.h.b16 %v515
    %v2785 = vunpack.c.l.b16 %v516
    %v2786 = vunpack.c.h.b16 %v516
    %v2787 = vunpack.c.l.b16 %v517
    %v2788 = vunpack.c.h.b16 %v517
    %v2789 = vunpack.c.l.b16 %v518
    %v2790 = vunpack.c.h.b16 %v518
    %v2791 = vunpack.c.l.b16 %v519
    %v2792 = vunpack.c.h.b16 %v519
    %v2793 = vunpack.c.l.b16 %v520
    %v2794 = vunpack.c.h.b16 %v520
    %v2795 = vunpack.c.l.b16 %v521
    %v2796 = vunpack.c.h.b16 %v521
    %v2797 = vunpack.c.l.b16 %v522
    %v2798 = vunpack.c.h.b16 %v522
    %v2799 = vunpack.c.l.b16 %v523
    %v2800 = vunpack.c.h.b16 %v523
    %v2801 = vunpack.c.l.b16 %v524
    %v2802 = vunpack.c.h.b16 %v524
    %v2803 = vunpack.c.l.b16 %v525
    %v2804 = vunpack.c.h.b16 %v525
    %v2805 = vunpack.c.l.b16 %v526
    %v2806 = vunpack.c.h.b16 %v526
    %v2807 = vunpack.c.l.b16 %v527
    %v2808 = vunpack.c.h.b16 %v527
    %v2809 = vunpack.c.l.b16 %v528
    %v2810 = vunpack.c.h.b16 %v528
    %v2811 = vunpack.c.l.b16 %v529
    %v2812 = vunpack.c.h.b16 %v529
    %v2813 = vunpack.c.l.b16 %v530
    %v2814 = vunpack.c.h.b16 %v530
    %v2815 = vunpack.c.l.b16 %v531
    %v2816 = vunpack.c.h.b16 %v531
    %v2817 = vunpack.c.l.b16 %v532
    %v2818 = vunpack.c.h.b16 %v532
    %v2819 = vunpack.c.l.b16 %v533
    %v2820 = vunpack.c.h.b16 %v533
    %v2821 = vunpack.c.l.b16 %v534
    %v2822 = vunpack.c.h.b16 %v534
    %v2823 = vunpack.c.l.b16 %v535
    %v2824 = vunpack.c.h.b16 %v535
    %v2825 = vunpack.c.l.b16 %v536
    %v2826 = vunpack.c.h.b16 %v536
    %v2827 = vunpack.c.l.b16 %v537
    %v2828 = vunpack.c.h.b16 %v537
    %v2829 = vunpack.c.l.b16 %v538
    %v2830 = vunpack.c.h.b16 %v538
    %v2831 = vunpack.c.l.b16 %v539
    %v2832 = vunpack.c.h.b16 %v539
    %v2833 = vunpack.c.l.b16 %v540
    %v2834 = vunpack.c.h.b16 %v540
    %v2835 = vunpack.c.l.b16 %v541
    %v2836 = vunpack.c.h.b16 %v541
    %v2837 = vunpack.c.l.b16 %v542
    %v2838 = vunpack.c.h.b16 %v542
    %v2839 = vunpack.c.l.b16 %v543
    %v2840 = vunpack.c.h.b16 %v543
    %v2841 = vunpack.c.l.b16 %v544
    %v2842 = vunpack.c.h.b16 %v544
    %v2843 = vunpack.c.l.b16 %v545
    %v2844 = vunpack.c.h.b16 %v545
    %v2845 = vunpack.c.l.b16 %v546
    %v2846 = vunpack.c.h.b16 %v546
    %v2847 = vunpack.c.l.b16 %v547
    %v2848 = vunpack.c.h.b16 %v547
    %v2849 = vunpack.c.l.b16 %v548
    %v2850 = vunpack.c.h.b16 %v548
    %v2851 = vunpack.c.l.b16 %v549
    %v2852 = vunpack.c.h.b16 %v549
    %v2853 = vunpack.c.l.b16 %v550
    %v2854 = vunpack.c.h.b16 %v550
    %v2855 = vunpack.c.l.b16 %v551
    %v2856 = vunpack.c.h.b16 %v551
    %v2857 = vunpack.c.l.b16 %v552
    %v2858 = vunpack.c.h.b16 %v552
    %v2859 = vunpack.c.l.b16 %v553
    %v2860 = vunpack.c.h.b16 %v553
    %v2861 = vunpack.c.l.b16 %v554
    %v2862 = vunpack.c.h.b16 %v554
    %v2863 = vunpack.c.l.b16 %v555
    %v2864 = vunpack.c.h.b16 %v555
    %v2865 = vunpack.c.l.b16 %v556
    %v2866 = vunpack.c.h.b16 %v556
    %v2867 = vunpack.c.l.b16 %v557
    %v2868 = vunpack.c.h.b16 %v557
    %v2869 = vunpack.c.l.b16 %v558
    %v2870 = vunpack.c.h.b16 %v558
    %v2871 = vunpack.c.l.b16 %v559
    %v2872 = vunpack.c.h.b16 %v559
    %v2873 = vunpack.c.l.b16 %v560
    %v2874 = vunpack.c.h.b16 %v560
    %v2875 = vunpack.c.l.b16 %v561
    %v2876 = vunpack.c.h.b16 %v561
    %v2877 = vunpack.c.l.b16 %v562
    %v2878 = vunpack.c.h.b16 %v562
    %v2879 = vunpack.c.l.b16 %v563
    %v2880 = vunpack.c.h.b16 %v563
    %v2881 = vunpack.c.l.b16 %v564
    %v2882 = vunpack.c.h.b16 %v564
    %v2883 = vunpack.c.l.b16 %v565
    %v2884 = vunpack.c.h.b16 %v565
    %v2885 = vunpack.c.l.b16 %v566
    %v2886 = vunpack.c.h.b16 %v566
    %v2887 = vunpack.c.l.b16 %v567
    %v2888 = vunpack.c.h.b16 %v567
    %v2889 = vunpack.c.l.b16 %v568
    %v2890 = vunpack.c.h.b16 %v568
    %v2891 = vunpack.c.l.b16 %v569
    %v2892 = vunpack.c.h.b16 %v569
    %v2893 = vunpack.c.l.b16 %v570
    %v2894 = vunpack.c.h.b16 %v570
    %v2895 = vunpack.c.l.b16 %v571
    %v2896 = vunpack.c.h.b16 %v571
    %v2897 = vunpack.c.l.b16 %v572
    %v2898 = vunpack.c.h.b16 %v572
    %v2899 = vunpack.c.l.b16 %v573
    %v2900 = vunpack.c.h.b16 %v573
    %v2901 = vunpack.c.l.b16 %v574
    %v2902 = vunpack.c.h.b16 %v574
    %v2903 = vunpack.c.l.b16 %v575
    %v2904 = vunpack.c.h.b16 %v575
    %v2905 = vunpack.c.l.b16 %v576
    %v2906 = vunpack.c.h.b16 %v576
    %v2907 = vunpack.c.l.b16 %v577
    %v2908 = vunpack.c.h.b16 %v577
    %v2909 = vunpack.c.l.b16 %v578
    %v2910 = vunpack.c.h.b16 %v578
    %v2911 = vunpack.c.l.b16 %v579
    %v2912 = vunpack.c.h.b16 %v579
    %v2913 = vunpack.c.l.b16 %v580
    %v2914 = vunpack.c.h.b16 %v580
    %v2915 = vunpack.c.l.b16 %v581
    %v2916 = vunpack.c.h.b16 %v581
    %v2917 = vunpack.c.l.b16 %v582
    %v2918 = vunpack.c.h.b16 %v582
    %v2919 = vunpack.c.l.b16 %v583
    %v2920 = vunpack.c.h.b16 %v583
    %v2921 = vunpack.c.l.b16 %v584
    %v2922 = vunpack.c.h.b16 %v584
    %v2923 = vunpack.c.l.b16 %v585
    %v2924 = vunpack.c.h.b16 %v585
    %v2925 = vunpack.c.l.b16 %v586
    %v2926 = vunpack.c.h.b16 %v586
    %v2927 = vunpack.c.l.b16 %v587
    %v2928 = vunpack.c.h.b16 %v587
    %v2929 = vunpack.c.l.b16 %v588
    %v2930 = vunpack.c.h.b16 %v588
    %v2931 = vunpack.c.l.b16 %v589
    %v2932 = vunpack.c.h.b16 %v589
    %v2933 = vunpack.c.l.b16 %v590
    %v2934 = vunpack.c.h.b16 %v590
    %v2935 = vunpack.c.l.b16 %v591
    %v2936 = vunpack.c.h.b16 %v591
    %v2937 = vunpack.c.l.b16 %v592
    %v2938 = vunpack.c.h.b16 %v592
    %v2939 = vunpack.c.l.b16 %v593
    %v2940 = vunpack.c.h.b16 %v593
    %v2941 = vunpack.c.l.b16 %v594
    %v2942 = vunpack.c.h.b16 %v594
    %v2943 = vunpack.c.l.b16 %v595
    %v2944 = vunpack.c.h.b16 %v595
    %v2945 = vunpack.c.l.b16 %v596
    %v2946 = vunpack.c.h.b16 %v596
    %v2947 = vunpack.c.l.b16 %v597
    %v2948 = vunpack.c.h.b16 %v597
    %v2949 = vunpack.c.l.b16 %v598
    %v2950 = vunpack.c.h.b16 %v598
    %v2951 = vunpack.c.l.b16 %v599
    %v2952 = vunpack.c.h.b16 %v599
    %v2953 = vunpack.c.l.b16 %v600
    %v2954 = vunpack.c.h.b16 %v600
    %v2955 = vunpack.c.l.b16 %v601
    %v2956 = vunpack.c.h.b16 %v601
    %v2957 = vunpack.c.l.b16 %v602
    %v2958 = vunpack.c.h.b16 %v602
    %v2959 = vunpack.c.l.b16 %v603
    %v2960 = vunpack.c.h.b16 %v603
    %v2961 = vunpack.c.l.b16 %v604
    %v2962 = vunpack.c.h.b16 %v604
    %v2963 = vunpack.c.l.b16 %v605
    %v2964 = vunpack.c.h.b16 %v605
    %v2965 = vunpack.c.l.b16 %v606
    %v2966 = vunpack.c.h.b16 %v606
    %v2967 = vunpack.c.l.b16 %v607
    %v2968 = vunpack.c.h.b16 %v607
    %v2969 = vunpack.c.l.b16 %v608
    %v2970 = vunpack.c.h.b16 %v608
    %v2971 = vunpack.c.l.b16 %v609
    %v2972 = vunpack.c.h.b16 %v609
    %v2973 = vunpack.c.l.b16 %v610
    %v2974 = vunpack.c.h.b16 %v610
    %v2975 = vunpack.c.l.b16 %v611
    %v2976 = vunpack.c.h.b16 %v611
    %v2977 = vunpack.c.l.b16 %v612
    %v2978 = vunpack.c.h.b16 %v612
    %v2979 = vunpack.c.l.b16 %v613
    %v2980 = vunpack.c.h.b16 %v613
    %v2981 = vunpack.c.l.b16 %v614
    %v2982 = vunpack.c.h.b16 %v614
    %v2983 = vunpack.c.l.b16 %v615
    %v2984 = vunpack.c.h.b16 %v615
    %v2985 = vunpack.c.l.b16 %v616
    %v2986 = vunpack.c.h.b16 %v616
    %v2987 = vunpack.c.l.b16 %v617
    %v2988 = vunpack.c.h.b16 %v617
    %v2989 = vunpack.c.l.b16 %v618
    %v2990 = vunpack.c.h.b16 %v618
    %v2991 = vunpack.c.l.b16 %v619
    %v2992 = vunpack.c.h.b16 %v619
    %v2993 = vunpack.c.l.b16 %v620
    %v2994 = vunpack.c.h.b16 %v620
    %v2995 = vunpack.c.l.b16 %v621
    %v2996 = vunpack.c.h.b16 %v621
    %v2997 = vunpack.c.l.b16 %v622
    %v2998 = vunpack.c.h.b16 %v622
    %v2999 = vunpack.c.l.b16 %v623
    %v3000 = vunpack.c.h.b16 %v623
    %v3001 = vunpack.c.l.b16 %v624
    %v3002 = vunpack.c.h.b16 %v624
    %v3003 = vunpack.c.l.b16 %v625
    %v3004 = vunpack.c.h.b16 %v625
    %v3005 = vunpack.c.l.b16 %v626
    %v3006 = vunpack.c.h.b16 %v626
    %v3007 = vunpack.c.l.b16 %v627
    %v3008 = vunpack.c.h.b16 %v627
    %v3009 = vunpack.c.l.b16 %v628
    %v3010 = vunpack.c.h.b16 %v628
    %v3011 = vunpack.c.l.b16 %v629
    %v3012 = vunpack.c.h.b16 %v629
    %v3013 = vunpack.c.l.b16 %v630
    %v3014 = vunpack.c.h.b16 %v630
    %v3015 = vunpack.c.l.b16 %v631
    %v3016 = vunpack.c.h.b16 %v631
    %v3017 = vunpack.c.l.b16 %v632
    %v3018 = vunpack.c.h.b16 %v632
    %v3019 = vunpack.c.l.b16 %v633
    %v3020 = vunpack.c.h.b16 %v633
    %v3021 = vunpack.c.l.b16 %v634
    %v3022 = vunpack.c.h.b16 %v634
    %v3023 = vunpack.c.l.b16 %v635
    %v3024 = vunpack.c.h.b16 %v635
    %v3025 = vunpack.c.l.b16 %v636
    %v3026 = vunpack.c.h.b16 %v636
    %v3027 = vunpack.c.l.b16 %v637
    %v3028 = vunpack.c.h.b16 %v637
    %v3029 = vunpack.c.l.b16 %v638
    %v3030 = vunpack.c.h.b16 %v638
    %v3031 = vunpack.c.l.b16 %v639
    %v3032 = vunpack.c.h.b16 %v639
    %v3033 = vunpack.c.l.b16 %v640
    %v3034 = vunpack.c.h.b16 %v640
    %v3035 = vunpack.c.l.b16 %v641
    %v3036 = vunpack.c.h.b16 %v641
    %v3037 = vunpack.c.l.b16 %v642
    %v3038 = vunpack.c.h.b16 %v642
    %v3039 = vunpack.c.l.b16 %v643
    %v3040 = vunpack.c.h.b16 %v643
    %v3041 = vunpack.c.l.b16 %v644
    %v3042 = vunpack.c.h.b16 %v644
    %v3043 = vunpack.c.l.b16 %v645
    %v3044 = vunpack.c.h.b16 %v645
    %v3045 = vunpack.c.l.b16 %v646
    %v3046 = vunpack.c.h.b16 %v646
    %v3047 = vunpack.c.l.b16 %v647
    %v3048 = vunpack.c.h.b16 %v647
    %v3049 = vunpack.c.l.b16 %v648
    %v3050 = vunpack.c.h.b16 %v648
    %v3051 = vunpack.c.l.b16 %v649
    %v3052 = vunpack.c.h.b16 %v649
    %v3053 = vunpack.c.l.b16 %v650
    %v3054 = vunpack.c.h.b16 %v650
    %v3055 = vunpack.c.l.b16 %v651
    %v3056 = vunpack.c.h.b16 %v651
    %v3057 = vunpack.c.l.b16 %v652
    %v3058 = vunpack.c.h.b16 %v652
    %v3059 = vunpack.c.l.b16 %v653
    %v3060 = vunpack.c.h.b16 %v653
    %v3061 = vunpack.c.l.b16 %v654
    %v3062 = vunpack.c.h.b16 %v654
    %v3063 = vunpack.c.l.b16 %v655
    %v3064 = vunpack.c.h.b16 %v655
    %v3065 = vunpack.c.l.b16 %v656
    %v3066 = vunpack.c.h.b16 %v656
    %v3067 = vunpack.c.l.b16 %v657
    %v3068 = vunpack.c.h.b16 %v657
    %v3069 = vunpack.c.l.b16 %v658
    %v3070 = vunpack.c.h.b16 %v658
    %v3071 = vunpack.c.l.b16 %v659
    %v3072 = vunpack.c.h.b16 %v659
    %v3073 = vunpack.c.l.b16 %v660
    %v3074 = vunpack.c.h.b16 %v660
    %v3075 = vunpack.c.l.b16 %v661
    %v3076 = vunpack.c.h.b16 %v661
    %v3077 = vunpack.c.l.b16 %v662
    %v3078 = vunpack.c.h.b16 %v662
    %v3079 = vunpack.c.l.b16 %v663
    %v3080 = vunpack.c.h.b16 %v663
    %v3081 = vunpack.c.l.b16 %v664
    %v3082 = vunpack.c.h.b16 %v664
    %v3083 = vunpack.c.l.b16 %v665
    %v3084 = vunpack.c.h.b16 %v665
    %v3085 = vunpack.c.l.b16 %v666
    %v3086 = vunpack.c.h.b16 %v666
    %v3087 = vunpack.c.l.b16 %v667
    %v3088 = vunpack.c.h.b16 %v667
    %v3089 = vunpack.c.l.b16 %v668
    %v3090 = vunpack.c.h.b16 %v668
    %v3091 = vunpack.c.l.b16 %v669
    %v3092 = vunpack.c.h.b16 %v669
    %v3093 = vunpack.c.l.b16 %v670
    %v3094 = vunpack.c.h.b16 %v670
    %v3095 = vunpack.c.l.b16 %v671
    %v3096 = vunpack.c.h.b16 %v671
    %v3097 = vunpack.c.l.b16 %v672
    %v3098 = vunpack.c.h.b16 %v672
    %v3099 = vunpack.c.l.b16 %v673
    %v3100 = vunpack.c.h.b16 %v673
    %v3101 = vunpack.c.l.b16 %v674
    %v3102 = vunpack.c.h.b16 %v674
    %v3103 = vunpack.c.l.b16 %v675
    %v3104 = vunpack.c.h.b16 %v675
    %v3105 = vunpack.c.l.b16 %v676
    %v3106 = vunpack.c.h.b16 %v676
    %v3107 = vunpack.c.l.b16 %v677
    %v3108 = vunpack.c.h.b16 %v677
    %v3109 = vunpack.c.l.b16 %v678
    %v3110 = vunpack.c.h.b16 %v678
    %v3111 = vunpack.c.l.b16 %v679
    %v3112 = vunpack.c.h.b16 %v679
    %v3113 = vunpack.c.l.b16 %v680
    %v3114 = vunpack.c.h.b16 %v680
    %v3115 = vunpack.c.l.b16 %v681
    %v3116 = vunpack.c.h.b16 %v681
    %v3117 = vunpack.c.l.b16 %v682
    %v3118 = vunpack.c.h.b16 %v682
    %v3119 = vunpack.c.l.b16 %v683
    %v3120 = vunpack.c.h.b16 %v683
    %v3121 = vunpack.c.l.b16 %v684
    %v3122 = vunpack.c.h.b16 %v684
    %v3123 = vunpack.c.l.b16 %v685
    %v3124 = vunpack.c.h.b16 %v685
    %v3125 = vunpack.c.l.b16 %v686
    %v3126 = vunpack.c.h.b16 %v686
    %v3127 = vunpack.c.l.b16 %v687
    %v3128 = vunpack.c.h.b16 %v687
    %v3129 = vunpack.c.l.b16 %v688
    %v3130 = vunpack.c.h.b16 %v688
    %v3131 = vunpack.c.l.b16 %v689
    %v3132 = vunpack.c.h.b16 %v689
    %v3133 = vunpack.c.l.b16 %v690
    %v3134 = vunpack.c.h.b16 %v690
    %v3135 = vunpack.c.l.b16 %v691
    %v3136 = vunpack.c.h.b16 %v691
    %v3137 = vunpack.c.l.b16 %v692
    %v3138 = vunpack.c.h.b16 %v692
    %v3139 = vunpack.c.l.b16 %v693
    %v3140 = vunpack.c.h.b16 %v693
    %v3141 = vunpack.c.l.b16 %v694
    %v3142 = vunpack.c.h.b16 %v694
    %v3143 = vunpack.c.l.b16 %v695
    %v3144 = vunpack.c.h.b16 %v695
    %v3145 = vunpack.c.l.b16 %v696
    %v3146 = vunpack.c.h.b16 %v696
    %v3147 = vunpack.c.l.b16 %v697
    %v3148 = vunpack.c.h.b16 %v697
    %v3149 = vunpack.c.l.b16 %v698
    %v3150 = vunpack.c.h.b16 %v698
    %v3151 = vunpack.c.l.b16 %v699
    %v3152 = vunpack.c.h.b16 %v699
    %v3153 = vunpack.c.l.b16 %v700
    %v3154 = vunpack.c.h.b16 %v700
    %v3155 = vunpack.c.l.b16 %v701
    %v3156 = vunpack.c.h.b16 %v701
    %v3157 = vunpack.c.l.b16 %v702
    %v3158 = vunpack.c.h.b16 %v702
    %v3159 = vunpack.c.l.b16 %v703
    %v3160 = vunpack.c.h.b16 %v703
    %v3161 = vunpack.c.l.b16 %v704
    %v3162 = vunpack.c.h.b16 %v704
    %v3163 = vunpack.c.l.b16 %v705
    %v3164 = vunpack.c.h.b16 %v705
    %v3165 = vunpack.c.l.b16 %v706
    %v3166 = vunpack.c.h.b16 %v706
    %v3167 = vunpack.c.l.b16 %v707
    %v3168 = vunpack.c.h.b16 %v707
    %v3169 = vunpack.c.l.b16 %v708
    %v3170 = vunpack.c.h.b16 %v708
    %v3171 = vunpack.c.l.b16 %v709
    %v3172 = vunpack.c.h.b16 %v709
    %v3173 = vunpack.c.l.b16 %v710
    %v3174 = vunpack.c.h.b16 %v710
    %v3175 = vunpack.c.l.b16 %v711
    %v3176 = vunpack.c.h.b16 %v711
    %v3177 = vunpack.c.l.b16 %v712
    %v3178 = vunpack.c.h.b16 %v712
    %v3179 = vunpack.c.l.b16 %v713
    %v3180 = vunpack.c.h.b16 %v713
    %v3181 = vunpack.c.l.b16 %v714
    %v3182 = vunpack.c.h.b16 %v714
    %v3183 = vunpack.c.l.b16 %v715
    %v3184 = vunpack.c.h.b16 %v715
    %v3185 = vunpack.c.l.b16 %v716
    %v3186 = vunpack.c.h.b16 %v716
    %v3187 = vunpack.c.l.b16 %v717
    %v3188 = vunpack.c.h.b16 %v717
    %v3189 = vunpack.c.l.b16 %v718
    %v3190 = vunpack.c.h.b16 %v718
    %v3191 = vunpack.c.l.b16 %v719
    %v3192 = vunpack.c.h.b16 %v719
    %v3193 = vunpack.c.l.b16 %v720
    %v3194 = vunpack.c.h.b16 %v720
    %v3195 = vunpack.c.l.b16 %v721
    %v3196 = vunpack.c.h.b16 %v721
    %v3197 = vunpack.c.l.b16 %v722
    %v3198 = vunpack.c.h.b16 %v722
    %v3199 = vunpack.c.l.b16 %v723
    %v3200 = vunpack.c.h.b16 %v723
    %v3201 = vunpack.c.l.b16 %v724
    %v3202 = vunpack.c.h.b16 %v724
    %v3203 = vunpack.c.l.b16 %v725
    %v3204 = vunpack.c.h.b16 %v725
    %v3205 = vunpack.c.l.b16 %v726
    %v3206 = vunpack.c.h.b16 %v726
    %v3207 = vunpack.c.l.b16 %v727
    %v3208 = vunpack.c.h.b16 %v727
    %v3209 = vunpack.c.l.b16 %v728
    %v3210 = vunpack.c.h.b16 %v728
    %v3211 = vunpack.c.l.b16 %v729
    %v3212 = vunpack.c.h.b16 %v729
    %v3213 = vunpack.c.l.b16 %v730
    %v3214 = vunpack.c.h.b16 %v730
    %v3215 = vunpack.c.l.b16 %v731
    %v3216 = vunpack.c.h.b16 %v731
    %v3217 = vunpack.c.l.b16 %v732
    %v3218 = vunpack.c.h.b16 %v732
    %v3219 = vunpack.c.l.b16 %v733
    %v3220 = vunpack.c.h.b16 %v733
    %v3221 = vunpack.c.l.b16 %v734
    %v3222 = vunpack.c.h.b16 %v734
    %v3223 = vunpack.c.l.b16 %v735
    %v3224 = vunpack.c.h.b16 %v735
    %v3225 = vunpack.c.l.b16 %v736
    %v3226 = vunpack.c.h.b16 %v736
    %v3227 = vunpack.c.l.b16 %v737
    %v3228 = vunpack.c.h.b16 %v737
    %v3229 = vunpack.c.l.b16 %v738
    %v3230 = vunpack.c.h.b16 %v738
    %v3231 = vunpack.c.l.b16 %v739
    %v3232 = vunpack.c.h.b16 %v739
    %v3233 = vunpack.c.l.b16 %v740
    %v3234 = vunpack.c.h.b16 %v740
    %v3235 = vunpack.c.l.b16 %v741
    %v3236 = vunpack.c.h.b16 %v741
    %v3237 = vunpack.c.l.b16 %v742
    %v3238 = vunpack.c.h.b16 %v742
    %v3239 = vunpack.c.l.b16 %v743
    %v3240 = vunpack.c.h.b16 %v743
    %v3241 = vunpack.c.l.b16 %v744
    %v3242 = vunpack.c.h.b16 %v744
    %v3243 = vunpack.c.l.b16 %v745
    %v3244 = vunpack.c.h.b16 %v745
    %v3245 = vunpack.c.l.b16 %v746
    %v3246 = vunpack.c.h.b16 %v746
    %v3247 = vunpack.c.l.b16 %v747
    %v3248 = vunpack.c.h.b16 %v747
    %v3249 = vunpack.c.l.b16 %v748
    %v3250 = vunpack.c.h.b16 %v748
    %v3251 = vunpack.c.l.b16 %v749
    %v3252 = vunpack.c.h.b16 %v749
    %v3253 = vunpack.c.l.b16 %v750
    %v3254 = vunpack.c.h.b16 %v750
    %v3255 = vunpack.c.l.b16 %v751
    %v3256 = vunpack.c.h.b16 %v751
    %v3257 = vunpack.c.l.b16 %v752
    %v3258 = vunpack.c.h.b16 %v752
    %v3259 = vunpack.c.l.b16 %v753
    %v3260 = vunpack.c.h.b16 %v753
    %v3261 = vunpack.c.l.b16 %v754
    %v3262 = vunpack.c.h.b16 %v754
    %v3263 = vunpack.c.l.b16 %v755
    %v3264 = vunpack.c.h.b16 %v755
    %v3265 = vunpack.c.l.b16 %v756
    %v3266 = vunpack.c.h.b16 %v756
    %v3267 = vunpack.c.l.b16 %v757
    %v3268 = vunpack.c.h.b16 %v757
    %v3269 = vunpack.c.l.b16 %v758
    %v3270 = vunpack.c.h.b16 %v758
    %v3271 = vunpack.c.l.b16 %v759
    %v3272 = vunpack.c.h.b16 %v759
    %v3273 = vunpack.c.l.b16 %v760
    %v3274 = vunpack.c.h.b16 %v760
    %v3275 = vunpack.c.l.b16 %v761
    %v3276 = vunpack.c.h.b16 %v761
    %v3277 = vunpack.c.l.b16 %v762
    %v3278 = vunpack.c.h.b16 %v762
    %v3279 = vunpack.c.l.b16 %v763
    %v3280 = vunpack.c.h.b16 %v763
    %v3281 = vunpack.c.l.b16 %v764
    %v3282 = vunpack.c.h.b16 %v764
    %v3283 = vunpack.c.l.b16 %v765
    %v3284 = vunpack.c.h.b16 %v765
    %v3285 = vunpack.c.l.b16 %v766
    %v3286 = vunpack.c.h.b16 %v766
    %v3287 = vunpack.c.l.b16 %v767
    %v3288 = vunpack.c.h.b16 %v767
    %v3289 = vunpack.c.l.b16 %v768
    %v3290 = vunpack.c.h.b16 %v768
    %v3291 = vunpack.c.l.b16 %v769
    %v3292 = vunpack.c.h.b16 %v769
    %v3293 = vunpack.c.l.b16 %v770
    %v3294 = vunpack.c.h.b16 %v770
    %v3295 = vunpack.c.l.b16 %v771
    %v3296 = vunpack.c.h.b16 %v771
    %v3297 = vunpack.c.l.b16 %v772
    %v3298 = vunpack.c.h.b16 %v772
    %v3299 = vunpack.c.l.b16 %v773
    %v3300 = vunpack.c.h.b16 %v773
    %v3301 = vunpack.c.l.b16 %v774
    %v3302 = vunpack.c.h.b16 %v774
    %v3303 = vunpack.c.l.b16 %v775
    %v3304 = vunpack.c.h.b16 %v775
    %v3305 = vunpack.c.l.b16 %v776
    %v3306 = vunpack.c.h.b16 %v776
    %v3307 = vunpack.c.l.b16 %v777
    %v3308 = vunpack.c.h.b16 %v777
    %v3309 = vunpack.c.l.b16 %v778
    %v3310 = vunpack.c.h.b16 %v778
    %v3311 = vunpack.c.l.b16 %v779
    %v3312 = vunpack.c.h.b16 %v779
    %v3313 = vunpack.c.l.b16 %v780
    %v3314 = vunpack.c.h.b16 %v780
    %v3315 = vunpack.c.l.b16 %v781
    %v3316 = vunpack.c.h.b16 %v781
    %v3317 = vunpack.c.l.b16 %v782
    %v3318 = vunpack.c.h.b16 %v782
    %v3319 = vunpack.c.l.b16 %v783
    %v3320 = vunpack.c.h.b16 %v783
    %v3321 = vunpack.c.l.b16 %v784
    %v3322 = vunpack.c.h.b16 %v784
    %v3323 = vunpack.c.l.b16 %v785
    %v3324 = vunpack.c.h.b16 %v785
    %v3325 = vunpack.c.l.b16 %v786
    %v3326 = vunpack.c.h.b16 %v786
    %v3327 = vunpack.c.l.b16 %v787
    %v3328 = vunpack.c.h.b16 %v787
    %v3329 = vunpack.c.l.b16 %v788
    %v3330 = vunpack.c.h.b16 %v788
    %v3331 = vunpack.c.l.b16 %v789
    %v3332 = vunpack.c.h.b16 %v789
    %v3333 = vunpack.c.l.b16 %v790
    %v3334 = vunpack.c.h.b16 %v790
    %v3335 = vunpack.c.l.b16 %v791
    %v3336 = vunpack.c.h.b16 %v791
    %v3337 = vunpack.c.l.b16 %v792
    %v3338 = vunpack.c.h.b16 %v792
    %v3339 = vunpack.c.l.b16 %v793
    %v3340 = vunpack.c.h.b16 %v793
    %v3341 = vunpack.c.l.b16 %v794
    %v3342 = vunpack.c.h.b16 %v794
    %v3343 = vunpack.c.l.b16 %v795
    %v3344 = vunpack.c.h.b16 %v795
    %v3345 = vunpack.c.l.b16 %v796
    %v3346 = vunpack.c.h.b16 %v796
    %v3347 = vunpack.c.l.b16 %v797
    %v3348 = vunpack.c.h.b16 %v797
    %v3349 = vunpack.c.l.b16 %v798
    %v3350 = vunpack.c.h.b16 %v798
    %v3351 = vunpack.c.l.b16 %v799
    %v3352 = vunpack.c.h.b16 %v799
    %v3353 = vunpack.c.l.b16 %v800
    %v3354 = vunpack.c.h.b16 %v800
    %v3355 = vunpack.c.l.b16 %v801
    %v3356 = vunpack.c.h.b16 %v801
    %v3357 = vunpack.c.l.b16 %v802
    %v3358 = vunpack.c.h.b16 %v802
    %v3359 = vunpack.c.l.b16 %v803
    %v3360 = vunpack.c.h.b16 %v803
    %v3361 = vunpack.c.l.b16 %v804
    %v3362 = vunpack.c.h.b16 %v804
    %v3363 = vunpack.c.l.b16 %v805
    %v3364 = vunpack.c.h.b16 %v805
    %v3365 = vunpack.c.l.b16 %v806
    %v3366 = vunpack.c.h.b16 %v806
    %v3367 = vunpack.c.l.b16 %v807
    %v3368 = vunpack.c.h.b16 %v807
    %v3369 = vunpack.c.l.b16 %v808
    %v3370 = vunpack.c.h.b16 %v808
    %v3371 = vunpack.c.l.b16 %v809
    %v3372 = vunpack.c.h.b16 %v809
    %v3373 = vpack.c.b16 %v1809, %v1805
    %v3374 = vpack.c.b16 %v1810, %v1806
    %v3375 = vpack.c.b16 %v1811, %v1807
    %v3376 = vpack.c.b16 %v1812, %v1808
    %v3377 = vpack.c.b16 %v1817, %v1813
    %v3378 = vpack.c.b16 %v1818, %v1814
    %v3379 = vpack.c.b16 %v1819, %v1815
    %v3380 = vpack.c.b16 %v1820, %v1816
    %v3381 = vpack.c.b16 %v1825, %v1821
    %v3382 = vpack.c.b16 %v1826, %v1822
    %v3383 = vpack.c.b16 %v1827, %v1823
    %v3384 = vpack.c.b16 %v1828, %v1824
    %v3385 = vpack.c.b16 %v1833, %v1829
    %v3386 = vpack.c.b16 %v1834, %v1830
    %v3387 = vpack.c.b16 %v1835, %v1831
    %v3388 = vpack.c.b16 %v1836, %v1832
    %v3389 = vpack.c.b16 %v1841, %v1837
    %v3390 = vpack.c.b16 %v1842, %v1838
    %v3391 = vpack.c.b16 %v1843, %v1839
    %v3392 = vpack.c.b16 %v1844, %v1840
    %v3393 = vpack.c.b16 %v1849, %v1845
    %v3394 = vpack.c.b16 %v1850, %v1846
    %v3395 = vpack.c.b16 %v1851, %v1847
    %v3396 = vpack.c.b16 %v1852, %v1848
    %v3397 = vpack.c.b16 %v1857, %v1853
    %v3398 = vpack.c.b16 %v1858, %v1854
    %v3399 = vpack.c.b16 %v1859, %v1855
    %v3400 = vpack.c.b16 %v1860, %v1856
    %v3401 = vpack.c.b16 %v1865, %v1861
    %v3402 = vpack.c.b16 %v1866, %v1862
    %v3403 = vpack.c.b16 %v1867, %v1863
    %v3404 = vpack.c.b16 %v1868, %v1864
    %v3405 = vpack.c.b16 %v1873, %v1869
    %v3406 = vpack.c.b16 %v1874, %v1870
    %v3407 = vpack.c.b16 %v1875, %v1871
    %v3408 = vpack.c.b16 %v1876, %v1872
    %v3409 = vpack.c.b16 %v1881, %v1877
    %v3410 = vpack.c.b16 %v1882, %v1878
    %v3411 = vpack.c.b16 %v1883, %v1879
    %v3412 = vpack.c.b16 %v1884, %v1880
    %v3413 = vpack.c.b16 %v1889, %v1885
    %v3414 = vpack.c.b16 %v1890, %v1886
    %v3415 = vpack.c.b16 %v1891, %v1887
    %v3416 = vpack.c.b16 %v1892, %v1888
    %v3417 = vpack.c.b16 %v1897, %v1893
    %v3418 = vpack.c.b16 %v1898, %v1894
    %v3419 = vpack.c.b16 %v1899, %v1895
    %v3420 = vpack.c.b16 %v1900, %v1896
    %v3421 = vpack.c.b16 %v1905, %v1901
    %v3422 = vpack.c.b16 %v1906, %v1902
    %v3423 = vpack.c.b16 %v1907, %v1903
    %v3424 = vpack.c.b16 %v1908, %v1904
    %v3425 = vpack.c.b16 %v1913, %v1909
    %v3426 = vpack.c.b16 %v1914, %v1910
    %v3427 = vpack.c.b16 %v1915, %v1911
    %v3428 = vpack.c.b16 %v1916, %v1912
    %v3429 = vpack.c.b16 %v1921, %v1917
    %v3430 = vpack.c.b16 %v1922, %v1918
    %v3431 = vpack.c.b16 %v1923, %v1919
    %v3432 = vpack.c.b16 %v1924, %v1920
    %v3433 = vpack.c.b16 %v1929, %v1925
    %v3434 = vpack.c.b16 %v1930, %v1926
    %v3435 = vpack.c.b16 %v1931, %v1927
    %v3436 = vpack.c.b16 %v1932, %v1928
    %v3437 = vpack.c.b16 %v1937, %v1933
    %v3438 = vpack.c.b16 %v1938, %v1934
    %v3439 = vpack.c.b16 %v1939, %v1935
    %v3440 = vpack.c.b16 %v1940, %v1936
    %v3441 = vpack.c.b16 %v1945, %v1941
    %v3442 = vpack.c.b16 %v1946, %v1942
    %v3443 = vpack.c.b16 %v1947, %v1943
    %v3444 = vpack.c.b16 %v1948, %v1944
    %v3445 = vpack.c.b16 %v1953, %v1949
    %v3446 = vpack.c.b16 %v1954, %v1950
    %v3447 = vpack.c.b16 %v1955, %v1951
    %v3448 = vpack.c.b16 %v1956, %v1952
    %v3449 = vpack.c.b16 %v1961, %v1957
    %v3450 = vpack.c.b16 %v1962, %v1958
    %v3451 = vpack.c.b16 %v1963, %v1959
    %v3452 = vpack.c.b16 %v1964, %v1960
    %v3453 = vpack.c.b16 %v1969, %v1965
    %v3454 = vpack.c.b16 %v1970, %v1966
    %v3455 = vpack.c.b16 %v1971, %v1967
    %v3456 = vpack.c.b16 %v1972, %v1968
    %v3457 = vpack.c.b16 %v1977, %v1973
    %v3458 = vpack.c.b16 %v1978, %v1974
    %v3459 = vpack.c.b16 %v1979, %v1975
    %v3460 = vpack.c.b16 %v1980, %v1976
    %v3461 = vpack.c.b16 %v1985, %v1981
    %v3462 = vpack.c.b16 %v1986, %v1982
    %v3463 = vpack.c.b16 %v1987, %v1983
    %v3464 = vpack.c.b16 %v1988, %v1984
    %v3465 = vpack.c.b16 %v1993, %v1989
    %v3466 = vpack.c.b16 %v1994, %v1990
    %v3467 = vpack.c.b16 %v1995, %v1991
    %v3468 = vpack.c.b16 %v1996, %v1992
    %v3469 = vpack.c.b16 %v2001, %v1997
    %v3470 = vpack.c.b16 %v2002, %v1998
    %v3471 = vpack.c.b16 %v2003, %v1999
    %v3472 = vpack.c.b16 %v2004, %v2000
    %v3473 = vpack.c.b16 %v2009, %v2005
    %v3474 = vpack.c.b16 %v2010, %v2006
    %v3475 = vpack.c.b16 %v2011, %v2007
    %v3476 = vpack.c.b16 %v2012, %v2008
    %v3477 = vpack.c.b16 %v2017, %v2013
    %v3478 = vpack.c.b16 %v2018, %v2014
    %v3479 = vpack.c.b16 %v2019, %v2015
    %v3480 = vpack.c.b16 %v2020, %v2016
    %v3481 = vpack.c.b16 %v2025, %v2021
    %v3482 = vpack.c.b16 %v2026, %v2022
    %v3483 = vpack.c.b16 %v2027, %v2023
    %v3484 = vpack.c.b16 %v2028, %v2024
    %v3485 = vpack.c.b16 %v2033, %v2029
    %v3486 = vpack.c.b16 %v2034, %v2030
    %v3487 = vpack.c.b16 %v2035, %v2031
    %v3488 = vpack.c.b16 %v2036, %v2032
    %v3489 = vpack.c.b16 %v2041, %v2037
    %v3490 = vpack.c.b16 %v2042, %v2038
    %v3491 = vpack.c.b16 %v2043, %v2039
    %v3492 = vpack.c.b16 %v2044, %v2040
    %v3493 = vpack.c.b16 %v2049, %v2045
    %v3494 = vpack.c.b16 %v2050, %v2046
    %v3495 = vpack.c.b16 %v2051, %v2047
    %v3496 = vpack.c.b16 %v2052, %v2048
    %v3497 = vpack.c.b16 %v2057, %v2053
    %v3498 = vpack.c.b16 %v2058, %v2054
    %v3499 = vpack.c.b16 %v2059, %v2055
    %v3500 = vpack.c.b16 %v2060, %v2056
    %v3501 = vpack.c.b16 %v2065, %v2061
    %v3502 = vpack.c.b16 %v2066, %v2062
    %v3503 = vpack.c.b16 %v2067, %v2063
    %v3504 = vpack.c.b16 %v2068, %v2064
    %v3505 = vpack.c.b16 %v2073, %v2069
    %v3506 = vpack.c.b16 %v2074, %v2070
    %v3507 = vpack.c.b16 %v2075, %v2071
    %v3508 = vpack.c.b16 %v2076, %v2072
    %v3509 = vpack.c.b16 %v2081, %v2077
    %v3510 = vpack.c.b16 %v2082, %v2078
    %v3511 = vpack.c.b16 %v2083, %v2079
    %v3512 = vpack.c.b16 %v2084, %v2080
    %v3513 = vpack.c.b16 %v2089, %v2085
    %v3514 = vpack.c.b16 %v2090, %v2086
    %v3515 = vpack.c.b16 %v2091, %v2087
    %v3516 = vpack.c.b16 %v2092, %v2088
    %v3517 = vpack.c.b16 %v2097, %v2093
    %v3518 = vpack.c.b16 %v2098, %v2094
    %v3519 = vpack.c.b16 %v2099, %v2095
    %v3520 = vpack.c.b16 %v2100, %v2096
    %v3521 = vpack.c.b16 %v2105, %v2101
    %v3522 = vpack.c.b16 %v2106, %v2102
    %v3523 = vpack.c.b16 %v2107, %v2103
    %v3524 = vpack.c.b16 %v2108, %v2104
    %v3525 = vpack.c.b16 %v2113, %v2109
    %v3526 = vpack.c.b16 %v2114, %v2110
    %v3527 = vpack.c.b16 %v2115, %v2111
    %v3528 = vpack.c.b16 %v2116, %v2112
    %v3529 = vpack.c.b16 %v2121, %v2117
    %v3530 = vpack.c.b16 %v2122, %v2118
    %v3531 = vpack.c.b16 %v2123, %v2119
    %v3532 = vpack.c.b16 %v2124, %v2120
    %v3533 = vpack.c.b16 %v2129, %v2125
    %v3534 = vpack.c.b16 %v2130, %v2126
    %v3535 = vpack.c.b16 %v2131, %v2127
    %v3536 = vpack.c.b16 %v2132, %v2128
    %v3537 = vpack.c.b16 %v2137, %v2133
    %v3538 = vpack.c.b16 %v2138, %v2134
    %v3539 = vpack.c.b16 %v2139, %v2135
    %v3540 = vpack.c.b16 %v2140, %v2136
    %v3541 = vpack.c.b16 %v2145, %v2141
    %v3542 = vpack.c.b16 %v2146, %v2142
    %v3543 = vpack.c.b16 %v2147, %v2143
    %v3544 = vpack.c.b16 %v2148, %v2144
    %v3545 = vpack.c.b16 %v2153, %v2149
    %v3546 = vpack.c.b16 %v2154, %v2150
    %v3547 = vpack.c.b16 %v2155, %v2151
    %v3548 = vpack.c.b16 %v2156, %v2152
    %v3549 = vpack.c.b16 %v2161, %v2157
    %v3550 = vpack.c.b16 %v2162, %v2158
    %v3551 = vpack.c.b16 %v2163, %v2159
    %v3552 = vpack.c.b16 %v2164, %v2160
    %v3553 = vpack.c.b16 %v2169, %v2165
    %v3554 = vpack.c.b16 %v2170, %v2166
    %v3555 = vpack.c.b16 %v2171, %v2167
    %v3556 = vpack.c.b16 %v2172, %v2168
    %v3557 = vpack.c.b16 %v2177, %v2173
    %v3558 = vpack.c.b16 %v2178, %v2174
    %v3559 = vpack.c.b16 %v2179, %v2175
    %v3560 = vpack.c.b16 %v2180, %v2176
    %v3561 = vpack.c.b16 %v2185, %v2181
    %v3562 = vpack.c.b16 %v2186, %v2182
    %v3563 = vpack.c.b16 %v2187, %v2183
    %v3564 = vpack.c.b16 %v2188, %v2184
    %v3565 = vpack.c.b16 %v2193, %v2189
    %v3566 = vpack.c.b16 %v2194, %v2190
    %v3567 = vpack.c.b16 %v2195, %v2191
    %v3568 = vpack.c.b16 %v2196, %v2192
    %v3569 = vpack.c.b16 %v2201, %v2197
    %v3570 = vpack.c.b16 %v2202, %v2198
    %v3571 = vpack.c.b16 %v2203, %v2199
    %v3572 = vpack.c.b16 %v2204, %v2200
    %v3573 = vpack.c.b16 %v2209, %v2205
    %v3574 = vpack.c.b16 %v2210, %v2206
    %v3575 = vpack.c.b16 %v2211, %v2207
    %v3576 = vpack.c.b16 %v2212, %v2208
    %v3577 = vpack.c.b16 %v2217, %v2213
    %v3578 = vpack.c.b16 %v2218, %v2214
    %v3579 = vpack.c.b16 %v2219, %v2215
    %v3580 = vpack.c.b16 %v2220, %v2216
    %v3581 = vpack.c.b16 %v2225, %v2221
    %v3582 = vpack.c.b16 %v2226, %v2222
    %v3583 = vpack.c.b16 %v2227, %v2223
    %v3584 = vpack.c.b16 %v2228, %v2224
    %v3585 = vpack.c.b16 %v2233, %v2229
    %v3586 = vpack.c.b16 %v2234, %v2230
    %v3587 = vpack.c.b16 %v2235, %v2231
    %v3588 = vpack.c.b16 %v2236, %v2232
    %v3589 = vpack.c.b16 %v2241, %v2237
    %v3590 = vpack.c.b16 %v2242, %v2238
    %v3591 = vpack.c.b16 %v2243, %v2239
    %v3592 = vpack.c.b16 %v2244, %v2240
    %v3593 = vpack.c.b16 %v2249, %v2245
    %v3594 = vpack.c.b16 %v2250, %v2246
    %v3595 = vpack.c.b16 %v2251, %v2247
    %v3596 = vpack.c.b16 %v2252, %v2248
    %v3597 = vpack.c.b16 %v2257, %v2253
    %v3598 = vpack.c.b16 %v2258, %v2254
    %v3599 = vpack.c.b16 %v2259, %v2255
    %v3600 = vpack.c.b16 %v2260, %v2256
    %v3601 = vpack.c.b16 %v2265, %v2261
    %v3602 = vpack.c.b16 %v2266, %v2262
    %v3603 = vpack.c.b16 %v2267, %v2263
    %v3604 = vpack.c.b16 %v2268, %v2264
    %v3605 = vpack.c.b16 %v2273, %v2269
    %v3606 = vpack.c.b16 %v2274, %v2270
    %v3607 = vpack.c.b16 %v2275, %v2271
    %v3608 = vpack.c.b16 %v2276, %v2272
    %v3609 = vpack.c.b16 %v2281, %v2277
    %v3610 = vpack.c.b16 %v2282, %v2278
    %v3611 = vpack.c.b16 %v2283, %v2279
    %v3612 = vpack.c.b16 %v2284, %v2280
    %v3613 = vpack.c.b16 %v2289, %v2285
    %v3614 = vpack.c.b16 %v2290, %v2286
    %v3615 = vpack.c.b16 %v2291, %v2287
    %v3616 = vpack.c.b16 %v2292, %v2288
    %v3617 = vpack.c.b16 %v2297, %v2293
    %v3618 = vpack.c.b16 %v2298, %v2294
    %v3619 = vpack.c.b16 %v2299, %v2295
    %v3620 = vpack.c.b16 %v2300, %v2296
    %v3621 = vpack.c.b16 %v2305, %v2301
    %v3622 = vpack.c.b16 %v2306, %v2302
    %v3623 = vpack.c.b16 %v2307, %v2303
    %v3624 = vpack.c.b16 %v2308, %v2304
    %v3625 = vpack.c.b16 %v2313, %v2309
    %v3626 = vpack.c.b16 %v2314, %v2310
    %v3627 = vpack.c.b16 %v2315, %v2311
    %v3628 = vpack.c.b16 %v2316, %v2312
    %v3629 = vpack.c.b16 %v2321, %v2317
    %v3630 = vpack.c.b16 %v2322, %v2318
    %v3631 = vpack.c.b16 %v2323, %v2319
    %v3632 = vpack.c.b16 %v2324, %v2320
    %v3633 = vpack.c.b16 %v2329, %v2325
    %v3634 = vpack.c.b16 %v2330, %v2326
    %v3635 = vpack.c.b16 %v2331, %v2327
    %v3636 = vpack.c.b16 %v2332, %v2328
    %v3637 = vpack.c.b16 %v2337, %v2333
    %v3638 = vpack.c.b16 %v2338, %v2334
    %v3639 = vpack.c.b16 %v2339, %v2335
    %v3640 = vpack.c.b16 %v2340, %v2336
    %v3641 = vpack.c.b16 %v2345, %v2341
    %v3642 = vpack.c.b16 %v2346, %v2342
    %v3643 = vpack.c.b16 %v2347, %v2343
    %v3644 = vpack.c.b16 %v2348, %v2344
    %v3645 = vpack.c.b16 %v2353, %v2349
    %v3646 = vpack.c.b16 %v2354, %v2350
    %v3647 = vpack.c.b16 %v2355, %v2351
    %v3648 = vpack.c.b16 %v2356, %v2352
    %v3649 = vpack.c.b16 %v2361, %v2357
    %v3650 = vpack.c.b16 %v2362, %v2358
    %v3651 = vpack.c.b16 %v2363, %v2359
    %v3652 = vpack.c.b16 %v2364, %v2360
    %v3653 = vpack.c.b16 %v2369, %v2365
    %v3654 = vpack.c.b16 %v2370, %v2366
    %v3655 = vpack.c.b16 %v2371, %v2367
    %v3656 = vpack.c.b16 %v2372, %v2368
    %v3657 = vpack.c.b16 %v2377, %v2373
    %v3658 = vpack.c.b16 %v2378, %v2374
    %v3659 = vpack.c.b16 %v2379, %v2375
    %v3660 = vpack.c.b16 %v2380, %v2376
    %v3661 = vpack.c.b16 %v2385, %v2381
    %v3662 = vpack.c.b16 %v2386, %v2382
    %v3663 = vpack.c.b16 %v2387, %v2383
    %v3664 = vpack.c.b16 %v2388, %v2384
    %v3665 = vpack.c.b16 %v2393, %v2389
    %v3666 = vpack.c.b16 %v2394, %v2390
    %v3667 = vpack.c.b16 %v2395, %v2391
    %v3668 = vpack.c.b16 %v2396, %v2392
    %v3669 = vpack.c.b16 %v2401, %v2397
    %v3670 = vpack.c.b16 %v2402, %v2398
    %v3671 = vpack.c.b16 %v2403, %v2399
    %v3672 = vpack.c.b16 %v2404, %v2400
    %v3673 = vpack.c.b16 %v2409, %v2405
    %v3674 = vpack.c.b16 %v2410, %v2406
    %v3675 = vpack.c.b16 %v2411, %v2407
    %v3676 = vpack.c.b16 %v2412, %v2408
    %v3677 = vpack.c.b16 %v2417, %v2413
    %v3678 = vpack.c.b16 %v2418, %v2414
    %v3679 = vpack.c.b16 %v2419, %v2415
    %v3680 = vpack.c.b16 %v2420, %v2416
    %v3681 = vpack.c.b16 %v2425, %v2421
    %v3682 = vpack.c.b16 %v2426, %v2422
    %v3683 = vpack.c.b16 %v2427, %v2423
    %v3684 = vpack.c.b16 %v2428, %v2424
    %v3685 = vpack.c.b16 %v2433, %v2429
    %v3686 = vpack.c.b16 %v2434, %v2430
    %v3687 = vpack.c.b16 %v2435, %v2431
    %v3688 = vpack.c.b16 %v2436, %v2432
    %v3689 = vpack.c.b16 %v2441, %v2437
    %v3690 = vpack.c.b16 %v2442, %v2438
    %v3691 = vpack.c.b16 %v2443, %v2439
    %v3692 = vpack.c.b16 %v2444, %v2440
    %v3693 = vpack.c.b16 %v2449, %v2445
    %v3694 = vpack.c.b16 %v2450, %v2446
    %v3695 = vpack.c.b16 %v2451, %v2447
    %v3696 = vpack.c.b16 %v2452, %v2448
    %v3697 = vpack.c.b16 %v2457, %v2453
    %v3698 = vpack.c.b16 %v2458, %v2454
    %v3699 = vpack.c.b16 %v2459, %v2455
    %v3700 = vpack.c.b16 %v2460, %v2456
    %v3701 = vpack.c.b16 %v2465, %v2461
    %v3702 = vpack.c.b16 %v2466, %v2462
    %v3703 = vpack.c.b16 %v2467, %v2463
    %v3704 = vpack.c.b16 %v2468, %v2464
    %v3705 = vpack.c.b16 %v2473, %v2469
    %v3706 = vpack.c.b16 %v2474, %v2470
    %v3707 = vpack.c.b16 %v2475, %v2471
    %v3708 = vpack.c.b16 %v2476, %v2472
    %v3709 = vpack.c.b16 %v2481, %v2477
    %v3710 = vpack.c.b16 %v2482, %v2478
    %v3711 = vpack.c.b16 %v2483, %v2479
    %v3712 = vpack.c.b16 %v2484, %v2480
    %v3713 = vpack.c.b16 %v2489, %v2485
    %v3714 = vpack.c.b16 %v2490, %v2486
    %v3715 = vpack.c.b16 %v2491, %v2487
    %v3716 = vpack.c.b16 %v2492, %v2488
    %v3717 = vpack.c.b16 %v2497, %v2493
    %v3718 = vpack.c.b16 %v2498, %v2494
    %v3719 = vpack.c.b16 %v2499, %v2495
    %v3720 = vpack.c.b16 %v2500, %v2496
    %v3721 = vpack.c.b16 %v2505, %v2501
    %v3722 = vpack.c.b16 %v2506, %v2502
    %v3723 = vpack.c.b16 %v2507, %v2503
    %v3724 = vpack.c.b16 %v2508, %v2504
    %v3725 = vpack.c.b16 %v2513, %v2509
    %v3726 = vpack.c.b16 %v2514, %v2510
    %v3727 = vpack.c.b16 %v2515, %v2511
    %v3728 = vpack.c.b16 %v2516, %v2512
    %v3729 = vpack.c.b16 %v2521, %v2517
    %v3730 = vpack.c.b16 %v2522, %v2518
    %v3731 = vpack.c.b16 %v2523, %v2519
    %v3732 = vpack.c.b16 %v2524, %v2520
    %v3733 = vpack.c.b16 %v2529, %v2525
    %v3734 = vpack.c.b16 %v2530, %v2526
    %v3735 = vpack.c.b16 %v2531, %v2527
    %v3736 = vpack.c.b16 %v2532, %v2528
    %v3737 = vpack.c.b16 %v2537, %v2533
    %v3738 = vpack.c.b16 %v2538, %v2534
    %v3739 = vpack.c.b16 %v2539, %v2535
    %v3740 = vpack.c.b16 %v2540, %v2536
    %v3741 = vpack.c.b16 %v2545, %v2541
    %v3742 = vpack.c.b16 %v2546, %v2542
    %v3743 = vpack.c.b16 %v2547, %v2543
    %v3744 = vpack.c.b16 %v2548, %v2544
    %v3745 = vpack.c.b16 %v2553, %v2549
    %v3746 = vpack.c.b16 %v2554, %v2550
    %v3747 = vpack.c.b16 %v2555, %v2551
    %v3748 = vpack.c.b16 %v2556, %v2552
    %v3749 = vpack.c.b16 %v2561, %v2557
    %v3750 = vpack.c.b16 %v2562, %v2558
    %v3751 = vpack.c.b16 %v2563, %v2559
    %v3752 = vpack.c.b16 %v2564, %v2560
    %v3753 = vpack.c.b16 %v2569, %v2565
    %v3754 = vpack.c.b16 %v2570, %v2566
    %v3755 = vpack.c.b16 %v2571, %v2567
    %v3756 = vpack.c.b16 %v2572, %v2568
    %v3757 = vpack.c.b16 %v2577, %v2573
    %v3758 = vpack.c.b16 %v2578, %v2574
    %v3759 = vpack.c.b16 %v2579, %v2575
    %v3760 = vpack.c.b16 %v2580, %v2576
    %v3761 = vpack.c.b16 %v2585, %v2581
    %v3762 = vpack.c.b16 %v2586, %v2582
    %v3763 = vpack.c.b16 %v2587, %v2583
    %v3764 = vpack.c.b16 %v2588, %v2584
    %v3765 = vpack.c.b16 %v2593, %v2589
    %v3766 = vpack.c.b16 %v2594, %v2590
    %v3767 = vpack.c.b16 %v2595, %v2591
    %v3768 = vpack.c.b16 %v2596, %v2592
    %v3769 = vpack.c.b16 %v2601, %v2597
    %v3770 = vpack.c.b16 %v2602, %v2598
    %v3771 = vpack.c.b16 %v2603, %v2599
    %v3772 = vpack.c.b16 %v2604, %v2600
    %v3773 = vpack.c.b16 %v2609, %v2605
    %v3774 = vpack.c.b16 %v2610, %v2606
    %v3775 = vpack.c.b16 %v2611, %v2607
    %v3776 = vpack.c.b16 %v2612, %v2608
    %v3777 = vpack.c.b16 %v2617, %v2613
    %v3778 = vpack.c.b16 %v2618, %v2614
    %v3779 = vpack.c.b16 %v2619, %v2615
    %v3780 = vpack.c.b16 %v2620, %v2616
    %v3781 = vpack.c.b16 %v2625, %v2621
    %v3782 = vpack.c.b16 %v2626, %v2622
    %v3783 = vpack.c.b16 %v2627, %v2623
    %v3784 = vpack.c.b16 %v2628, %v2624
    %v3785 = vpack.c.b16 %v2633, %v2629
    %v3786 = vpack.c.b16 %v2634, %v2630
    %v3787 = vpack.c.b16 %v2635, %v2631
    %v3788 = vpack.c.b16 %v2636, %v2632
    %v3789 = vpack.c.b16 %v2641, %v2637
    %v3790 = vpack.c.b16 %v2642, %v2638
    %v3791 = vpack.c.b16 %v2643, %v2639
    %v3792 = vpack.c.b16 %v2644, %v2640
    %v3793 = vpack.c.b16 %v2649, %v2645
    %v3794 = vpack.c.b16 %v2650, %v2646
    %v3795 = vpack.c.b16 %v2651, %v2647
    %v3796 = vpack.c.b16 %v2652, %v2648
    %v3797 = vpack.c.b16 %v2657, %v2653
    %v3798 = vpack.c.b16 %v2658, %v2654
    %v3799 = vpack.c.b16 %v2659, %v2655
    %v3800 = vpack.c.b16 %v2660, %v2656
    %v3801 = vpack.c.b16 %v2665, %v2661
    %v3802 = vpack.c.b16 %v2666, %v2662
    %v3803 = vpack.c.b16 %v2667, %v2663
    %v3804 = vpack.c.b16 %v2668, %v2664
    %v3805 = vpack.c.b16 %v2673, %v2669
    %v3806 = vpack.c.b16 %v2674, %v2670
    %v3807 = vpack.c.b16 %v2675, %v2671
    %v3808 = vpack.c.b16 %v2676, %v2672
    %v3809 = vpack.c.b16 %v2681, %v2677
    %v3810 = vpack.c.b16 %v2682, %v2678
    %v3811 = vpack.c.b16 %v2683, %v2679
    %v3812 = vpack.c.b16 %v2684, %v2680
    %v3813 = vpack.c.b16 %v2689, %v2685
    %v3814 = vpack.c.b16 %v2690, %v2686
    %v3815 = vpack.c.b16 %v2691, %v2687
    %v3816 = vpack.c.b16 %v2692, %v2688
    %v3817 = vpack.c.b16 %v2697, %v2693
    %v3818 = vpack.c.b16 %v2698, %v2694
    %v3819 = vpack.c.b16 %v2699, %v2695
    %v3820 = vpack.c.b16 %v2700, %v2696
    %v3821 = vpack.c.b16 %v2705, %v2701
    %v3822 = vpack.c.b16 %v2706, %v2702
    %v3823 = vpack.c.b16 %v2707, %v2703
    %v3824 = vpack.c.b16 %v2708, %v2704
    %v3825 = vpack.c.b16 %v2713, %v2709
    %v3826 = vpack.c.b16 %v2714, %v2710
    %v3827 = vpack.c.b16 %v2715, %v2711
    %v3828 = vpack.c.b16 %v2716, %v2712
    %v3829 = vpack.c.b16 %v2721, %v2717
    %v3830 = vpack.c.b16 %v2722, %v2718
    %v3831 = vpack.c.b16 %v2723, %v2719
    %v3832 = vpack.c.b16 %v2724, %v2720
    %v3833 = vpack.c.b16 %v2729, %v2725
    %v3834 = vpack.c.b16 %v2730, %v2726
    %v3835 = vpack.c.b16 %v2731, %v2727
    %v3836 = vpack.c.b16 %v2732, %v2728
    %v3837 = vpack.c.b16 %v2737, %v2733
    %v3838 = vpack.c.b16 %v2738, %v2734
    %v3839 = vpack.c.b16 %v2739, %v2735
    %v3840 = vpack.c.b16 %v2740, %v2736
    %v3841 = vpack.c.b16 %v2745, %v2741
    %v3842 = vpack.c.b16 %v2746, %v2742
    %v3843 = vpack.c.b16 %v2747, %v2743
    %v3844 = vpack.c.b16 %v2748, %v2744
    %v3845 = vpack.c.b16 %v2753, %v2749
    %v3846 = vpack.c.b16 %v2754, %v2750
    %v3847 = vpack.c.b16 %v2755, %v2751
    %v3848 = vpack.c.b16 %v2756, %v2752
    %v3849 = vpack.c.b16 %v2761, %v2757
    %v3850 = vpack.c.b16 %v2762, %v2758
    %v3851 = vpack.c.b16 %v2763, %v2759
    %v3852 = vpack.c.b16 %v2764, %v2760
    %v3853 = vpack.c.b16 %v2769, %v2765
    %v3854 = vpack.c.b16 %v2770, %v2766
    %v3855 = vpack.c.b16 %v2771, %v2767
    %v3856 = vpack.c.b16 %v2772, %v2768
    %v3857 = vpack.c.b16 %v2777, %v2773
    %v3858 = vpack.c.b16 %v2778, %v2774
    %v3859 = vpack.c.b16 %v2779, %v2775
    %v3860 = vpack.c.b16 %v2780, %v2776
    %v3861 = vpack.c.b16 %v2785, %v2781
    %v3862 = vpack.c.b16 %v2786, %v2782
    %v3863 = vpack.c.b16 %v2787, %v2783
    %v3864 = vpack.c.b16 %v2788, %v2784
    %v3865 = vpack.c.b16 %v2793, %v2789
    %v3866 = vpack.c.b16 %v2794, %v2790
    %v3867 = vpack.c.b16 %v2795, %v2791
    %v3868 = vpack.c.b16 %v2796, %v2792
    %v3869 = vpack.c.b16 %v2801, %v2797
    %v3870 = vpack.c.b16 %v2802, %v2798
    %v3871 = vpack.c.b16 %v2803, %v2799
    %v3872 = vpack.c.b16 %v2804, %v2800
    %v3873 = vpack.c.b16 %v2809, %v2805
    %v3874 = vpack.c.b16 %v2810, %v2806
    %v3875 = vpack.c.b16 %v2811, %v2807
    %v3876 = vpack.c.b16 %v2812, %v2808
    %v3877 = vpack.c.b16 %v2817, %v2813
    %v3878 = vpack.c.b16 %v2818, %v2814
    %v3879 = vpack.c.b16 %v2819, %v2815
    %v3880 = vpack.c.b16 %v2820, %v2816
    %v3881 = vpack.c.b16 %v2825, %v2821
    %v3882 = vpack.c.b16 %v2826, %v2822
    %v3883 = vpack.c.b16 %v2827, %v2823
    %v3884 = vpack.c.b16 %v2828, %v2824
    %v3885 = vpack.c.b16 %v2833, %v2829
    %v3886 = vpack.c.b16 %v2834, %v2830
    %v3887 = vpack.c.b16 %v2835, %v2831
    %v3888 = vpack.c.b16 %v2836, %v2832
    %v3889 = vpack.c.b16 %v2841, %v2837
    %v3890 = vpack.c.b16 %v2842, %v2838
    %v3891 = vpack.c.b16 %v2843, %v2839
    %v3892 = vpack.c.b16 %v2844, %v2840
    %v3893 = vpack.c.b16 %v2849, %v2845
    %v3894 = vpack.c.b16 %v2850, %v2846
    %v3895 = vpack.c.b16 %v2851, %v2847
    %v3896 = vpack.c.b16 %v2852, %v2848
    %v3897 = vpack.c.b16 %v2857, %v2853
    %v3898 = vpack.c.b16 %v2858, %v2854
    %v3899 = vpack.c.b16 %v2859, %v2855
    %v3900 = vpack.c.b16 %v2860, %v2856
    %v3901 = vpack.c.b16 %v2865, %v2861
    %v3902 = vpack.c.b16 %v2866, %v2862
    %v3903 = vpack.c.b16 %v2867, %v2863
    %v3904 = vpack.c.b16 %v2868, %v2864
    %v3905 = vpack.c.b16 %v2873, %v2869
    %v3906 = vpack.c.b16 %v2874, %v2870
    %v3907 = vpack.c.b16 %v2875, %v2871
    %v3908 = vpack.c.b16 %v2876, %v2872
    %v3909 = vpack.c.b16 %v2881, %v2877
    %v3910 = vpack.c.b16 %v2882, %v2878
    %v3911 = vpack.c.b16 %v2883, %v2879
    %v3912 = vpack.c.b16 %v2884, %v2880
    %v3913 = vpack.c.b16 %v2889, %v2885
    %v3914 = vpack.c.b16 %v2890, %v2886
    %v3915 = vpack.c.b16 %v2891, %v2887
    %v3916 = vpack.c.b16 %v2892, %v2888
    %v3917 = vpack.c.b16 %v2897, %v2893
    %v3918 = vpack.c.b16 %v2898, %v2894
    %v3919 = vpack.c.b16 %v2899, %v2895
    %v3920 = vpack.c.b16 %v2900, %v2896
    %v3921 = vpack.c.b16 %v2905, %v2901
    %v3922 = vpack.c.b16 %v2906, %v2902
    %v3923 = vpack.c.b16 %v2907, %v2903
    %v3924 = vpack.c.b16 %v2908, %v2904
    %v3925 = vpack.c.b16 %v2913, %v2909
    %v3926 = vpack.c.b16 %v2914, %v2910
    %v3927 = vpack.c.b16 %v2915, %v2911
    %v3928 = vpack.c.b16 %v2916, %v2912
    %v3929 = vpack.c.b16 %v2921, %v2917
    %v3930 = vpack.c.b16 %v2922, %v2918
    %v3931 = vpack.c.b16 %v2923, %v2919
    %v3932 = vpack.c.b16 %v2924, %v2920
    %v3933 = vpack.c.b16 %v2929, %v2925
    %v3934 = vpack.c.b16 %v2930, %v2926
    %v3935 = vpack.c.b16 %v2931, %v2927
    %v3936 = vpack.c.b16 %v2932, %v2928
    %v3937 = vpack.c.b16 %v2937, %v2933
    %v3938 = vpack.c.b16 %v2938, %v2934
    %v3939 = vpack.c.b16 %v2939, %v2935
    %v3940 = vpack.c.b16 %v2940, %v2936
    %v3941 = vpack.c.b16 %v2945, %v2941
    %v3942 = vpack.c.b16 %v2946, %v2942
    %v3943 = vpack.c.b16 %v2947, %v2943
    %v3944 = vpack.c.b16 %v2948, %v2944
    %v3945 = vpack.c.b16 %v2953, %v2949
    %v3946 = vpack.c.b16 %v2954, %v2950
    %v3947 = vpack.c.b16 %v2955, %v2951
    %v3948 = vpack.c.b16 %v2956, %v2952
    %v3949 = vpack.c.b16 %v2961, %v2957
    %v3950 = vpack.c.b16 %v2962, %v2958
    %v3951 = vpack.c.b16 %v2963, %v2959
    %v3952 = vpack.c.b16 %v2964, %v2960
    %v3953 = vpack.c.b16 %v2969, %v2965
    %v3954 = vpack.c.b16 %v2970, %v2966
    %v3955 = vpack.c.b16 %v2971, %v2967
    %v3956 = vpack.c.b16 %v2972, %v2968
    %v3957 = vpack.c.b16 %v2977, %v2973
    %v3958 = vpack.c.b16 %v2978, %v2974
    %v3959 = vpack.c.b16 %v2979, %v2975
    %v3960 = vpack.c.b16 %v2980, %v2976
    %v3961 = vpack.c.b16 %v2985, %v2981
    %v3962 = vpack.c.b16 %v2986, %v2982
    %v3963 = vpack.c.b16 %v2987, %v2983
    %v3964 = vpack.c.b16 %v2988, %v2984
    %v3965 = vpack.c.b16 %v2993, %v2989
    %v3966 = vpack.c.b16 %v2994, %v2990
    %v3967 = vpack.c.b16 %v2995, %v2991
    %v3968 = vpack.c.b16 %v2996, %v2992
    %v3969 = vpack.c.b16 %v3001, %v2997
    %v3970 = vpack.c.b16 %v3002, %v2998
    %v3971 = vpack.c.b16 %v3003, %v2999
    %v3972 = vpack.c.b16 %v3004, %v3000
    %v3973 = vpack.c.b16 %v3009, %v3005
    %v3974 = vpack.c.b16 %v3010, %v3006
    %v3975 = vpack.c.b16 %v3011, %v3007
    %v3976 = vpack.c.b16 %v3012, %v3008
    %v3977 = vpack.c.b16 %v3017, %v3013
    %v3978 = vpack.c.b16 %v3018, %v3014
    %v3979 = vpack.c.b16 %v3019, %v3015
    %v3980 = vpack.c.b16 %v3020, %v3016
    %v3981 = vpack.c.b16 %v3025, %v3021
    %v3982 = vpack.c.b16 %v3026, %v3022
    %v3983 = vpack.c.b16 %v3027, %v3023
    %v3984 = vpack.c.b16 %v3028, %v3024
    %v3985 = vpack.c.b16 %v3033, %v3029
    %v3986 = vpack.c.b16 %v3034, %v3030
    %v3987 = vpack.c.b16 %v3035, %v3031
    %v3988 = vpack.c.b16 %v3036, %v3032
    %v3989 = vpack.c.b16 %v3041, %v3037
    %v3990 = vpack.c.b16 %v3042, %v3038
    %v3991 = vpack.c.b16 %v3043, %v3039
    %v3992 = vpack.c.b16 %v3044, %v3040
    %v3993 = vpack.c.b16 %v3049, %v3045
    %v3994 = vpack.c.b16 %v3050, %v3046
    %v3995 = vpack.c.b16 %v3051, %v3047
    %v3996 = vpack.c.b16 %v3052, %v3048
    %v3997 = vpack.c.b16 %v3057, %v3053
    %v3998 = vpack.c.b16 %v3058, %v3054
    %v3999 = vpack.c.b16 %v3059, %v3055
    %v4000 = vpack.c.b16 %v3060, %v3056
    %v4001 = vpack.c.b16 %v3065, %v3061
    %v4002 = vpack.c.b16 %v3066, %v3062
    %v4003 = vpack.c.b16 %v3067, %v3063
    %v4004 = vpack.c.b16 %v3068, %v3064
    %v4005 = vpack.c.b16 %v3073, %v3069
    %v4006 = vpack.c.b16 %v3074, %v3070
    %v4007 = vpack.c.b16 %v3075, %v3071
    %v4008 = vpack.c.b16 %v3076, %v3072
    %v4009 = vpack.c.b16 %v3081, %v3077
    %v4010 = vpack.c.b16 %v3082, %v3078
    %v4011 = vpack.c.b16 %v3083, %v3079
    %v4012 = vpack.c.b16 %v3084, %v3080
    %v4013 = vpack.c.b16 %v3089, %v3085
    %v4014 = vpack.c.b16 %v3090, %v3086
    %v4015 = vpack.c.b16 %v3091, %v3087
    %v4016 = vpack.c.b16 %v3092, %v3088
    %v4017 = vpack.c.b16 %v3097, %v3093
    %v4018 = vpack.c.b16 %v3098, %v3094
    %v4019 = vpack.c.b16 %v3099, %v3095
    %v4020 = vpack.c.b16 %v3100, %v3096
    %v4021 = vpack.c.b16 %v3105, %v3101
    %v4022 = vpack.c.b16 %v3106, %v3102
    %v4023 = vpack.c.b16 %v3107, %v3103
    %v4024 = vpack.c.b16 %v3108, %v3104
    %v4025 = vpack.c.b16 %v3113, %v3109
    %v4026 = vpack.c.b16 %v3114, %v3110
    %v4027 = vpack.c.b16 %v3115, %v3111
    %v4028 = vpack.c.b16 %v3116, %v3112
    %v4029 = vpack.c.b16 %v3121, %v3117
    %v4030 = vpack.c.b16 %v3122, %v3118
    %v4031 = vpack.c.b16 %v3123, %v3119
    %v4032 = vpack.c.b16 %v3124, %v3120
    %v4033 = vpack.c.b16 %v3129, %v3125
    %v4034 = vpack.c.b16 %v3130, %v3126
    %v4035 = vpack.c.b16 %v3131, %v3127
    %v4036 = vpack.c.b16 %v3132, %v3128
    %v4037 = vpack.c.b16 %v3137, %v3133
    %v4038 = vpack.c.b16 %v3138, %v3134
    %v4039 = vpack.c.b16 %v3139, %v3135
    %v4040 = vpack.c.b16 %v3140, %v3136
    %v4041 = vpack.c.b16 %v3145, %v3141
    %v4042 = vpack.c.b16 %v3146, %v3142
    %v4043 = vpack.c.b16 %v3147, %v3143
    %v4044 = vpack.c.b16 %v3148, %v3144
    %v4045 = vpack.c.b16 %v3153, %v3149
    %v4046 = vpack.c.b16 %v3154, %v3150
    %v4047 = vpack.c.b16 %v3155, %v3151
    %v4048 = vpack.c.b16 %v3156, %v3152
    %v4049 = vpack.c.b16 %v3161, %v3157
    %v4050 = vpack.c.b16 %v3162, %v3158
    %v4051 = vpack.c.b16 %v3163, %v3159
    %v4052 = vpack.c.b16 %v3164, %v3160
    %v4053 = vpack.c.b16 %v3169, %v3165
    %v4054 = vpack.c.b16 %v3170, %v3166
    %v4055 = vpack.c.b16 %v3171, %v3167
    %v4056 = vpack.c.b16 %v3172, %v3168
    %v4057 = vpack.c.b16 %v3177, %v3173
    %v4058 = vpack.c.b16 %v3178, %v3174
    %v4059 = vpack.c.b16 %v3179, %v3175
    %v4060 = vpack.c.b16 %v3180, %v3176
    %v4061 = vpack.c.b16 %v3185, %v3181
    %v4062 = vpack.c.b16 %v3186, %v3182
    %v4063 = vpack.c.b16 %v3187, %v3183
    %v4064 = vpack.c.b16 %v3188, %v3184
    %v4065 = vpack.c.b16 %v3193, %v3189
    %v4066 = vpack.c.b16 %v3194, %v3190
    %v4067 = vpack.c.b16 %v3195, %v3191
    %v4068 = vpack.c.b16 %v3196, %v3192
    %v4069 = vpack.c.b16 %v3201, %v3197
    %v4070 = vpack.c.b16 %v3202, %v3198
    %v4071 = vpack.c.b16 %v3203, %v3199
    %v4072 = vpack.c.b16 %v3204, %v3200
    %v4073 = vpack.c.b16 %v3209, %v3205
    %v4074 = vpack.c.b16 %v3210, %v3206
    %v4075 = vpack.c.b16 %v3211, %v3207
    %v4076 = vpack.c.b16 %v3212, %v3208
    %v4077 = vpack.c.b16 %v3217, %v3213
    %v4078 = vpack.c.b16 %v3218, %v3214
    %v4079 = vpack.c.b16 %v3219, %v3215
    %v4080 = vpack.c.b16 %v3220, %v3216
    %v4081 = vpack.c.b16 %v3225, %v3221
    %v4082 = vpack.c.b16 %v3226, %v3222
    %v4083 = vpack.c.b16 %v3227, %v3223
    %v4084 = vpack.c.b16 %v3228, %v3224
    %v4085 = vpack.c.b16 %v3233, %v3229
    %v4086 = vpack.c.b16 %v3234, %v3230
    %v4087 = vpack.c.b16 %v3235, %v3231
    %v4088 = vpack.c.b16 %v3236, %v3232
    %v4089 = vpack.c.b16 %v3241, %v3237
    %v4090 = vpack.c.b16 %v3242, %v3238
    %v4091 = vpack.c.b16 %v3243, %v3239
    %v4092 = vpack.c.b16 %v3244, %v3240
    %v4093 = vpack.c.b16 %v3249, %v3245
    %v4094 = vpack.c.b16 %v3250, %v3246
    %v4095 = vpack.c.b16 %v3251, %v3247
    %v4096 = vpack.c.b16 %v3252, %v3248
    %v4097 = vpack.c.b16 %v3257, %v3253
    %v4098 = vpack.c.b16 %v3258, %v3254
    %v4099 = vpack.c.b16 %v3259, %v3255
    %v4100 = vpack.c.b16 %v3260, %v3256
    %v4101 = vpack.c.b16 %v3265, %v3261
    %v4102 = vpack.c.b16 %v3266, %v3262
    %v4103 = vpack.c.b16 %v3267, %v3263
    %v4104 = vpack.c.b16 %v3268, %v3264
    %v4105 = vpack.c.b16 %v3273, %v3269
    %v4106 = vpack.c.b16 %v3274, %v3270
    %v4107 = vpack.c.b16 %v3275, %v3271
    %v4108 = vpack.c.b16 %v3276, %v3272
    %v4109 = vpack.c.b16 %v3281, %v3277
    %v4110 = vpack.c.b16 %v3282, %v3278
    %v4111 = vpack.c.b16 %v3283, %v3279
    %v4112 = vpack.c.b16 %v3284, %v3280
    %v4113 = vpack.c.b16 %v3289, %v3285
    %v4114 = vpack.c.b16 %v3290, %v3286
    %v4115 = vpack.c.b16 %v3291, %v3287
    %v4116 = vpack.c.b16 %v3292, %v3288
    %v4117 = vpack.c.b16 %v3297, %v3293
    %v4118 = vpack.c.b16 %v3298, %v3294
    %v4119 = vpack.c.b16 %v3299, %v3295
    %v4120 = vpack.c.b16 %v3300, %v3296
    %v4121 = vpack.c.b16 %v3305, %v3301
    %v4122 = vpack.c.b16 %v3306, %v3302
    %v4123 = vpack.c.b16 %v3307, %v3303
    %v4124 = vpack.c.b16 %v3308, %v3304
    %v4125 = vpack.c.b16 %v3313, %v3309
    %v4126 = vpack.c.b16 %v3314, %v3310
    %v4127 = vpack.c.b16 %v3315, %v3311
    %v4128 = vpack.c.b16 %v3316, %v3312
    %v4129 = vpack.c.b16 %v3321, %v3317
    %v4130 = vpack.c.b16 %v3322, %v3318
    %v4131 = vpack.c.b16 %v3323, %v3319
    %v4132 = vpack.c.b16 %v3324, %v3320
    %v4133 = vpack.c.b16 %v3329, %v3325
    %v4134 = vpack.c.b16 %v3330, %v3326
    %v4135 = vpack.c.b16 %v3331, %v3327
    %v4136 = vpack.c.b16 %v3332, %v3328
    %v4137 = vpack.c.b16 %v3337, %v3333
    %v4138 = vpack.c.b16 %v3338, %v3334
    %v4139 = vpack.c.b16 %v3339, %v3335
    %v4140 = vpack.c.b16 %v3340, %v3336
    %v4141 = vpack.c.b16 %v3345, %v3341
    %v4142 = vpack.c.b16 %v3346, %v3342
    %v4143 = vpack.c.b16 %v3347, %v3343
    %v4144 = vpack.c.b16 %v3348, %v3344
    %v4145 = vpack.c.b16 %v3353, %v3349
    %v4146 = vpack.c.b16 %v3354, %v3350
    %v4147 = vpack.c.b16 %v3355, %v3351
    %v4148 = vpack.c.b16 %v3356, %v3352
    %v4149 = vpack.c.b16 %v3361, %v3357
    %v4150 = vpack.c.b16 %v3362, %v3358
    %v4151 = vpack.c.b16 %v3363, %v3359
    %v4152 = vpack.c.b16 %v3364, %v3360
    %v4153 = vpack.c.b16 %v3369, %v3365
    %v4154 = vpack.c.b16 %v3370, %v3366
    %v4155 = vpack.c.b16 %v3371, %v3367
    %v4156 = vpack.c.b16 %v3372, %v3368
    %vm4941 = vcmask 523264
    %v4943 = vsel %vm4941, %v996, 0
    %4945 = vmatprep.subr.bf16.mxu0 %v3374
    %4946 = vmatpush1.bf16.msra.mxu0 %v3373
    %4947 = vmatprep.subr.bf16.mxu0 %v3378
    %4948 = vmatpush1.bf16.msra.mxu0 %v3377
    %4949 = vmatprep.subr.bf16.mxu0 %v3382
    %4950 = vmatpush1.bf16.msra.mxu0 %v3381
    %4951 = vmatprep.subr.bf16.mxu0 %v3386
    %4952 = vmatpush1.bf16.msra.mxu0 %v3385
    %4953 = vmatprep.subr.bf16.mxu0 %v3390
    %4954 = vmatpush1.bf16.msra.mxu0 %v3389
    %4955 = vmatprep.subr.bf16.mxu0 %v3394
    %4956 = vmatpush1.bf16.msra.mxu0 %v3393
    %4957 = vmatprep.subr.bf16.mxu0 %v3398
    %4958 = vmatpush1.bf16.msra.mxu0 %v3397
    %4959 = vmatprep.subr.bf16.mxu0 %v3402
    %4960 = vmatpush1.bf16.msra.mxu0 %v3401
    %4961 = vmatprep.subr.bf16.mxu0 %v3406
    %4962 = vmatpush1.bf16.msra.mxu0 %v3405
    %4963 = vmatprep.subr.bf16.mxu0 %v3410
    %4964 = vmatpush1.bf16.msra.mxu0 %v3409
    %4965 = vmatprep.subr.bf16.mxu0 %v3414
    %4966 = vmatpush1.bf16.msra.mxu0 %v3413
    %4967 = vmatprep.subr.bf16.mxu0 %v3418
    %4968 = vmatpush1.bf16.msra.mxu0 %v3417
    %4969 = vmatprep.subr.bf16.mxu0 %v3422
    %4970 = vmatpush1.bf16.msra.mxu0 %v3421
    %4971 = vmatprep.subr.bf16.mxu0 %v3426
    %4972 = vmatpush1.bf16.msra.mxu0 %v3425
    %4973 = vmatprep.subr.bf16.mxu0 %v3430
    %4974 = vmatpush1.bf16.msra.mxu0 %v3429
    %4975 = vmatprep.subr.bf16.mxu0 %v3434
    %4976 = vmatpush1.bf16.msra.mxu0 %v3433
    %4977 = vmatprep.mubr.bf16.mxu0 %v873
    %4978 = vmatmul.mubr.bf16.gmra.mrb[0].mxu0 %v859
    %v4979 = vpop.f32.mrb[0].mxu0
    %v4980 = vadd.f32 %v815, %v4979
    %v4981 = vpop.f32.mrb[0].mxu0
    %v4982 = vadd.f32 %v819, %v4981
    %v4983 = vpop.f32.mrb[0].mxu0
    %v4984 = vpop.f32.mrb[0].mxu0
    %4985 = vdwg.mxu0
    %4986 = vmatprep.subr.bf16.mxu0 %v3438
    %4987 = vmatpush1.bf16.msra.mxu0 %v3437
    %4988 = vmatprep.subr.bf16.mxu0 %v3442
    %4989 = vmatpush1.bf16.msra.mxu0 %v3441
    %4990 = vmatprep.subr.bf16.mxu0 %v3446
    %4991 = vmatpush1.bf16.msra.mxu0 %v3445
    %4992 = vmatprep.subr.bf16.mxu0 %v3450
    %4993 = vmatpush1.bf16.msra.mxu0 %v3449
    %4994 = vmatprep.subr.bf16.mxu0 %v3454
    %4995 = vmatpush1.bf16.msra.mxu0 %v3453
    %4996 = vmatprep.subr.bf16.mxu0 %v3458
    %4997 = vmatpush1.bf16.msra.mxu0 %v3457
    %4998 = vmatprep.subr.bf16.mxu0 %v3462
    %4999 = vmatpush1.bf16.msra.mxu0 %v3461
    %5000 = vmatprep.subr.bf16.mxu0 %v3466
    %5001 = vmatpush1.bf16.msra.mxu0 %v3465
    %5002 = vmatprep.subr.bf16.mxu0 %v3470
    %5003 = vmatpush1.bf16.msra.mxu0 %v3469
    %5004 = vmatprep.subr.bf16.mxu0 %v3474
    %5005 = vmatpush1.bf16.msra.mxu0 %v3473
    %5006 = vmatprep.subr.bf16.mxu0 %v3478
    %5007 = vmatpush1.bf16.msra.mxu0 %v3477
    %5008 = vmatprep.subr.bf16.mxu0 %v3482
    %5009 = vmatpush1.bf16.msra.mxu0 %v3481
    %5010 = vmatprep.subr.bf16.mxu0 %v3486
    %5011 = vmatpush1.bf16.msra.mxu0 %v3485
    %5012 = vmatprep.subr.bf16.mxu0 %v3490
    %5013 = vmatpush1.bf16.msra.mxu0 %v3489
    %5014 = vmatprep.subr.bf16.mxu0 %v3494
    %5015 = vmatpush1.bf16.msra.mxu0 %v3493
    %5016 = vmatprep.subr.bf16.mxu0 %v3498
    %5017 = vmatpush1.bf16.msra.mxu0 %v3497
    %5018 = vmatprep.mubr.bf16.mxu0 %v883
    %5019 = vmatmul.mubr.bf16.gmra.mrb[0].mxu0 %v881
    %v5020 = vpop.f32.mrb[0].mxu0
    %v5021 = vadd.f32 %v4980, %v5020
    %v5022 = vpop.f32.mrb[0].mxu0
    %v5023 = vadd.f32 %v4982, %v5022
    %v5024 = vpop.f32.mrb[0].mxu0
    %v5025 = vpop.f32.mrb[0].mxu0
    %5026 = vdwg.mxu0
    %5027 = vmatprep.subr.bf16.mxu0 %v3502
    %5028 = vmatpush1.bf16.msra.mxu0 %v3501
    %5029 = vmatprep.subr.bf16.mxu0 %v3506
    %5030 = vmatpush1.bf16.msra.mxu0 %v3505
    %5031 = vmatprep.subr.bf16.mxu0 %v3510
    %5032 = vmatpush1.bf16.msra.mxu0 %v3509
    %5033 = vmatprep.subr.bf16.mxu0 %v3514
    %5034 = vmatpush1.bf16.msra.mxu0 %v3513
    %5035 = vmatprep.subr.bf16.mxu0 %v3518
    %5036 = vmatpush1.bf16.msra.mxu0 %v3517
    %5037 = vmatprep.subr.bf16.mxu0 %v3522
    %5038 = vmatpush1.bf16.msra.mxu0 %v3521
    %5039 = vmatprep.subr.bf16.mxu0 %v3526
    %5040 = vmatpush1.bf16.msra.mxu0 %v3525
    %5041 = vmatprep.subr.bf16.mxu0 %v3530
    %5042 = vmatpush1.bf16.msra.mxu0 %v3529
    %5043 = vmatprep.subr.bf16.mxu0 %v3534
    %5044 = vmatpush1.bf16.msra.mxu0 %v3533
    %5045 = vmatprep.subr.bf16.mxu0 %v3538
    %5046 = vmatpush1.bf16.msra.mxu0 %v3537
    %5047 = vmatprep.subr.bf16.mxu0 %v3542
    %5048 = vmatpush1.bf16.msra.mxu0 %v3541
    %5049 = vmatprep.subr.bf16.mxu0 %v3546
    %5050 = vmatpush1.bf16.msra.mxu0 %v3545
    %5051 = vmatprep.subr.bf16.mxu0 %v3550
    %5052 = vmatpush1.bf16.msra.mxu0 %v3549
    %5053 = vmatprep.subr.bf16.mxu0 %v3554
    %5054 = vmatpush1.bf16.msra.mxu0 %v3553
    %5055 = vmatprep.subr.bf16.mxu0 %v3558
    %5056 = vmatpush1.bf16.msra.mxu0 %v3557
    %5057 = vmatprep.subr.bf16.mxu0 %v3562
    %5058 = vmatpush1.bf16.msra.mxu0 %v3561
    %5059 = vmatprep.mubr.bf16.mxu0 %v880
    %5060 = vmatmul.mubr.bf16.gmra.mrb[0].mxu0 %v866
    %v5061 = vpop.f32.mrb[0].mxu0
    %v5062 = vadd.f32 %v5021, %v5061
    %v5063 = vpop.f32.mrb[0].mxu0
    %v5064 = vadd.f32 %v5023, %v5063
    %v5065 = vpop.f32.mrb[0].mxu0
    %v5066 = vpop.f32.mrb[0].mxu0
    %5067 = vdwg.mxu0
    %5068 = vmatprep.subr.bf16.mxu0 %v3566
    %5069 = vmatpush1.bf16.msra.mxu0 %v3565
    %5070 = vmatprep.subr.bf16.mxu0 %v3570
    %5071 = vmatpush1.bf16.msra.mxu0 %v3569
    %5072 = vmatprep.subr.bf16.mxu0 %v3574
    %5073 = vmatpush1.bf16.msra.mxu0 %v3573
    %5074 = vmatprep.subr.bf16.mxu0 %v3578
    %5075 = vmatpush1.bf16.msra.mxu0 %v3577
    %5076 = vmatprep.subr.bf16.mxu0 %v3582
    %5077 = vmatpush1.bf16.msra.mxu0 %v3581
    %5078 = vmatprep.subr.bf16.mxu0 %v3586
    %5079 = vmatpush1.bf16.msra.mxu0 %v3585
    %5080 = vmatprep.subr.bf16.mxu0 %v3590
    %5081 = vmatpush1.bf16.msra.mxu0 %v3589
    %5082 = vmatprep.subr.bf16.mxu0 %v3594
    %5083 = vmatpush1.bf16.msra.mxu0 %v3593
    %5084 = vmatprep.subr.bf16.mxu0 %v3598
    %5085 = vmatpush1.bf16.msra.mxu0 %v3597
    %5086 = vmatprep.subr.bf16.mxu0 %v3602
    %5087 = vmatpush1.bf16.msra.mxu0 %v3601
    %5088 = vmatprep.subr.bf16.mxu0 %v3606
    %5089 = vmatpush1.bf16.msra.mxu0 %v3605
    %5090 = vmatprep.subr.bf16.mxu0 %v3610
    %5091 = vmatpush1.bf16.msra.mxu0 %v3609
    %5092 = vmatprep.subr.bf16.mxu0 %v3614
    %5093 = vmatpush1.bf16.msra.mxu0 %v3613
    %5094 = vmatprep.subr.bf16.mxu0 %v3618
    %5095 = vmatpush1.bf16.msra.mxu0 %v3617
    %5096 = vmatprep.subr.bf16.mxu0 %v3622
    %5097 = vmatpush1.bf16.msra.mxu0 %v3621
    %5098 = vmatprep.subr.bf16.mxu0 %v3626
    %5099 = vmatpush1.bf16.msra.mxu0 %v3625
    %5100 = vmatprep.mubr.bf16.mxu0 %v884
    %5101 = vmatmul.mubr.bf16.gmra.mrb[0].mxu0 %v882
    %v5102 = vpop.f32.mrb[0].mxu0
    %v5103 = vadd.f32 %v5062, %v5102
    %v5104 = vpop.f32.mrb[0].mxu0
    %v5105 = vadd.f32 %v5064, %v5104
    %v5106 = vpop.f32.mrb[0].mxu0
    %v5107 = vpop.f32.mrb[0].mxu0
    %5108 = vdwg.mxu0
    %5109 = vmatprep.subr.bf16.mxu0 %v3630
    %5110 = vmatpush1.bf16.msra.mxu0 %v3629
    %5111 = vmatprep.subr.bf16.mxu0 %v3634
    %5112 = vmatpush1.bf16.msra.mxu0 %v3633
    %5113 = vmatprep.subr.bf16.mxu0 %v3638
    %5114 = vmatpush1.bf16.msra.mxu0 %v3637
    %5115 = vmatprep.subr.bf16.mxu0 %v3642
    %5116 = vmatpush1.bf16.msra.mxu0 %v3641
    %5117 = vmatprep.subr.bf16.mxu0 %v3646
    %5118 = vmatpush1.bf16.msra.mxu0 %v3645
    %5119 = vmatprep.subr.bf16.mxu0 %v3650
    %5120 = vmatpush1.bf16.msra.mxu0 %v3649
    %5121 = vmatprep.subr.bf16.mxu0 %v3654
    %5122 = vmatpush1.bf16.msra.mxu0 %v3653
    %5123 = vmatprep.subr.bf16.mxu0 %v3658
    %5124 = vmatpush1.bf16.msra.mxu0 %v3657
    %5125 = vmatprep.subr.bf16.mxu0 %v3662
    %5126 = vmatpush1.bf16.msra.mxu0 %v3661
    %5127 = vmatprep.subr.bf16.mxu0 %v3666
    %5128 = vmatpush1.bf16.msra.mxu0 %v3665
    %5129 = vmatprep.subr.bf16.mxu0 %v3670
    %5130 = vmatpush1.bf16.msra.mxu0 %v3669
    %5131 = vmatprep.subr.bf16.mxu0 %v3674
    %5132 = vmatpush1.bf16.msra.mxu0 %v3673
    %5133 = vmatprep.subr.bf16.mxu0 %v3678
    %5134 = vmatpush1.bf16.msra.mxu0 %v3677
    %5135 = vmatprep.subr.bf16.mxu0 %v3682
    %5136 = vmatpush1.bf16.msra.mxu0 %v3681
    %5137 = vmatprep.subr.bf16.mxu0 %v3686
    %5138 = vmatpush1.bf16.msra.mxu0 %v3685
    %5139 = vmatprep.subr.bf16.mxu0 %v3690
    %5140 = vmatpush1.bf16.msra.mxu0 %v3689
    %5141 = vmatprep.mubr.bf16.mxu0 %v922
    %5142 = vmatmul.mubr.bf16.gmra.mrb[0].mxu0 %v908
    %v5143 = vpop.f32.mrb[0].mxu0
    %v5144 = vadd.f32 %v5103, %v5143
    %v5145 = vpop.f32.mrb[0].mxu0
    %v5146 = vadd.f32 %v5105, %v5145
    %v5147 = vpop.f32.mrb[0].mxu0
    %v5148 = vpop.f32.mrb[0].mxu0
    %5149 = vdwg.mxu0
    %5150 = vmatprep.subr.bf16.mxu0 %v3694
    %5151 = vmatpush1.bf16.msra.mxu0 %v3693
    %5152 = vmatprep.subr.bf16.mxu0 %v3698
    %5153 = vmatpush1.bf16.msra.mxu0 %v3697
    %5154 = vmatprep.subr.bf16.mxu0 %v3702
    %5155 = vmatpush1.bf16.msra.mxu0 %v3701
    %5156 = vmatprep.subr.bf16.mxu0 %v3706
    %5157 = vmatpush1.bf16.msra.mxu0 %v3705
    %5158 = vmatprep.subr.bf16.mxu0 %v3710
    %5159 = vmatpush1.bf16.msra.mxu0 %v3709
    %5160 = vmatprep.subr.bf16.mxu0 %v3714
    %5161 = vmatpush1.bf16.msra.mxu0 %v3713
    %5162 = vmatprep.subr.bf16.mxu0 %v3718
    %5163 = vmatpush1.bf16.msra.mxu0 %v3717
    %5164 = vmatprep.subr.bf16.mxu0 %v3722
    %5165 = vmatpush1.bf16.msra.mxu0 %v3721
    %5166 = vmatprep.subr.bf16.mxu0 %v3726
    %5167 = vmatpush1.bf16.msra.mxu0 %v3725
    %5168 = vmatprep.subr.bf16.mxu0 %v3730
    %5169 = vmatpush1.bf16.msra.mxu0 %v3729
    %5170 = vmatprep.subr.bf16.mxu0 %v3734
    %5171 = vmatpush1.bf16.msra.mxu0 %v3733
    %5172 = vmatprep.subr.bf16.mxu0 %v3738
    %5173 = vmatpush1.bf16.msra.mxu0 %v3737
    %5174 = vmatprep.subr.bf16.mxu0 %v3742
    %5175 = vmatpush1.bf16.msra.mxu0 %v3741
    %5176 = vmatprep.subr.bf16.mxu0 %v3746
    %5177 = vmatpush1.bf16.msra.mxu0 %v3745
    %5178 = vmatprep.subr.bf16.mxu0 %v3750
    %5179 = vmatpush1.bf16.msra.mxu0 %v3749
    %5180 = vmatprep.subr.bf16.mxu0 %v3754
    %5181 = vmatpush1.bf16.msra.mxu0 %v3753
    %5182 = vmatprep.mubr.bf16.mxu0 %v932
    %5183 = vmatmul.mubr.bf16.gmra.mrb[0].mxu0 %v930
    %v5184 = vpop.f32.mrb[0].mxu0
    %v5185 = vadd.f32 %v5144, %v5184
    %v5186 = vpop.f32.mrb[0].mxu0
    %v5187 = vadd.f32 %v5146, %v5186
    %v5188 = vpop.f32.mrb[0].mxu0
    %v5189 = vpop.f32.mrb[0].mxu0
    %5190 = vdwg.mxu0
    %5191 = vmatprep.subr.bf16.mxu0 %v3758
    %5192 = vmatpush1.bf16.msra.mxu0 %v3757
    %5193 = vmatprep.subr.bf16.mxu0 %v3762
    %5194 = vmatpush1.bf16.msra.mxu0 %v3761
    %5195 = vmatprep.subr.bf16.mxu0 %v3766
    %5196 = vmatpush1.bf16.msra.mxu0 %v3765
    %5197 = vmatprep.subr.bf16.mxu0 %v3770
    %5198 = vmatpush1.bf16.msra.mxu0 %v3769
    %5199 = vmatprep.subr.bf16.mxu0 %v3774
    %5200 = vmatpush1.bf16.msra.mxu0 %v3773
    %5201 = vmatprep.subr.bf16.mxu0 %v3778
    %5202 = vmatpush1.bf16.msra.mxu0 %v3777
    %5203 = vmatprep.subr.bf16.mxu0 %v3782
    %5204 = vmatpush1.bf16.msra.mxu0 %v3781
    %5205 = vmatprep.subr.bf16.mxu0 %v3786
    %5206 = vmatpush1.bf16.msra.mxu0 %v3785
    %5207 = vmatprep.subr.bf16.mxu0 %v3790
    %5208 = vmatpush1.bf16.msra.mxu0 %v3789
    %5209 = vmatprep.subr.bf16.mxu0 %v3794
    %5210 = vmatpush1.bf16.msra.mxu0 %v3793
    %5211 = vmatprep.subr.bf16.mxu0 %v3798
    %5212 = vmatpush1.bf16.msra.mxu0 %v3797
    %5213 = vmatprep.subr.bf16.mxu0 %v3802
    %5214 = vmatpush1.bf16.msra.mxu0 %v3801
    %5215 = vmatprep.subr.bf16.mxu0 %v3806
    %5216 = vmatpush1.bf16.msra.mxu0 %v3805
    %5217 = vmatprep.subr.bf16.mxu0 %v3810
    %5218 = vmatpush1.bf16.msra.mxu0 %v3809
    %5219 = vmatprep.subr.bf16.mxu0 %v3814
    %5220 = vmatpush1.bf16.msra.mxu0 %v3813
    %5221 = vmatprep.subr.bf16.mxu0 %v3818
    %5222 = vmatpush1.bf16.msra.mxu0 %v3817
    %5223 = vmatprep.mubr.bf16.mxu0 %v929
    %5224 = vmatmul.mubr.bf16.gmra.mrb[0].mxu0 %v915
    %v5225 = vpop.f32.mrb[0].mxu0
    %v5226 = vadd.f32 %v5185, %v5225
    %v5227 = vpop.f32.mrb[0].mxu0
    %v5228 = vadd.f32 %v5187, %v5227
    %v5229 = vpop.f32.mrb[0].mxu0
    %v5230 = vpop.f32.mrb[0].mxu0
    %5231 = vdwg.mxu0
    %5232 = vmatprep.subr.bf16.mxu0 %v3822
    %5233 = vmatpush1.bf16.msra.mxu0 %v3821
    %5234 = vmatprep.subr.bf16.mxu0 %v3826
    %5235 = vmatpush1.bf16.msra.mxu0 %v3825
    %5236 = vmatprep.subr.bf16.mxu0 %v3830
    %5237 = vmatpush1.bf16.msra.mxu0 %v3829
    %5238 = vmatprep.subr.bf16.mxu0 %v3834
    %5239 = vmatpush1.bf16.msra.mxu0 %v3833
    %5240 = vmatprep.subr.bf16.mxu0 %v3838
    %5241 = vmatpush1.bf16.msra.mxu0 %v3837
    %5242 = vmatprep.subr.bf16.mxu0 %v3842
    %5243 = vmatpush1.bf16.msra.mxu0 %v3841
    %5244 = vmatprep.subr.bf16.mxu0 %v3846
    %5245 = vmatpush1.bf16.msra.mxu0 %v3845
    %5246 = vmatprep.subr.bf16.mxu0 %v3850
    %5247 = vmatpush1.bf16.msra.mxu0 %v3849
    %5248 = vmatprep.subr.bf16.mxu0 %v3854
    %5249 = vmatpush1.bf16.msra.mxu0 %v3853
    %5250 = vmatprep.subr.bf16.mxu0 %v3858
    %5251 = vmatpush1.bf16.msra.mxu0 %v3857
    %5252 = vmatprep.subr.bf16.mxu0 %v3862
    %5253 = vmatpush1.bf16.msra.mxu0 %v3861
    %5254 = vmatprep.subr.bf16.mxu0 %v3866
    %5255 = vmatpush1.bf16.msra.mxu0 %v3865
    %5256 = vmatprep.subr.bf16.mxu0 %v3870
    %5257 = vmatpush1.bf16.msra.mxu0 %v3869
    %5258 = vmatprep.subr.bf16.mxu0 %v3874
    %5259 = vmatpush1.bf16.msra.mxu0 %v3873
    %5260 = vmatprep.subr.bf16.mxu0 %v3878
    %5261 = vmatpush1.bf16.msra.mxu0 %v3877
    %5262 = vmatprep.subr.bf16.mxu0 %v3882
    %5263 = vmatpush1.bf16.msra.mxu0 %v3881
    %5264 = vmatprep.mubr.bf16.mxu0 %v933
    %5265 = vmatmul.mubr.bf16.gmra.mrb[0].mxu0 %v931
    %v5266 = vpop.f32.mrb[0].mxu0
    %v5267 = vadd.f32 %v5226, %v5266
    %v5268 = vpop.f32.mrb[0].mxu0
    %v5269 = vadd.f32 %v5228, %v5268
    %v5270 = vpop.f32.mrb[0].mxu0
    %v5271 = vpop.f32.mrb[0].mxu0
    %5272 = vdwg.mxu0
    %5273 = vmatprep.subr.bf16.mxu0 %v3886
    %5274 = vmatpush1.bf16.msra.mxu0 %v3885
    %5275 = vmatprep.subr.bf16.mxu0 %v3890
    %5276 = vmatpush1.bf16.msra.mxu0 %v3889
    %5277 = vmatprep.subr.bf16.mxu0 %v3894
    %5278 = vmatpush1.bf16.msra.mxu0 %v3893
    %5279 = vmatprep.subr.bf16.mxu0 %v3898
    %5280 = vmatpush1.bf16.msra.mxu0 %v3897
    %5281 = vmatprep.subr.bf16.mxu0 %v3902
    %5282 = vmatpush1.bf16.msra.mxu0 %v3901
    %5283 = vmatprep.subr.bf16.mxu0 %v3906
    %5284 = vmatpush1.bf16.msra.mxu0 %v3905
    %5285 = vmatprep.subr.bf16.mxu0 %v3910
    %5286 = vmatpush1.bf16.msra.mxu0 %v3909
    %5287 = vmatprep.subr.bf16.mxu0 %v3914
    %5288 = vmatpush1.bf16.msra.mxu0 %v3913
    %5289 = vmatprep.subr.bf16.mxu0 %v3918
    %5290 = vmatpush1.bf16.msra.mxu0 %v3917
    %5291 = vmatprep.subr.bf16.mxu0 %v3922
    %5292 = vmatpush1.bf16.msra.mxu0 %v3921
    %5293 = vmatprep.subr.bf16.mxu0 %v3926
    %5294 = vmatpush1.bf16.msra.mxu0 %v3925
    %5295 = vmatprep.subr.bf16.mxu0 %v3930
    %5296 = vmatpush1.bf16.msra.mxu0 %v3929
    %5297 = vmatprep.subr.bf16.mxu0 %v3934
    %5298 = vmatpush1.bf16.msra.mxu0 %v3933
    %5299 = vmatprep.subr.bf16.mxu0 %v3938
    %5300 = vmatpush1.bf16.msra.mxu0 %v3937
    %5301 = vmatprep.subr.bf16.mxu0 %v3942
    %5302 = vmatpush1.bf16.msra.mxu0 %v3941
    %5303 = vmatprep.subr.bf16.mxu0 %v3946
    %5304 = vmatpush1.bf16.msra.mxu0 %v3945
    %5305 = vmatprep.mubr.bf16.mxu0 %v971
    %5306 = vmatmul.mubr.bf16.gmra.mrb[0].mxu0 %v957
    %v5307 = vpop.f32.mrb[0].mxu0
    %v5308 = vadd.f32 %v5267, %v5307
    %v5309 = vpop.f32.mrb[0].mxu0
    %v5310 = vadd.f32 %v5269, %v5309
    %v5311 = vpop.f32.mrb[0].mxu0
    %v5312 = vpop.f32.mrb[0].mxu0
    %5313 = vdwg.mxu0
    %5314 = vmatprep.subr.bf16.mxu0 %v3950
    %5315 = vmatpush1.bf16.msra.mxu0 %v3949
    %5316 = vmatprep.subr.bf16.mxu0 %v3954
    %5317 = vmatpush1.bf16.msra.mxu0 %v3953
    %5318 = vmatprep.subr.bf16.mxu0 %v3958
    %5319 = vmatpush1.bf16.msra.mxu0 %v3957
    %5320 = vmatprep.subr.bf16.mxu0 %v3962
    %5321 = vmatpush1.bf16.msra.mxu0 %v3961
    %5322 = vmatprep.subr.bf16.mxu0 %v3966
    %5323 = vmatpush1.bf16.msra.mxu0 %v3965
    %5324 = vmatprep.subr.bf16.mxu0 %v3970
    %5325 = vmatpush1.bf16.msra.mxu0 %v3969
    %5326 = vmatprep.subr.bf16.mxu0 %v3974
    %5327 = vmatpush1.bf16.msra.mxu0 %v3973
    %5328 = vmatprep.subr.bf16.mxu0 %v3978
    %5329 = vmatpush1.bf16.msra.mxu0 %v3977
    %5330 = vmatprep.subr.bf16.mxu0 %v3982
    %5331 = vmatpush1.bf16.msra.mxu0 %v3981
    %5332 = vmatprep.subr.bf16.mxu0 %v3986
    %5333 = vmatpush1.bf16.msra.mxu0 %v3985
    %5334 = vmatprep.subr.bf16.mxu0 %v3990
    %5335 = vmatpush1.bf16.msra.mxu0 %v3989
    %5336 = vmatprep.subr.bf16.mxu0 %v3994
    %5337 = vmatpush1.bf16.msra.mxu0 %v3993
    %5338 = vmatprep.subr.bf16.mxu0 %v3998
    %5339 = vmatpush1.bf16.msra.mxu0 %v3997
    %5340 = vmatprep.subr.bf16.mxu0 %v4002
    %5341 = vmatpush1.bf16.msra.mxu0 %v4001
    %5342 = vmatprep.subr.bf16.mxu0 %v4006
    %5343 = vmatpush1.bf16.msra.mxu0 %v4005
    %5344 = vmatprep.subr.bf16.mxu0 %v4010
    %5345 = vmatpush1.bf16.msra.mxu0 %v4009
    %5346 = vmatprep.mubr.bf16.mxu0 %v981
    %5347 = vmatmul.mubr.bf16.gmra.mrb[0].mxu0 %v979
    %v5348 = vpop.f32.mrb[0].mxu0
    %v5349 = vadd.f32 %v5308, %v5348
    %v5350 = vpop.f32.mrb[0].mxu0
    %v5351 = vadd.f32 %v5310, %v5350
    %v5352 = vpop.f32.mrb[0].mxu0
    %v5353 = vpop.f32.mrb[0].mxu0
    %5354 = vdwg.mxu0
    %5355 = vmatprep.subr.bf16.mxu0 %v4014
    %5356 = vmatpush1.bf16.msra.mxu0 %v4013
    %5357 = vmatprep.subr.bf16.mxu0 %v4018
    %5358 = vmatpush1.bf16.msra.mxu0 %v4017
    %5359 = vmatprep.subr.bf16.mxu0 %v4022
    %5360 = vmatpush1.bf16.msra.mxu0 %v4021
    %5361 = vmatprep.subr.bf16.mxu0 %v4026
    %5362 = vmatpush1.bf16.msra.mxu0 %v4025
    %5363 = vmatprep.subr.bf16.mxu0 %v4030
    %5364 = vmatpush1.bf16.msra.mxu0 %v4029
    %5365 = vmatprep.subr.bf16.mxu0 %v4034
    %5366 = vmatpush1.bf16.msra.mxu0 %v4033
    %5367 = vmatprep.subr.bf16.mxu0 %v4038
    %5368 = vmatpush1.bf16.msra.mxu0 %v4037
    %5369 = vmatprep.subr.bf16.mxu0 %v4042
    %5370 = vmatpush1.bf16.msra.mxu0 %v4041
    %5371 = vmatprep.subr.bf16.mxu0 %v4046
    %5372 = vmatpush1.bf16.msra.mxu0 %v4045
    %5373 = vmatprep.subr.bf16.mxu0 %v4050
    %5374 = vmatpush1.bf16.msra.mxu0 %v4049
    %5375 = vmatprep.subr.bf16.mxu0 %v4054
    %5376 = vmatpush1.bf16.msra.mxu0 %v4053
    %5377 = vmatprep.subr.bf16.mxu0 %v4058
    %5378 = vmatpush1.bf16.msra.mxu0 %v4057
    %5379 = vmatprep.subr.bf16.mxu0 %v4062
    %5380 = vmatpush1.bf16.msra.mxu0 %v4061
    %5381 = vmatprep.subr.bf16.mxu0 %v4066
    %5382 = vmatpush1.bf16.msra.mxu0 %v4065
    %5383 = vmatprep.subr.bf16.mxu0 %v4070
    %5384 = vmatpush1.bf16.msra.mxu0 %v4069
    %5385 = vmatprep.subr.bf16.mxu0 %v4074
    %5386 = vmatpush1.bf16.msra.mxu0 %v4073
    %5387 = vmatprep.mubr.bf16.mxu0 %v978
    %5388 = vmatmul.mubr.bf16.gmra.mrb[0].mxu0 %v964
    %v5389 = vpop.f32.mrb[0].mxu0
    %v5390 = vadd.f32 %v5349, %v5389
    %v5391 = vpop.f32.mrb[0].mxu0
    %v5392 = vadd.f32 %v5351, %v5391
    %v5393 = vpop.f32.mrb[0].mxu0
    %v5394 = vpop.f32.mrb[0].mxu0
    %5395 = vdwg.mxu0
    %5396 = vmatprep.subr.bf16.mxu0 %v4078
    %5397 = vmatpush1.bf16.msra.mxu0 %v4077
    %5398 = vmatprep.subr.bf16.mxu0 %v4082
    %5399 = vmatpush1.bf16.msra.mxu0 %v4081
    %5400 = vmatprep.subr.bf16.mxu0 %v4086
    %5401 = vmatpush1.bf16.msra.mxu0 %v4085
    %5402 = vmatprep.subr.bf16.mxu0 %v4090
    %5403 = vmatpush1.bf16.msra.mxu0 %v4089
    %5404 = vmatprep.subr.bf16.mxu0 %v4094
    %5405 = vmatpush1.bf16.msra.mxu0 %v4093
    %5406 = vmatprep.subr.bf16.mxu0 %v4098
    %5407 = vmatpush1.bf16.msra.mxu0 %v4097
    %5408 = vmatprep.subr.bf16.mxu0 %v4102
    %5409 = vmatpush1.bf16.msra.mxu0 %v4101
    %5410 = vmatprep.subr.bf16.mxu0 %v4106
    %5411 = vmatpush1.bf16.msra.mxu0 %v4105
    %5412 = vmatprep.subr.bf16.mxu0 %v4110
    %5413 = vmatpush1.bf16.msra.mxu0 %v4109
    %5414 = vmatprep.subr.bf16.mxu0 %v4114
    %5415 = vmatpush1.bf16.msra.mxu0 %v4113
    %5416 = vmatprep.subr.bf16.mxu0 %v4118
    %5417 = vmatpush1.bf16.msra.mxu0 %v4117
    %5418 = vmatprep.subr.bf16.mxu0 %v4122
    %5419 = vmatpush1.bf16.msra.mxu0 %v4121
    %5420 = vmatprep.subr.bf16.mxu0 %v4126
    %5421 = vmatpush1.bf16.msra.mxu0 %v4125
    %5422 = vmatprep.subr.bf16.mxu0 %v4130
    %5423 = vmatpush1.bf16.msra.mxu0 %v4129
    %5424 = vmatprep.subr.bf16.mxu0 %v4134
    %5425 = vmatpush1.bf16.msra.mxu0 %v4133
    %5426 = vmatprep.subr.bf16.mxu0 %v4138
    %5427 = vmatpush1.bf16.msra.mxu0 %v4137
    %5428 = vmatprep.mubr.bf16.mxu0 %v982
    %5429 = vmatmul.mubr.bf16.gmra.mrb[0].mxu0 %v980
    %v5430 = vpop.f32.mrb[0].mxu0
    %v5431 = vadd.f32 %v5390, %v5430
    %v5432 = vpop.f32.mrb[0].mxu0
    %v5433 = vadd.f32 %v5392, %v5432
    %v5434 = vpop.f32.mrb[0].mxu0
    %v5435 = vpop.f32.mrb[0].mxu0
    %5436 = vdwg.mxu0
    %5437 = vmatprep.subr.bf16.mxu0 %v4142
    %5438 = vmatpush1.bf16.msra.mxu0 %v4141
    %5439 = vmatprep.subr.bf16.mxu0 %v4146
    %5440 = vmatpush1.bf16.msra.mxu0 %v4145
    %5441 = vmatprep.subr.bf16.mxu0 %v4150
    %5442 = vmatpush1.bf16.msra.mxu0 %v4149
    %5443 = vmatprep.subr.bf16.mxu0 %v4154
    %5444 = vmatpush1.bf16.msra.mxu0 %v4153
    %5445 = vmatprep.subr.bf16.mxu0 0
    %5446 = vmatpush1.bf16.msra.mxu0 0
    %5447 = vmatprep.subr.bf16.mxu0 0
    %5448 = vmatpush1.bf16.msra.mxu0 0
    %5449 = vmatprep.subr.bf16.mxu0 0
    %5450 = vmatpush1.bf16.msra.mxu0 0
    %5451 = vmatprep.subr.bf16.mxu0 0
    %5452 = vmatpush1.bf16.msra.mxu0 0
    %5453 = vmatprep.subr.bf16.mxu0 0
    %5454 = vmatpush1.bf16.msra.mxu0 0
    %5455 = vmatprep.subr.bf16.mxu0 0
    %5456 = vmatpush1.bf16.msra.mxu0 0
    %5457 = vmatprep.subr.bf16.mxu0 0
    %5458 = vmatpush1.bf16.msra.mxu0 0
    %5459 = vmatprep.subr.bf16.mxu0 0
    %5460 = vmatpush1.bf16.msra.mxu0 0
    %5461 = vmatprep.subr.bf16.mxu0 0
    %5462 = vmatpush1.bf16.msra.mxu0 0
    %5463 = vmatprep.subr.bf16.mxu0 0
    %5464 = vmatpush1.bf16.msra.mxu0 0
    %5465 = vmatprep.subr.bf16.mxu0 0
    %5466 = vmatpush1.bf16.msra.mxu0 0
    %5467 = vmatprep.subr.bf16.mxu0 0
    %5468 = vmatpush1.bf16.msra.mxu0 0
    %5469 = vmatprep.mubr.bf16.mxu0 0
    %5470 = vmatmul.mubr.bf16.gmra.mrb[0].mxu0 %v4943
    %v5471 = vpop.f32.mrb[0].mxu0
    %v5472 = vadd.f32 %v5431, %v5471
    %v5473 = vpop.f32.mrb[0].mxu0
    %v5474 = vadd.f32 %v5433, %v5473
    %v5475 = vpop.f32.mrb[0].mxu0
    %v5476 = vpop.f32.mrb[0].mxu0
    %5477 = vdwg.mxu0
    %5478 = vmatprep.subr.bf16.mxu0 %v3376
    %5479 = vmatpush1.bf16.msra.mxu0 %v3375
    %5480 = vmatprep.subr.bf16.mxu0 %v3380
    %5481 = vmatpush1.bf16.msra.mxu0 %v3379
    %5482 = vmatprep.subr.bf16.mxu0 %v3384
    %5483 = vmatpush1.bf16.msra.mxu0 %v3383
    %5484 = vmatprep.subr.bf16.mxu0 %v3388
    %5485 = vmatpush1.bf16.msra.mxu0 %v3387
    %5486 = vmatprep.subr.bf16.mxu0 %v3392
    %5487 = vmatpush1.bf16.msra.mxu0 %v3391
    %5488 = vmatprep.subr.bf16.mxu0 %v3396
    %5489 = vmatpush1.bf16.msra.mxu0 %v3395
    %5490 = vmatprep.subr.bf16.mxu0 %v3400
    %5491 = vmatpush1.bf16.msra.mxu0 %v3399
    %5492 = vmatprep.subr.bf16.mxu0 %v3404
    %5493 = vmatpush1.bf16.msra.mxu0 %v3403
    %5494 = vmatprep.subr.bf16.mxu0 %v3408
    %5495 = vmatpush1.bf16.msra.mxu0 %v3407
    %5496 = vmatprep.subr.bf16.mxu0 %v3412
    %5497 = vmatpush1.bf16.msra.mxu0 %v3411
    %5498 = vmatprep.subr.bf16.mxu0 %v3416
    %5499 = vmatpush1.bf16.msra.mxu0 %v3415
    %5500 = vmatprep.subr.bf16.mxu0 %v3420
    %5501 = vmatpush1.bf16.msra.mxu0 %v3419
    %5502 = vmatprep.subr.bf16.mxu0 %v3424
    %5503 = vmatpush1.bf16.msra.mxu0 %v3423
    %5504 = vmatprep.subr.bf16.mxu0 %v3428
    %5505 = vmatpush1.bf16.msra.mxu0 %v3427
    %5506 = vmatprep.subr.bf16.mxu0 %v3432
    %5507 = vmatpush1.bf16.msra.mxu0 %v3431
    %5508 = vmatprep.subr.bf16.mxu0 %v3436
    %5509 = vmatpush1.bf16.msra.mxu0 %v3435
    %5510 = vmatprep.mubr.bf16.mxu0 %v873
    %5511 = vmatmul.mubr.bf16.gmra.mrb[0].mxu0 %v859
    %v5512 = vpop.f32.mrb[0].mxu0
    %v5513 = vadd.f32 %v823, %v5512
    %v5514 = vpop.f32.mrb[0].mxu0
    %v5515 = vadd.f32 %v827, %v5514
    %v5516 = vpop.f32.mrb[0].mxu0
    %v5517 = vpop.f32.mrb[0].mxu0
    %5518 = vdwg.mxu0
    %5519 = vmatprep.subr.bf16.mxu0 %v3440
    %5520 = vmatpush1.bf16.msra.mxu0 %v3439
    %5521 = vmatprep.subr.bf16.mxu0 %v3444
    %5522 = vmatpush1.bf16.msra.mxu0 %v3443
    %5523 = vmatprep.subr.bf16.mxu0 %v3448
    %5524 = vmatpush1.bf16.msra.mxu0 %v3447
    %5525 = vmatprep.subr.bf16.mxu0 %v3452
    %5526 = vmatpush1.bf16.msra.mxu0 %v3451
    %5527 = vmatprep.subr.bf16.mxu0 %v3456
    %5528 = vmatpush1.bf16.msra.mxu0 %v3455
    %5529 = vmatprep.subr.bf16.mxu0 %v3460
    %5530 = vmatpush1.bf16.msra.mxu0 %v3459
    %5531 = vmatprep.subr.bf16.mxu0 %v3464
    %5532 = vmatpush1.bf16.msra.mxu0 %v3463
    %5533 = vmatprep.subr.bf16.mxu0 %v3468
    %5534 = vmatpush1.bf16.msra.mxu0 %v3467
    %5535 = vmatprep.subr.bf16.mxu0 %v3472
    %5536 = vmatpush1.bf16.msra.mxu0 %v3471
    %5537 = vmatprep.subr.bf16.mxu0 %v3476
    %5538 = vmatpush1.bf16.msra.mxu0 %v3475
    %5539 = vmatprep.subr.bf16.mxu0 %v3480
    %5540 = vmatpush1.bf16.msra.mxu0 %v3479
    %5541 = vmatprep.subr.bf16.mxu0 %v3484
    %5542 = vmatpush1.bf16.msra.mxu0 %v3483
    %5543 = vmatprep.subr.bf16.mxu0 %v3488
    %5544 = vmatpush1.bf16.msra.mxu0 %v3487
    %5545 = vmatprep.subr.bf16.mxu0 %v3492
    %5546 = vmatpush1.bf16.msra.mxu0 %v3491
    %5547 = vmatprep.subr.bf16.mxu0 %v3496
    %5548 = vmatpush1.bf16.msra.mxu0 %v3495
    %5549 = vmatprep.subr.bf16.mxu0 %v3500
    %5550 = vmatpush1.bf16.msra.mxu0 %v3499
    %5551 = vmatprep.mubr.bf16.mxu0 %v883
    %5552 = vmatmul.mubr.bf16.gmra.mrb[0].mxu0 %v881
    %v5553 = vpop.f32.mrb[0].mxu0
    %v5554 = vadd.f32 %v5513, %v5553
    %v5555 = vpop.f32.mrb[0].mxu0
    %v5556 = vadd.f32 %v5515, %v5555
    %v5557 = vpop.f32.mrb[0].mxu0
    %v5558 = vpop.f32.mrb[0].mxu0
    %5559 = vdwg.mxu0
    %5560 = vmatprep.subr.bf16.mxu0 %v3504
    %5561 = vmatpush1.bf16.msra.mxu0 %v3503
    %5562 = vmatprep.subr.bf16.mxu0 %v3508
    %5563 = vmatpush1.bf16.msra.mxu0 %v3507
    %5564 = vmatprep.subr.bf16.mxu0 %v3512
    %5565 = vmatpush1.bf16.msra.mxu0 %v3511
    %5566 = vmatprep.subr.bf16.mxu0 %v3516
    %5567 = vmatpush1.bf16.msra.mxu0 %v3515
    %5568 = vmatprep.subr.bf16.mxu0 %v3520
    %5569 = vmatpush1.bf16.msra.mxu0 %v3519
    %5570 = vmatprep.subr.bf16.mxu0 %v3524
    %5571 = vmatpush1.bf16.msra.mxu0 %v3523
    %5572 = vmatprep.subr.bf16.mxu0 %v3528
    %5573 = vmatpush1.bf16.msra.mxu0 %v3527
    %5574 = vmatprep.subr.bf16.mxu0 %v3532
    %5575 = vmatpush1.bf16.msra.mxu0 %v3531
    %5576 = vmatprep.subr.bf16.mxu0 %v3536
    %5577 = vmatpush1.bf16.msra.mxu0 %v3535
    %5578 = vmatprep.subr.bf16.mxu0 %v3540
    %5579 = vmatpush1.bf16.msra.mxu0 %v3539
    %5580 = vmatprep.subr.bf16.mxu0 %v3544
    %5581 = vmatpush1.bf16.msra.mxu0 %v3543
    %5582 = vmatprep.subr.bf16.mxu0 %v3548
    %5583 = vmatpush1.bf16.msra.mxu0 %v3547
    %5584 = vmatprep.subr.bf16.mxu0 %v3552
    %5585 = vmatpush1.bf16.msra.mxu0 %v3551
    %5586 = vmatprep.subr.bf16.mxu0 %v3556
    %5587 = vmatpush1.bf16.msra.mxu0 %v3555
    %5588 = vmatprep.subr.bf16.mxu0 %v3560
    %5589 = vmatpush1.bf16.msra.mxu0 %v3559
    %5590 = vmatprep.subr.bf16.mxu0 %v3564
    %5591 = vmatpush1.bf16.msra.mxu0 %v3563
    %5592 = vmatprep.mubr.bf16.mxu0 %v880
    %5593 = vmatmul.mubr.bf16.gmra.mrb[0].mxu0 %v866
    %v5594 = vpop.f32.mrb[0].mxu0
    %v5595 = vadd.f32 %v5554, %v5594
    %v5596 = vpop.f32.mrb[0].mxu0
    %v5597 = vadd.f32 %v5556, %v5596
    %v5598 = vpop.f32.mrb[0].mxu0
    %v5599 = vpop.f32.mrb[0].mxu0
    %5600 = vdwg.mxu0
    %5601 = vmatprep.subr.bf16.mxu0 %v3568
    %5602 = vmatpush1.bf16.msra.mxu0 %v3567
    %5603 = vmatprep.subr.bf16.mxu0 %v3572
    %5604 = vmatpush1.bf16.msra.mxu0 %v3571
    %5605 = vmatprep.subr.bf16.mxu0 %v3576
    %5606 = vmatpush1.bf16.msra.mxu0 %v3575
    %5607 = vmatprep.subr.bf16.mxu0 %v3580
    %5608 = vmatpush1.bf16.msra.mxu0 %v3579
    %5609 = vmatprep.subr.bf16.mxu0 %v3584
    %5610 = vmatpush1.bf16.msra.mxu0 %v3583
    %5611 = vmatprep.subr.bf16.mxu0 %v3588
    %5612 = vmatpush1.bf16.msra.mxu0 %v3587
    %5613 = vmatprep.subr.bf16.mxu0 %v3592
    %5614 = vmatpush1.bf16.msra.mxu0 %v3591
    %5615 = vmatprep.subr.bf16.mxu0 %v3596
    %5616 = vmatpush1.bf16.msra.mxu0 %v3595
    %5617 = vmatprep.subr.bf16.mxu0 %v3600
    %5618 = vmatpush1.bf16.msra.mxu0 %v3599
    %5619 = vmatprep.subr.bf16.mxu0 %v3604
    %5620 = vmatpush1.bf16.msra.mxu0 %v3603
    %5621 = vmatprep.subr.bf16.mxu0 %v3608
    %5622 = vmatpush1.bf16.msra.mxu0 %v3607
    %5623 = vmatprep.subr.bf16.mxu0 %v3612
    %5624 = vmatpush1.bf16.msra.mxu0 %v3611
    %5625 = vmatprep.subr.bf16.mxu0 %v3616
    %5626 = vmatpush1.bf16.msra.mxu0 %v3615
    %5627 = vmatprep.subr.bf16.mxu0 %v3620
    %5628 = vmatpush1.bf16.msra.mxu0 %v3619
    %5629 = vmatprep.subr.bf16.mxu0 %v3624
    %5630 = vmatpush1.bf16.msra.mxu0 %v3623
    %5631 = vmatprep.subr.bf16.mxu0 %v3628
    %5632 = vmatpush1.bf16.msra.mxu0 %v3627
    %5633 = vmatprep.mubr.bf16.mxu0 %v884
    %5634 = vmatmul.mubr.bf16.gmra.mrb[0].mxu0 %v882
    %v5635 = vpop.f32.mrb[0].mxu0
    %v5636 = vadd.f32 %v5595, %v5635
    %v5637 = vpop.f32.mrb[0].mxu0
    %v5638 = vadd.f32 %v5597, %v5637
    %v5639 = vpop.f32.mrb[0].mxu0
    %v5640 = vpop.f32.mrb[0].mxu0
    %5641 = vdwg.mxu0
    %5642 = vmatprep.subr.bf16.mxu0 %v3632
    %5643 = vmatpush1.bf16.msra.mxu0 %v3631
    %5644 = vmatprep.subr.bf16.mxu0 %v3636
    %5645 = vmatpush1.bf16.msra.mxu0 %v3635
    %5646 = vmatprep.subr.bf16.mxu0 %v3640
    %5647 = vmatpush1.bf16.msra.mxu0 %v3639
    %5648 = vmatprep.subr.bf16.mxu0 %v3644
    %5649 = vmatpush1.bf16.msra.mxu0 %v3643
    %5650 = vmatprep.subr.bf16.mxu0 %v3648
    %5651 = vmatpush1.bf16.msra.mxu0 %v3647
    %5652 = vmatprep.subr.bf16.mxu0 %v3652
    %5653 = vmatpush1.bf16.msra.mxu0 %v3651
    %5654 = vmatprep.subr.bf16.mxu0 %v3656
    %5655 = vmatpush1.bf16.msra.mxu0 %v3655
    %5656 = vmatprep.subr.bf16.mxu0 %v3660
    %5657 = vmatpush1.bf16.msra.mxu0 %v3659
    %5658 = vmatprep.subr.bf16.mxu0 %v3664
    %5659 = vmatpush1.bf16.msra.mxu0 %v3663
    %5660 = vmatprep.subr.bf16.mxu0 %v3668
    %5661 = vmatpush1.bf16.msra.mxu0 %v3667
    %5662 = vmatprep.subr.bf16.mxu0 %v3672
    %5663 = vmatpush1.bf16.msra.mxu0 %v3671
    %5664 = vmatprep.subr.bf16.mxu0 %v3676
    %5665 = vmatpush1.bf16.msra.mxu0 %v3675
    %5666 = vmatprep.subr.bf16.mxu0 %v3680
    %5667 = vmatpush1.bf16.msra.mxu0 %v3679
    %5668 = vmatprep.subr.bf16.mxu0 %v3684
    %5669 = vmatpush1.bf16.msra.mxu0 %v3683
    %5670 = vmatprep.subr.bf16.mxu0 %v3688
    %5671 = vmatpush1.bf16.msra.mxu0 %v3687
    %5672 = vmatprep.subr.bf16.mxu0 %v3692
    %5673 = vmatpush1.bf16.msra.mxu0 %v3691
    %5674 = vmatprep.mubr.bf16.mxu0 %v922
    %5675 = vmatmul.mubr.bf16.gmra.mrb[0].mxu0 %v908
    %v5676 = vpop.f32.mrb[0].mxu0
    %v5677 = vadd.f32 %v5636, %v5676
    %v5678 = vpop.f32.mrb[0].mxu0
    %v5679 = vadd.f32 %v5638, %v5678
    %v5680 = vpop.f32.mrb[0].mxu0
    %v5681 = vpop.f32.mrb[0].mxu0
    %5682 = vdwg.mxu0
    %5683 = vmatprep.subr.bf16.mxu0 %v3696
    %5684 = vmatpush1.bf16.msra.mxu0 %v3695
    %5685 = vmatprep.subr.bf16.mxu0 %v3700
    %5686 = vmatpush1.bf16.msra.mxu0 %v3699
    %5687 = vmatprep.subr.bf16.mxu0 %v3704
    %5688 = vmatpush1.bf16.msra.mxu0 %v3703
    %5689 = vmatprep.subr.bf16.mxu0 %v3708
    %5690 = vmatpush1.bf16.msra.mxu0 %v3707
    %5691 = vmatprep.subr.bf16.mxu0 %v3712
    %5692 = vmatpush1.bf16.msra.mxu0 %v3711
    %5693 = vmatprep.subr.bf16.mxu0 %v3716
    %5694 = vmatpush1.bf16.msra.mxu0 %v3715
    %5695 = vmatprep.subr.bf16.mxu0 %v3720
    %5696 = vmatpush1.bf16.msra.mxu0 %v3719
    %5697 = vmatprep.subr.bf16.mxu0 %v3724
    %5698 = vmatpush1.bf16.msra.mxu0 %v3723
    %5699 = vmatprep.subr.bf16.mxu0 %v3728
    %5700 = vmatpush1.bf16.msra.mxu0 %v3727
    %5701 = vmatprep.subr.bf16.mxu0 %v3732
    %5702 = vmatpush1.bf16.msra.mxu0 %v3731
    %5703 = vmatprep.subr.bf16.mxu0 %v3736
    %5704 = vmatpush1.bf16.msra.mxu0 %v3735
    %5705 = vmatprep.subr.bf16.mxu0 %v3740
    %5706 = vmatpush1.bf16.msra.mxu0 %v3739
    %5707 = vmatprep.subr.bf16.mxu0 %v3744
    %5708 = vmatpush1.bf16.msra.mxu0 %v3743
    %5709 = vmatprep.subr.bf16.mxu0 %v3748
    %5710 = vmatpush1.bf16.msra.mxu0 %v3747
    %5711 = vmatprep.subr.bf16.mxu0 %v3752
    %5712 = vmatpush1.bf16.msra.mxu0 %v3751
    %5713 = vmatprep.subr.bf16.mxu0 %v3756
    %5714 = vmatpush1.bf16.msra.mxu0 %v3755
    %5715 = vmatprep.mubr.bf16.mxu0 %v932
    %5716 = vmatmul.mubr.bf16.gmra.mrb[0].mxu0 %v930
    %v5717 = vpop.f32.mrb[0].mxu0
    %v5718 = vadd.f32 %v5677, %v5717
    %v5719 = vpop.f32.mrb[0].mxu0
    %v5720 = vadd.f32 %v5679, %v5719
    %v5721 = vpop.f32.mrb[0].mxu0
    %v5722 = vpop.f32.mrb[0].mxu0
    %5723 = vdwg.mxu0
    %5724 = vmatprep.subr.bf16.mxu0 %v3760
    %5725 = vmatpush1.bf16.msra.mxu0 %v3759
    %5726 = vmatprep.subr.bf16.mxu0 %v3764
    %5727 = vmatpush1.bf16.msra.mxu0 %v3763
    %5728 = vmatprep.subr.bf16.mxu0 %v3768
    %5729 = vmatpush1.bf16.msra.mxu0 %v3767
    %5730 = vmatprep.subr.bf16.mxu0 %v3772
    %5731 = vmatpush1.bf16.msra.mxu0 %v3771
    %5732 = vmatprep.subr.bf16.mxu0 %v3776
    %5733 = vmatpush1.bf16.msra.mxu0 %v3775
    %5734 = vmatprep.subr.bf16.mxu0 %v3780
    %5735 = vmatpush1.bf16.msra.mxu0 %v3779
    %5736 = vmatprep.subr.bf16.mxu0 %v3784
    %5737 = vmatpush1.bf16.msra.mxu0 %v3783
    %5738 = vmatprep.subr.bf16.mxu0 %v3788
    %5739 = vmatpush1.bf16.msra.mxu0 %v3787
    %5740 = vmatprep.subr.bf16.mxu0 %v3792
    %5741 = vmatpush1.bf16.msra.mxu0 %v3791
    %5742 = vmatprep.subr.bf16.mxu0 %v3796
    %5743 = vmatpush1.bf16.msra.mxu0 %v3795
    %5744 = vmatprep.subr.bf16.mxu0 %v3800
    %5745 = vmatpush1.bf16.msra.mxu0 %v3799
    %5746 = vmatprep.subr.bf16.mxu0 %v3804
    %5747 = vmatpush1.bf16.msra.mxu0 %v3803
    %5748 = vmatprep.subr.bf16.mxu0 %v3808
    %5749 = vmatpush1.bf16.msra.mxu0 %v3807
    %5750 = vmatprep.subr.bf16.mxu0 %v3812
    %5751 = vmatpush1.bf16.msra.mxu0 %v3811
    %5752 = vmatprep.subr.bf16.mxu0 %v3816
    %5753 = vmatpush1.bf16.msra.mxu0 %v3815
    %5754 = vmatprep.subr.bf16.mxu0 %v3820
    %5755 = vmatpush1.bf16.msra.mxu0 %v3819
    %5756 = vmatprep.mubr.bf16.mxu0 %v929
    %5757 = vmatmul.mubr.bf16.gmra.mrb[0].mxu0 %v915
    %v5758 = vpop.f32.mrb[0].mxu0
    %v5759 = vadd.f32 %v5718, %v5758
    %v5760 = vpop.f32.mrb[0].mxu0
    %v5761 = vadd.f32 %v5720, %v5760
    %v5762 = vpop.f32.mrb[0].mxu0
    %v5763 = vpop.f32.mrb[0].mxu0
    %5764 = vdwg.mxu0
    %5765 = vmatprep.subr.bf16.mxu0 %v3824
    %5766 = vmatpush1.bf16.msra.mxu0 %v3823
    %5767 = vmatprep.subr.bf16.mxu0 %v3828
    %5768 = vmatpush1.bf16.msra.mxu0 %v3827
    %5769 = vmatprep.subr.bf16.mxu0 %v3832
    %5770 = vmatpush1.bf16.msra.mxu0 %v3831
    %5771 = vmatprep.subr.bf16.mxu0 %v3836
    %5772 = vmatpush1.bf16.msra.mxu0 %v3835
    %5773 = vmatprep.subr.bf16.mxu0 %v3840
    %5774 = vmatpush1.bf16.msra.mxu0 %v3839
    %5775 = vmatprep.subr.bf16.mxu0 %v3844
    %5776 = vmatpush1.bf16.msra.mxu0 %v3843
    %5777 = vmatprep.subr.bf16.mxu0 %v3848
    %5778 = vmatpush1.bf16.msra.mxu0 %v3847
    %5779 = vmatprep.subr.bf16.mxu0 %v3852
    %5780 = vmatpush1.bf16.msra.mxu0 %v3851
    %5781 = vmatprep.subr.bf16.mxu0 %v3856
    %5782 = vmatpush1.bf16.msra.mxu0 %v3855
    %5783 = vmatprep.subr.bf16.mxu0 %v3860
    %5784 = vmatpush1.bf16.msra.mxu0 %v3859
    %5785 = vmatprep.subr.bf16.mxu0 %v3864
    %5786 = vmatpush1.bf16.msra.mxu0 %v3863
    %5787 = vmatprep.subr.bf16.mxu0 %v3868
    %5788 = vmatpush1.bf16.msra.mxu0 %v3867
    %5789 = vmatprep.subr.bf16.mxu0 %v3872
    %5790 = vmatpush1.bf16.msra.mxu0 %v3871
    %5791 = vmatprep.subr.bf16.mxu0 %v3876
    %5792 = vmatpush1.bf16.msra.mxu0 %v3875
    %5793 = vmatprep.subr.bf16.mxu0 %v3880
    %5794 = vmatpush1.bf16.msra.mxu0 %v3879
    %5795 = vmatprep.subr.bf16.mxu0 %v3884
    %5796 = vmatpush1.bf16.msra.mxu0 %v3883
    %5797 = vmatprep.mubr.bf16.mxu0 %v933
    %5798 = vmatmul.mubr.bf16.gmra.mrb[0].mxu0 %v931
    %v5799 = vpop.f32.mrb[0].mxu0
    %v5800 = vadd.f32 %v5759, %v5799
    %v5801 = vpop.f32.mrb[0].mxu0
    %v5802 = vadd.f32 %v5761, %v5801
    %v5803 = vpop.f32.mrb[0].mxu0
    %v5804 = vpop.f32.mrb[0].mxu0
    %5805 = vdwg.mxu0
    %5806 = vmatprep.subr.bf16.mxu0 %v3888
    %5807 = vmatpush1.bf16.msra.mxu0 %v3887
    %5808 = vmatprep.subr.bf16.mxu0 %v3892
    %5809 = vmatpush1.bf16.msra.mxu0 %v3891
    %5810 = vmatprep.subr.bf16.mxu0 %v3896
    %5811 = vmatpush1.bf16.msra.mxu0 %v3895
    %5812 = vmatprep.subr.bf16.mxu0 %v3900
    %5813 = vmatpush1.bf16.msra.mxu0 %v3899
    %5814 = vmatprep.subr.bf16.mxu0 %v3904
    %5815 = vmatpush1.bf16.msra.mxu0 %v3903
    %5816 = vmatprep.subr.bf16.mxu0 %v3908
    %5817 = vmatpush1.bf16.msra.mxu0 %v3907
    %5818 = vmatprep.subr.bf16.mxu0 %v3912
    %5819 = vmatpush1.bf16.msra.mxu0 %v3911
    %5820 = vmatprep.subr.bf16.mxu0 %v3916
    %5821 = vmatpush1.bf16.msra.mxu0 %v3915
    %5822 = vmatprep.subr.bf16.mxu0 %v3920
    %5823 = vmatpush1.bf16.msra.mxu0 %v3919
    %5824 = vmatprep.subr.bf16.mxu0 %v3924
    %5825 = vmatpush1.bf16.msra.mxu0 %v3923
    %5826 = vmatprep.subr.bf16.mxu0 %v3928
    %5827 = vmatpush1.bf16.msra.mxu0 %v3927
    %5828 = vmatprep.subr.bf16.mxu0 %v3932
    %5829 = vmatpush1.bf16.msra.mxu0 %v3931
    %5830 = vmatprep.subr.bf16.mxu0 %v3936
    %5831 = vmatpush1.bf16.msra.mxu0 %v3935
    %5832 = vmatprep.subr.bf16.mxu0 %v3940
    %5833 = vmatpush1.bf16.msra.mxu0 %v3939
    %5834 = vmatprep.subr.bf16.mxu0 %v3944
    %5835 = vmatpush1.bf16.msra.mxu0 %v3943
    %5836 = vmatprep.subr.bf16.mxu0 %v3948
    %5837 = vmatpush1.bf16.msra.mxu0 %v3947
    %5838 = vmatprep.mubr.bf16.mxu0 %v971
    %5839 = vmatmul.mubr.bf16.gmra.mrb[0].mxu0 %v957
    %v5840 = vpop.f32.mrb[0].mxu0
    %v5841 = vadd.f32 %v5800, %v5840
    %v5842 = vpop.f32.mrb[0].mxu0
    %v5843 = vadd.f32 %v5802, %v5842
    %v5844 = vpop.f32.mrb[0].mxu0
    %v5845 = vpop.f32.mrb[0].mxu0
    %5846 = vdwg.mxu0
    %5847 = vmatprep.subr.bf16.mxu0 %v3952
    %5848 = vmatpush1.bf16.msra.mxu0 %v3951
    %5849 = vmatprep.subr.bf16.mxu0 %v3956
    %5850 = vmatpush1.bf16.msra.mxu0 %v3955
    %5851 = vmatprep.subr.bf16.mxu0 %v3960
    %5852 = vmatpush1.bf16.msra.mxu0 %v3959
    %5853 = vmatprep.subr.bf16.mxu0 %v3964
    %5854 = vmatpush1.bf16.msra.mxu0 %v3963
    %5855 = vmatprep.subr.bf16.mxu0 %v3968
    %5856 = vmatpush1.bf16.msra.mxu0 %v3967
    %5857 = vmatprep.subr.bf16.mxu0 %v3972
    %5858 = vmatpush1.bf16.msra.mxu0 %v3971
    %5859 = vmatprep.subr.bf16.mxu0 %v3976
    %5860 = vmatpush1.bf16.msra.mxu0 %v3975
    %5861 = vmatprep.subr.bf16.mxu0 %v3980
    %5862 = vmatpush1.bf16.msra.mxu0 %v3979
    %5863 = vmatprep.subr.bf16.mxu0 %v3984
    %5864 = vmatpush1.bf16.msra.mxu0 %v3983
    %5865 = vmatprep.subr.bf16.mxu0 %v3988
    %5866 = vmatpush1.bf16.msra.mxu0 %v3987
    %5867 = vmatprep.subr.bf16.mxu0 %v3992
    %5868 = vmatpush1.bf16.msra.mxu0 %v3991
    %5869 = vmatprep.subr.bf16.mxu0 %v3996
    %5870 = vmatpush1.bf16.msra.mxu0 %v3995
    %5871 = vmatprep.subr.bf16.mxu0 %v4000
    %5872 = vmatpush1.bf16.msra.mxu0 %v3999
    %5873 = vmatprep.subr.bf16.mxu0 %v4004
    %5874 = vmatpush1.bf16.msra.mxu0 %v4003
    %5875 = vmatprep.subr.bf16.mxu0 %v4008
    %5876 = vmatpush1.bf16.msra.mxu0 %v4007
    %5877 = vmatprep.subr.bf16.mxu0 %v4012
    %5878 = vmatpush1.bf16.msra.mxu0 %v4011
    %5879 = vmatprep.mubr.bf16.mxu0 %v981
    %5880 = vmatmul.mubr.bf16.gmra.mrb[0].mxu0 %v979
    %v5881 = vpop.f32.mrb[0].mxu0
    %v5882 = vadd.f32 %v5841, %v5881
    %v5883 = vpop.f32.mrb[0].mxu0
    %v5884 = vadd.f32 %v5843, %v5883
    %v5885 = vpop.f32.mrb[0].mxu0
    %v5886 = vpop.f32.mrb[0].mxu0
    %5887 = vdwg.mxu0
    %5888 = vmatprep.subr.bf16.mxu0 %v4016
    %5889 = vmatpush1.bf16.msra.mxu0 %v4015
    %5890 = vmatprep.subr.bf16.mxu0 %v4020
    %5891 = vmatpush1.bf16.msra.mxu0 %v4019
    %5892 = vmatprep.subr.bf16.mxu0 %v4024
    %5893 = vmatpush1.bf16.msra.mxu0 %v4023
    %5894 = vmatprep.subr.bf16.mxu0 %v4028
    %5895 = vmatpush1.bf16.msra.mxu0 %v4027
    %5896 = vmatprep.subr.bf16.mxu0 %v4032
    %5897 = vmatpush1.bf16.msra.mxu0 %v4031
    %5898 = vmatprep.subr.bf16.mxu0 %v4036
    %5899 = vmatpush1.bf16.msra.mxu0 %v4035
    %5900 = vmatprep.subr.bf16.mxu0 %v4040
    %5901 = vmatpush1.bf16.msra.mxu0 %v4039
    %5902 = vmatprep.subr.bf16.mxu0 %v4044
    %5903 = vmatpush1.bf16.msra.mxu0 %v4043
    %5904 = vmatprep.subr.bf16.mxu0 %v4048
    %5905 = vmatpush1.bf16.msra.mxu0 %v4047
    %5906 = vmatprep.subr.bf16.mxu0 %v4052
    %5907 = vmatpush1.bf16.msra.mxu0 %v4051
    %5908 = vmatprep.subr.bf16.mxu0 %v4056
    %5909 = vmatpush1.bf16.msra.mxu0 %v4055
    %5910 = vmatprep.subr.bf16.mxu0 %v4060
    %5911 = vmatpush1.bf16.msra.mxu0 %v4059
    %5912 = vmatprep.subr.bf16.mxu0 %v4064
    %5913 = vmatpush1.bf16.msra.mxu0 %v4063
    %5914 = vmatprep.subr.bf16.mxu0 %v4068
    %5915 = vmatpush1.bf16.msra.mxu0 %v4067
    %5916 = vmatprep.subr.bf16.mxu0 %v4072
    %5917 = vmatpush1.bf16.msra.mxu0 %v4071
    %5918 = vmatprep.subr.bf16.mxu0 %v4076
    %5919 = vmatpush1.bf16.msra.mxu0 %v4075
    %5920 = vmatprep.mubr.bf16.mxu0 %v978
    %5921 = vmatmul.mubr.bf16.gmra.mrb[0].mxu0 %v964
    %v5922 = vpop.f32.mrb[0].mxu0
    %v5923 = vadd.f32 %v5882, %v5922
    %v5924 = vpop.f32.mrb[0].mxu0
    %v5925 = vadd.f32 %v5884, %v5924
    %v5926 = vpop.f32.mrb[0].mxu0
    %v5927 = vpop.f32.mrb[0].mxu0
    %5928 = vdwg.mxu0
    %5929 = vmatprep.subr.bf16.mxu0 %v4080
    %5930 = vmatpush1.bf16.msra.mxu0 %v4079
    %5931 = vmatprep.subr.bf16.mxu0 %v4084
    %5932 = vmatpush1.bf16.msra.mxu0 %v4083
    %5933 = vmatprep.subr.bf16.mxu0 %v4088
    %5934 = vmatpush1.bf16.msra.mxu0 %v4087
    %5935 = vmatprep.subr.bf16.mxu0 %v4092
    %5936 = vmatpush1.bf16.msra.mxu0 %v4091
    %5937 = vmatprep.subr.bf16.mxu0 %v4096
    %5938 = vmatpush1.bf16.msra.mxu0 %v4095
    %5939 = vmatprep.subr.bf16.mxu0 %v4100
    %5940 = vmatpush1.bf16.msra.mxu0 %v4099
    %5941 = vmatprep.subr.bf16.mxu0 %v4104
    %5942 = vmatpush1.bf16.msra.mxu0 %v4103
    %5943 = vmatprep.subr.bf16.mxu0 %v4108
    %5944 = vmatpush1.bf16.msra.mxu0 %v4107
    %5945 = vmatprep.subr.bf16.mxu0 %v4112
    %5946 = vmatpush1.bf16.msra.mxu0 %v4111
    %5947 = vmatprep.subr.bf16.mxu0 %v4116
    %5948 = vmatpush1.bf16.msra.mxu0 %v4115
    %5949 = vmatprep.subr.bf16.mxu0 %v4120
    %5950 = vmatpush1.bf16.msra.mxu0 %v4119
    %5951 = vmatprep.subr.bf16.mxu0 %v4124
    %5952 = vmatpush1.bf16.msra.mxu0 %v4123
    %5953 = vmatprep.subr.bf16.mxu0 %v4128
    %5954 = vmatpush1.bf16.msra.mxu0 %v4127
    %5955 = vmatprep.subr.bf16.mxu0 %v4132
    %5956 = vmatpush1.bf16.msra.mxu0 %v4131
    %5957 = vmatprep.subr.bf16.mxu0 %v4136
    %5958 = vmatpush1.bf16.msra.mxu0 %v4135
    %5959 = vmatprep.subr.bf16.mxu0 %v4140
    %5960 = vmatpush1.bf16.msra.mxu0 %v4139
    %5961 = vmatprep.mubr.bf16.mxu0 %v982
    %5962 = vmatmul.mubr.bf16.gmra.mrb[0].mxu0 %v980
    %v5963 = vpop.f32.mrb[0].mxu0
    %v5964 = vadd.f32 %v5923, %v5963
    %v5965 = vpop.f32.mrb[0].mxu0
    %v5966 = vadd.f32 %v5925, %v5965
    %v5967 = vpop.f32.mrb[0].mxu0
    %v5968 = vpop.f32.mrb[0].mxu0
    %5969 = vdwg.mxu0
    %5970 = vmatprep.subr.bf16.mxu0 %v4144
    %5971 = vmatpush1.bf16.msra.mxu0 %v4143
    %5972 = vmatprep.subr.bf16.mxu0 %v4148
    %5973 = vmatpush1.bf16.msra.mxu0 %v4147
    %5974 = vmatprep.subr.bf16.mxu0 %v4152
    %5975 = vmatpush1.bf16.msra.mxu0 %v4151
    %5976 = vmatprep.subr.bf16.mxu0 %v4156
    %5977 = vmatpush1.bf16.msra.mxu0 %v4155
    %5978 = vmatprep.subr.bf16.mxu0 0
    %5979 = vmatpush1.bf16.msra.mxu0 0
    %5980 = vmatprep.subr.bf16.mxu0 0
    %5981 = vmatpush1.bf16.msra.mxu0 0
    %5982 = vmatprep.subr.bf16.mxu0 0
    %5983 = vmatpush1.bf16.msra.mxu0 0
    %5984 = vmatprep.subr.bf16.mxu0 0
    %5985 = vmatpush1.bf16.msra.mxu0 0
    %5986 = vmatprep.subr.bf16.mxu0 0
    %5987 = vmatpush1.bf16.msra.mxu0 0
    %5988 = vmatprep.subr.bf16.mxu0 0
    %5989 = vmatpush1.bf16.msra.mxu0 0
    %5990 = vmatprep.subr.bf16.mxu0 0
    %5991 = vmatpush1.bf16.msra.mxu0 0
    %5992 = vmatprep.subr.bf16.mxu0 0
    %5993 = vmatpush1.bf16.msra.mxu0 0
    %5994 = vmatprep.subr.bf16.mxu0 0
    %5995 = vmatpush1.bf16.msra.mxu0 0
    %5996 = vmatprep.subr.bf16.mxu0 0
    %5997 = vmatpush1.bf16.msra.mxu0 0
    %5998 = vmatprep.subr.bf16.mxu0 0
    %5999 = vmatpush1.bf16.msra.mxu0 0
    %6000 = vmatprep.subr.bf16.mxu0 0
    %6001 = vmatpush1.bf16.msra.mxu0 0
    %6002 = vmatprep.mubr.bf16.mxu0 0
    %6003 = vmatmul.mubr.bf16.gmra.mrb[0].mxu0 %v4943
    %v6004 = vpop.f32.mrb[0].mxu0
    %v6005 = vadd.f32 %v5964, %v6004
    %v6006 = vpop.f32.mrb[0].mxu0
    %v6007 = vadd.f32 %v5966, %v6006
    %v6008 = vpop.f32.mrb[0].mxu0
    %v6009 = vpop.f32.mrb[0].mxu0
    %6010 = vdwg.mxu0
    %v6011 = vmax.f32 %v5472, 0.0
    %v6012 = vmax.f32 %v5474, 0.0
    %v6013 = vmax.f32 %v6005, 0.0
    %v6014 = vmax.f32 %v6007, 0.0
    %v6015 = vpack.c.bf16 %v6011, %v6011
    %v6016 = vpack.c.bf16 %v6012, %v6012
    %v6017 = vpack.c.bf16 %v6013, %v6013
    %v6018 = vpack.c.bf16 %v6014, %v6014
    %v6019 = vld [vmem:[%s3] sm:$0xf]
    %v6020 = vld [vmem:[%s3 + $0x4] sm:$0xf]
    %v6021 = vld [vmem:[%s3 + $0x8] sm:$0xf]
    %v6022 = vld [vmem:[%s3 + $0xc] sm:$0xf]
    %v6023 = vld [vmem:[%s3 + $0x10] sm:$0xf]
    %v6024 = vld [vmem:[%s3 + $0x14] sm:$0xf]
    %v6025 = vld [vmem:[%s3 + $0x18] sm:$0xf]
    %v6026 = vld [vmem:[%s3 + $0x1c] sm:$0xf]
    %v6027 = vld [vmem:[%s3 + $0x20] sm:$0xf]
    %v6028 = vld [vmem:[%s3 + $0x24] sm:$0xf]
    %v6029 = vld [vmem:[%s3 + $0x28] sm:$0xf]
    %v6030 = vld [vmem:[%s3 + $0x2c] sm:$0xf]
    %v6031 = vld [vmem:[%s3 + $0x30] sm:$0xf]
    %v6032 = vld [vmem:[%s3 + $0x34] sm:$0xf]
    %v6033 = vld [vmem:[%s3 + $0x38] sm:$0xf]
    %v6034 = vld [vmem:[%s3 + $0x3c] sm:$0xf]
    %v6035 = vld [vmem:[%s3 + $0x40] sm:$0xf]
    %v6036 = vld [vmem:[%s3 + $0x44] sm:$0xf]
    %v6037 = vld [vmem:[%s3 + $0x48] sm:$0xf]
    %v6038 = vld [vmem:[%s3 + $0x4c] sm:$0xf]
    %v6039 = vld [vmem:[%s3 + $0x50] sm:$0xf]
    %v6040 = vld [vmem:[%s3 + $0x54] sm:$0xf]
    %v6041 = vld [vmem:[%s3 + $0x58] sm:$0xf]
    %v6042 = vld [vmem:[%s3 + $0x5c] sm:$0xf]
    %v6043 = vld [vmem:[%s3 + $0x60] sm:$0xf]
    %v6044 = vld [vmem:[%s3 + $0x64] sm:$0xf]
    %v6045 = vld [vmem:[%s3 + $0x68] sm:$0xf]
    %v6046 = vld [vmem:[%s3 + $0x6c] sm:$0xf]
    %v6047 = vld [vmem:[%s3 + $0x70] sm:$0xf]
    %v6048 = vld [vmem:[%s3 + $0x74] sm:$0xf]
    %v6049 = vld [vmem:[%s3 + $0x78] sm:$0xf]
    %v6050 = vld [vmem:[%s3 + $0x7c] sm:$0xf]
    %v6051 = vld [vmem:[%s3 + $0x80] sm:$0xf]
    %v6052 = vld [vmem:[%s3 + $0x84] sm:$0xf]
    %v6053 = vld [vmem:[%s3 + $0x88] sm:$0xf]
    %v6054 = vld [vmem:[%s3 + $0x8c] sm:$0xf]
    %v6055 = vld [vmem:[%s3 + $0x90] sm:$0xf]
    %v6056 = vld [vmem:[%s3 + $0x94] sm:$0xf]
    %v6057 = vld [vmem:[%s3 + $0x98] sm:$0xf]
    %v6058 = vld [vmem:[%s3 + $0x9c] sm:$0xf]
    %v6059 = vld [vmem:[%s3 + $0xa0] sm:$0xf]
    %v6060 = vld [vmem:[%s3 + $0xa4] sm:$0xf]
    %v6061 = vld [vmem:[%s3 + $0xa8] sm:$0xf]
    %v6062 = vld [vmem:[%s3 + $0xac] sm:$0xf]
    %v6063 = vld [vmem:[%s3 + $0xb0] sm:$0xf]
    %v6064 = vld [vmem:[%s3 + $0xb4] sm:$0xf]
    %v6065 = vld [vmem:[%s3 + $0xb8] sm:$0xf]
    %v6066 = vld [vmem:[%s3 + $0xbc] sm:$0xf]
    %v6067 = vld [vmem:[%s3 + $0xc0] sm:$0xf]
    %v6068 = vld [vmem:[%s3 + $0xc4] sm:$0xf]
    %v6069 = vld [vmem:[%s3 + $0xc8] sm:$0xf]
    %v6070 = vld [vmem:[%s3 + $0xcc] sm:$0xf]
    %v6071 = vld [vmem:[%s3 + $0xd0] sm:$0xf]
    %v6072 = vld [vmem:[%s3 + $0xd4] sm:$0xf]
    %v6073 = vld [vmem:[%s3 + $0xd8] sm:$0xf]
    %v6074 = vld [vmem:[%s3 + $0xdc] sm:$0xf]
    %v6075 = vld [vmem:[%s3 + $0xe0] sm:$0xf]
    %v6076 = vld [vmem:[%s3 + $0xe4] sm:$0xf]
    %v6077 = vld [vmem:[%s3 + $0xe8] sm:$0xf]
    %v6078 = vld [vmem:[%s3 + $0xec] sm:$0xf]
    %v6079 = vld [vmem:[%s3 + $0xf0] sm:$0xf]
    %v6080 = vld [vmem:[%s3 + $0xf4] sm:$0xf]
    %v6081 = vld [vmem:[%s3 + $0xf8] sm:$0xf]
    %v6082 = vld [vmem:[%s3 + $0xfc] sm:$0xf]
    %v6083 = vld [vmem:[%s4] sm:$0x1]
    %v6085 = vlaneseq
    %v6086 = vshrl.u32 %v6085, 7
    %v6087 = vsub.s32 0, %v6086
    %v6088 = vrot.slane %v6083, %v6087
    %v6154 = vunpack.c.l.b16 %v6019
    %v6155 = vunpack.c.l.b16 %v6020
    %v6156 = vunpack.c.l.b16 %v6021
    %v6157 = vunpack.c.l.b16 %v6022
    %v6158 = vunpack.c.l.b16 %v6023
    %v6159 = vunpack.c.l.b16 %v6024
    %v6160 = vunpack.c.l.b16 %v6025
    %v6161 = vunpack.c.l.b16 %v6026
    %v6162 = vunpack.c.l.b16 %v6027
    %v6163 = vunpack.c.l.b16 %v6028
    %v6164 = vunpack.c.l.b16 %v6029
    %v6165 = vunpack.c.l.b16 %v6030
    %v6166 = vunpack.c.l.b16 %v6031
    %v6167 = vunpack.c.l.b16 %v6032
    %v6168 = vunpack.c.l.b16 %v6033
    %v6169 = vunpack.c.l.b16 %v6034
    %v6170 = vunpack.c.l.b16 %v6035
    %v6171 = vunpack.c.l.b16 %v6036
    %v6172 = vunpack.c.l.b16 %v6037
    %v6173 = vunpack.c.l.b16 %v6038
    %v6174 = vunpack.c.l.b16 %v6039
    %v6175 = vunpack.c.l.b16 %v6040
    %v6176 = vunpack.c.l.b16 %v6041
    %v6177 = vunpack.c.l.b16 %v6042
    %v6178 = vunpack.c.l.b16 %v6043
    %v6179 = vunpack.c.l.b16 %v6044
    %v6180 = vunpack.c.l.b16 %v6045
    %v6181 = vunpack.c.l.b16 %v6046
    %v6182 = vunpack.c.l.b16 %v6047
    %v6183 = vunpack.c.l.b16 %v6048
    %v6184 = vunpack.c.l.b16 %v6049
    %v6185 = vunpack.c.l.b16 %v6050
    %v6186 = vunpack.c.l.b16 %v6051
    %v6187 = vunpack.c.l.b16 %v6052
    %v6188 = vunpack.c.l.b16 %v6053
    %v6189 = vunpack.c.l.b16 %v6054
    %v6190 = vunpack.c.l.b16 %v6055
    %v6191 = vunpack.c.l.b16 %v6056
    %v6192 = vunpack.c.l.b16 %v6057
    %v6193 = vunpack.c.l.b16 %v6058
    %v6194 = vunpack.c.l.b16 %v6059
    %v6195 = vunpack.c.l.b16 %v6060
    %v6196 = vunpack.c.l.b16 %v6061
    %v6197 = vunpack.c.l.b16 %v6062
    %v6198 = vunpack.c.l.b16 %v6063
    %v6199 = vunpack.c.l.b16 %v6064
    %v6200 = vunpack.c.l.b16 %v6065
    %v6201 = vunpack.c.l.b16 %v6066
    %v6202 = vunpack.c.l.b16 %v6067
    %v6203 = vunpack.c.l.b16 %v6068
    %v6204 = vunpack.c.l.b16 %v6069
    %v6205 = vunpack.c.l.b16 %v6070
    %v6206 = vunpack.c.l.b16 %v6071
    %v6207 = vunpack.c.l.b16 %v6072
    %v6208 = vunpack.c.l.b16 %v6073
    %v6209 = vunpack.c.l.b16 %v6074
    %v6210 = vunpack.c.l.b16 %v6075
    %v6211 = vunpack.c.l.b16 %v6076
    %v6212 = vunpack.c.l.b16 %v6077
    %v6213 = vunpack.c.l.b16 %v6078
    %v6214 = vunpack.c.l.b16 %v6079
    %v6215 = vunpack.c.l.b16 %v6080
    %v6216 = vunpack.c.l.b16 %v6081
    %v6217 = vunpack.c.l.b16 %v6082
    %v6218 = vpack.c.b16 %v6155, %v6154
    %v6219 = vpack.c.b16 %v6157, %v6156
    %v6220 = vpack.c.b16 %v6159, %v6158
    %v6221 = vpack.c.b16 %v6161, %v6160
    %v6222 = vpack.c.b16 %v6163, %v6162
    %v6223 = vpack.c.b16 %v6165, %v6164
    %v6224 = vpack.c.b16 %v6167, %v6166
    %v6225 = vpack.c.b16 %v6169, %v6168
    %v6226 = vpack.c.b16 %v6171, %v6170
    %v6227 = vpack.c.b16 %v6173, %v6172
    %v6228 = vpack.c.b16 %v6175, %v6174
    %v6229 = vpack.c.b16 %v6177, %v6176
    %v6230 = vpack.c.b16 %v6179, %v6178
    %v6231 = vpack.c.b16 %v6181, %v6180
    %v6232 = vpack.c.b16 %v6183, %v6182
    %v6233 = vpack.c.b16 %v6185, %v6184
    %v6234 = vpack.c.b16 %v6187, %v6186
    %v6235 = vpack.c.b16 %v6189, %v6188
    %v6236 = vpack.c.b16 %v6191, %v6190
    %v6237 = vpack.c.b16 %v6193, %v6192
    %v6238 = vpack.c.b16 %v6195, %v6194
    %v6239 = vpack.c.b16 %v6197, %v6196
    %v6240 = vpack.c.b16 %v6199, %v6198
    %v6241 = vpack.c.b16 %v6201, %v6200
    %v6242 = vpack.c.b16 %v6203, %v6202
    %v6243 = vpack.c.b16 %v6205, %v6204
    %v6244 = vpack.c.b16 %v6207, %v6206
    %v6245 = vpack.c.b16 %v6209, %v6208
    %v6246 = vpack.c.b16 %v6211, %v6210
    %v6247 = vpack.c.b16 %v6213, %v6212
    %v6248 = vpack.c.b16 %v6215, %v6214
    %v6249 = vpack.c.b16 %v6217, %v6216
    %6282 = vmatprep.subr.bf16.mxu0 0
    %6283 = vmatpush1.bf16.msra.mxu0 %v6218
    %6284 = vmatprep.subr.bf16.mxu0 0
    %6285 = vmatpush1.bf16.msra.mxu0 %v6219
    %6286 = vmatprep.subr.bf16.mxu0 0
    %6287 = vmatpush1.bf16.msra.mxu0 %v6220
    %6288 = vmatprep.subr.bf16.mxu0 0
    %6289 = vmatpush1.bf16.msra.mxu0 %v6221
    %6290 = vmatprep.subr.bf16.mxu0 0
    %6291 = vmatpush1.bf16.msra.mxu0 %v6222
    %6292 = vmatprep.subr.bf16.mxu0 0
    %6293 = vmatpush1.bf16.msra.mxu0 %v6223
    %6294 = vmatprep.subr.bf16.mxu0 0
    %6295 = vmatpush1.bf16.msra.mxu0 %v6224
    %6296 = vmatprep.subr.bf16.mxu0 0
    %6297 = vmatpush1.bf16.msra.mxu0 %v6225
    %6298 = vmatprep.subr.bf16.mxu0 0
    %6299 = vmatpush1.bf16.msra.mxu0 %v6226
    %6300 = vmatprep.subr.bf16.mxu0 0
    %6301 = vmatpush1.bf16.msra.mxu0 %v6227
    %6302 = vmatprep.subr.bf16.mxu0 0
    %6303 = vmatpush1.bf16.msra.mxu0 %v6228
    %6304 = vmatprep.subr.bf16.mxu0 0
    %6305 = vmatpush1.bf16.msra.mxu0 %v6229
    %6306 = vmatprep.subr.bf16.mxu0 0
    %6307 = vmatpush1.bf16.msra.mxu0 %v6230
    %6308 = vmatprep.subr.bf16.mxu0 0
    %6309 = vmatpush1.bf16.msra.mxu0 %v6231
    %6310 = vmatprep.subr.bf16.mxu0 0
    %6311 = vmatpush1.bf16.msra.mxu0 %v6232
    %6312 = vmatprep.subr.bf16.mxu0 0
    %6313 = vmatpush1.bf16.msra.mxu0 %v6233
    %6314 = vmatprep.mubr.bf16.mxu0 %v6016
    %6315 = vmatmul.mubr.bf16.gmra.mrb[0].mxu0 %v6015
    %v6316 = vpop.f32.mrb[0].mxu0
    %v6317 = vadd.f32 %v6088, %v6316
    %v6318 = vpop.f32.mrb[0].mxu0
    %v6319 = vpop.f32.mrb[0].mxu0
    %v6320 = vpop.f32.mrb[0].mxu0
    %6321 = vdwg.mxu0
    %6322 = vmatprep.subr.bf16.mxu0 0
    %6323 = vmatpush1.bf16.msra.mxu0 %v6234
    %6324 = vmatprep.subr.bf16.mxu0 0
    %6325 = vmatpush1.bf16.msra.mxu0 %v6235
    %6326 = vmatprep.subr.bf16.mxu0 0
    %6327 = vmatpush1.bf16.msra.mxu0 %v6236
    %6328 = vmatprep.subr.bf16.mxu0 0
    %6329 = vmatpush1.bf16.msra.mxu0 %v6237
    %6330 = vmatprep.subr.bf16.mxu0 0
    %6331 = vmatpush1.bf16.msra.mxu0 %v6238
    %6332 = vmatprep.subr.bf16.mxu0 0
    %6333 = vmatpush1.bf16.msra.mxu0 %v6239
    %6334 = vmatprep.subr.bf16.mxu0 0
    %6335 = vmatpush1.bf16.msra.mxu0 %v6240
    %6336 = vmatprep.subr.bf16.mxu0 0
    %6337 = vmatpush1.bf16.msra.mxu0 %v6241
    %6338 = vmatprep.subr.bf16.mxu0 0
    %6339 = vmatpush1.bf16.msra.mxu0 %v6242
    %6340 = vmatprep.subr.bf16.mxu0 0
    %6341 = vmatpush1.bf16.msra.mxu0 %v6243
    %6342 = vmatprep.subr.bf16.mxu0 0
    %6343 = vmatpush1.bf16.msra.mxu0 %v6244
    %6344 = vmatprep.subr.bf16.mxu0 0
    %6345 = vmatpush1.bf16.msra.mxu0 %v6245
    %6346 = vmatprep.subr.bf16.mxu0 0
    %6347 = vmatpush1.bf16.msra.mxu0 %v6246
    %6348 = vmatprep.subr.bf16.mxu0 0
    %6349 = vmatpush1.bf16.msra.mxu0 %v6247
    %6350 = vmatprep.subr.bf16.mxu0 0
    %6351 = vmatpush1.bf16.msra.mxu0 %v6248
    %6352 = vmatprep.subr.bf16.mxu0 0
    %6353 = vmatpush1.bf16.msra.mxu0 %v6249
    %6354 = vmatprep.mubr.bf16.mxu0 %v6018
    %6355 = vmatmul.mubr.bf16.gmra.mrb[0].mxu0 %v6017
    %v6356 = vpop.f32.mrb[0].mxu0
    %v6357 = vadd.f32 %v6317, %v6356
    %v6358 = vpop.f32.mrb[0].mxu0
    %v6359 = vpop.f32.mrb[0].mxu0
    %v6360 = vpop.f32.mrb[0].mxu0
    %6361 = vdwg.mxu0
    %6362 = vst [vmem:[#allocation2] sm:$0x3] %v6357
    // Predicated region
    $region22: #{forward.7} parent=1 // pred_check
      _
    $region23: #{forward.7} parent=1 // pred_check_branch
      %6364 = sbr.rel (0) target = $region25
    $region24: #{forward.7} parent=1 // pred_region
      %s6366 = ssub.s32 32, 32
      %6367 = vsyncadd [#allocation3], %s6366
      %s6369 = sshll.u32 [#allocation2], 4
      %s6370 = int_to_ptr.vmem [resolvable:$true] %s6369
      %6372 = dma.vmem_to_hbm [thread:$0]  %s6370, 32, %s5, [#allocation3]
    $region25: #{forward.7} parent=1 // pred_fallthru
      _
    // Predicated region
    $region26: #{forward.7} parent=1 // pred_check
      _
    $region27: #{forward.7} parent=1 // pred_check_branch
      %6374 = sbr.rel (0) target = $region29
    $region28: #{forward.7} parent=1 // pred_region
      %6375 = dma.done [#allocation3], 32
    $region29: #{forward.7} parent=1 // pred_fallthru
      _
    %6376 = vsyncpa [#allocation3], 1

</llo_original>
